<compile_context>
chip_gen: v7x
topology: tpu7x:2x2x1
jax: 0.10.0
libtpu: 0.0.40
codegen_flags: <defaults>
</compile_context>

<pallas_src>
import functools

import jax
import jax.numpy as jnp
from jax.experimental import pallas as pl
from jax.experimental.pallas import tpu as pltpu


# ------------------------------ Pallas kernel ------------------------------ #

def _mix_channels(xs, w_mat):
    """Channel contraction (xs @ w_mat) as VPU broadcast-FMA.

    xs:    (TM, Wo, C_in)  value
    w_mat: (C_in, C_out)   value
    ->     (TM, Wo, C_out) float32
    """
    c_in = w_mat.shape[0]
    acc = xs[:, :, 0:1].astype(jnp.float32) * w_mat[0:1][None, :, :]
    for c in range(1, c_in):
        acc = acc + xs[:, :, c:c + 1].astype(jnp.float32) * w_mat[c:c + 1][None, :, :]
    return acc


def multi_scale_kernel(x_ref, *refs, kernel_set):
    """Fully fused multi_scale_block forward for one (TM, W, C_in) tile of M=B*H.

    refs = [ws, bs, w_s0, b_s0] + [w0_i, b0_i, w1_i, b1_i]*n_blocks + out_refs
    """
    n_stages = len(kernel_set)
    n_w = 4 + 4 * (n_stages - 1)
    w_refs = refs[:n_w]
    out_refs = refs[n_w:]

    tm, w_in, _ = x_ref.shape
    c_out = out_refs[0].shape[2]

    def bias3(b):                               # (1, C) -> (1, 1, C)
        return b.reshape(1, 1, c_out)

    # ---- start_conv (1x1) fused with scale[0] ((1, k0) VALID conv) ----
    ws = w_refs[0][...]                         # (c_in, c_out)
    bs = bias3(w_refs[1][...])
    w_s0 = w_refs[2]                            # ref (k0, c_out, c_out)
    b_s0 = bias3(w_refs[3][...])
    k0 = kernel_set[0]
    w0_len = w_in - k0 + 1

    acc = jnp.zeros((tm, w0_len, c_out), jnp.float32)
    for t in range(k0):
        xt = x_ref[:, pl.ds(t, w0_len), :]      # shifted input window (ref load)
        ht = _mix_channels(xt, ws) + bs         # start_conv on the window
        acc = acc + _mix_channels(ht, w_s0[t])  # scale[0] tap t
    out_refs[0][...] = (acc + b_s0).astype(out_refs[0].dtype)

    # ---- layer_block stages: stride-2 1x1 conv + (1,k) conv + MaxPool(1,3,s2)
    #      + residual add + ReLU, all fused; input = previous output's VMEM block
    prev_ref = out_refs[0]
    w_prev = w0_len
    for i in range(1, n_stages):
        k = kernel_set[i]
        base = 4 + 4 * (i - 1)
        w0 = w_refs[base][...]                  # (c_out, c_out) 1x1 stride-2 conv
        b0 = bias3(w_refs[base + 1][...])
        w1 = w_refs[base + 2]                   # ref (k, c_out, c_out)
        b1 = bias3(w_refs[base + 3][...])

        wc = (w_prev - 1) // 2 + 1              # stride-2 1x1 conv output width
        w1_len = w_prev - k + 1                 # (1,k) VALID conv output width
        wp = (w1_len - 3) // 2 + 1              # pooled output width

        # MaxPool taps computed directly from stride-2 sublane reads of the
        # previous output: pooled tap tau at position j touches conv1 column
        # 2j+tau, i.e. input columns 2j+tau+s.  No pooling stack, no HBM trips.
        pooled = None
        for tau in range(3):
            tap = jnp.zeros((tm, wp, c_out), jnp.float32)
            for s in range(k):
                xs = prev_ref[:, pl.ds(tau + s, wp, 2), :]
                tap = tap + _mix_channels(xs, w1[s])
            pooled = tap if pooled is None else jnp.maximum(pooled, tap)
        pooled = pooled + b1

        # Residual: last wp columns of the stride-2 1x1 conv of the input.
        xr = prev_ref[:, pl.ds(2 * (wc - wp), wp, 2), :]
        res = _mix_channels(xr, w0) + b0

        out_refs[i][...] = jnp.maximum(pooled + res, 0.0).astype(out_refs[i].dtype)
        prev_ref = out_refs[i]
        w_prev = wp


# ------------------------------ Pallas wrapper ------------------------------ #

def multi_scale_block_fwd(x_nchw, params, kernel_set):
    B, c_in, H, W = x_nchw.shape
    c_out = params['start_w'].shape[0]
    n_stages = len(kernel_set)
    M = B * H

    # NCHW -> (M, W, C) channels-last
    x = jnp.transpose(x_nchw, (0, 2, 3, 1)).reshape(M, W, c_in)

    # Fat M-tiles; at least 2 balanced tiles when M is large enough so the v7x
    # megacore can split the parallel axis (capped at 128 rows per tile).
    if M <= 8:
        tm = M
    else:
        tm = min(128, ((M + 1) // 2 + 7) // 8 * 8)
    num_tiles = pl.cdiv(M, tm)
    m_pad = num_tiles * tm
    if m_pad != M:
        x = jnp.pad(x, ((0, m_pad - M), (0, 0), (0, 0)))

    # Per-stage output widths (must match the in-kernel arithmetic).
    widths = []
    w_cur = W - kernel_set[0] + 1                    # scale[0]: (1,k0) VALID conv
    widths.append(w_cur)
    for i in range(1, n_stages):
        w1_len = w_cur - kernel_set[i] + 1           # (1,k) VALID conv
        wp = (w1_len - 3) // 2 + 1                   # MaxPool (1,3) stride 2
        assert wp >= 1, "sequence too short for kernel_set"
        widths.append(wp)
        w_cur = wp

    # Pack weights: torch (C_out, C_in, 1, K) -> kernel (K, C_in, C_out).
    def conv_w(w):
        return jnp.transpose(w[:, :, 0, :], (2, 1, 0))

    flat_w, w_specs = [], []

    def add_w(arr):
        flat_w.append(arr)
        if arr.ndim == 2:
            w_specs.append(pl.BlockSpec(arr.shape, lambda m: (0, 0)))
        else:
            w_specs.append(pl.BlockSpec(arr.shape, lambda m: (0, 0, 0)))

    add_w(conv_w(params['start_w'])[0])              # (c_in, c_out)
    add_w(params['start_b'].reshape(1, c_out))
    add_w(conv_w(params['scale0_w']))                # (k0, c_out, c_out)
    add_w(params['scale0_b'].reshape(1, c_out))
    for bp in params['blocks']:
        add_w(conv_w(bp['w0'])[0])                   # (c_out, c_out)
        add_w(bp['b0'].reshape(1, c_out))
        add_w(conv_w(bp['w1']))                      # (k, c_out, c_out)
        add_w(bp['b1'].reshape(1, c_out))

    out_shape = tuple(jax.ShapeDtypeStruct((m_pad, w_i, c_out), jnp.float32)
                      for w_i in widths)
    out_specs = tuple(pl.BlockSpec((tm, w_i, c_out), lambda m: (m, 0, 0))
                      for w_i in widths)
    in_specs = [pl.BlockSpec((tm, W, c_in), lambda m: (m, 0, 0))] + w_specs

    kernel = functools.partial(multi_scale_kernel, kernel_set=tuple(kernel_set))
    outs = pl.pallas_call(
        kernel,
        out_shape=out_shape,
        grid=(num_tiles,),
        in_specs=in_specs,
        out_specs=out_specs,
        compiler_params=pltpu.CompilerParams(
            dimension_semantics=("parallel",)),
    )(x, *flat_w)

    def to_nchw(y, w_i):
        y = y[:M]
        return jnp.transpose(y.reshape(B, H, w_i, c_out), (0, 3, 1, 2))

    return [to_nchw(y, w_i) for y, w_i in zip(outs, widths)]


# --------------------------- pure-JAX reference ----------------------------- #

def _ref_conv(x, w, b, sw=1):
    y = jax.lax.conv_general_dilated(
        x, w, window_strides=(1, sw), padding='VALID',
        dimension_numbers=('NCHW', 'OIHW', 'NCHW'))
    return y + b[None, :, None, None]


def _ref_maxpool_1x3_s2(x):
    return jax.lax.reduce_window(x, -jnp.inf, jax.lax.max,
                                 (1, 1, 1, 3), (1, 1, 1, 2), 'VALID')


def ref_forward(x, params, kernel_set):
    x = _ref_conv(x, params['start_w'], params['start_b'])
    outs = []
    x = _ref_conv(x, params['scale0_w'], params['scale0_b'])
    outs.append(x)
    for i in range(1, len(kernel_set)):
        bp = params['blocks'][i - 1]
        co = _ref_conv(x, bp['w0'], bp['b0'], sw=2)
        c1 = _ref_conv(x, bp['w1'], bp['b1'])
        p = _ref_maxpool_1x3_s2(c1)
        x = jax.nn.relu(p + co[..., -p.shape[3]:])
        outs.append(x)
    return outs


# ----------------------------- parameter init ------------------------------ #

def init_params(key, c_in, c_out, kernel_set):
    def conv_p(k, cout, cin, ksz):
        kw, kb = jax.random.split(k)
        w = jax.random.normal(kw, (cout, cin, 1, ksz), jnp.float32) * 0.1
        b = jax.random.normal(kb, (cout,), jnp.float32) * 0.1
        return w, b

    n_blocks = len(kernel_set) - 1
    keys = jax.random.split(key, 2 + 2 * n_blocks)
    p = {}
    p['start_w'], p['start_b'] = conv_p(keys[0], c_out, c_in, 1)
    p['scale0_w'], p['scale0_b'] = conv_p(keys[1], c_out, c_out, kernel_set[0])
    blocks = []
    for i in range(n_blocks):
        w0, b0 = conv_p(keys[2 + 2 * i], c_out, c_out, 1)
        w1, b1 = conv_p(keys[3 + 2 * i], c_out, c_out, kernel_set[i + 1])
        blocks.append({'w0': w0, 'b0': b0, 'w1': w1, 'b1': b1})
    p['blocks'] = blocks
    return p


# ----------------------------------- main ----------------------------------- #

if __name__ == "__main__":
    B, c_in, c_out, H, seq_length = 2, 4, 8, 4, 16
    kernel_set = [3, 3]

    key = jax.random.PRNGKey(0)
    kx, kp = jax.random.split(key)
    x = jax.random.normal(kx, (B, c_in, H, seq_length), jnp.float32)
    params = init_params(kp, c_in, c_out, kernel_set)

    outs = multi_scale_block_fwd(x, params, kernel_set)
    outs = [jax.block_until_ready(o) for o in outs]

    refs = ref_forward(x, params, kernel_set)
    for o, r in zip(outs, refs):
        assert o.shape == r.shape, (o.shape, r.shape)
        err = float(jnp.max(jnp.abs(o - r)))
        assert jnp.allclose(o, r, rtol=1e-4, atol=1e-4), err

    print("KERNEL_OK")
</pallas_src>

<mosaic_0001>
module attributes {stable_mosaic.version = 11 : i64} {
  func.func @multi_scale_kernel(%arg0: i32, %arg1: memref<8x16x4xf32, #tpu.memory_space<vmem>>, %arg2: memref<4x8xf32, #tpu.memory_space<vmem>>, %arg3: memref<1x8xf32, #tpu.memory_space<vmem>>, %arg4: memref<3x8x8xf32, #tpu.memory_space<vmem>>, %arg5: memref<1x8xf32, #tpu.memory_space<vmem>>, %arg6: memref<8x8xf32, #tpu.memory_space<vmem>>, %arg7: memref<1x8xf32, #tpu.memory_space<vmem>>, %arg8: memref<3x8x8xf32, #tpu.memory_space<vmem>>, %arg9: memref<1x8xf32, #tpu.memory_space<vmem>>, %arg10: memref<8x14x8xf32, #tpu.memory_space<vmem>>, %arg11: memref<8x5x8xf32, #tpu.memory_space<vmem>>) attributes {dimension_semantics = [#tpu.dimension_semantics<parallel>], iteration_bounds = array<i64: 1>, scalar_prefetch = 0 : i64, scratch_operands = 0 : i64, tpu.core_type = #tpu.core_type<tc>, window_params = [{transform_indices = @transform_0, window_bounds = array<i64: 8, 16, 4>}, {pipeline_mode = #tpu.pipeline_mode<synchronous>, transform_indices = @transform_1, window_bounds = array<i64: 4, 8>}, {pipeline_mode = #tpu.pipeline_mode<synchronous>, transform_indices = @transform_2, window_bounds = array<i64: 1, 8>}, {pipeline_mode = #tpu.pipeline_mode<synchronous>, transform_indices = @transform_3, window_bounds = array<i64: 3, 8, 8>}, {pipeline_mode = #tpu.pipeline_mode<synchronous>, transform_indices = @transform_4, window_bounds = array<i64: 1, 8>}, {pipeline_mode = #tpu.pipeline_mode<synchronous>, transform_indices = @transform_5, window_bounds = array<i64: 8, 8>}, {pipeline_mode = #tpu.pipeline_mode<synchronous>, transform_indices = @transform_6, window_bounds = array<i64: 1, 8>}, {pipeline_mode = #tpu.pipeline_mode<synchronous>, transform_indices = @transform_7, window_bounds = array<i64: 3, 8, 8>}, {pipeline_mode = #tpu.pipeline_mode<synchronous>, transform_indices = @transform_8, window_bounds = array<i64: 1, 8>}, {transform_indices = @transform_9, window_bounds = array<i64: 8, 14, 8>}, {transform_indices = @transform_10, window_bounds = array<i64: 8, 5, 8>}]} {
    %c0 = arith.constant 0 : index
    %c0_0 = arith.constant 0 : index
    %0 = vector.load %arg2[%c0, %c0_0] : memref<4x8xf32, #tpu.memory_space<vmem>>, vector<4x8xf32>
    %c0_1 = arith.constant 0 : index
    %c0_2 = arith.constant 0 : index
    %1 = vector.load %arg3[%c0_1, %c0_2] : memref<1x8xf32, #tpu.memory_space<vmem>>, vector<1x8xf32>
    %2 = vector.shape_cast %1 : vector<1x8xf32> to vector<1x1x8xf32>
    %c0_3 = arith.constant 0 : index
    %c0_4 = arith.constant 0 : index
    %3 = vector.load %arg5[%c0_3, %c0_4] : memref<1x8xf32, #tpu.memory_space<vmem>>, vector<1x8xf32>
    %4 = vector.shape_cast %3 : vector<1x8xf32> to vector<1x1x8xf32>
    %cst = arith.constant 0.000000e+00 : f32
    %5 = vector.broadcast %cst : f32 to vector<8x14x8xf32>
    %c0_5 = arith.constant 0 : index
    %c0_6 = arith.constant 0 : index
    %c0_7 = arith.constant 0 : index
    %6 = vector.load %arg1[%c0_5, %c0_6, %c0_7] : memref<8x16x4xf32, #tpu.memory_space<vmem>>, vector<8x14x4xf32>
    %7 = vector.extract_strided_slice %6 {offsets = [0, 0, 0], sizes = [8, 14, 1], strides = [1, 1, 1]} : vector<8x14x4xf32> to vector<8x14x1xf32>
    %8 = vector.extract_strided_slice %0 {offsets = [0, 0], sizes = [1, 8], strides = [1, 1]} : vector<4x8xf32> to vector<1x8xf32>
    %9 = vector.shape_cast %8 : vector<1x8xf32> to vector<1x1x8xf32>
    %10 = vector.broadcast %7 : vector<8x14x1xf32> to vector<8x14x8xf32>
    %11 = vector.broadcast %9 : vector<1x1x8xf32> to vector<8x14x8xf32>
    %12 = arith.mulf %10, %11 : vector<8x14x8xf32>
    %13 = vector.extract_strided_slice %6 {offsets = [0, 0, 1], sizes = [8, 14, 1], strides = [1, 1, 1]} : vector<8x14x4xf32> to vector<8x14x1xf32>
    %14 = vector.extract_strided_slice %0 {offsets = [1, 0], sizes = [1, 8], strides = [1, 1]} : vector<4x8xf32> to vector<1x8xf32>
    %15 = vector.shape_cast %14 : vector<1x8xf32> to vector<1x1x8xf32>
    %16 = vector.broadcast %13 : vector<8x14x1xf32> to vector<8x14x8xf32>
    %17 = vector.broadcast %15 : vector<1x1x8xf32> to vector<8x14x8xf32>
    %18 = arith.mulf %16, %17 : vector<8x14x8xf32>
    %19 = arith.addf %12, %18 : vector<8x14x8xf32>
    %20 = vector.extract_strided_slice %6 {offsets = [0, 0, 2], sizes = [8, 14, 1], strides = [1, 1, 1]} : vector<8x14x4xf32> to vector<8x14x1xf32>
    %21 = vector.extract_strided_slice %0 {offsets = [2, 0], sizes = [1, 8], strides = [1, 1]} : vector<4x8xf32> to vector<1x8xf32>
    %22 = vector.shape_cast %21 : vector<1x8xf32> to vector<1x1x8xf32>
    %23 = vector.broadcast %20 : vector<8x14x1xf32> to vector<8x14x8xf32>
    %24 = vector.broadcast %22 : vector<1x1x8xf32> to vector<8x14x8xf32>
    %25 = arith.mulf %23, %24 : vector<8x14x8xf32>
    %26 = arith.addf %19, %25 : vector<8x14x8xf32>
    %27 = vector.extract_strided_slice %6 {offsets = [0, 0, 3], sizes = [8, 14, 1], strides = [1, 1, 1]} : vector<8x14x4xf32> to vector<8x14x1xf32>
    %28 = vector.extract_strided_slice %0 {offsets = [3, 0], sizes = [1, 8], strides = [1, 1]} : vector<4x8xf32> to vector<1x8xf32>
    %29 = vector.shape_cast %28 : vector<1x8xf32> to vector<1x1x8xf32>
    %30 = vector.broadcast %27 : vector<8x14x1xf32> to vector<8x14x8xf32>
    %31 = vector.broadcast %29 : vector<1x1x8xf32> to vector<8x14x8xf32>
    %32 = arith.mulf %30, %31 : vector<8x14x8xf32>
    %33 = arith.addf %26, %32 : vector<8x14x8xf32>
    %34 = vector.broadcast %2 : vector<1x1x8xf32> to vector<8x14x8xf32>
    %35 = arith.addf %33, %34 : vector<8x14x8xf32>
    %c0_8 = arith.constant 0 : index
    %c0_9 = arith.constant 0 : index
    %c0_10 = arith.constant 0 : index
    %36 = vector.load %arg4[%c0_8, %c0_9, %c0_10] : memref<3x8x8xf32, #tpu.memory_space<vmem>>, vector<1x8x8xf32>
    %37 = vector.shape_cast %36 : vector<1x8x8xf32> to vector<8x8xf32>
    %38 = vector.extract_strided_slice %35 {offsets = [0, 0, 0], sizes = [8, 14, 1], strides = [1, 1, 1]} : vector<8x14x8xf32> to vector<8x14x1xf32>
    %39 = vector.extract_strided_slice %37 {offsets = [0, 0], sizes = [1, 8], strides = [1, 1]} : vector<8x8xf32> to vector<1x8xf32>
    %40 = vector.shape_cast %39 : vector<1x8xf32> to vector<1x1x8xf32>
    %41 = vector.broadcast %38 : vector<8x14x1xf32> to vector<8x14x8xf32>
    %42 = vector.broadcast %40 : vector<1x1x8xf32> to vector<8x14x8xf32>
    %43 = arith.mulf %41, %42 : vector<8x14x8xf32>
    %44 = vector.extract_strided_slice %35 {offsets = [0, 0, 1], sizes = [8, 14, 1], strides = [1, 1, 1]} : vector<8x14x8xf32> to vector<8x14x1xf32>
    %45 = vector.extract_strided_slice %37 {offsets = [1, 0], sizes = [1, 8], strides = [1, 1]} : vector<8x8xf32> to vector<1x8xf32>
    %46 = vector.shape_cast %45 : vector<1x8xf32> to vector<1x1x8xf32>
    %47 = vector.broadcast %44 : vector<8x14x1xf32> to vector<8x14x8xf32>
    %48 = vector.broadcast %46 : vector<1x1x8xf32> to vector<8x14x8xf32>
    %49 = arith.mulf %47, %48 : vector<8x14x8xf32>
    %50 = arith.addf %43, %49 : vector<8x14x8xf32>
    %51 = vector.extract_strided_slice %35 {offsets = [0, 0, 2], sizes = [8, 14, 1], strides = [1, 1, 1]} : vector<8x14x8xf32> to vector<8x14x1xf32>
    %52 = vector.extract_strided_slice %37 {offsets = [2, 0], sizes = [1, 8], strides = [1, 1]} : vector<8x8xf32> to vector<1x8xf32>
    %53 = vector.shape_cast %52 : vector<1x8xf32> to vector<1x1x8xf32>
    %54 = vector.broadcast %51 : vector<8x14x1xf32> to vector<8x14x8xf32>
    %55 = vector.broadcast %53 : vector<1x1x8xf32> to vector<8x14x8xf32>
    %56 = arith.mulf %54, %55 : vector<8x14x8xf32>
    %57 = arith.addf %50, %56 : vector<8x14x8xf32>
    %58 = vector.extract_strided_slice %35 {offsets = [0, 0, 3], sizes = [8, 14, 1], strides = [1, 1, 1]} : vector<8x14x8xf32> to vector<8x14x1xf32>
    %59 = vector.extract_strided_slice %37 {offsets = [3, 0], sizes = [1, 8], strides = [1, 1]} : vector<8x8xf32> to vector<1x8xf32>
    %60 = vector.shape_cast %59 : vector<1x8xf32> to vector<1x1x8xf32>
    %61 = vector.broadcast %58 : vector<8x14x1xf32> to vector<8x14x8xf32>
    %62 = vector.broadcast %60 : vector<1x1x8xf32> to vector<8x14x8xf32>
    %63 = arith.mulf %61, %62 : vector<8x14x8xf32>
    %64 = arith.addf %57, %63 : vector<8x14x8xf32>
    %65 = vector.extract_strided_slice %35 {offsets = [0, 0, 4], sizes = [8, 14, 1], strides = [1, 1, 1]} : vector<8x14x8xf32> to vector<8x14x1xf32>
    %66 = vector.extract_strided_slice %37 {offsets = [4, 0], sizes = [1, 8], strides = [1, 1]} : vector<8x8xf32> to vector<1x8xf32>
    %67 = vector.shape_cast %66 : vector<1x8xf32> to vector<1x1x8xf32>
    %68 = vector.broadcast %65 : vector<8x14x1xf32> to vector<8x14x8xf32>
    %69 = vector.broadcast %67 : vector<1x1x8xf32> to vector<8x14x8xf32>
    %70 = arith.mulf %68, %69 : vector<8x14x8xf32>
    %71 = arith.addf %64, %70 : vector<8x14x8xf32>
    %72 = vector.extract_strided_slice %35 {offsets = [0, 0, 5], sizes = [8, 14, 1], strides = [1, 1, 1]} : vector<8x14x8xf32> to vector<8x14x1xf32>
    %73 = vector.extract_strided_slice %37 {offsets = [5, 0], sizes = [1, 8], strides = [1, 1]} : vector<8x8xf32> to vector<1x8xf32>
    %74 = vector.shape_cast %73 : vector<1x8xf32> to vector<1x1x8xf32>
    %75 = vector.broadcast %72 : vector<8x14x1xf32> to vector<8x14x8xf32>
    %76 = vector.broadcast %74 : vector<1x1x8xf32> to vector<8x14x8xf32>
    %77 = arith.mulf %75, %76 : vector<8x14x8xf32>
    %78 = arith.addf %71, %77 : vector<8x14x8xf32>
    %79 = vector.extract_strided_slice %35 {offsets = [0, 0, 6], sizes = [8, 14, 1], strides = [1, 1, 1]} : vector<8x14x8xf32> to vector<8x14x1xf32>
    %80 = vector.extract_strided_slice %37 {offsets = [6, 0], sizes = [1, 8], strides = [1, 1]} : vector<8x8xf32> to vector<1x8xf32>
    %81 = vector.shape_cast %80 : vector<1x8xf32> to vector<1x1x8xf32>
    %82 = vector.broadcast %79 : vector<8x14x1xf32> to vector<8x14x8xf32>
    %83 = vector.broadcast %81 : vector<1x1x8xf32> to vector<8x14x8xf32>
    %84 = arith.mulf %82, %83 : vector<8x14x8xf32>
    %85 = arith.addf %78, %84 : vector<8x14x8xf32>
    %86 = vector.extract_strided_slice %35 {offsets = [0, 0, 7], sizes = [8, 14, 1], strides = [1, 1, 1]} : vector<8x14x8xf32> to vector<8x14x1xf32>
    %87 = vector.extract_strided_slice %37 {offsets = [7, 0], sizes = [1, 8], strides = [1, 1]} : vector<8x8xf32> to vector<1x8xf32>
    %88 = vector.shape_cast %87 : vector<1x8xf32> to vector<1x1x8xf32>
    %89 = vector.broadcast %86 : vector<8x14x1xf32> to vector<8x14x8xf32>
    %90 = vector.broadcast %88 : vector<1x1x8xf32> to vector<8x14x8xf32>
    %91 = arith.mulf %89, %90 : vector<8x14x8xf32>
    %92 = arith.addf %85, %91 : vector<8x14x8xf32>
    %93 = arith.addf %5, %92 : vector<8x14x8xf32>
    %c0_11 = arith.constant 0 : index
    %c1 = arith.constant 1 : index
    %c0_12 = arith.constant 0 : index
    %94 = vector.load %arg1[%c0_11, %c1, %c0_12] : memref<8x16x4xf32, #tpu.memory_space<vmem>>, vector<8x14x4xf32>
    %95 = vector.extract_strided_slice %94 {offsets = [0, 0, 0], sizes = [8, 14, 1], strides = [1, 1, 1]} : vector<8x14x4xf32> to vector<8x14x1xf32>
    %96 = vector.extract_strided_slice %0 {offsets = [0, 0], sizes = [1, 8], strides = [1, 1]} : vector<4x8xf32> to vector<1x8xf32>
    %97 = vector.shape_cast %96 : vector<1x8xf32> to vector<1x1x8xf32>
    %98 = vector.broadcast %95 : vector<8x14x1xf32> to vector<8x14x8xf32>
    %99 = vector.broadcast %97 : vector<1x1x8xf32> to vector<8x14x8xf32>
    %100 = arith.mulf %98, %99 : vector<8x14x8xf32>
    %101 = vector.extract_strided_slice %94 {offsets = [0, 0, 1], sizes = [8, 14, 1], strides = [1, 1, 1]} : vector<8x14x4xf32> to vector<8x14x1xf32>
    %102 = vector.extract_strided_slice %0 {offsets = [1, 0], sizes = [1, 8], strides = [1, 1]} : vector<4x8xf32> to vector<1x8xf32>
    %103 = vector.shape_cast %102 : vector<1x8xf32> to vector<1x1x8xf32>
    %104 = vector.broadcast %101 : vector<8x14x1xf32> to vector<8x14x8xf32>
    %105 = vector.broadcast %103 : vector<1x1x8xf32> to vector<8x14x8xf32>
    %106 = arith.mulf %104, %105 : vector<8x14x8xf32>
    %107 = arith.addf %100, %106 : vector<8x14x8xf32>
    %108 = vector.extract_strided_slice %94 {offsets = [0, 0, 2], sizes = [8, 14, 1], strides = [1, 1, 1]} : vector<8x14x4xf32> to vector<8x14x1xf32>
    %109 = vector.extract_strided_slice %0 {offsets = [2, 0], sizes = [1, 8], strides = [1, 1]} : vector<4x8xf32> to vector<1x8xf32>
    %110 = vector.shape_cast %109 : vector<1x8xf32> to vector<1x1x8xf32>
    %111 = vector.broadcast %108 : vector<8x14x1xf32> to vector<8x14x8xf32>
    %112 = vector.broadcast %110 : vector<1x1x8xf32> to vector<8x14x8xf32>
    %113 = arith.mulf %111, %112 : vector<8x14x8xf32>
    %114 = arith.addf %107, %113 : vector<8x14x8xf32>
    %115 = vector.extract_strided_slice %94 {offsets = [0, 0, 3], sizes = [8, 14, 1], strides = [1, 1, 1]} : vector<8x14x4xf32> to vector<8x14x1xf32>
    %116 = vector.extract_strided_slice %0 {offsets = [3, 0], sizes = [1, 8], strides = [1, 1]} : vector<4x8xf32> to vector<1x8xf32>
    %117 = vector.shape_cast %116 : vector<1x8xf32> to vector<1x1x8xf32>
    %118 = vector.broadcast %115 : vector<8x14x1xf32> to vector<8x14x8xf32>
    %119 = vector.broadcast %117 : vector<1x1x8xf32> to vector<8x14x8xf32>
    %120 = arith.mulf %118, %119 : vector<8x14x8xf32>
    %121 = arith.addf %114, %120 : vector<8x14x8xf32>
    %122 = vector.broadcast %2 : vector<1x1x8xf32> to vector<8x14x8xf32>
    %123 = arith.addf %121, %122 : vector<8x14x8xf32>
    %c1_13 = arith.constant 1 : index
    %c0_14 = arith.constant 0 : index
    %c0_15 = arith.constant 0 : index
    %124 = vector.load %arg4[%c1_13, %c0_14, %c0_15] : memref<3x8x8xf32, #tpu.memory_space<vmem>>, vector<1x8x8xf32>
    %125 = vector.shape_cast %124 : vector<1x8x8xf32> to vector<8x8xf32>
    %126 = vector.extract_strided_slice %123 {offsets = [0, 0, 0], sizes = [8, 14, 1], strides = [1, 1, 1]} : vector<8x14x8xf32> to vector<8x14x1xf32>
    %127 = vector.extract_strided_slice %125 {offsets = [0, 0], sizes = [1, 8], strides = [1, 1]} : vector<8x8xf32> to vector<1x8xf32>
    %128 = vector.shape_cast %127 : vector<1x8xf32> to vector<1x1x8xf32>
    %129 = vector.broadcast %126 : vector<8x14x1xf32> to vector<8x14x8xf32>
    %130 = vector.broadcast %128 : vector<1x1x8xf32> to vector<8x14x8xf32>
    %131 = arith.mulf %129, %130 : vector<8x14x8xf32>
    %132 = vector.extract_strided_slice %123 {offsets = [0, 0, 1], sizes = [8, 14, 1], strides = [1, 1, 1]} : vector<8x14x8xf32> to vector<8x14x1xf32>
    %133 = vector.extract_strided_slice %125 {offsets = [1, 0], sizes = [1, 8], strides = [1, 1]} : vector<8x8xf32> to vector<1x8xf32>
    %134 = vector.shape_cast %133 : vector<1x8xf32> to vector<1x1x8xf32>
    %135 = vector.broadcast %132 : vector<8x14x1xf32> to vector<8x14x8xf32>
    %136 = vector.broadcast %134 : vector<1x1x8xf32> to vector<8x14x8xf32>
    %137 = arith.mulf %135, %136 : vector<8x14x8xf32>
    %138 = arith.addf %131, %137 : vector<8x14x8xf32>
    %139 = vector.extract_strided_slice %123 {offsets = [0, 0, 2], sizes = [8, 14, 1], strides = [1, 1, 1]} : vector<8x14x8xf32> to vector<8x14x1xf32>
    %140 = vector.extract_strided_slice %125 {offsets = [2, 0], sizes = [1, 8], strides = [1, 1]} : vector<8x8xf32> to vector<1x8xf32>
    %141 = vector.shape_cast %140 : vector<1x8xf32> to vector<1x1x8xf32>
    %142 = vector.broadcast %139 : vector<8x14x1xf32> to vector<8x14x8xf32>
    %143 = vector.broadcast %141 : vector<1x1x8xf32> to vector<8x14x8xf32>
    %144 = arith.mulf %142, %143 : vector<8x14x8xf32>
    %145 = arith.addf %138, %144 : vector<8x14x8xf32>
    %146 = vector.extract_strided_slice %123 {offsets = [0, 0, 3], sizes = [8, 14, 1], strides = [1, 1, 1]} : vector<8x14x8xf32> to vector<8x14x1xf32>
    %147 = vector.extract_strided_slice %125 {offsets = [3, 0], sizes = [1, 8], strides = [1, 1]} : vector<8x8xf32> to vector<1x8xf32>
    %148 = vector.shape_cast %147 : vector<1x8xf32> to vector<1x1x8xf32>
    %149 = vector.broadcast %146 : vector<8x14x1xf32> to vector<8x14x8xf32>
    %150 = vector.broadcast %148 : vector<1x1x8xf32> to vector<8x14x8xf32>
    %151 = arith.mulf %149, %150 : vector<8x14x8xf32>
    %152 = arith.addf %145, %151 : vector<8x14x8xf32>
    %153 = vector.extract_strided_slice %123 {offsets = [0, 0, 4], sizes = [8, 14, 1], strides = [1, 1, 1]} : vector<8x14x8xf32> to vector<8x14x1xf32>
    %154 = vector.extract_strided_slice %125 {offsets = [4, 0], sizes = [1, 8], strides = [1, 1]} : vector<8x8xf32> to vector<1x8xf32>
    %155 = vector.shape_cast %154 : vector<1x8xf32> to vector<1x1x8xf32>
    %156 = vector.broadcast %153 : vector<8x14x1xf32> to vector<8x14x8xf32>
    %157 = vector.broadcast %155 : vector<1x1x8xf32> to vector<8x14x8xf32>
    %158 = arith.mulf %156, %157 : vector<8x14x8xf32>
    %159 = arith.addf %152, %158 : vector<8x14x8xf32>
    %160 = vector.extract_strided_slice %123 {offsets = [0, 0, 5], sizes = [8, 14, 1], strides = [1, 1, 1]} : vector<8x14x8xf32> to vector<8x14x1xf32>
    %161 = vector.extract_strided_slice %125 {offsets = [5, 0], sizes = [1, 8], strides = [1, 1]} : vector<8x8xf32> to vector<1x8xf32>
    %162 = vector.shape_cast %161 : vector<1x8xf32> to vector<1x1x8xf32>
    %163 = vector.broadcast %160 : vector<8x14x1xf32> to vector<8x14x8xf32>
    %164 = vector.broadcast %162 : vector<1x1x8xf32> to vector<8x14x8xf32>
    %165 = arith.mulf %163, %164 : vector<8x14x8xf32>
    %166 = arith.addf %159, %165 : vector<8x14x8xf32>
    %167 = vector.extract_strided_slice %123 {offsets = [0, 0, 6], sizes = [8, 14, 1], strides = [1, 1, 1]} : vector<8x14x8xf32> to vector<8x14x1xf32>
    %168 = vector.extract_strided_slice %125 {offsets = [6, 0], sizes = [1, 8], strides = [1, 1]} : vector<8x8xf32> to vector<1x8xf32>
    %169 = vector.shape_cast %168 : vector<1x8xf32> to vector<1x1x8xf32>
    %170 = vector.broadcast %167 : vector<8x14x1xf32> to vector<8x14x8xf32>
    %171 = vector.broadcast %169 : vector<1x1x8xf32> to vector<8x14x8xf32>
    %172 = arith.mulf %170, %171 : vector<8x14x8xf32>
    %173 = arith.addf %166, %172 : vector<8x14x8xf32>
    %174 = vector.extract_strided_slice %123 {offsets = [0, 0, 7], sizes = [8, 14, 1], strides = [1, 1, 1]} : vector<8x14x8xf32> to vector<8x14x1xf32>
    %175 = vector.extract_strided_slice %125 {offsets = [7, 0], sizes = [1, 8], strides = [1, 1]} : vector<8x8xf32> to vector<1x8xf32>
    %176 = vector.shape_cast %175 : vector<1x8xf32> to vector<1x1x8xf32>
    %177 = vector.broadcast %174 : vector<8x14x1xf32> to vector<8x14x8xf32>
    %178 = vector.broadcast %176 : vector<1x1x8xf32> to vector<8x14x8xf32>
    %179 = arith.mulf %177, %178 : vector<8x14x8xf32>
    %180 = arith.addf %173, %179 : vector<8x14x8xf32>
    %181 = arith.addf %93, %180 : vector<8x14x8xf32>
    %c0_16 = arith.constant 0 : index
    %c2 = arith.constant 2 : index
    %c0_17 = arith.constant 0 : index
    %182 = vector.load %arg1[%c0_16, %c2, %c0_17] : memref<8x16x4xf32, #tpu.memory_space<vmem>>, vector<8x14x4xf32>
    %183 = vector.extract_strided_slice %182 {offsets = [0, 0, 0], sizes = [8, 14, 1], strides = [1, 1, 1]} : vector<8x14x4xf32> to vector<8x14x1xf32>
    %184 = vector.extract_strided_slice %0 {offsets = [0, 0], sizes = [1, 8], strides = [1, 1]} : vector<4x8xf32> to vector<1x8xf32>
    %185 = vector.shape_cast %184 : vector<1x8xf32> to vector<1x1x8xf32>
    %186 = vector.broadcast %183 : vector<8x14x1xf32> to vector<8x14x8xf32>
    %187 = vector.broadcast %185 : vector<1x1x8xf32> to vector<8x14x8xf32>
    %188 = arith.mulf %186, %187 : vector<8x14x8xf32>
    %189 = vector.extract_strided_slice %182 {offsets = [0, 0, 1], sizes = [8, 14, 1], strides = [1, 1, 1]} : vector<8x14x4xf32> to vector<8x14x1xf32>
    %190 = vector.extract_strided_slice %0 {offsets = [1, 0], sizes = [1, 8], strides = [1, 1]} : vector<4x8xf32> to vector<1x8xf32>
    %191 = vector.shape_cast %190 : vector<1x8xf32> to vector<1x1x8xf32>
    %192 = vector.broadcast %189 : vector<8x14x1xf32> to vector<8x14x8xf32>
    %193 = vector.broadcast %191 : vector<1x1x8xf32> to vector<8x14x8xf32>
    %194 = arith.mulf %192, %193 : vector<8x14x8xf32>
    %195 = arith.addf %188, %194 : vector<8x14x8xf32>
    %196 = vector.extract_strided_slice %182 {offsets = [0, 0, 2], sizes = [8, 14, 1], strides = [1, 1, 1]} : vector<8x14x4xf32> to vector<8x14x1xf32>
    %197 = vector.extract_strided_slice %0 {offsets = [2, 0], sizes = [1, 8], strides = [1, 1]} : vector<4x8xf32> to vector<1x8xf32>
    %198 = vector.shape_cast %197 : vector<1x8xf32> to vector<1x1x8xf32>
    %199 = vector.broadcast %196 : vector<8x14x1xf32> to vector<8x14x8xf32>
    %200 = vector.broadcast %198 : vector<1x1x8xf32> to vector<8x14x8xf32>
    %201 = arith.mulf %199, %200 : vector<8x14x8xf32>
    %202 = arith.addf %195, %201 : vector<8x14x8xf32>
    %203 = vector.extract_strided_slice %182 {offsets = [0, 0, 3], sizes = [8, 14, 1], strides = [1, 1, 1]} : vector<8x14x4xf32> to vector<8x14x1xf32>
    %204 = vector.extract_strided_slice %0 {offsets = [3, 0], sizes = [1, 8], strides = [1, 1]} : vector<4x8xf32> to vector<1x8xf32>
    %205 = vector.shape_cast %204 : vector<1x8xf32> to vector<1x1x8xf32>
    %206 = vector.broadcast %203 : vector<8x14x1xf32> to vector<8x14x8xf32>
    %207 = vector.broadcast %205 : vector<1x1x8xf32> to vector<8x14x8xf32>
    %208 = arith.mulf %206, %207 : vector<8x14x8xf32>
    %209 = arith.addf %202, %208 : vector<8x14x8xf32>
    %210 = vector.broadcast %2 : vector<1x1x8xf32> to vector<8x14x8xf32>
    %211 = arith.addf %209, %210 : vector<8x14x8xf32>
    %c2_18 = arith.constant 2 : index
    %c0_19 = arith.constant 0 : index
    %c0_20 = arith.constant 0 : index
    %212 = vector.load %arg4[%c2_18, %c0_19, %c0_20] : memref<3x8x8xf32, #tpu.memory_space<vmem>>, vector<1x8x8xf32>
    %213 = vector.shape_cast %212 : vector<1x8x8xf32> to vector<8x8xf32>
    %214 = vector.extract_strided_slice %211 {offsets = [0, 0, 0], sizes = [8, 14, 1], strides = [1, 1, 1]} : vector<8x14x8xf32> to vector<8x14x1xf32>
    %215 = vector.extract_strided_slice %213 {offsets = [0, 0], sizes = [1, 8], strides = [1, 1]} : vector<8x8xf32> to vector<1x8xf32>
    %216 = vector.shape_cast %215 : vector<1x8xf32> to vector<1x1x8xf32>
    %217 = vector.broadcast %214 : vector<8x14x1xf32> to vector<8x14x8xf32>
    %218 = vector.broadcast %216 : vector<1x1x8xf32> to vector<8x14x8xf32>
    %219 = arith.mulf %217, %218 : vector<8x14x8xf32>
    %220 = vector.extract_strided_slice %211 {offsets = [0, 0, 1], sizes = [8, 14, 1], strides = [1, 1, 1]} : vector<8x14x8xf32> to vector<8x14x1xf32>
    %221 = vector.extract_strided_slice %213 {offsets = [1, 0], sizes = [1, 8], strides = [1, 1]} : vector<8x8xf32> to vector<1x8xf32>
    %222 = vector.shape_cast %221 : vector<1x8xf32> to vector<1x1x8xf32>
    %223 = vector.broadcast %220 : vector<8x14x1xf32> to vector<8x14x8xf32>
    %224 = vector.broadcast %222 : vector<1x1x8xf32> to vector<8x14x8xf32>
    %225 = arith.mulf %223, %224 : vector<8x14x8xf32>
    %226 = arith.addf %219, %225 : vector<8x14x8xf32>
    %227 = vector.extract_strided_slice %211 {offsets = [0, 0, 2], sizes = [8, 14, 1], strides = [1, 1, 1]} : vector<8x14x8xf32> to vector<8x14x1xf32>
    %228 = vector.extract_strided_slice %213 {offsets = [2, 0], sizes = [1, 8], strides = [1, 1]} : vector<8x8xf32> to vector<1x8xf32>
    %229 = vector.shape_cast %228 : vector<1x8xf32> to vector<1x1x8xf32>
    %230 = vector.broadcast %227 : vector<8x14x1xf32> to vector<8x14x8xf32>
    %231 = vector.broadcast %229 : vector<1x1x8xf32> to vector<8x14x8xf32>
    %232 = arith.mulf %230, %231 : vector<8x14x8xf32>
    %233 = arith.addf %226, %232 : vector<8x14x8xf32>
    %234 = vector.extract_strided_slice %211 {offsets = [0, 0, 3], sizes = [8, 14, 1], strides = [1, 1, 1]} : vector<8x14x8xf32> to vector<8x14x1xf32>
    %235 = vector.extract_strided_slice %213 {offsets = [3, 0], sizes = [1, 8], strides = [1, 1]} : vector<8x8xf32> to vector<1x8xf32>
    %236 = vector.shape_cast %235 : vector<1x8xf32> to vector<1x1x8xf32>
    %237 = vector.broadcast %234 : vector<8x14x1xf32> to vector<8x14x8xf32>
    %238 = vector.broadcast %236 : vector<1x1x8xf32> to vector<8x14x8xf32>
    %239 = arith.mulf %237, %238 : vector<8x14x8xf32>
    %240 = arith.addf %233, %239 : vector<8x14x8xf32>
    %241 = vector.extract_strided_slice %211 {offsets = [0, 0, 4], sizes = [8, 14, 1], strides = [1, 1, 1]} : vector<8x14x8xf32> to vector<8x14x1xf32>
    %242 = vector.extract_strided_slice %213 {offsets = [4, 0], sizes = [1, 8], strides = [1, 1]} : vector<8x8xf32> to vector<1x8xf32>
    %243 = vector.shape_cast %242 : vector<1x8xf32> to vector<1x1x8xf32>
    %244 = vector.broadcast %241 : vector<8x14x1xf32> to vector<8x14x8xf32>
    %245 = vector.broadcast %243 : vector<1x1x8xf32> to vector<8x14x8xf32>
    %246 = arith.mulf %244, %245 : vector<8x14x8xf32>
    %247 = arith.addf %240, %246 : vector<8x14x8xf32>
    %248 = vector.extract_strided_slice %211 {offsets = [0, 0, 5], sizes = [8, 14, 1], strides = [1, 1, 1]} : vector<8x14x8xf32> to vector<8x14x1xf32>
    %249 = vector.extract_strided_slice %213 {offsets = [5, 0], sizes = [1, 8], strides = [1, 1]} : vector<8x8xf32> to vector<1x8xf32>
    %250 = vector.shape_cast %249 : vector<1x8xf32> to vector<1x1x8xf32>
    %251 = vector.broadcast %248 : vector<8x14x1xf32> to vector<8x14x8xf32>
    %252 = vector.broadcast %250 : vector<1x1x8xf32> to vector<8x14x8xf32>
    %253 = arith.mulf %251, %252 : vector<8x14x8xf32>
    %254 = arith.addf %247, %253 : vector<8x14x8xf32>
    %255 = vector.extract_strided_slice %211 {offsets = [0, 0, 6], sizes = [8, 14, 1], strides = [1, 1, 1]} : vector<8x14x8xf32> to vector<8x14x1xf32>
    %256 = vector.extract_strided_slice %213 {offsets = [6, 0], sizes = [1, 8], strides = [1, 1]} : vector<8x8xf32> to vector<1x8xf32>
    %257 = vector.shape_cast %256 : vector<1x8xf32> to vector<1x1x8xf32>
    %258 = vector.broadcast %255 : vector<8x14x1xf32> to vector<8x14x8xf32>
    %259 = vector.broadcast %257 : vector<1x1x8xf32> to vector<8x14x8xf32>
    %260 = arith.mulf %258, %259 : vector<8x14x8xf32>
    %261 = arith.addf %254, %260 : vector<8x14x8xf32>
    %262 = vector.extract_strided_slice %211 {offsets = [0, 0, 7], sizes = [8, 14, 1], strides = [1, 1, 1]} : vector<8x14x8xf32> to vector<8x14x1xf32>
    %263 = vector.extract_strided_slice %213 {offsets = [7, 0], sizes = [1, 8], strides = [1, 1]} : vector<8x8xf32> to vector<1x8xf32>
    %264 = vector.shape_cast %263 : vector<1x8xf32> to vector<1x1x8xf32>
    %265 = vector.broadcast %262 : vector<8x14x1xf32> to vector<8x14x8xf32>
    %266 = vector.broadcast %264 : vector<1x1x8xf32> to vector<8x14x8xf32>
    %267 = arith.mulf %265, %266 : vector<8x14x8xf32>
    %268 = arith.addf %261, %267 : vector<8x14x8xf32>
    %269 = arith.addf %181, %268 : vector<8x14x8xf32>
    %270 = vector.broadcast %4 : vector<1x1x8xf32> to vector<8x14x8xf32>
    %271 = arith.addf %269, %270 : vector<8x14x8xf32>
    %c0_21 = arith.constant 0 : index
    %c0_22 = arith.constant 0 : index
    %c0_23 = arith.constant 0 : index
    %272 = vector.load %arg10[%c0_21, %c0_22, %c0_23] : memref<8x14x8xf32, #tpu.memory_space<vmem>>, vector<8x14x8xf32>
    tpu.vector_store %arg10[%c0_21, %c0_22, %c0_23], %271 {strides = array<i32>} : memref<8x14x8xf32, #tpu.memory_space<vmem>>, vector<8x14x8xf32>,
    %c0_24 = arith.constant 0 : index
    %c0_25 = arith.constant 0 : index
    %273 = vector.load %arg6[%c0_24, %c0_25] : memref<8x8xf32, #tpu.memory_space<vmem>>, vector<8x8xf32>
    %c0_26 = arith.constant 0 : index
    %c0_27 = arith.constant 0 : index
    %274 = vector.load %arg7[%c0_26, %c0_27] : memref<1x8xf32, #tpu.memory_space<vmem>>, vector<1x8xf32>
    %275 = vector.shape_cast %274 : vector<1x8xf32> to vector<1x1x8xf32>
    %c0_28 = arith.constant 0 : index
    %c0_29 = arith.constant 0 : index
    %276 = vector.load %arg9[%c0_28, %c0_29] : memref<1x8xf32, #tpu.memory_space<vmem>>, vector<1x8xf32>
    %277 = vector.shape_cast %276 : vector<1x8xf32> to vector<1x1x8xf32>
    %cst_30 = arith.constant 0.000000e+00 : f32
    %278 = vector.broadcast %cst_30 : f32 to vector<8x5x8xf32>
    %c0_31 = arith.constant 0 : index
    %c0_32 = arith.constant 0 : index
    %c0_33 = arith.constant 0 : index
    %279 = tpu.strided_load %arg10[%c0_31, %c0_32, %c0_33] {strides = array<i32: 1, 2, 1>} : memref<8x14x8xf32, #tpu.memory_space<vmem>>, vector<8x5x8xf32>
    %c0_34 = arith.constant 0 : index
    %c0_35 = arith.constant 0 : index
    %c0_36 = arith.constant 0 : index
    %280 = vector.load %arg8[%c0_34, %c0_35, %c0_36] : memref<3x8x8xf32, #tpu.memory_space<vmem>>, vector<1x8x8xf32>
    %281 = vector.shape_cast %280 : vector<1x8x8xf32> to vector<8x8xf32>
    %282 = vector.extract_strided_slice %279 {offsets = [0, 0, 0], sizes = [8, 5, 1], strides = [1, 1, 1]} : vector<8x5x8xf32> to vector<8x5x1xf32>
    %283 = vector.extract_strided_slice %281 {offsets = [0, 0], sizes = [1, 8], strides = [1, 1]} : vector<8x8xf32> to vector<1x8xf32>
    %284 = vector.shape_cast %283 : vector<1x8xf32> to vector<1x1x8xf32>
    %285 = vector.broadcast %282 : vector<8x5x1xf32> to vector<8x5x8xf32>
    %286 = vector.broadcast %284 : vector<1x1x8xf32> to vector<8x5x8xf32>
    %287 = arith.mulf %285, %286 : vector<8x5x8xf32>
    %288 = vector.extract_strided_slice %279 {offsets = [0, 0, 1], sizes = [8, 5, 1], strides = [1, 1, 1]} : vector<8x5x8xf32> to vector<8x5x1xf32>
    %289 = vector.extract_strided_slice %281 {offsets = [1, 0], sizes = [1, 8], strides = [1, 1]} : vector<8x8xf32> to vector<1x8xf32>
    %290 = vector.shape_cast %289 : vector<1x8xf32> to vector<1x1x8xf32>
    %291 = vector.broadcast %288 : vector<8x5x1xf32> to vector<8x5x8xf32>
    %292 = vector.broadcast %290 : vector<1x1x8xf32> to vector<8x5x8xf32>
    %293 = arith.mulf %291, %292 : vector<8x5x8xf32>
    %294 = arith.addf %287, %293 : vector<8x5x8xf32>
    %295 = vector.extract_strided_slice %279 {offsets = [0, 0, 2], sizes = [8, 5, 1], strides = [1, 1, 1]} : vector<8x5x8xf32> to vector<8x5x1xf32>
    %296 = vector.extract_strided_slice %281 {offsets = [2, 0], sizes = [1, 8], strides = [1, 1]} : vector<8x8xf32> to vector<1x8xf32>
    %297 = vector.shape_cast %296 : vector<1x8xf32> to vector<1x1x8xf32>
    %298 = vector.broadcast %295 : vector<8x5x1xf32> to vector<8x5x8xf32>
    %299 = vector.broadcast %297 : vector<1x1x8xf32> to vector<8x5x8xf32>
    %300 = arith.mulf %298, %299 : vector<8x5x8xf32>
    %301 = arith.addf %294, %300 : vector<8x5x8xf32>
    %302 = vector.extract_strided_slice %279 {offsets = [0, 0, 3], sizes = [8, 5, 1], strides = [1, 1, 1]} : vector<8x5x8xf32> to vector<8x5x1xf32>
    %303 = vector.extract_strided_slice %281 {offsets = [3, 0], sizes = [1, 8], strides = [1, 1]} : vector<8x8xf32> to vector<1x8xf32>
    %304 = vector.shape_cast %303 : vector<1x8xf32> to vector<1x1x8xf32>
    %305 = vector.broadcast %302 : vector<8x5x1xf32> to vector<8x5x8xf32>
    %306 = vector.broadcast %304 : vector<1x1x8xf32> to vector<8x5x8xf32>
    %307 = arith.mulf %305, %306 : vector<8x5x8xf32>
    %308 = arith.addf %301, %307 : vector<8x5x8xf32>
    %309 = vector.extract_strided_slice %279 {offsets = [0, 0, 4], sizes = [8, 5, 1], strides = [1, 1, 1]} : vector<8x5x8xf32> to vector<8x5x1xf32>
    %310 = vector.extract_strided_slice %281 {offsets = [4, 0], sizes = [1, 8], strides = [1, 1]} : vector<8x8xf32> to vector<1x8xf32>
    %311 = vector.shape_cast %310 : vector<1x8xf32> to vector<1x1x8xf32>
    %312 = vector.broadcast %309 : vector<8x5x1xf32> to vector<8x5x8xf32>
    %313 = vector.broadcast %311 : vector<1x1x8xf32> to vector<8x5x8xf32>
    %314 = arith.mulf %312, %313 : vector<8x5x8xf32>
    %315 = arith.addf %308, %314 : vector<8x5x8xf32>
    %316 = vector.extract_strided_slice %279 {offsets = [0, 0, 5], sizes = [8, 5, 1], strides = [1, 1, 1]} : vector<8x5x8xf32> to vector<8x5x1xf32>
    %317 = vector.extract_strided_slice %281 {offsets = [5, 0], sizes = [1, 8], strides = [1, 1]} : vector<8x8xf32> to vector<1x8xf32>
    %318 = vector.shape_cast %317 : vector<1x8xf32> to vector<1x1x8xf32>
    %319 = vector.broadcast %316 : vector<8x5x1xf32> to vector<8x5x8xf32>
    %320 = vector.broadcast %318 : vector<1x1x8xf32> to vector<8x5x8xf32>
    %321 = arith.mulf %319, %320 : vector<8x5x8xf32>
    %322 = arith.addf %315, %321 : vector<8x5x8xf32>
    %323 = vector.extract_strided_slice %279 {offsets = [0, 0, 6], sizes = [8, 5, 1], strides = [1, 1, 1]} : vector<8x5x8xf32> to vector<8x5x1xf32>
    %324 = vector.extract_strided_slice %281 {offsets = [6, 0], sizes = [1, 8], strides = [1, 1]} : vector<8x8xf32> to vector<1x8xf32>
    %325 = vector.shape_cast %324 : vector<1x8xf32> to vector<1x1x8xf32>
    %326 = vector.broadcast %323 : vector<8x5x1xf32> to vector<8x5x8xf32>
    %327 = vector.broadcast %325 : vector<1x1x8xf32> to vector<8x5x8xf32>
    %328 = arith.mulf %326, %327 : vector<8x5x8xf32>
    %329 = arith.addf %322, %328 : vector<8x5x8xf32>
    %330 = vector.extract_strided_slice %279 {offsets = [0, 0, 7], sizes = [8, 5, 1], strides = [1, 1, 1]} : vector<8x5x8xf32> to vector<8x5x1xf32>
    %331 = vector.extract_strided_slice %281 {offsets = [7, 0], sizes = [1, 8], strides = [1, 1]} : vector<8x8xf32> to vector<1x8xf32>
    %332 = vector.shape_cast %331 : vector<1x8xf32> to vector<1x1x8xf32>
    %333 = vector.broadcast %330 : vector<8x5x1xf32> to vector<8x5x8xf32>
    %334 = vector.broadcast %332 : vector<1x1x8xf32> to vector<8x5x8xf32>
    %335 = arith.mulf %333, %334 : vector<8x5x8xf32>
    %336 = arith.addf %329, %335 : vector<8x5x8xf32>
    %337 = arith.addf %278, %336 : vector<8x5x8xf32>
    %c0_37 = arith.constant 0 : index
    %c1_38 = arith.constant 1 : index
    %c0_39 = arith.constant 0 : index
    %338 = tpu.strided_load %arg10[%c0_37, %c1_38, %c0_39] {strides = array<i32: 1, 2, 1>} : memref<8x14x8xf32, #tpu.memory_space<vmem>>, vector<8x5x8xf32>
    %c1_40 = arith.constant 1 : index
    %c0_41 = arith.constant 0 : index
    %c0_42 = arith.constant 0 : index
    %339 = vector.load %arg8[%c1_40, %c0_41, %c0_42] : memref<3x8x8xf32, #tpu.memory_space<vmem>>, vector<1x8x8xf32>
    %340 = vector.shape_cast %339 : vector<1x8x8xf32> to vector<8x8xf32>
    %341 = vector.extract_strided_slice %338 {offsets = [0, 0, 0], sizes = [8, 5, 1], strides = [1, 1, 1]} : vector<8x5x8xf32> to vector<8x5x1xf32>
    %342 = vector.extract_strided_slice %340 {offsets = [0, 0], sizes = [1, 8], strides = [1, 1]} : vector<8x8xf32> to vector<1x8xf32>
    %343 = vector.shape_cast %342 : vector<1x8xf32> to vector<1x1x8xf32>
    %344 = vector.broadcast %341 : vector<8x5x1xf32> to vector<8x5x8xf32>
    %345 = vector.broadcast %343 : vector<1x1x8xf32> to vector<8x5x8xf32>
    %346 = arith.mulf %344, %345 : vector<8x5x8xf32>
    %347 = vector.extract_strided_slice %338 {offsets = [0, 0, 1], sizes = [8, 5, 1], strides = [1, 1, 1]} : vector<8x5x8xf32> to vector<8x5x1xf32>
    %348 = vector.extract_strided_slice %340 {offsets = [1, 0], sizes = [1, 8], strides = [1, 1]} : vector<8x8xf32> to vector<1x8xf32>
    %349 = vector.shape_cast %348 : vector<1x8xf32> to vector<1x1x8xf32>
    %350 = vector.broadcast %347 : vector<8x5x1xf32> to vector<8x5x8xf32>
    %351 = vector.broadcast %349 : vector<1x1x8xf32> to vector<8x5x8xf32>
    %352 = arith.mulf %350, %351 : vector<8x5x8xf32>
    %353 = arith.addf %346, %352 : vector<8x5x8xf32>
    %354 = vector.extract_strided_slice %338 {offsets = [0, 0, 2], sizes = [8, 5, 1], strides = [1, 1, 1]} : vector<8x5x8xf32> to vector<8x5x1xf32>
    %355 = vector.extract_strided_slice %340 {offsets = [2, 0], sizes = [1, 8], strides = [1, 1]} : vector<8x8xf32> to vector<1x8xf32>
    %356 = vector.shape_cast %355 : vector<1x8xf32> to vector<1x1x8xf32>
    %357 = vector.broadcast %354 : vector<8x5x1xf32> to vector<8x5x8xf32>
    %358 = vector.broadcast %356 : vector<1x1x8xf32> to vector<8x5x8xf32>
    %359 = arith.mulf %357, %358 : vector<8x5x8xf32>
    %360 = arith.addf %353, %359 : vector<8x5x8xf32>
    %361 = vector.extract_strided_slice %338 {offsets = [0, 0, 3], sizes = [8, 5, 1], strides = [1, 1, 1]} : vector<8x5x8xf32> to vector<8x5x1xf32>
    %362 = vector.extract_strided_slice %340 {offsets = [3, 0], sizes = [1, 8], strides = [1, 1]} : vector<8x8xf32> to vector<1x8xf32>
    %363 = vector.shape_cast %362 : vector<1x8xf32> to vector<1x1x8xf32>
    %364 = vector.broadcast %361 : vector<8x5x1xf32> to vector<8x5x8xf32>
    %365 = vector.broadcast %363 : vector<1x1x8xf32> to vector<8x5x8xf32>
    %366 = arith.mulf %364, %365 : vector<8x5x8xf32>
    %367 = arith.addf %360, %366 : vector<8x5x8xf32>
    %368 = vector.extract_strided_slice %338 {offsets = [0, 0, 4], sizes = [8, 5, 1], strides = [1, 1, 1]} : vector<8x5x8xf32> to vector<8x5x1xf32>
    %369 = vector.extract_strided_slice %340 {offsets = [4, 0], sizes = [1, 8], strides = [1, 1]} : vector<8x8xf32> to vector<1x8xf32>
    %370 = vector.shape_cast %369 : vector<1x8xf32> to vector<1x1x8xf32>
    %371 = vector.broadcast %368 : vector<8x5x1xf32> to vector<8x5x8xf32>
    %372 = vector.broadcast %370 : vector<1x1x8xf32> to vector<8x5x8xf32>
    %373 = arith.mulf %371, %372 : vector<8x5x8xf32>
    %374 = arith.addf %367, %373 : vector<8x5x8xf32>
    %375 = vector.extract_strided_slice %338 {offsets = [0, 0, 5], sizes = [8, 5, 1], strides = [1, 1, 1]} : vector<8x5x8xf32> to vector<8x5x1xf32>
    %376 = vector.extract_strided_slice %340 {offsets = [5, 0], sizes = [1, 8], strides = [1, 1]} : vector<8x8xf32> to vector<1x8xf32>
    %377 = vector.shape_cast %376 : vector<1x8xf32> to vector<1x1x8xf32>
    %378 = vector.broadcast %375 : vector<8x5x1xf32> to vector<8x5x8xf32>
    %379 = vector.broadcast %377 : vector<1x1x8xf32> to vector<8x5x8xf32>
    %380 = arith.mulf %378, %379 : vector<8x5x8xf32>
    %381 = arith.addf %374, %380 : vector<8x5x8xf32>
    %382 = vector.extract_strided_slice %338 {offsets = [0, 0, 6], sizes = [8, 5, 1], strides = [1, 1, 1]} : vector<8x5x8xf32> to vector<8x5x1xf32>
    %383 = vector.extract_strided_slice %340 {offsets = [6, 0], sizes = [1, 8], strides = [1, 1]} : vector<8x8xf32> to vector<1x8xf32>
    %384 = vector.shape_cast %383 : vector<1x8xf32> to vector<1x1x8xf32>
    %385 = vector.broadcast %382 : vector<8x5x1xf32> to vector<8x5x8xf32>
    %386 = vector.broadcast %384 : vector<1x1x8xf32> to vector<8x5x8xf32>
    %387 = arith.mulf %385, %386 : vector<8x5x8xf32>
    %388 = arith.addf %381, %387 : vector<8x5x8xf32>
    %389 = vector.extract_strided_slice %338 {offsets = [0, 0, 7], sizes = [8, 5, 1], strides = [1, 1, 1]} : vector<8x5x8xf32> to vector<8x5x1xf32>
    %390 = vector.extract_strided_slice %340 {offsets = [7, 0], sizes = [1, 8], strides = [1, 1]} : vector<8x8xf32> to vector<1x8xf32>
    %391 = vector.shape_cast %390 : vector<1x8xf32> to vector<1x1x8xf32>
    %392 = vector.broadcast %389 : vector<8x5x1xf32> to vector<8x5x8xf32>
    %393 = vector.broadcast %391 : vector<1x1x8xf32> to vector<8x5x8xf32>
    %394 = arith.mulf %392, %393 : vector<8x5x8xf32>
    %395 = arith.addf %388, %394 : vector<8x5x8xf32>
    %396 = arith.addf %337, %395 : vector<8x5x8xf32>
    %c0_43 = arith.constant 0 : index
    %c2_44 = arith.constant 2 : index
    %c0_45 = arith.constant 0 : index
    %397 = tpu.strided_load %arg10[%c0_43, %c2_44, %c0_45] {strides = array<i32: 1, 2, 1>} : memref<8x14x8xf32, #tpu.memory_space<vmem>>, vector<8x5x8xf32>
    %c2_46 = arith.constant 2 : index
    %c0_47 = arith.constant 0 : index
    %c0_48 = arith.constant 0 : index
    %398 = vector.load %arg8[%c2_46, %c0_47, %c0_48] : memref<3x8x8xf32, #tpu.memory_space<vmem>>, vector<1x8x8xf32>
    %399 = vector.shape_cast %398 : vector<1x8x8xf32> to vector<8x8xf32>
    %400 = vector.extract_strided_slice %397 {offsets = [0, 0, 0], sizes = [8, 5, 1], strides = [1, 1, 1]} : vector<8x5x8xf32> to vector<8x5x1xf32>
    %401 = vector.extract_strided_slice %399 {offsets = [0, 0], sizes = [1, 8], strides = [1, 1]} : vector<8x8xf32> to vector<1x8xf32>
    %402 = vector.shape_cast %401 : vector<1x8xf32> to vector<1x1x8xf32>
    %403 = vector.broadcast %400 : vector<8x5x1xf32> to vector<8x5x8xf32>
    %404 = vector.broadcast %402 : vector<1x1x8xf32> to vector<8x5x8xf32>
    %405 = arith.mulf %403, %404 : vector<8x5x8xf32>
    %406 = vector.extract_strided_slice %397 {offsets = [0, 0, 1], sizes = [8, 5, 1], strides = [1, 1, 1]} : vector<8x5x8xf32> to vector<8x5x1xf32>
    %407 = vector.extract_strided_slice %399 {offsets = [1, 0], sizes = [1, 8], strides = [1, 1]} : vector<8x8xf32> to vector<1x8xf32>
    %408 = vector.shape_cast %407 : vector<1x8xf32> to vector<1x1x8xf32>
    %409 = vector.broadcast %406 : vector<8x5x1xf32> to vector<8x5x8xf32>
    %410 = vector.broadcast %408 : vector<1x1x8xf32> to vector<8x5x8xf32>
    %411 = arith.mulf %409, %410 : vector<8x5x8xf32>
    %412 = arith.addf %405, %411 : vector<8x5x8xf32>
    %413 = vector.extract_strided_slice %397 {offsets = [0, 0, 2], sizes = [8, 5, 1], strides = [1, 1, 1]} : vector<8x5x8xf32> to vector<8x5x1xf32>
    %414 = vector.extract_strided_slice %399 {offsets = [2, 0], sizes = [1, 8], strides = [1, 1]} : vector<8x8xf32> to vector<1x8xf32>
    %415 = vector.shape_cast %414 : vector<1x8xf32> to vector<1x1x8xf32>
    %416 = vector.broadcast %413 : vector<8x5x1xf32> to vector<8x5x8xf32>
    %417 = vector.broadcast %415 : vector<1x1x8xf32> to vector<8x5x8xf32>
    %418 = arith.mulf %416, %417 : vector<8x5x8xf32>
    %419 = arith.addf %412, %418 : vector<8x5x8xf32>
    %420 = vector.extract_strided_slice %397 {offsets = [0, 0, 3], sizes = [8, 5, 1], strides = [1, 1, 1]} : vector<8x5x8xf32> to vector<8x5x1xf32>
    %421 = vector.extract_strided_slice %399 {offsets = [3, 0], sizes = [1, 8], strides = [1, 1]} : vector<8x8xf32> to vector<1x8xf32>
    %422 = vector.shape_cast %421 : vector<1x8xf32> to vector<1x1x8xf32>
    %423 = vector.broadcast %420 : vector<8x5x1xf32> to vector<8x5x8xf32>
    %424 = vector.broadcast %422 : vector<1x1x8xf32> to vector<8x5x8xf32>
    %425 = arith.mulf %423, %424 : vector<8x5x8xf32>
    %426 = arith.addf %419, %425 : vector<8x5x8xf32>
    %427 = vector.extract_strided_slice %397 {offsets = [0, 0, 4], sizes = [8, 5, 1], strides = [1, 1, 1]} : vector<8x5x8xf32> to vector<8x5x1xf32>
    %428 = vector.extract_strided_slice %399 {offsets = [4, 0], sizes = [1, 8], strides = [1, 1]} : vector<8x8xf32> to vector<1x8xf32>
    %429 = vector.shape_cast %428 : vector<1x8xf32> to vector<1x1x8xf32>
    %430 = vector.broadcast %427 : vector<8x5x1xf32> to vector<8x5x8xf32>
    %431 = vector.broadcast %429 : vector<1x1x8xf32> to vector<8x5x8xf32>
    %432 = arith.mulf %430, %431 : vector<8x5x8xf32>
    %433 = arith.addf %426, %432 : vector<8x5x8xf32>
    %434 = vector.extract_strided_slice %397 {offsets = [0, 0, 5], sizes = [8, 5, 1], strides = [1, 1, 1]} : vector<8x5x8xf32> to vector<8x5x1xf32>
    %435 = vector.extract_strided_slice %399 {offsets = [5, 0], sizes = [1, 8], strides = [1, 1]} : vector<8x8xf32> to vector<1x8xf32>
    %436 = vector.shape_cast %435 : vector<1x8xf32> to vector<1x1x8xf32>
    %437 = vector.broadcast %434 : vector<8x5x1xf32> to vector<8x5x8xf32>
    %438 = vector.broadcast %436 : vector<1x1x8xf32> to vector<8x5x8xf32>
    %439 = arith.mulf %437, %438 : vector<8x5x8xf32>
    %440 = arith.addf %433, %439 : vector<8x5x8xf32>
    %441 = vector.extract_strided_slice %397 {offsets = [0, 0, 6], sizes = [8, 5, 1], strides = [1, 1, 1]} : vector<8x5x8xf32> to vector<8x5x1xf32>
    %442 = vector.extract_strided_slice %399 {offsets = [6, 0], sizes = [1, 8], strides = [1, 1]} : vector<8x8xf32> to vector<1x8xf32>
    %443 = vector.shape_cast %442 : vector<1x8xf32> to vector<1x1x8xf32>
    %444 = vector.broadcast %441 : vector<8x5x1xf32> to vector<8x5x8xf32>
    %445 = vector.broadcast %443 : vector<1x1x8xf32> to vector<8x5x8xf32>
    %446 = arith.mulf %444, %445 : vector<8x5x8xf32>
    %447 = arith.addf %440, %446 : vector<8x5x8xf32>
    %448 = vector.extract_strided_slice %397 {offsets = [0, 0, 7], sizes = [8, 5, 1], strides = [1, 1, 1]} : vector<8x5x8xf32> to vector<8x5x1xf32>
    %449 = vector.extract_strided_slice %399 {offsets = [7, 0], sizes = [1, 8], strides = [1, 1]} : vector<8x8xf32> to vector<1x8xf32>
    %450 = vector.shape_cast %449 : vector<1x8xf32> to vector<1x1x8xf32>
    %451 = vector.broadcast %448 : vector<8x5x1xf32> to vector<8x5x8xf32>
    %452 = vector.broadcast %450 : vector<1x1x8xf32> to vector<8x5x8xf32>
    %453 = arith.mulf %451, %452 : vector<8x5x8xf32>
    %454 = arith.addf %447, %453 : vector<8x5x8xf32>
    %455 = arith.addf %396, %454 : vector<8x5x8xf32>
    %cst_49 = arith.constant 0.000000e+00 : f32
    %456 = vector.broadcast %cst_49 : f32 to vector<8x5x8xf32>
    %c0_50 = arith.constant 0 : index
    %c1_51 = arith.constant 1 : index
    %c0_52 = arith.constant 0 : index
    %457 = tpu.strided_load %arg10[%c0_50, %c1_51, %c0_52] {strides = array<i32: 1, 2, 1>} : memref<8x14x8xf32, #tpu.memory_space<vmem>>, vector<8x5x8xf32>
    %c0_53 = arith.constant 0 : index
    %c0_54 = arith.constant 0 : index
    %c0_55 = arith.constant 0 : index
    %458 = vector.load %arg8[%c0_53, %c0_54, %c0_55] : memref<3x8x8xf32, #tpu.memory_space<vmem>>, vector<1x8x8xf32>
    %459 = vector.shape_cast %458 : vector<1x8x8xf32> to vector<8x8xf32>
    %460 = vector.extract_strided_slice %457 {offsets = [0, 0, 0], sizes = [8, 5, 1], strides = [1, 1, 1]} : vector<8x5x8xf32> to vector<8x5x1xf32>
    %461 = vector.extract_strided_slice %459 {offsets = [0, 0], sizes = [1, 8], strides = [1, 1]} : vector<8x8xf32> to vector<1x8xf32>
    %462 = vector.shape_cast %461 : vector<1x8xf32> to vector<1x1x8xf32>
    %463 = vector.broadcast %460 : vector<8x5x1xf32> to vector<8x5x8xf32>
    %464 = vector.broadcast %462 : vector<1x1x8xf32> to vector<8x5x8xf32>
    %465 = arith.mulf %463, %464 : vector<8x5x8xf32>
    %466 = vector.extract_strided_slice %457 {offsets = [0, 0, 1], sizes = [8, 5, 1], strides = [1, 1, 1]} : vector<8x5x8xf32> to vector<8x5x1xf32>
    %467 = vector.extract_strided_slice %459 {offsets = [1, 0], sizes = [1, 8], strides = [1, 1]} : vector<8x8xf32> to vector<1x8xf32>
    %468 = vector.shape_cast %467 : vector<1x8xf32> to vector<1x1x8xf32>
    %469 = vector.broadcast %466 : vector<8x5x1xf32> to vector<8x5x8xf32>
    %470 = vector.broadcast %468 : vector<1x1x8xf32> to vector<8x5x8xf32>
    %471 = arith.mulf %469, %470 : vector<8x5x8xf32>
    %472 = arith.addf %465, %471 : vector<8x5x8xf32>
    %473 = vector.extract_strided_slice %457 {offsets = [0, 0, 2], sizes = [8, 5, 1], strides = [1, 1, 1]} : vector<8x5x8xf32> to vector<8x5x1xf32>
    %474 = vector.extract_strided_slice %459 {offsets = [2, 0], sizes = [1, 8], strides = [1, 1]} : vector<8x8xf32> to vector<1x8xf32>
    %475 = vector.shape_cast %474 : vector<1x8xf32> to vector<1x1x8xf32>
    %476 = vector.broadcast %473 : vector<8x5x1xf32> to vector<8x5x8xf32>
    %477 = vector.broadcast %475 : vector<1x1x8xf32> to vector<8x5x8xf32>
    %478 = arith.mulf %476, %477 : vector<8x5x8xf32>
    %479 = arith.addf %472, %478 : vector<8x5x8xf32>
    %480 = vector.extract_strided_slice %457 {offsets = [0, 0, 3], sizes = [8, 5, 1], strides = [1, 1, 1]} : vector<8x5x8xf32> to vector<8x5x1xf32>
    %481 = vector.extract_strided_slice %459 {offsets = [3, 0], sizes = [1, 8], strides = [1, 1]} : vector<8x8xf32> to vector<1x8xf32>
    %482 = vector.shape_cast %481 : vector<1x8xf32> to vector<1x1x8xf32>
    %483 = vector.broadcast %480 : vector<8x5x1xf32> to vector<8x5x8xf32>
    %484 = vector.broadcast %482 : vector<1x1x8xf32> to vector<8x5x8xf32>
    %485 = arith.mulf %483, %484 : vector<8x5x8xf32>
    %486 = arith.addf %479, %485 : vector<8x5x8xf32>
    %487 = vector.extract_strided_slice %457 {offsets = [0, 0, 4], sizes = [8, 5, 1], strides = [1, 1, 1]} : vector<8x5x8xf32> to vector<8x5x1xf32>
    %488 = vector.extract_strided_slice %459 {offsets = [4, 0], sizes = [1, 8], strides = [1, 1]} : vector<8x8xf32> to vector<1x8xf32>
    %489 = vector.shape_cast %488 : vector<1x8xf32> to vector<1x1x8xf32>
    %490 = vector.broadcast %487 : vector<8x5x1xf32> to vector<8x5x8xf32>
    %491 = vector.broadcast %489 : vector<1x1x8xf32> to vector<8x5x8xf32>
    %492 = arith.mulf %490, %491 : vector<8x5x8xf32>
    %493 = arith.addf %486, %492 : vector<8x5x8xf32>
    %494 = vector.extract_strided_slice %457 {offsets = [0, 0, 5], sizes = [8, 5, 1], strides = [1, 1, 1]} : vector<8x5x8xf32> to vector<8x5x1xf32>
    %495 = vector.extract_strided_slice %459 {offsets = [5, 0], sizes = [1, 8], strides = [1, 1]} : vector<8x8xf32> to vector<1x8xf32>
    %496 = vector.shape_cast %495 : vector<1x8xf32> to vector<1x1x8xf32>
    %497 = vector.broadcast %494 : vector<8x5x1xf32> to vector<8x5x8xf32>
    %498 = vector.broadcast %496 : vector<1x1x8xf32> to vector<8x5x8xf32>
    %499 = arith.mulf %497, %498 : vector<8x5x8xf32>
    %500 = arith.addf %493, %499 : vector<8x5x8xf32>
    %501 = vector.extract_strided_slice %457 {offsets = [0, 0, 6], sizes = [8, 5, 1], strides = [1, 1, 1]} : vector<8x5x8xf32> to vector<8x5x1xf32>
    %502 = vector.extract_strided_slice %459 {offsets = [6, 0], sizes = [1, 8], strides = [1, 1]} : vector<8x8xf32> to vector<1x8xf32>
    %503 = vector.shape_cast %502 : vector<1x8xf32> to vector<1x1x8xf32>
    %504 = vector.broadcast %501 : vector<8x5x1xf32> to vector<8x5x8xf32>
    %505 = vector.broadcast %503 : vector<1x1x8xf32> to vector<8x5x8xf32>
    %506 = arith.mulf %504, %505 : vector<8x5x8xf32>
    %507 = arith.addf %500, %506 : vector<8x5x8xf32>
    %508 = vector.extract_strided_slice %457 {offsets = [0, 0, 7], sizes = [8, 5, 1], strides = [1, 1, 1]} : vector<8x5x8xf32> to vector<8x5x1xf32>
    %509 = vector.extract_strided_slice %459 {offsets = [7, 0], sizes = [1, 8], strides = [1, 1]} : vector<8x8xf32> to vector<1x8xf32>
    %510 = vector.shape_cast %509 : vector<1x8xf32> to vector<1x1x8xf32>
    %511 = vector.broadcast %508 : vector<8x5x1xf32> to vector<8x5x8xf32>
    %512 = vector.broadcast %510 : vector<1x1x8xf32> to vector<8x5x8xf32>
    %513 = arith.mulf %511, %512 : vector<8x5x8xf32>
    %514 = arith.addf %507, %513 : vector<8x5x8xf32>
    %515 = arith.addf %456, %514 : vector<8x5x8xf32>
    %c0_56 = arith.constant 0 : index
    %c2_57 = arith.constant 2 : index
    %c0_58 = arith.constant 0 : index
    %516 = tpu.strided_load %arg10[%c0_56, %c2_57, %c0_58] {strides = array<i32: 1, 2, 1>} : memref<8x14x8xf32, #tpu.memory_space<vmem>>, vector<8x5x8xf32>
    %c1_59 = arith.constant 1 : index
    %c0_60 = arith.constant 0 : index
    %c0_61 = arith.constant 0 : index
    %517 = vector.load %arg8[%c1_59, %c0_60, %c0_61] : memref<3x8x8xf32, #tpu.memory_space<vmem>>, vector<1x8x8xf32>
    %518 = vector.shape_cast %517 : vector<1x8x8xf32> to vector<8x8xf32>
    %519 = vector.extract_strided_slice %516 {offsets = [0, 0, 0], sizes = [8, 5, 1], strides = [1, 1, 1]} : vector<8x5x8xf32> to vector<8x5x1xf32>
    %520 = vector.extract_strided_slice %518 {offsets = [0, 0], sizes = [1, 8], strides = [1, 1]} : vector<8x8xf32> to vector<1x8xf32>
    %521 = vector.shape_cast %520 : vector<1x8xf32> to vector<1x1x8xf32>
    %522 = vector.broadcast %519 : vector<8x5x1xf32> to vector<8x5x8xf32>
    %523 = vector.broadcast %521 : vector<1x1x8xf32> to vector<8x5x8xf32>
    %524 = arith.mulf %522, %523 : vector<8x5x8xf32>
    %525 = vector.extract_strided_slice %516 {offsets = [0, 0, 1], sizes = [8, 5, 1], strides = [1, 1, 1]} : vector<8x5x8xf32> to vector<8x5x1xf32>
    %526 = vector.extract_strided_slice %518 {offsets = [1, 0], sizes = [1, 8], strides = [1, 1]} : vector<8x8xf32> to vector<1x8xf32>
    %527 = vector.shape_cast %526 : vector<1x8xf32> to vector<1x1x8xf32>
    %528 = vector.broadcast %525 : vector<8x5x1xf32> to vector<8x5x8xf32>
    %529 = vector.broadcast %527 : vector<1x1x8xf32> to vector<8x5x8xf32>
    %530 = arith.mulf %528, %529 : vector<8x5x8xf32>
    %531 = arith.addf %524, %530 : vector<8x5x8xf32>
    %532 = vector.extract_strided_slice %516 {offsets = [0, 0, 2], sizes = [8, 5, 1], strides = [1, 1, 1]} : vector<8x5x8xf32> to vector<8x5x1xf32>
    %533 = vector.extract_strided_slice %518 {offsets = [2, 0], sizes = [1, 8], strides = [1, 1]} : vector<8x8xf32> to vector<1x8xf32>
    %534 = vector.shape_cast %533 : vector<1x8xf32> to vector<1x1x8xf32>
    %535 = vector.broadcast %532 : vector<8x5x1xf32> to vector<8x5x8xf32>
    %536 = vector.broadcast %534 : vector<1x1x8xf32> to vector<8x5x8xf32>
    %537 = arith.mulf %535, %536 : vector<8x5x8xf32>
    %538 = arith.addf %531, %537 : vector<8x5x8xf32>
    %539 = vector.extract_strided_slice %516 {offsets = [0, 0, 3], sizes = [8, 5, 1], strides = [1, 1, 1]} : vector<8x5x8xf32> to vector<8x5x1xf32>
    %540 = vector.extract_strided_slice %518 {offsets = [3, 0], sizes = [1, 8], strides = [1, 1]} : vector<8x8xf32> to vector<1x8xf32>
    %541 = vector.shape_cast %540 : vector<1x8xf32> to vector<1x1x8xf32>
    %542 = vector.broadcast %539 : vector<8x5x1xf32> to vector<8x5x8xf32>
    %543 = vector.broadcast %541 : vector<1x1x8xf32> to vector<8x5x8xf32>
    %544 = arith.mulf %542, %543 : vector<8x5x8xf32>
    %545 = arith.addf %538, %544 : vector<8x5x8xf32>
    %546 = vector.extract_strided_slice %516 {offsets = [0, 0, 4], sizes = [8, 5, 1], strides = [1, 1, 1]} : vector<8x5x8xf32> to vector<8x5x1xf32>
    %547 = vector.extract_strided_slice %518 {offsets = [4, 0], sizes = [1, 8], strides = [1, 1]} : vector<8x8xf32> to vector<1x8xf32>
    %548 = vector.shape_cast %547 : vector<1x8xf32> to vector<1x1x8xf32>
    %549 = vector.broadcast %546 : vector<8x5x1xf32> to vector<8x5x8xf32>
    %550 = vector.broadcast %548 : vector<1x1x8xf32> to vector<8x5x8xf32>
    %551 = arith.mulf %549, %550 : vector<8x5x8xf32>
    %552 = arith.addf %545, %551 : vector<8x5x8xf32>
    %553 = vector.extract_strided_slice %516 {offsets = [0, 0, 5], sizes = [8, 5, 1], strides = [1, 1, 1]} : vector<8x5x8xf32> to vector<8x5x1xf32>
    %554 = vector.extract_strided_slice %518 {offsets = [5, 0], sizes = [1, 8], strides = [1, 1]} : vector<8x8xf32> to vector<1x8xf32>
    %555 = vector.shape_cast %554 : vector<1x8xf32> to vector<1x1x8xf32>
    %556 = vector.broadcast %553 : vector<8x5x1xf32> to vector<8x5x8xf32>
    %557 = vector.broadcast %555 : vector<1x1x8xf32> to vector<8x5x8xf32>
    %558 = arith.mulf %556, %557 : vector<8x5x8xf32>
    %559 = arith.addf %552, %558 : vector<8x5x8xf32>
    %560 = vector.extract_strided_slice %516 {offsets = [0, 0, 6], sizes = [8, 5, 1], strides = [1, 1, 1]} : vector<8x5x8xf32> to vector<8x5x1xf32>
    %561 = vector.extract_strided_slice %518 {offsets = [6, 0], sizes = [1, 8], strides = [1, 1]} : vector<8x8xf32> to vector<1x8xf32>
    %562 = vector.shape_cast %561 : vector<1x8xf32> to vector<1x1x8xf32>
    %563 = vector.broadcast %560 : vector<8x5x1xf32> to vector<8x5x8xf32>
    %564 = vector.broadcast %562 : vector<1x1x8xf32> to vector<8x5x8xf32>
    %565 = arith.mulf %563, %564 : vector<8x5x8xf32>
    %566 = arith.addf %559, %565 : vector<8x5x8xf32>
    %567 = vector.extract_strided_slice %516 {offsets = [0, 0, 7], sizes = [8, 5, 1], strides = [1, 1, 1]} : vector<8x5x8xf32> to vector<8x5x1xf32>
    %568 = vector.extract_strided_slice %518 {offsets = [7, 0], sizes = [1, 8], strides = [1, 1]} : vector<8x8xf32> to vector<1x8xf32>
    %569 = vector.shape_cast %568 : vector<1x8xf32> to vector<1x1x8xf32>
    %570 = vector.broadcast %567 : vector<8x5x1xf32> to vector<8x5x8xf32>
    %571 = vector.broadcast %569 : vector<1x1x8xf32> to vector<8x5x8xf32>
    %572 = arith.mulf %570, %571 : vector<8x5x8xf32>
    %573 = arith.addf %566, %572 : vector<8x5x8xf32>
    %574 = arith.addf %515, %573 : vector<8x5x8xf32>
    %c0_62 = arith.constant 0 : index
    %c3 = arith.constant 3 : index
    %c0_63 = arith.constant 0 : index
    %575 = tpu.strided_load %arg10[%c0_62, %c3, %c0_63] {strides = array<i32: 1, 2, 1>} : memref<8x14x8xf32, #tpu.memory_space<vmem>>, vector<8x5x8xf32>
    %c2_64 = arith.constant 2 : index
    %c0_65 = arith.constant 0 : index
    %c0_66 = arith.constant 0 : index
    %576 = vector.load %arg8[%c2_64, %c0_65, %c0_66] : memref<3x8x8xf32, #tpu.memory_space<vmem>>, vector<1x8x8xf32>
    %577 = vector.shape_cast %576 : vector<1x8x8xf32> to vector<8x8xf32>
    %578 = vector.extract_strided_slice %575 {offsets = [0, 0, 0], sizes = [8, 5, 1], strides = [1, 1, 1]} : vector<8x5x8xf32> to vector<8x5x1xf32>
    %579 = vector.extract_strided_slice %577 {offsets = [0, 0], sizes = [1, 8], strides = [1, 1]} : vector<8x8xf32> to vector<1x8xf32>
    %580 = vector.shape_cast %579 : vector<1x8xf32> to vector<1x1x8xf32>
    %581 = vector.broadcast %578 : vector<8x5x1xf32> to vector<8x5x8xf32>
    %582 = vector.broadcast %580 : vector<1x1x8xf32> to vector<8x5x8xf32>
    %583 = arith.mulf %581, %582 : vector<8x5x8xf32>
    %584 = vector.extract_strided_slice %575 {offsets = [0, 0, 1], sizes = [8, 5, 1], strides = [1, 1, 1]} : vector<8x5x8xf32> to vector<8x5x1xf32>
    %585 = vector.extract_strided_slice %577 {offsets = [1, 0], sizes = [1, 8], strides = [1, 1]} : vector<8x8xf32> to vector<1x8xf32>
    %586 = vector.shape_cast %585 : vector<1x8xf32> to vector<1x1x8xf32>
    %587 = vector.broadcast %584 : vector<8x5x1xf32> to vector<8x5x8xf32>
    %588 = vector.broadcast %586 : vector<1x1x8xf32> to vector<8x5x8xf32>
    %589 = arith.mulf %587, %588 : vector<8x5x8xf32>
    %590 = arith.addf %583, %589 : vector<8x5x8xf32>
    %591 = vector.extract_strided_slice %575 {offsets = [0, 0, 2], sizes = [8, 5, 1], strides = [1, 1, 1]} : vector<8x5x8xf32> to vector<8x5x1xf32>
    %592 = vector.extract_strided_slice %577 {offsets = [2, 0], sizes = [1, 8], strides = [1, 1]} : vector<8x8xf32> to vector<1x8xf32>
    %593 = vector.shape_cast %592 : vector<1x8xf32> to vector<1x1x8xf32>
    %594 = vector.broadcast %591 : vector<8x5x1xf32> to vector<8x5x8xf32>
    %595 = vector.broadcast %593 : vector<1x1x8xf32> to vector<8x5x8xf32>
    %596 = arith.mulf %594, %595 : vector<8x5x8xf32>
    %597 = arith.addf %590, %596 : vector<8x5x8xf32>
    %598 = vector.extract_strided_slice %575 {offsets = [0, 0, 3], sizes = [8, 5, 1], strides = [1, 1, 1]} : vector<8x5x8xf32> to vector<8x5x1xf32>
    %599 = vector.extract_strided_slice %577 {offsets = [3, 0], sizes = [1, 8], strides = [1, 1]} : vector<8x8xf32> to vector<1x8xf32>
    %600 = vector.shape_cast %599 : vector<1x8xf32> to vector<1x1x8xf32>
    %601 = vector.broadcast %598 : vector<8x5x1xf32> to vector<8x5x8xf32>
    %602 = vector.broadcast %600 : vector<1x1x8xf32> to vector<8x5x8xf32>
    %603 = arith.mulf %601, %602 : vector<8x5x8xf32>
    %604 = arith.addf %597, %603 : vector<8x5x8xf32>
    %605 = vector.extract_strided_slice %575 {offsets = [0, 0, 4], sizes = [8, 5, 1], strides = [1, 1, 1]} : vector<8x5x8xf32> to vector<8x5x1xf32>
    %606 = vector.extract_strided_slice %577 {offsets = [4, 0], sizes = [1, 8], strides = [1, 1]} : vector<8x8xf32> to vector<1x8xf32>
    %607 = vector.shape_cast %606 : vector<1x8xf32> to vector<1x1x8xf32>
    %608 = vector.broadcast %605 : vector<8x5x1xf32> to vector<8x5x8xf32>
    %609 = vector.broadcast %607 : vector<1x1x8xf32> to vector<8x5x8xf32>
    %610 = arith.mulf %608, %609 : vector<8x5x8xf32>
    %611 = arith.addf %604, %610 : vector<8x5x8xf32>
    %612 = vector.extract_strided_slice %575 {offsets = [0, 0, 5], sizes = [8, 5, 1], strides = [1, 1, 1]} : vector<8x5x8xf32> to vector<8x5x1xf32>
    %613 = vector.extract_strided_slice %577 {offsets = [5, 0], sizes = [1, 8], strides = [1, 1]} : vector<8x8xf32> to vector<1x8xf32>
    %614 = vector.shape_cast %613 : vector<1x8xf32> to vector<1x1x8xf32>
    %615 = vector.broadcast %612 : vector<8x5x1xf32> to vector<8x5x8xf32>
    %616 = vector.broadcast %614 : vector<1x1x8xf32> to vector<8x5x8xf32>
    %617 = arith.mulf %615, %616 : vector<8x5x8xf32>
    %618 = arith.addf %611, %617 : vector<8x5x8xf32>
    %619 = vector.extract_strided_slice %575 {offsets = [0, 0, 6], sizes = [8, 5, 1], strides = [1, 1, 1]} : vector<8x5x8xf32> to vector<8x5x1xf32>
    %620 = vector.extract_strided_slice %577 {offsets = [6, 0], sizes = [1, 8], strides = [1, 1]} : vector<8x8xf32> to vector<1x8xf32>
    %621 = vector.shape_cast %620 : vector<1x8xf32> to vector<1x1x8xf32>
    %622 = vector.broadcast %619 : vector<8x5x1xf32> to vector<8x5x8xf32>
    %623 = vector.broadcast %621 : vector<1x1x8xf32> to vector<8x5x8xf32>
    %624 = arith.mulf %622, %623 : vector<8x5x8xf32>
    %625 = arith.addf %618, %624 : vector<8x5x8xf32>
    %626 = vector.extract_strided_slice %575 {offsets = [0, 0, 7], sizes = [8, 5, 1], strides = [1, 1, 1]} : vector<8x5x8xf32> to vector<8x5x1xf32>
    %627 = vector.extract_strided_slice %577 {offsets = [7, 0], sizes = [1, 8], strides = [1, 1]} : vector<8x8xf32> to vector<1x8xf32>
    %628 = vector.shape_cast %627 : vector<1x8xf32> to vector<1x1x8xf32>
    %629 = vector.broadcast %626 : vector<8x5x1xf32> to vector<8x5x8xf32>
    %630 = vector.broadcast %628 : vector<1x1x8xf32> to vector<8x5x8xf32>
    %631 = arith.mulf %629, %630 : vector<8x5x8xf32>
    %632 = arith.addf %625, %631 : vector<8x5x8xf32>
    %633 = arith.addf %574, %632 : vector<8x5x8xf32>
    %634 = arith.maximumf %455, %633 : vector<8x5x8xf32>
    %cst_67 = arith.constant 0.000000e+00 : f32
    %635 = vector.broadcast %cst_67 : f32 to vector<8x5x8xf32>
    %c0_68 = arith.constant 0 : index
    %c2_69 = arith.constant 2 : index
    %c0_70 = arith.constant 0 : index
    %636 = tpu.strided_load %arg10[%c0_68, %c2_69, %c0_70] {strides = array<i32: 1, 2, 1>} : memref<8x14x8xf32, #tpu.memory_space<vmem>>, vector<8x5x8xf32>
    %c0_71 = arith.constant 0 : index
    %c0_72 = arith.constant 0 : index
    %c0_73 = arith.constant 0 : index
    %637 = vector.load %arg8[%c0_71, %c0_72, %c0_73] : memref<3x8x8xf32, #tpu.memory_space<vmem>>, vector<1x8x8xf32>
    %638 = vector.shape_cast %637 : vector<1x8x8xf32> to vector<8x8xf32>
    %639 = vector.extract_strided_slice %636 {offsets = [0, 0, 0], sizes = [8, 5, 1], strides = [1, 1, 1]} : vector<8x5x8xf32> to vector<8x5x1xf32>
    %640 = vector.extract_strided_slice %638 {offsets = [0, 0], sizes = [1, 8], strides = [1, 1]} : vector<8x8xf32> to vector<1x8xf32>
    %641 = vector.shape_cast %640 : vector<1x8xf32> to vector<1x1x8xf32>
    %642 = vector.broadcast %639 : vector<8x5x1xf32> to vector<8x5x8xf32>
    %643 = vector.broadcast %641 : vector<1x1x8xf32> to vector<8x5x8xf32>
    %644 = arith.mulf %642, %643 : vector<8x5x8xf32>
    %645 = vector.extract_strided_slice %636 {offsets = [0, 0, 1], sizes = [8, 5, 1], strides = [1, 1, 1]} : vector<8x5x8xf32> to vector<8x5x1xf32>
    %646 = vector.extract_strided_slice %638 {offsets = [1, 0], sizes = [1, 8], strides = [1, 1]} : vector<8x8xf32> to vector<1x8xf32>
    %647 = vector.shape_cast %646 : vector<1x8xf32> to vector<1x1x8xf32>
    %648 = vector.broadcast %645 : vector<8x5x1xf32> to vector<8x5x8xf32>
    %649 = vector.broadcast %647 : vector<1x1x8xf32> to vector<8x5x8xf32>
    %650 = arith.mulf %648, %649 : vector<8x5x8xf32>
    %651 = arith.addf %644, %650 : vector<8x5x8xf32>
    %652 = vector.extract_strided_slice %636 {offsets = [0, 0, 2], sizes = [8, 5, 1], strides = [1, 1, 1]} : vector<8x5x8xf32> to vector<8x5x1xf32>
    %653 = vector.extract_strided_slice %638 {offsets = [2, 0], sizes = [1, 8], strides = [1, 1]} : vector<8x8xf32> to vector<1x8xf32>
    %654 = vector.shape_cast %653 : vector<1x8xf32> to vector<1x1x8xf32>
    %655 = vector.broadcast %652 : vector<8x5x1xf32> to vector<8x5x8xf32>
    %656 = vector.broadcast %654 : vector<1x1x8xf32> to vector<8x5x8xf32>
    %657 = arith.mulf %655, %656 : vector<8x5x8xf32>
    %658 = arith.addf %651, %657 : vector<8x5x8xf32>
    %659 = vector.extract_strided_slice %636 {offsets = [0, 0, 3], sizes = [8, 5, 1], strides = [1, 1, 1]} : vector<8x5x8xf32> to vector<8x5x1xf32>
    %660 = vector.extract_strided_slice %638 {offsets = [3, 0], sizes = [1, 8], strides = [1, 1]} : vector<8x8xf32> to vector<1x8xf32>
    %661 = vector.shape_cast %660 : vector<1x8xf32> to vector<1x1x8xf32>
    %662 = vector.broadcast %659 : vector<8x5x1xf32> to vector<8x5x8xf32>
    %663 = vector.broadcast %661 : vector<1x1x8xf32> to vector<8x5x8xf32>
    %664 = arith.mulf %662, %663 : vector<8x5x8xf32>
    %665 = arith.addf %658, %664 : vector<8x5x8xf32>
    %666 = vector.extract_strided_slice %636 {offsets = [0, 0, 4], sizes = [8, 5, 1], strides = [1, 1, 1]} : vector<8x5x8xf32> to vector<8x5x1xf32>
    %667 = vector.extract_strided_slice %638 {offsets = [4, 0], sizes = [1, 8], strides = [1, 1]} : vector<8x8xf32> to vector<1x8xf32>
    %668 = vector.shape_cast %667 : vector<1x8xf32> to vector<1x1x8xf32>
    %669 = vector.broadcast %666 : vector<8x5x1xf32> to vector<8x5x8xf32>
    %670 = vector.broadcast %668 : vector<1x1x8xf32> to vector<8x5x8xf32>
    %671 = arith.mulf %669, %670 : vector<8x5x8xf32>
    %672 = arith.addf %665, %671 : vector<8x5x8xf32>
    %673 = vector.extract_strided_slice %636 {offsets = [0, 0, 5], sizes = [8, 5, 1], strides = [1, 1, 1]} : vector<8x5x8xf32> to vector<8x5x1xf32>
    %674 = vector.extract_strided_slice %638 {offsets = [5, 0], sizes = [1, 8], strides = [1, 1]} : vector<8x8xf32> to vector<1x8xf32>
    %675 = vector.shape_cast %674 : vector<1x8xf32> to vector<1x1x8xf32>
    %676 = vector.broadcast %673 : vector<8x5x1xf32> to vector<8x5x8xf32>
    %677 = vector.broadcast %675 : vector<1x1x8xf32> to vector<8x5x8xf32>
    %678 = arith.mulf %676, %677 : vector<8x5x8xf32>
    %679 = arith.addf %672, %678 : vector<8x5x8xf32>
    %680 = vector.extract_strided_slice %636 {offsets = [0, 0, 6], sizes = [8, 5, 1], strides = [1, 1, 1]} : vector<8x5x8xf32> to vector<8x5x1xf32>
    %681 = vector.extract_strided_slice %638 {offsets = [6, 0], sizes = [1, 8], strides = [1, 1]} : vector<8x8xf32> to vector<1x8xf32>
    %682 = vector.shape_cast %681 : vector<1x8xf32> to vector<1x1x8xf32>
    %683 = vector.broadcast %680 : vector<8x5x1xf32> to vector<8x5x8xf32>
    %684 = vector.broadcast %682 : vector<1x1x8xf32> to vector<8x5x8xf32>
    %685 = arith.mulf %683, %684 : vector<8x5x8xf32>
    %686 = arith.addf %679, %685 : vector<8x5x8xf32>
    %687 = vector.extract_strided_slice %636 {offsets = [0, 0, 7], sizes = [8, 5, 1], strides = [1, 1, 1]} : vector<8x5x8xf32> to vector<8x5x1xf32>
    %688 = vector.extract_strided_slice %638 {offsets = [7, 0], sizes = [1, 8], strides = [1, 1]} : vector<8x8xf32> to vector<1x8xf32>
    %689 = vector.shape_cast %688 : vector<1x8xf32> to vector<1x1x8xf32>
    %690 = vector.broadcast %687 : vector<8x5x1xf32> to vector<8x5x8xf32>
    %691 = vector.broadcast %689 : vector<1x1x8xf32> to vector<8x5x8xf32>
    %692 = arith.mulf %690, %691 : vector<8x5x8xf32>
    %693 = arith.addf %686, %692 : vector<8x5x8xf32>
    %694 = arith.addf %635, %693 : vector<8x5x8xf32>
    %c0_74 = arith.constant 0 : index
    %c3_75 = arith.constant 3 : index
    %c0_76 = arith.constant 0 : index
    %695 = tpu.strided_load %arg10[%c0_74, %c3_75, %c0_76] {strides = array<i32: 1, 2, 1>} : memref<8x14x8xf32, #tpu.memory_space<vmem>>, vector<8x5x8xf32>
    %c1_77 = arith.constant 1 : index
    %c0_78 = arith.constant 0 : index
    %c0_79 = arith.constant 0 : index
    %696 = vector.load %arg8[%c1_77, %c0_78, %c0_79] : memref<3x8x8xf32, #tpu.memory_space<vmem>>, vector<1x8x8xf32>
    %697 = vector.shape_cast %696 : vector<1x8x8xf32> to vector<8x8xf32>
    %698 = vector.extract_strided_slice %695 {offsets = [0, 0, 0], sizes = [8, 5, 1], strides = [1, 1, 1]} : vector<8x5x8xf32> to vector<8x5x1xf32>
    %699 = vector.extract_strided_slice %697 {offsets = [0, 0], sizes = [1, 8], strides = [1, 1]} : vector<8x8xf32> to vector<1x8xf32>
    %700 = vector.shape_cast %699 : vector<1x8xf32> to vector<1x1x8xf32>
    %701 = vector.broadcast %698 : vector<8x5x1xf32> to vector<8x5x8xf32>
    %702 = vector.broadcast %700 : vector<1x1x8xf32> to vector<8x5x8xf32>
    %703 = arith.mulf %701, %702 : vector<8x5x8xf32>
    %704 = vector.extract_strided_slice %695 {offsets = [0, 0, 1], sizes = [8, 5, 1], strides = [1, 1, 1]} : vector<8x5x8xf32> to vector<8x5x1xf32>
    %705 = vector.extract_strided_slice %697 {offsets = [1, 0], sizes = [1, 8], strides = [1, 1]} : vector<8x8xf32> to vector<1x8xf32>
    %706 = vector.shape_cast %705 : vector<1x8xf32> to vector<1x1x8xf32>
    %707 = vector.broadcast %704 : vector<8x5x1xf32> to vector<8x5x8xf32>
    %708 = vector.broadcast %706 : vector<1x1x8xf32> to vector<8x5x8xf32>
    %709 = arith.mulf %707, %708 : vector<8x5x8xf32>
    %710 = arith.addf %703, %709 : vector<8x5x8xf32>
    %711 = vector.extract_strided_slice %695 {offsets = [0, 0, 2], sizes = [8, 5, 1], strides = [1, 1, 1]} : vector<8x5x8xf32> to vector<8x5x1xf32>
    %712 = vector.extract_strided_slice %697 {offsets = [2, 0], sizes = [1, 8], strides = [1, 1]} : vector<8x8xf32> to vector<1x8xf32>
    %713 = vector.shape_cast %712 : vector<1x8xf32> to vector<1x1x8xf32>
    %714 = vector.broadcast %711 : vector<8x5x1xf32> to vector<8x5x8xf32>
    %715 = vector.broadcast %713 : vector<1x1x8xf32> to vector<8x5x8xf32>
    %716 = arith.mulf %714, %715 : vector<8x5x8xf32>
    %717 = arith.addf %710, %716 : vector<8x5x8xf32>
    %718 = vector.extract_strided_slice %695 {offsets = [0, 0, 3], sizes = [8, 5, 1], strides = [1, 1, 1]} : vector<8x5x8xf32> to vector<8x5x1xf32>
    %719 = vector.extract_strided_slice %697 {offsets = [3, 0], sizes = [1, 8], strides = [1, 1]} : vector<8x8xf32> to vector<1x8xf32>
    %720 = vector.shape_cast %719 : vector<1x8xf32> to vector<1x1x8xf32>
    %721 = vector.broadcast %718 : vector<8x5x1xf32> to vector<8x5x8xf32>
    %722 = vector.broadcast %720 : vector<1x1x8xf32> to vector<8x5x8xf32>
    %723 = arith.mulf %721, %722 : vector<8x5x8xf32>
    %724 = arith.addf %717, %723 : vector<8x5x8xf32>
    %725 = vector.extract_strided_slice %695 {offsets = [0, 0, 4], sizes = [8, 5, 1], strides = [1, 1, 1]} : vector<8x5x8xf32> to vector<8x5x1xf32>
    %726 = vector.extract_strided_slice %697 {offsets = [4, 0], sizes = [1, 8], strides = [1, 1]} : vector<8x8xf32> to vector<1x8xf32>
    %727 = vector.shape_cast %726 : vector<1x8xf32> to vector<1x1x8xf32>
    %728 = vector.broadcast %725 : vector<8x5x1xf32> to vector<8x5x8xf32>
    %729 = vector.broadcast %727 : vector<1x1x8xf32> to vector<8x5x8xf32>
    %730 = arith.mulf %728, %729 : vector<8x5x8xf32>
    %731 = arith.addf %724, %730 : vector<8x5x8xf32>
    %732 = vector.extract_strided_slice %695 {offsets = [0, 0, 5], sizes = [8, 5, 1], strides = [1, 1, 1]} : vector<8x5x8xf32> to vector<8x5x1xf32>
    %733 = vector.extract_strided_slice %697 {offsets = [5, 0], sizes = [1, 8], strides = [1, 1]} : vector<8x8xf32> to vector<1x8xf32>
    %734 = vector.shape_cast %733 : vector<1x8xf32> to vector<1x1x8xf32>
    %735 = vector.broadcast %732 : vector<8x5x1xf32> to vector<8x5x8xf32>
    %736 = vector.broadcast %734 : vector<1x1x8xf32> to vector<8x5x8xf32>
    %737 = arith.mulf %735, %736 : vector<8x5x8xf32>
    %738 = arith.addf %731, %737 : vector<8x5x8xf32>
    %739 = vector.extract_strided_slice %695 {offsets = [0, 0, 6], sizes = [8, 5, 1], strides = [1, 1, 1]} : vector<8x5x8xf32> to vector<8x5x1xf32>
    %740 = vector.extract_strided_slice %697 {offsets = [6, 0], sizes = [1, 8], strides = [1, 1]} : vector<8x8xf32> to vector<1x8xf32>
    %741 = vector.shape_cast %740 : vector<1x8xf32> to vector<1x1x8xf32>
    %742 = vector.broadcast %739 : vector<8x5x1xf32> to vector<8x5x8xf32>
    %743 = vector.broadcast %741 : vector<1x1x8xf32> to vector<8x5x8xf32>
    %744 = arith.mulf %742, %743 : vector<8x5x8xf32>
    %745 = arith.addf %738, %744 : vector<8x5x8xf32>
    %746 = vector.extract_strided_slice %695 {offsets = [0, 0, 7], sizes = [8, 5, 1], strides = [1, 1, 1]} : vector<8x5x8xf32> to vector<8x5x1xf32>
    %747 = vector.extract_strided_slice %697 {offsets = [7, 0], sizes = [1, 8], strides = [1, 1]} : vector<8x8xf32> to vector<1x8xf32>
    %748 = vector.shape_cast %747 : vector<1x8xf32> to vector<1x1x8xf32>
    %749 = vector.broadcast %746 : vector<8x5x1xf32> to vector<8x5x8xf32>
    %750 = vector.broadcast %748 : vector<1x1x8xf32> to vector<8x5x8xf32>
    %751 = arith.mulf %749, %750 : vector<8x5x8xf32>
    %752 = arith.addf %745, %751 : vector<8x5x8xf32>
    %753 = arith.addf %694, %752 : vector<8x5x8xf32>
    %c0_80 = arith.constant 0 : index
    %c4 = arith.constant 4 : index
    %c0_81 = arith.constant 0 : index
    %754 = tpu.strided_load %arg10[%c0_80, %c4, %c0_81] {strides = array<i32: 1, 2, 1>} : memref<8x14x8xf32, #tpu.memory_space<vmem>>, vector<8x5x8xf32>
    %c2_82 = arith.constant 2 : index
    %c0_83 = arith.constant 0 : index
    %c0_84 = arith.constant 0 : index
    %755 = vector.load %arg8[%c2_82, %c0_83, %c0_84] : memref<3x8x8xf32, #tpu.memory_space<vmem>>, vector<1x8x8xf32>
    %756 = vector.shape_cast %755 : vector<1x8x8xf32> to vector<8x8xf32>
    %757 = vector.extract_strided_slice %754 {offsets = [0, 0, 0], sizes = [8, 5, 1], strides = [1, 1, 1]} : vector<8x5x8xf32> to vector<8x5x1xf32>
    %758 = vector.extract_strided_slice %756 {offsets = [0, 0], sizes = [1, 8], strides = [1, 1]} : vector<8x8xf32> to vector<1x8xf32>
    %759 = vector.shape_cast %758 : vector<1x8xf32> to vector<1x1x8xf32>
    %760 = vector.broadcast %757 : vector<8x5x1xf32> to vector<8x5x8xf32>
    %761 = vector.broadcast %759 : vector<1x1x8xf32> to vector<8x5x8xf32>
    %762 = arith.mulf %760, %761 : vector<8x5x8xf32>
    %763 = vector.extract_strided_slice %754 {offsets = [0, 0, 1], sizes = [8, 5, 1], strides = [1, 1, 1]} : vector<8x5x8xf32> to vector<8x5x1xf32>
    %764 = vector.extract_strided_slice %756 {offsets = [1, 0], sizes = [1, 8], strides = [1, 1]} : vector<8x8xf32> to vector<1x8xf32>
    %765 = vector.shape_cast %764 : vector<1x8xf32> to vector<1x1x8xf32>
    %766 = vector.broadcast %763 : vector<8x5x1xf32> to vector<8x5x8xf32>
    %767 = vector.broadcast %765 : vector<1x1x8xf32> to vector<8x5x8xf32>
    %768 = arith.mulf %766, %767 : vector<8x5x8xf32>
    %769 = arith.addf %762, %768 : vector<8x5x8xf32>
    %770 = vector.extract_strided_slice %754 {offsets = [0, 0, 2], sizes = [8, 5, 1], strides = [1, 1, 1]} : vector<8x5x8xf32> to vector<8x5x1xf32>
    %771 = vector.extract_strided_slice %756 {offsets = [2, 0], sizes = [1, 8], strides = [1, 1]} : vector<8x8xf32> to vector<1x8xf32>
    %772 = vector.shape_cast %771 : vector<1x8xf32> to vector<1x1x8xf32>
    %773 = vector.broadcast %770 : vector<8x5x1xf32> to vector<8x5x8xf32>
    %774 = vector.broadcast %772 : vector<1x1x8xf32> to vector<8x5x8xf32>
    %775 = arith.mulf %773, %774 : vector<8x5x8xf32>
    %776 = arith.addf %769, %775 : vector<8x5x8xf32>
    %777 = vector.extract_strided_slice %754 {offsets = [0, 0, 3], sizes = [8, 5, 1], strides = [1, 1, 1]} : vector<8x5x8xf32> to vector<8x5x1xf32>
    %778 = vector.extract_strided_slice %756 {offsets = [3, 0], sizes = [1, 8], strides = [1, 1]} : vector<8x8xf32> to vector<1x8xf32>
    %779 = vector.shape_cast %778 : vector<1x8xf32> to vector<1x1x8xf32>
    %780 = vector.broadcast %777 : vector<8x5x1xf32> to vector<8x5x8xf32>
    %781 = vector.broadcast %779 : vector<1x1x8xf32> to vector<8x5x8xf32>
    %782 = arith.mulf %780, %781 : vector<8x5x8xf32>
    %783 = arith.addf %776, %782 : vector<8x5x8xf32>
    %784 = vector.extract_strided_slice %754 {offsets = [0, 0, 4], sizes = [8, 5, 1], strides = [1, 1, 1]} : vector<8x5x8xf32> to vector<8x5x1xf32>
    %785 = vector.extract_strided_slice %756 {offsets = [4, 0], sizes = [1, 8], strides = [1, 1]} : vector<8x8xf32> to vector<1x8xf32>
    %786 = vector.shape_cast %785 : vector<1x8xf32> to vector<1x1x8xf32>
    %787 = vector.broadcast %784 : vector<8x5x1xf32> to vector<8x5x8xf32>
    %788 = vector.broadcast %786 : vector<1x1x8xf32> to vector<8x5x8xf32>
    %789 = arith.mulf %787, %788 : vector<8x5x8xf32>
    %790 = arith.addf %783, %789 : vector<8x5x8xf32>
    %791 = vector.extract_strided_slice %754 {offsets = [0, 0, 5], sizes = [8, 5, 1], strides = [1, 1, 1]} : vector<8x5x8xf32> to vector<8x5x1xf32>
    %792 = vector.extract_strided_slice %756 {offsets = [5, 0], sizes = [1, 8], strides = [1, 1]} : vector<8x8xf32> to vector<1x8xf32>
    %793 = vector.shape_cast %792 : vector<1x8xf32> to vector<1x1x8xf32>
    %794 = vector.broadcast %791 : vector<8x5x1xf32> to vector<8x5x8xf32>
    %795 = vector.broadcast %793 : vector<1x1x8xf32> to vector<8x5x8xf32>
    %796 = arith.mulf %794, %795 : vector<8x5x8xf32>
    %797 = arith.addf %790, %796 : vector<8x5x8xf32>
    %798 = vector.extract_strided_slice %754 {offsets = [0, 0, 6], sizes = [8, 5, 1], strides = [1, 1, 1]} : vector<8x5x8xf32> to vector<8x5x1xf32>
    %799 = vector.extract_strided_slice %756 {offsets = [6, 0], sizes = [1, 8], strides = [1, 1]} : vector<8x8xf32> to vector<1x8xf32>
    %800 = vector.shape_cast %799 : vector<1x8xf32> to vector<1x1x8xf32>
    %801 = vector.broadcast %798 : vector<8x5x1xf32> to vector<8x5x8xf32>
    %802 = vector.broadcast %800 : vector<1x1x8xf32> to vector<8x5x8xf32>
    %803 = arith.mulf %801, %802 : vector<8x5x8xf32>
    %804 = arith.addf %797, %803 : vector<8x5x8xf32>
    %805 = vector.extract_strided_slice %754 {offsets = [0, 0, 7], sizes = [8, 5, 1], strides = [1, 1, 1]} : vector<8x5x8xf32> to vector<8x5x1xf32>
    %806 = vector.extract_strided_slice %756 {offsets = [7, 0], sizes = [1, 8], strides = [1, 1]} : vector<8x8xf32> to vector<1x8xf32>
    %807 = vector.shape_cast %806 : vector<1x8xf32> to vector<1x1x8xf32>
    %808 = vector.broadcast %805 : vector<8x5x1xf32> to vector<8x5x8xf32>
    %809 = vector.broadcast %807 : vector<1x1x8xf32> to vector<8x5x8xf32>
    %810 = arith.mulf %808, %809 : vector<8x5x8xf32>
    %811 = arith.addf %804, %810 : vector<8x5x8xf32>
    %812 = arith.addf %753, %811 : vector<8x5x8xf32>
    %813 = arith.maximumf %634, %812 : vector<8x5x8xf32>
    %814 = vector.broadcast %277 : vector<1x1x8xf32> to vector<8x5x8xf32>
    %815 = arith.addf %813, %814 : vector<8x5x8xf32>
    %c0_85 = arith.constant 0 : index
    %c4_86 = arith.constant 4 : index
    %c0_87 = arith.constant 0 : index
    %816 = tpu.strided_load %arg10[%c0_85, %c4_86, %c0_87] {strides = array<i32: 1, 2, 1>} : memref<8x14x8xf32, #tpu.memory_space<vmem>>, vector<8x5x8xf32>
    %817 = vector.extract_strided_slice %816 {offsets = [0, 0, 0], sizes = [8, 5, 1], strides = [1, 1, 1]} : vector<8x5x8xf32> to vector<8x5x1xf32>
    %818 = vector.extract_strided_slice %273 {offsets = [0, 0], sizes = [1, 8], strides = [1, 1]} : vector<8x8xf32> to vector<1x8xf32>
    %819 = vector.shape_cast %818 : vector<1x8xf32> to vector<1x1x8xf32>
    %820 = vector.broadcast %817 : vector<8x5x1xf32> to vector<8x5x8xf32>
    %821 = vector.broadcast %819 : vector<1x1x8xf32> to vector<8x5x8xf32>
    %822 = arith.mulf %820, %821 : vector<8x5x8xf32>
    %823 = vector.extract_strided_slice %816 {offsets = [0, 0, 1], sizes = [8, 5, 1], strides = [1, 1, 1]} : vector<8x5x8xf32> to vector<8x5x1xf32>
    %824 = vector.extract_strided_slice %273 {offsets = [1, 0], sizes = [1, 8], strides = [1, 1]} : vector<8x8xf32> to vector<1x8xf32>
    %825 = vector.shape_cast %824 : vector<1x8xf32> to vector<1x1x8xf32>
    %826 = vector.broadcast %823 : vector<8x5x1xf32> to vector<8x5x8xf32>
    %827 = vector.broadcast %825 : vector<1x1x8xf32> to vector<8x5x8xf32>
    %828 = arith.mulf %826, %827 : vector<8x5x8xf32>
    %829 = arith.addf %822, %828 : vector<8x5x8xf32>
    %830 = vector.extract_strided_slice %816 {offsets = [0, 0, 2], sizes = [8, 5, 1], strides = [1, 1, 1]} : vector<8x5x8xf32> to vector<8x5x1xf32>
    %831 = vector.extract_strided_slice %273 {offsets = [2, 0], sizes = [1, 8], strides = [1, 1]} : vector<8x8xf32> to vector<1x8xf32>
    %832 = vector.shape_cast %831 : vector<1x8xf32> to vector<1x1x8xf32>
    %833 = vector.broadcast %830 : vector<8x5x1xf32> to vector<8x5x8xf32>
    %834 = vector.broadcast %832 : vector<1x1x8xf32> to vector<8x5x8xf32>
    %835 = arith.mulf %833, %834 : vector<8x5x8xf32>
    %836 = arith.addf %829, %835 : vector<8x5x8xf32>
    %837 = vector.extract_strided_slice %816 {offsets = [0, 0, 3], sizes = [8, 5, 1], strides = [1, 1, 1]} : vector<8x5x8xf32> to vector<8x5x1xf32>
    %838 = vector.extract_strided_slice %273 {offsets = [3, 0], sizes = [1, 8], strides = [1, 1]} : vector<8x8xf32> to vector<1x8xf32>
    %839 = vector.shape_cast %838 : vector<1x8xf32> to vector<1x1x8xf32>
    %840 = vector.broadcast %837 : vector<8x5x1xf32> to vector<8x5x8xf32>
    %841 = vector.broadcast %839 : vector<1x1x8xf32> to vector<8x5x8xf32>
    %842 = arith.mulf %840, %841 : vector<8x5x8xf32>
    %843 = arith.addf %836, %842 : vector<8x5x8xf32>
    %844 = vector.extract_strided_slice %816 {offsets = [0, 0, 4], sizes = [8, 5, 1], strides = [1, 1, 1]} : vector<8x5x8xf32> to vector<8x5x1xf32>
    %845 = vector.extract_strided_slice %273 {offsets = [4, 0], sizes = [1, 8], strides = [1, 1]} : vector<8x8xf32> to vector<1x8xf32>
    %846 = vector.shape_cast %845 : vector<1x8xf32> to vector<1x1x8xf32>
    %847 = vector.broadcast %844 : vector<8x5x1xf32> to vector<8x5x8xf32>
    %848 = vector.broadcast %846 : vector<1x1x8xf32> to vector<8x5x8xf32>
    %849 = arith.mulf %847, %848 : vector<8x5x8xf32>
    %850 = arith.addf %843, %849 : vector<8x5x8xf32>
    %851 = vector.extract_strided_slice %816 {offsets = [0, 0, 5], sizes = [8, 5, 1], strides = [1, 1, 1]} : vector<8x5x8xf32> to vector<8x5x1xf32>
    %852 = vector.extract_strided_slice %273 {offsets = [5, 0], sizes = [1, 8], strides = [1, 1]} : vector<8x8xf32> to vector<1x8xf32>
    %853 = vector.shape_cast %852 : vector<1x8xf32> to vector<1x1x8xf32>
    %854 = vector.broadcast %851 : vector<8x5x1xf32> to vector<8x5x8xf32>
    %855 = vector.broadcast %853 : vector<1x1x8xf32> to vector<8x5x8xf32>
    %856 = arith.mulf %854, %855 : vector<8x5x8xf32>
    %857 = arith.addf %850, %856 : vector<8x5x8xf32>
    %858 = vector.extract_strided_slice %816 {offsets = [0, 0, 6], sizes = [8, 5, 1], strides = [1, 1, 1]} : vector<8x5x8xf32> to vector<8x5x1xf32>
    %859 = vector.extract_strided_slice %273 {offsets = [6, 0], sizes = [1, 8], strides = [1, 1]} : vector<8x8xf32> to vector<1x8xf32>
    %860 = vector.shape_cast %859 : vector<1x8xf32> to vector<1x1x8xf32>
    %861 = vector.broadcast %858 : vector<8x5x1xf32> to vector<8x5x8xf32>
    %862 = vector.broadcast %860 : vector<1x1x8xf32> to vector<8x5x8xf32>
    %863 = arith.mulf %861, %862 : vector<8x5x8xf32>
    %864 = arith.addf %857, %863 : vector<8x5x8xf32>
    %865 = vector.extract_strided_slice %816 {offsets = [0, 0, 7], sizes = [8, 5, 1], strides = [1, 1, 1]} : vector<8x5x8xf32> to vector<8x5x1xf32>
    %866 = vector.extract_strided_slice %273 {offsets = [7, 0], sizes = [1, 8], strides = [1, 1]} : vector<8x8xf32> to vector<1x8xf32>
    %867 = vector.shape_cast %866 : vector<1x8xf32> to vector<1x1x8xf32>
    %868 = vector.broadcast %865 : vector<8x5x1xf32> to vector<8x5x8xf32>
    %869 = vector.broadcast %867 : vector<1x1x8xf32> to vector<8x5x8xf32>
    %870 = arith.mulf %868, %869 : vector<8x5x8xf32>
    %871 = arith.addf %864, %870 : vector<8x5x8xf32>
    %872 = vector.broadcast %275 : vector<1x1x8xf32> to vector<8x5x8xf32>
    %873 = arith.addf %871, %872 : vector<8x5x8xf32>
    %874 = arith.addf %815, %873 : vector<8x5x8xf32>
    %cst_88 = arith.constant 0.000000e+00 : f32
    %875 = vector.broadcast %cst_88 : f32 to vector<8x5x8xf32>
    %876 = arith.maximumf %874, %875 : vector<8x5x8xf32>
    %c0_89 = arith.constant 0 : index
    %c0_90 = arith.constant 0 : index
    %c0_91 = arith.constant 0 : index
    %877 = vector.load %arg11[%c0_89, %c0_90, %c0_91] : memref<8x5x8xf32, #tpu.memory_space<vmem>>, vector<8x5x8xf32>
    tpu.vector_store %arg11[%c0_89, %c0_90, %c0_91], %876 {strides = array<i32>} : memref<8x5x8xf32, #tpu.memory_space<vmem>>, vector<8x5x8xf32>,
    return
  }
  func.func @transform_0(%arg0: i32) -> (i32, i32, i32) {
    %c0_i32 = arith.constant 0 : i32
    %c0_i32_0 = arith.constant 0 : i32
    %c0_i32_1 = arith.constant 0 : i32
    return %arg0, %c0_i32, %c0_i32_0 : i32, i32, i32
  }
  func.func @transform_1(%arg0: i32) -> (i32, i32) {
    %c0_i32 = arith.constant 0 : i32
    %c0_i32_0 = arith.constant 0 : i32
    %c0_i32_1 = arith.constant 0 : i32
    return %c0_i32, %c0_i32_0 : i32, i32
  }
  func.func @transform_2(%arg0: i32) -> (i32, i32) {
    %c0_i32 = arith.constant 0 : i32
    %c0_i32_0 = arith.constant 0 : i32
    %c0_i32_1 = arith.constant 0 : i32
    return %c0_i32, %c0_i32_0 : i32, i32
  }
  func.func @transform_3(%arg0: i32) -> (i32, i32, i32) {
    %c0_i32 = arith.constant 0 : i32
    %c0_i32_0 = arith.constant 0 : i32
    %c0_i32_1 = arith.constant 0 : i32
    %c0_i32_2 = arith.constant 0 : i32
    return %c0_i32, %c0_i32_0, %c0_i32_1 : i32, i32, i32
  }
  func.func @transform_4(%arg0: i32) -> (i32, i32) {
    %c0_i32 = arith.constant 0 : i32
    %c0_i32_0 = arith.constant 0 : i32
    %c0_i32_1 = arith.constant 0 : i32
    return %c0_i32, %c0_i32_0 : i32, i32
  }
  func.func @transform_5(%arg0: i32) -> (i32, i32) {
    %c0_i32 = arith.constant 0 : i32
    %c0_i32_0 = arith.constant 0 : i32
    %c0_i32_1 = arith.constant 0 : i32
    return %c0_i32, %c0_i32_0 : i32, i32
  }
  func.func @transform_6(%arg0: i32) -> (i32, i32) {
    %c0_i32 = arith.constant 0 : i32
    %c0_i32_0 = arith.constant 0 : i32
    %c0_i32_1 = arith.constant 0 : i32
    return %c0_i32, %c0_i32_0 : i32, i32
  }
  func.func @transform_7(%arg0: i32) -> (i32, i32, i32) {
    %c0_i32 = arith.constant 0 : i32
    %c0_i32_0 = arith.constant 0 : i32
    %c0_i32_1 = arith.constant 0 : i32
    %c0_i32_2 = arith.constant 0 : i32
    return %c0_i32, %c0_i32_0, %c0_i32_1 : i32, i32, i32
  }
  func.func @transform_8(%arg0: i32) -> (i32, i32) {
    %c0_i32 = arith.constant 0 : i32
    %c0_i32_0 = arith.constant 0 : i32
    %c0_i32_1 = arith.constant 0 : i32
    return %c0_i32, %c0_i32_0 : i32, i32
  }
  func.func @transform_9(%arg0: i32) -> (i32, i32, i32) {
    %c0_i32 = arith.constant 0 : i32
    %c0_i32_0 = arith.constant 0 : i32
    %c0_i32_1 = arith.constant 0 : i32
    return %arg0, %c0_i32, %c0_i32_0 : i32, i32, i32
  }
  func.func @transform_10(%arg0: i32) -> (i32, i32, i32) {
    %c0_i32 = arith.constant 0 : i32
    %c0_i32_0 = arith.constant 0 : i32
    %c0_i32_1 = arith.constant 0 : i32
    return %arg0, %c0_i32, %c0_i32_0 : i32, i32, i32
  }
}

</mosaic_0001>

<llo_original>
// kernel: tpu_custom_call.1
$region0: #{tpu_custom_call.1}
  #allocation0 [shape = 'u32[]', space=smem, size = 0x4, offset = 0x4, fixed_abs, tag = 'smem constant byte address 0x4 - core index']
  #allocation1 [shape = 'u32[144,128]{1,0:T(1,128)}', space=vmem, size = 0x12000, scoped, tag = 'internal scratch']
  %s0 = inlined_call_operand.vmem [shape: f32[8,16,4], index: 0, kind: input, shape index: {}]
  %s1 = inlined_call_operand.vmem [shape: f32[4,8], index: 1, kind: input, shape index: {}]
  %s2 = inlined_call_operand.vmem [shape: f32[1,8], index: 2, kind: input, shape index: {}]
  %s3 = inlined_call_operand.vmem [shape: f32[3,8,8], index: 3, kind: input, shape index: {}]
  %s4 = inlined_call_operand.vmem [shape: f32[1,8], index: 4, kind: input, shape index: {}]
  %s5 = inlined_call_operand.vmem [shape: f32[8,8], index: 5, kind: input, shape index: {}]
  %s6 = inlined_call_operand.vmem [shape: f32[1,8], index: 6, kind: input, shape index: {}]
  %s7 = inlined_call_operand.vmem [shape: f32[3,8,8], index: 7, kind: input, shape index: {}]
  %s8 = inlined_call_operand.vmem [shape: f32[1,8], index: 8, kind: input, shape index: {}]
  %s9 = inlined_call_operand.vmem [shape: f32[8,14,8], index: 9, kind: output, shape index: {0}]
  %s10 = inlined_call_operand.vmem [shape: f32[8,5,8], index: 10, kind: output, shape index: {1}]
  %11 = xla_tuple %s9, %s10
  %s12 = sld [smem:[#allocation0]]
  $region54: #{tpu_custom_call.1} parent=0
    _
  %s14 = ssub.s32 1, %s12
  %s15 = scalar_select 0, %s14, %s12
  // Predicated region
  $region2: #{tpu_custom_call.1} parent=0 // pred_check
    _
  $region3: #{tpu_custom_call.1} parent=0 // pred_check_branch
    %17 = sbr.rel (0) target = $region5
  $region4: #{tpu_custom_call.1} parent=0 // pred_region
    _
  $region5: #{tpu_custom_call.1} parent=0 // pred_fallthru
    _
  // Predicated region
  $region6: #{tpu_custom_call.1} parent=0 // pred_check
    _
  $region7: #{tpu_custom_call.1} parent=0 // pred_check_branch
    %19 = sbr.rel (0) target = $region9
  $region8: #{tpu_custom_call.1} parent=0 // pred_region
    _
  $region9: #{tpu_custom_call.1} parent=0 // pred_fallthru
    _
  // Predicated region
  $region10: #{tpu_custom_call.1} parent=0 // pred_check
    _
  $region11: #{tpu_custom_call.1} parent=0 // pred_check_branch
    %21 = sbr.rel (0) target = $region13
  $region12: #{tpu_custom_call.1} parent=0 // pred_region
    _
  $region13: #{tpu_custom_call.1} parent=0 // pred_fallthru
    _
  // Predicated region
  $region14: #{tpu_custom_call.1} parent=0 // pred_check
    _
  $region15: #{tpu_custom_call.1} parent=0 // pred_check_branch
    %23 = sbr.rel (0) target = $region17
  $region16: #{tpu_custom_call.1} parent=0 // pred_region
    _
  $region17: #{tpu_custom_call.1} parent=0 // pred_fallthru
    _
  // Predicated region
  $region18: #{tpu_custom_call.1} parent=0 // pred_check
    _
  $region19: #{tpu_custom_call.1} parent=0 // pred_check_branch
    %25 = sbr.rel (0) target = $region21
  $region20: #{tpu_custom_call.1} parent=0 // pred_region
    _
  $region21: #{tpu_custom_call.1} parent=0 // pred_fallthru
    _
  // Predicated region
  $region22: #{tpu_custom_call.1} parent=0 // pred_check
    _
  $region23: #{tpu_custom_call.1} parent=0 // pred_check_branch
    %27 = sbr.rel (0) target = $region25
  $region24: #{tpu_custom_call.1} parent=0 // pred_region
    _
  $region25: #{tpu_custom_call.1} parent=0 // pred_fallthru
    _
  // Predicated region
  $region26: #{tpu_custom_call.1} parent=0 // pred_check
    _
  $region27: #{tpu_custom_call.1} parent=0 // pred_check_branch
    %29 = sbr.rel (0) target = $region29
  $region28: #{tpu_custom_call.1} parent=0 // pred_region
    _
  $region29: #{tpu_custom_call.1} parent=0 // pred_fallthru
    _
  // Predicated region
  $region30: #{tpu_custom_call.1} parent=0 // pred_check
    _
  $region31: #{tpu_custom_call.1} parent=0 // pred_check_branch
    %31 = sbr.rel (0) target = $region33
  $region32: #{tpu_custom_call.1} parent=0 // pred_region
    _
  $region33: #{tpu_custom_call.1} parent=0 // pred_fallthru
    _
  // Predicated region
  $region34: #{tpu_custom_call.1} parent=0 // pred_check
    _
  $region35: #{tpu_custom_call.1} parent=0 // pred_check_branch
    %33 = sbr.rel (0) target = $region37
  $region36: #{tpu_custom_call.1} parent=0 // pred_region
    _
  $region37: #{tpu_custom_call.1} parent=0 // pred_fallthru
    _
  %v34 = vld [vmem:[%s1] sm:$0xf]
  %v35 = vld [vmem:[%s2] sm:$0x1]
  %v36 = vld [vmem:[%s4] sm:$0x1]
  %v37 = vld [vmem:[%s0] sm:$0xff]
  %v38 = vld [vmem:[%s0 + $0x8] sm:$0x3f]
  %v39 = vld [vmem:[%s0 + $0x10] sm:$0xff]
  %v40 = vld [vmem:[%s0 + $0x18] sm:$0x3f]
  %v41 = vld [vmem:[%s0 + $0x20] sm:$0xff]
  %v42 = vld [vmem:[%s0 + $0x28] sm:$0x3f]
  %v43 = vld [vmem:[%s0 + $0x30] sm:$0xff]
  %v44 = vld [vmem:[%s0 + $0x38] sm:$0x3f]
  %v45 = vld [vmem:[%s0 + $0x40] sm:$0xff]
  %v46 = vld [vmem:[%s0 + $0x48] sm:$0x3f]
  %v47 = vld [vmem:[%s0 + $0x50] sm:$0xff]
  %v48 = vld [vmem:[%s0 + $0x58] sm:$0x3f]
  %v49 = vld [vmem:[%s0 + $0x60] sm:$0xff]
  %v50 = vld [vmem:[%s0 + $0x68] sm:$0x3f]
  %v51 = vld [vmem:[%s0 + $0x70] sm:$0xff]
  %v52 = vld [vmem:[%s0 + $0x78] sm:$0x3f]
  %54 = vset.pattern.permute.xlu0 0
  %55 = vperm.xlu0 %54, %v37
  %v56 = vpop.permute.xlu0 %55
  %59 = vset.pattern.permute.xlu0 0
  %60 = vperm.xlu0 %59, %v38
  %v61 = vpop.permute.xlu0 %60
  %64 = vset.pattern.permute.xlu0 0
  %65 = vperm.xlu0 %64, %v39
  %v66 = vpop.permute.xlu0 %65
  %69 = vset.pattern.permute.xlu0 0
  %70 = vperm.xlu0 %69, %v40
  %v71 = vpop.permute.xlu0 %70
  %74 = vset.pattern.permute.xlu0 0
  %75 = vperm.xlu0 %74, %v41
  %v76 = vpop.permute.xlu0 %75
  %79 = vset.pattern.permute.xlu0 0
  %80 = vperm.xlu0 %79, %v42
  %v81 = vpop.permute.xlu0 %80
  %84 = vset.pattern.permute.xlu0 0
  %85 = vperm.xlu0 %84, %v43
  %v86 = vpop.permute.xlu0 %85
  %89 = vset.pattern.permute.xlu0 0
  %90 = vperm.xlu0 %89, %v44
  %v91 = vpop.permute.xlu0 %90
  %94 = vset.pattern.permute.xlu0 0
  %95 = vperm.xlu0 %94, %v45
  %v96 = vpop.permute.xlu0 %95
  %99 = vset.pattern.permute.xlu0 0
  %100 = vperm.xlu0 %99, %v46
  %v101 = vpop.permute.xlu0 %100
  %104 = vset.pattern.permute.xlu0 0
  %105 = vperm.xlu0 %104, %v47
  %v106 = vpop.permute.xlu0 %105
  %109 = vset.pattern.permute.xlu0 0
  %110 = vperm.xlu0 %109, %v48
  %v111 = vpop.permute.xlu0 %110
  %114 = vset.pattern.permute.xlu0 0
  %115 = vperm.xlu0 %114, %v49
  %v116 = vpop.permute.xlu0 %115
  %119 = vset.pattern.permute.xlu0 0
  %120 = vperm.xlu0 %119, %v50
  %v121 = vpop.permute.xlu0 %120
  %124 = vset.pattern.permute.xlu0 0
  %125 = vperm.xlu0 %124, %v51
  %v126 = vpop.permute.xlu0 %125
  %129 = vset.pattern.permute.xlu0 0
  %130 = vperm.xlu0 %129, %v52
  %v131 = vpop.permute.xlu0 %130
  %v133 = vlaneseq
  %v134 = vshrl.u32 %v133, 7
  %v135 = vsub.s32 0, %v134
  %v136 = vrot.slane %v34, %v135
  %v137 = vmul.f32 %v56, %v136
  %v138 = vmul.f32 %v61, %v136
  %v139 = vmul.f32 %v66, %v136
  %v140 = vmul.f32 %v71, %v136
  %v141 = vmul.f32 %v76, %v136
  %v142 = vmul.f32 %v81, %v136
  %v143 = vmul.f32 %v86, %v136
  %v144 = vmul.f32 %v91, %v136
  %v145 = vmul.f32 %v96, %v136
  %v146 = vmul.f32 %v101, %v136
  %v147 = vmul.f32 %v106, %v136
  %v148 = vmul.f32 %v111, %v136
  %v149 = vmul.f32 %v116, %v136
  %v150 = vmul.f32 %v121, %v136
  %v151 = vmul.f32 %v126, %v136
  %v152 = vmul.f32 %v131, %v136
  %153 = vset.pattern.permute.xlu0 1
  %154 = vperm.xlu0 %153, %v37
  %v155 = vpop.permute.xlu0 %154
  %157 = vset.pattern.permute.xlu0 1
  %158 = vperm.xlu0 %157, %v38
  %v159 = vpop.permute.xlu0 %158
  %161 = vset.pattern.permute.xlu0 1
  %162 = vperm.xlu0 %161, %v39
  %v163 = vpop.permute.xlu0 %162
  %165 = vset.pattern.permute.xlu0 1
  %166 = vperm.xlu0 %165, %v40
  %v167 = vpop.permute.xlu0 %166
  %169 = vset.pattern.permute.xlu0 1
  %170 = vperm.xlu0 %169, %v41
  %v171 = vpop.permute.xlu0 %170
  %173 = vset.pattern.permute.xlu0 1
  %174 = vperm.xlu0 %173, %v42
  %v175 = vpop.permute.xlu0 %174
  %177 = vset.pattern.permute.xlu0 1
  %178 = vperm.xlu0 %177, %v43
  %v179 = vpop.permute.xlu0 %178
  %181 = vset.pattern.permute.xlu0 1
  %182 = vperm.xlu0 %181, %v44
  %v183 = vpop.permute.xlu0 %182
  %185 = vset.pattern.permute.xlu0 1
  %186 = vperm.xlu0 %185, %v45
  %v187 = vpop.permute.xlu0 %186
  %189 = vset.pattern.permute.xlu0 1
  %190 = vperm.xlu0 %189, %v46
  %v191 = vpop.permute.xlu0 %190
  %193 = vset.pattern.permute.xlu0 1
  %194 = vperm.xlu0 %193, %v47
  %v195 = vpop.permute.xlu0 %194
  %197 = vset.pattern.permute.xlu0 1
  %198 = vperm.xlu0 %197, %v48
  %v199 = vpop.permute.xlu0 %198
  %201 = vset.pattern.permute.xlu0 1
  %202 = vperm.xlu0 %201, %v49
  %v203 = vpop.permute.xlu0 %202
  %205 = vset.pattern.permute.xlu0 1
  %206 = vperm.xlu0 %205, %v50
  %v207 = vpop.permute.xlu0 %206
  %209 = vset.pattern.permute.xlu0 1
  %210 = vperm.xlu0 %209, %v51
  %v211 = vpop.permute.xlu0 %210
  %213 = vset.pattern.permute.xlu0 1
  %214 = vperm.xlu0 %213, %v52
  %v215 = vpop.permute.xlu0 %214
  %v217 = vlaneseq
  %v218 = vshrl.u32 %v217, 7
  %v219 = vsub.s32 1, %v218
  %v220 = vrot.slane %v34, %v219
  %v221 = vmul.f32 %v155, %v220
  %v222 = vmul.f32 %v159, %v220
  %v223 = vmul.f32 %v163, %v220
  %v224 = vmul.f32 %v167, %v220
  %v225 = vmul.f32 %v171, %v220
  %v226 = vmul.f32 %v175, %v220
  %v227 = vmul.f32 %v179, %v220
  %v228 = vmul.f32 %v183, %v220
  %v229 = vmul.f32 %v187, %v220
  %v230 = vmul.f32 %v191, %v220
  %v231 = vmul.f32 %v195, %v220
  %v232 = vmul.f32 %v199, %v220
  %v233 = vmul.f32 %v203, %v220
  %v234 = vmul.f32 %v207, %v220
  %v235 = vmul.f32 %v211, %v220
  %v236 = vmul.f32 %v215, %v220
  %v237 = vadd.f32 %v137, %v221
  %v238 = vadd.f32 %v138, %v222
  %v239 = vadd.f32 %v139, %v223
  %v240 = vadd.f32 %v140, %v224
  %v241 = vadd.f32 %v141, %v225
  %v242 = vadd.f32 %v142, %v226
  %v243 = vadd.f32 %v143, %v227
  %v244 = vadd.f32 %v144, %v228
  %v245 = vadd.f32 %v145, %v229
  %v246 = vadd.f32 %v146, %v230
  %v247 = vadd.f32 %v147, %v231
  %v248 = vadd.f32 %v148, %v232
  %v249 = vadd.f32 %v149, %v233
  %v250 = vadd.f32 %v150, %v234
  %v251 = vadd.f32 %v151, %v235
  %v252 = vadd.f32 %v152, %v236
  %253 = vset.pattern.permute.xlu0 2
  %254 = vperm.xlu0 %253, %v37
  %v255 = vpop.permute.xlu0 %254
  %257 = vset.pattern.permute.xlu0 2
  %258 = vperm.xlu0 %257, %v38
  %v259 = vpop.permute.xlu0 %258
  %261 = vset.pattern.permute.xlu0 2
  %262 = vperm.xlu0 %261, %v39
  %v263 = vpop.permute.xlu0 %262
  %265 = vset.pattern.permute.xlu0 2
  %266 = vperm.xlu0 %265, %v40
  %v267 = vpop.permute.xlu0 %266
  %269 = vset.pattern.permute.xlu0 2
  %270 = vperm.xlu0 %269, %v41
  %v271 = vpop.permute.xlu0 %270
  %273 = vset.pattern.permute.xlu0 2
  %274 = vperm.xlu0 %273, %v42
  %v275 = vpop.permute.xlu0 %274
  %277 = vset.pattern.permute.xlu0 2
  %278 = vperm.xlu0 %277, %v43
  %v279 = vpop.permute.xlu0 %278
  %281 = vset.pattern.permute.xlu0 2
  %282 = vperm.xlu0 %281, %v44
  %v283 = vpop.permute.xlu0 %282
  %285 = vset.pattern.permute.xlu0 2
  %286 = vperm.xlu0 %285, %v45
  %v287 = vpop.permute.xlu0 %286
  %289 = vset.pattern.permute.xlu0 2
  %290 = vperm.xlu0 %289, %v46
  %v291 = vpop.permute.xlu0 %290
  %293 = vset.pattern.permute.xlu0 2
  %294 = vperm.xlu0 %293, %v47
  %v295 = vpop.permute.xlu0 %294
  %297 = vset.pattern.permute.xlu0 2
  %298 = vperm.xlu0 %297, %v48
  %v299 = vpop.permute.xlu0 %298
  %301 = vset.pattern.permute.xlu0 2
  %302 = vperm.xlu0 %301, %v49
  %v303 = vpop.permute.xlu0 %302
  %305 = vset.pattern.permute.xlu0 2
  %306 = vperm.xlu0 %305, %v50
  %v307 = vpop.permute.xlu0 %306
  %309 = vset.pattern.permute.xlu0 2
  %310 = vperm.xlu0 %309, %v51
  %v311 = vpop.permute.xlu0 %310
  %313 = vset.pattern.permute.xlu0 2
  %314 = vperm.xlu0 %313, %v52
  %v315 = vpop.permute.xlu0 %314
  %v317 = vlaneseq
  %v318 = vshrl.u32 %v317, 7
  %v319 = vsub.s32 2, %v318
  %v320 = vrot.slane %v34, %v319
  %v321 = vmul.f32 %v255, %v320
  %v322 = vmul.f32 %v259, %v320
  %v323 = vmul.f32 %v263, %v320
  %v324 = vmul.f32 %v267, %v320
  %v325 = vmul.f32 %v271, %v320
  %v326 = vmul.f32 %v275, %v320
  %v327 = vmul.f32 %v279, %v320
  %v328 = vmul.f32 %v283, %v320
  %v329 = vmul.f32 %v287, %v320
  %v330 = vmul.f32 %v291, %v320
  %v331 = vmul.f32 %v295, %v320
  %v332 = vmul.f32 %v299, %v320
  %v333 = vmul.f32 %v303, %v320
  %v334 = vmul.f32 %v307, %v320
  %v335 = vmul.f32 %v311, %v320
  %v336 = vmul.f32 %v315, %v320
  %v337 = vadd.f32 %v237, %v321
  %v338 = vadd.f32 %v238, %v322
  %v339 = vadd.f32 %v239, %v323
  %v340 = vadd.f32 %v240, %v324
  %v341 = vadd.f32 %v241, %v325
  %v342 = vadd.f32 %v242, %v326
  %v343 = vadd.f32 %v243, %v327
  %v344 = vadd.f32 %v244, %v328
  %v345 = vadd.f32 %v245, %v329
  %v346 = vadd.f32 %v246, %v330
  %v347 = vadd.f32 %v247, %v331
  %v348 = vadd.f32 %v248, %v332
  %v349 = vadd.f32 %v249, %v333
  %v350 = vadd.f32 %v250, %v334
  %v351 = vadd.f32 %v251, %v335
  %v352 = vadd.f32 %v252, %v336
  %353 = vset.pattern.permute.xlu0 3
  %354 = vperm.xlu0 %353, %v37
  %v355 = vpop.permute.xlu0 %354
  %357 = vset.pattern.permute.xlu0 3
  %358 = vperm.xlu0 %357, %v38
  %v359 = vpop.permute.xlu0 %358
  %361 = vset.pattern.permute.xlu0 3
  %362 = vperm.xlu0 %361, %v39
  %v363 = vpop.permute.xlu0 %362
  %365 = vset.pattern.permute.xlu0 3
  %366 = vperm.xlu0 %365, %v40
  %v367 = vpop.permute.xlu0 %366
  %369 = vset.pattern.permute.xlu0 3
  %370 = vperm.xlu0 %369, %v41
  %v371 = vpop.permute.xlu0 %370
  %373 = vset.pattern.permute.xlu0 3
  %374 = vperm.xlu0 %373, %v42
  %v375 = vpop.permute.xlu0 %374
  %377 = vset.pattern.permute.xlu0 3
  %378 = vperm.xlu0 %377, %v43
  %v379 = vpop.permute.xlu0 %378
  %381 = vset.pattern.permute.xlu0 3
  %382 = vperm.xlu0 %381, %v44
  %v383 = vpop.permute.xlu0 %382
  %385 = vset.pattern.permute.xlu0 3
  %386 = vperm.xlu0 %385, %v45
  %v387 = vpop.permute.xlu0 %386
  %389 = vset.pattern.permute.xlu0 3
  %390 = vperm.xlu0 %389, %v46
  %v391 = vpop.permute.xlu0 %390
  %393 = vset.pattern.permute.xlu0 3
  %394 = vperm.xlu0 %393, %v47
  %v395 = vpop.permute.xlu0 %394
  %397 = vset.pattern.permute.xlu0 3
  %398 = vperm.xlu0 %397, %v48
  %v399 = vpop.permute.xlu0 %398
  %401 = vset.pattern.permute.xlu0 3
  %402 = vperm.xlu0 %401, %v49
  %v403 = vpop.permute.xlu0 %402
  %405 = vset.pattern.permute.xlu0 3
  %406 = vperm.xlu0 %405, %v50
  %v407 = vpop.permute.xlu0 %406
  %409 = vset.pattern.permute.xlu0 3
  %410 = vperm.xlu0 %409, %v51
  %v411 = vpop.permute.xlu0 %410
  %413 = vset.pattern.permute.xlu0 3
  %414 = vperm.xlu0 %413, %v52
  %v415 = vpop.permute.xlu0 %414
  %v417 = vlaneseq
  %v418 = vshrl.u32 %v417, 7
  %v419 = vsub.s32 3, %v418
  %v420 = vrot.slane %v34, %v419
  %v421 = vmul.f32 %v355, %v420
  %v422 = vmul.f32 %v359, %v420
  %v423 = vmul.f32 %v363, %v420
  %v424 = vmul.f32 %v367, %v420
  %v425 = vmul.f32 %v371, %v420
  %v426 = vmul.f32 %v375, %v420
  %v427 = vmul.f32 %v379, %v420
  %v428 = vmul.f32 %v383, %v420
  %v429 = vmul.f32 %v387, %v420
  %v430 = vmul.f32 %v391, %v420
  %v431 = vmul.f32 %v395, %v420
  %v432 = vmul.f32 %v399, %v420
  %v433 = vmul.f32 %v403, %v420
  %v434 = vmul.f32 %v407, %v420
  %v435 = vmul.f32 %v411, %v420
  %v436 = vmul.f32 %v415, %v420
  %v437 = vadd.f32 %v337, %v421
  %v438 = vadd.f32 %v338, %v422
  %v439 = vadd.f32 %v339, %v423
  %v440 = vadd.f32 %v340, %v424
  %v441 = vadd.f32 %v341, %v425
  %v442 = vadd.f32 %v342, %v426
  %v443 = vadd.f32 %v343, %v427
  %v444 = vadd.f32 %v344, %v428
  %v445 = vadd.f32 %v345, %v429
  %v446 = vadd.f32 %v346, %v430
  %v447 = vadd.f32 %v347, %v431
  %v448 = vadd.f32 %v348, %v432
  %v449 = vadd.f32 %v349, %v433
  %v450 = vadd.f32 %v350, %v434
  %v451 = vadd.f32 %v351, %v435
  %v452 = vadd.f32 %v352, %v436
  %v454 = vlaneseq
  %v455 = vshrl.u32 %v454, 7
  %v456 = vsub.s32 0, %v455
  %v457 = vrot.slane %v35, %v456
  %v459 = vadd.f32 %v437, %v457
  %v460 = vadd.f32 %v438, %v457
  %v461 = vadd.f32 %v439, %v457
  %v462 = vadd.f32 %v440, %v457
  %v463 = vadd.f32 %v441, %v457
  %v464 = vadd.f32 %v442, %v457
  %v465 = vadd.f32 %v443, %v457
  %v466 = vadd.f32 %v444, %v457
  %v467 = vadd.f32 %v445, %v457
  %v468 = vadd.f32 %v446, %v457
  %v469 = vadd.f32 %v447, %v457
  %v470 = vadd.f32 %v448, %v457
  %v471 = vadd.f32 %v449, %v457
  %v472 = vadd.f32 %v450, %v457
  %v473 = vadd.f32 %v451, %v457
  %v474 = vadd.f32 %v452, %v457
  %v475 = vld [vmem:[%s3] sm:$0xff]
  %477 = vset.pattern.permute.xlu0 0
  %478 = vperm.xlu0 %477, %v459
  %v479 = vpop.permute.xlu0 %478
  %482 = vset.pattern.permute.xlu0 0
  %483 = vperm.xlu0 %482, %v460
  %v484 = vpop.permute.xlu0 %483
  %487 = vset.pattern.permute.xlu0 0
  %488 = vperm.xlu0 %487, %v461
  %v489 = vpop.permute.xlu0 %488
  %492 = vset.pattern.permute.xlu0 0
  %493 = vperm.xlu0 %492, %v462
  %v494 = vpop.permute.xlu0 %493
  %497 = vset.pattern.permute.xlu0 0
  %498 = vperm.xlu0 %497, %v463
  %v499 = vpop.permute.xlu0 %498
  %502 = vset.pattern.permute.xlu0 0
  %503 = vperm.xlu0 %502, %v464
  %v504 = vpop.permute.xlu0 %503
  %507 = vset.pattern.permute.xlu0 0
  %508 = vperm.xlu0 %507, %v465
  %v509 = vpop.permute.xlu0 %508
  %512 = vset.pattern.permute.xlu0 0
  %513 = vperm.xlu0 %512, %v466
  %v514 = vpop.permute.xlu0 %513
  %517 = vset.pattern.permute.xlu0 0
  %518 = vperm.xlu0 %517, %v467
  %v519 = vpop.permute.xlu0 %518
  %522 = vset.pattern.permute.xlu0 0
  %523 = vperm.xlu0 %522, %v468
  %v524 = vpop.permute.xlu0 %523
  %527 = vset.pattern.permute.xlu0 0
  %528 = vperm.xlu0 %527, %v469
  %v529 = vpop.permute.xlu0 %528
  %532 = vset.pattern.permute.xlu0 0
  %533 = vperm.xlu0 %532, %v470
  %v534 = vpop.permute.xlu0 %533
  %537 = vset.pattern.permute.xlu0 0
  %538 = vperm.xlu0 %537, %v471
  %v539 = vpop.permute.xlu0 %538
  %542 = vset.pattern.permute.xlu0 0
  %543 = vperm.xlu0 %542, %v472
  %v544 = vpop.permute.xlu0 %543
  %547 = vset.pattern.permute.xlu0 0
  %548 = vperm.xlu0 %547, %v473
  %v549 = vpop.permute.xlu0 %548
  %552 = vset.pattern.permute.xlu0 0
  %553 = vperm.xlu0 %552, %v474
  %v554 = vpop.permute.xlu0 %553
  %v556 = vlaneseq
  %v557 = vshrl.u32 %v556, 7
  %v558 = vsub.s32 0, %v557
  %v559 = vrot.slane %v475, %v558
  %v560 = vmul.f32 %v479, %v559
  %v561 = vmul.f32 %v484, %v559
  %v562 = vmul.f32 %v489, %v559
  %v563 = vmul.f32 %v494, %v559
  %v564 = vmul.f32 %v499, %v559
  %v565 = vmul.f32 %v504, %v559
  %v566 = vmul.f32 %v509, %v559
  %v567 = vmul.f32 %v514, %v559
  %v568 = vmul.f32 %v519, %v559
  %v569 = vmul.f32 %v524, %v559
  %v570 = vmul.f32 %v529, %v559
  %v571 = vmul.f32 %v534, %v559
  %v572 = vmul.f32 %v539, %v559
  %v573 = vmul.f32 %v544, %v559
  %v574 = vmul.f32 %v549, %v559
  %v575 = vmul.f32 %v554, %v559
  %576 = vset.pattern.permute.xlu0 1
  %577 = vperm.xlu0 %576, %v459
  %v578 = vpop.permute.xlu0 %577
  %580 = vset.pattern.permute.xlu0 1
  %581 = vperm.xlu0 %580, %v460
  %v582 = vpop.permute.xlu0 %581
  %584 = vset.pattern.permute.xlu0 1
  %585 = vperm.xlu0 %584, %v461
  %v586 = vpop.permute.xlu0 %585
  %588 = vset.pattern.permute.xlu0 1
  %589 = vperm.xlu0 %588, %v462
  %v590 = vpop.permute.xlu0 %589
  %592 = vset.pattern.permute.xlu0 1
  %593 = vperm.xlu0 %592, %v463
  %v594 = vpop.permute.xlu0 %593
  %596 = vset.pattern.permute.xlu0 1
  %597 = vperm.xlu0 %596, %v464
  %v598 = vpop.permute.xlu0 %597
  %600 = vset.pattern.permute.xlu0 1
  %601 = vperm.xlu0 %600, %v465
  %v602 = vpop.permute.xlu0 %601
  %604 = vset.pattern.permute.xlu0 1
  %605 = vperm.xlu0 %604, %v466
  %v606 = vpop.permute.xlu0 %605
  %608 = vset.pattern.permute.xlu0 1
  %609 = vperm.xlu0 %608, %v467
  %v610 = vpop.permute.xlu0 %609
  %612 = vset.pattern.permute.xlu0 1
  %613 = vperm.xlu0 %612, %v468
  %v614 = vpop.permute.xlu0 %613
  %616 = vset.pattern.permute.xlu0 1
  %617 = vperm.xlu0 %616, %v469
  %v618 = vpop.permute.xlu0 %617
  %620 = vset.pattern.permute.xlu0 1
  %621 = vperm.xlu0 %620, %v470
  %v622 = vpop.permute.xlu0 %621
  %624 = vset.pattern.permute.xlu0 1
  %625 = vperm.xlu0 %624, %v471
  %v626 = vpop.permute.xlu0 %625
  %628 = vset.pattern.permute.xlu0 1
  %629 = vperm.xlu0 %628, %v472
  %v630 = vpop.permute.xlu0 %629
  %632 = vset.pattern.permute.xlu0 1
  %633 = vperm.xlu0 %632, %v473
  %v634 = vpop.permute.xlu0 %633
  %636 = vset.pattern.permute.xlu0 1
  %637 = vperm.xlu0 %636, %v474
  %v638 = vpop.permute.xlu0 %637
  %v640 = vlaneseq
  %v641 = vshrl.u32 %v640, 7
  %v642 = vsub.s32 1, %v641
  %v643 = vrot.slane %v475, %v642
  %v644 = vmul.f32 %v578, %v643
  %v645 = vmul.f32 %v582, %v643
  %v646 = vmul.f32 %v586, %v643
  %v647 = vmul.f32 %v590, %v643
  %v648 = vmul.f32 %v594, %v643
  %v649 = vmul.f32 %v598, %v643
  %v650 = vmul.f32 %v602, %v643
  %v651 = vmul.f32 %v606, %v643
  %v652 = vmul.f32 %v610, %v643
  %v653 = vmul.f32 %v614, %v643
  %v654 = vmul.f32 %v618, %v643
  %v655 = vmul.f32 %v622, %v643
  %v656 = vmul.f32 %v626, %v643
  %v657 = vmul.f32 %v630, %v643
  %v658 = vmul.f32 %v634, %v643
  %v659 = vmul.f32 %v638, %v643
  %v660 = vadd.f32 %v560, %v644
  %v661 = vadd.f32 %v561, %v645
  %v662 = vadd.f32 %v562, %v646
  %v663 = vadd.f32 %v563, %v647
  %v664 = vadd.f32 %v564, %v648
  %v665 = vadd.f32 %v565, %v649
  %v666 = vadd.f32 %v566, %v650
  %v667 = vadd.f32 %v567, %v651
  %v668 = vadd.f32 %v568, %v652
  %v669 = vadd.f32 %v569, %v653
  %v670 = vadd.f32 %v570, %v654
  %v671 = vadd.f32 %v571, %v655
  %v672 = vadd.f32 %v572, %v656
  %v673 = vadd.f32 %v573, %v657
  %v674 = vadd.f32 %v574, %v658
  %v675 = vadd.f32 %v575, %v659
  %676 = vset.pattern.permute.xlu0 2
  %677 = vperm.xlu0 %676, %v459
  %v678 = vpop.permute.xlu0 %677
  %680 = vset.pattern.permute.xlu0 2
  %681 = vperm.xlu0 %680, %v460
  %v682 = vpop.permute.xlu0 %681
  %684 = vset.pattern.permute.xlu0 2
  %685 = vperm.xlu0 %684, %v461
  %v686 = vpop.permute.xlu0 %685
  %688 = vset.pattern.permute.xlu0 2
  %689 = vperm.xlu0 %688, %v462
  %v690 = vpop.permute.xlu0 %689
  %692 = vset.pattern.permute.xlu0 2
  %693 = vperm.xlu0 %692, %v463
  %v694 = vpop.permute.xlu0 %693
  %696 = vset.pattern.permute.xlu0 2
  %697 = vperm.xlu0 %696, %v464
  %v698 = vpop.permute.xlu0 %697
  %700 = vset.pattern.permute.xlu0 2
  %701 = vperm.xlu0 %700, %v465
  %v702 = vpop.permute.xlu0 %701
  %704 = vset.pattern.permute.xlu0 2
  %705 = vperm.xlu0 %704, %v466
  %v706 = vpop.permute.xlu0 %705
  %708 = vset.pattern.permute.xlu0 2
  %709 = vperm.xlu0 %708, %v467
  %v710 = vpop.permute.xlu0 %709
  %712 = vset.pattern.permute.xlu0 2
  %713 = vperm.xlu0 %712, %v468
  %v714 = vpop.permute.xlu0 %713
  %716 = vset.pattern.permute.xlu0 2
  %717 = vperm.xlu0 %716, %v469
  %v718 = vpop.permute.xlu0 %717
  %720 = vset.pattern.permute.xlu0 2
  %721 = vperm.xlu0 %720, %v470
  %v722 = vpop.permute.xlu0 %721
  %724 = vset.pattern.permute.xlu0 2
  %725 = vperm.xlu0 %724, %v471
  %v726 = vpop.permute.xlu0 %725
  %728 = vset.pattern.permute.xlu0 2
  %729 = vperm.xlu0 %728, %v472
  %v730 = vpop.permute.xlu0 %729
  %732 = vset.pattern.permute.xlu0 2
  %733 = vperm.xlu0 %732, %v473
  %v734 = vpop.permute.xlu0 %733
  %736 = vset.pattern.permute.xlu0 2
  %737 = vperm.xlu0 %736, %v474
  %v738 = vpop.permute.xlu0 %737
  %v740 = vlaneseq
  %v741 = vshrl.u32 %v740, 7
  %v742 = vsub.s32 2, %v741
  %v743 = vrot.slane %v475, %v742
  %v744 = vmul.f32 %v678, %v743
  %v745 = vmul.f32 %v682, %v743
  %v746 = vmul.f32 %v686, %v743
  %v747 = vmul.f32 %v690, %v743
  %v748 = vmul.f32 %v694, %v743
  %v749 = vmul.f32 %v698, %v743
  %v750 = vmul.f32 %v702, %v743
  %v751 = vmul.f32 %v706, %v743
  %v752 = vmul.f32 %v710, %v743
  %v753 = vmul.f32 %v714, %v743
  %v754 = vmul.f32 %v718, %v743
  %v755 = vmul.f32 %v722, %v743
  %v756 = vmul.f32 %v726, %v743
  %v757 = vmul.f32 %v730, %v743
  %v758 = vmul.f32 %v734, %v743
  %v759 = vmul.f32 %v738, %v743
  %v760 = vadd.f32 %v660, %v744
  %v761 = vadd.f32 %v661, %v745
  %v762 = vadd.f32 %v662, %v746
  %v763 = vadd.f32 %v663, %v747
  %v764 = vadd.f32 %v664, %v748
  %v765 = vadd.f32 %v665, %v749
  %v766 = vadd.f32 %v666, %v750
  %v767 = vadd.f32 %v667, %v751
  %v768 = vadd.f32 %v668, %v752
  %v769 = vadd.f32 %v669, %v753
  %v770 = vadd.f32 %v670, %v754
  %v771 = vadd.f32 %v671, %v755
  %v772 = vadd.f32 %v672, %v756
  %v773 = vadd.f32 %v673, %v757
  %v774 = vadd.f32 %v674, %v758
  %v775 = vadd.f32 %v675, %v759
  %776 = vset.pattern.permute.xlu0 3
  %777 = vperm.xlu0 %776, %v459
  %v778 = vpop.permute.xlu0 %777
  %780 = vset.pattern.permute.xlu0 3
  %781 = vperm.xlu0 %780, %v460
  %v782 = vpop.permute.xlu0 %781
  %784 = vset.pattern.permute.xlu0 3
  %785 = vperm.xlu0 %784, %v461
  %v786 = vpop.permute.xlu0 %785
  %788 = vset.pattern.permute.xlu0 3
  %789 = vperm.xlu0 %788, %v462
  %v790 = vpop.permute.xlu0 %789
  %792 = vset.pattern.permute.xlu0 3
  %793 = vperm.xlu0 %792, %v463
  %v794 = vpop.permute.xlu0 %793
  %796 = vset.pattern.permute.xlu0 3
  %797 = vperm.xlu0 %796, %v464
  %v798 = vpop.permute.xlu0 %797
  %800 = vset.pattern.permute.xlu0 3
  %801 = vperm.xlu0 %800, %v465
  %v802 = vpop.permute.xlu0 %801
  %804 = vset.pattern.permute.xlu0 3
  %805 = vperm.xlu0 %804, %v466
  %v806 = vpop.permute.xlu0 %805
  %808 = vset.pattern.permute.xlu0 3
  %809 = vperm.xlu0 %808, %v467
  %v810 = vpop.permute.xlu0 %809
  %812 = vset.pattern.permute.xlu0 3
  %813 = vperm.xlu0 %812, %v468
  %v814 = vpop.permute.xlu0 %813
  %816 = vset.pattern.permute.xlu0 3
  %817 = vperm.xlu0 %816, %v469
  %v818 = vpop.permute.xlu0 %817
  %820 = vset.pattern.permute.xlu0 3
  %821 = vperm.xlu0 %820, %v470
  %v822 = vpop.permute.xlu0 %821
  %824 = vset.pattern.permute.xlu0 3
  %825 = vperm.xlu0 %824, %v471
  %v826 = vpop.permute.xlu0 %825
  %828 = vset.pattern.permute.xlu0 3
  %829 = vperm.xlu0 %828, %v472
  %v830 = vpop.permute.xlu0 %829
  %832 = vset.pattern.permute.xlu0 3
  %833 = vperm.xlu0 %832, %v473
  %v834 = vpop.permute.xlu0 %833
  %836 = vset.pattern.permute.xlu0 3
  %837 = vperm.xlu0 %836, %v474
  %v838 = vpop.permute.xlu0 %837
  %v840 = vlaneseq
  %v841 = vshrl.u32 %v840, 7
  %v842 = vsub.s32 3, %v841
  %v843 = vrot.slane %v475, %v842
  %v844 = vmul.f32 %v778, %v843
  %v845 = vmul.f32 %v782, %v843
  %v846 = vmul.f32 %v786, %v843
  %v847 = vmul.f32 %v790, %v843
  %v848 = vmul.f32 %v794, %v843
  %v849 = vmul.f32 %v798, %v843
  %v850 = vmul.f32 %v802, %v843
  %v851 = vmul.f32 %v806, %v843
  %v852 = vmul.f32 %v810, %v843
  %v853 = vmul.f32 %v814, %v843
  %v854 = vmul.f32 %v818, %v843
  %v855 = vmul.f32 %v822, %v843
  %v856 = vmul.f32 %v826, %v843
  %v857 = vmul.f32 %v830, %v843
  %v858 = vmul.f32 %v834, %v843
  %v859 = vmul.f32 %v838, %v843
  %v860 = vadd.f32 %v760, %v844
  %v861 = vadd.f32 %v761, %v845
  %v862 = vadd.f32 %v762, %v846
  %v863 = vadd.f32 %v763, %v847
  %v864 = vadd.f32 %v764, %v848
  %v865 = vadd.f32 %v765, %v849
  %v866 = vadd.f32 %v766, %v850
  %v867 = vadd.f32 %v767, %v851
  %v868 = vadd.f32 %v768, %v852
  %v869 = vadd.f32 %v769, %v853
  %v870 = vadd.f32 %v770, %v854
  %v871 = vadd.f32 %v771, %v855
  %v872 = vadd.f32 %v772, %v856
  %v873 = vadd.f32 %v773, %v857
  %v874 = vadd.f32 %v774, %v858
  %v875 = vadd.f32 %v775, %v859
  %876 = vset.pattern.permute.xlu0 4
  %877 = vperm.xlu0 %876, %v459
  %v878 = vpop.permute.xlu0 %877
  %880 = vset.pattern.permute.xlu0 4
  %881 = vperm.xlu0 %880, %v460
  %v882 = vpop.permute.xlu0 %881
  %884 = vset.pattern.permute.xlu0 4
  %885 = vperm.xlu0 %884, %v461
  %v886 = vpop.permute.xlu0 %885
  %888 = vset.pattern.permute.xlu0 4
  %889 = vperm.xlu0 %888, %v462
  %v890 = vpop.permute.xlu0 %889
  %892 = vset.pattern.permute.xlu0 4
  %893 = vperm.xlu0 %892, %v463
  %v894 = vpop.permute.xlu0 %893
  %896 = vset.pattern.permute.xlu0 4
  %897 = vperm.xlu0 %896, %v464
  %v898 = vpop.permute.xlu0 %897
  %900 = vset.pattern.permute.xlu0 4
  %901 = vperm.xlu0 %900, %v465
  %v902 = vpop.permute.xlu0 %901
  %904 = vset.pattern.permute.xlu0 4
  %905 = vperm.xlu0 %904, %v466
  %v906 = vpop.permute.xlu0 %905
  %908 = vset.pattern.permute.xlu0 4
  %909 = vperm.xlu0 %908, %v467
  %v910 = vpop.permute.xlu0 %909
  %912 = vset.pattern.permute.xlu0 4
  %913 = vperm.xlu0 %912, %v468
  %v914 = vpop.permute.xlu0 %913
  %916 = vset.pattern.permute.xlu0 4
  %917 = vperm.xlu0 %916, %v469
  %v918 = vpop.permute.xlu0 %917
  %920 = vset.pattern.permute.xlu0 4
  %921 = vperm.xlu0 %920, %v470
  %v922 = vpop.permute.xlu0 %921
  %924 = vset.pattern.permute.xlu0 4
  %925 = vperm.xlu0 %924, %v471
  %v926 = vpop.permute.xlu0 %925
  %928 = vset.pattern.permute.xlu0 4
  %929 = vperm.xlu0 %928, %v472
  %v930 = vpop.permute.xlu0 %929
  %932 = vset.pattern.permute.xlu0 4
  %933 = vperm.xlu0 %932, %v473
  %v934 = vpop.permute.xlu0 %933
  %936 = vset.pattern.permute.xlu0 4
  %937 = vperm.xlu0 %936, %v474
  %v938 = vpop.permute.xlu0 %937
  %v940 = vlaneseq
  %v941 = vshrl.u32 %v940, 7
  %v942 = vsub.s32 4, %v941
  %v943 = vrot.slane %v475, %v942
  %v944 = vmul.f32 %v878, %v943
  %v945 = vmul.f32 %v882, %v943
  %v946 = vmul.f32 %v886, %v943
  %v947 = vmul.f32 %v890, %v943
  %v948 = vmul.f32 %v894, %v943
  %v949 = vmul.f32 %v898, %v943
  %v950 = vmul.f32 %v902, %v943
  %v951 = vmul.f32 %v906, %v943
  %v952 = vmul.f32 %v910, %v943
  %v953 = vmul.f32 %v914, %v943
  %v954 = vmul.f32 %v918, %v943
  %v955 = vmul.f32 %v922, %v943
  %v956 = vmul.f32 %v926, %v943
  %v957 = vmul.f32 %v930, %v943
  %v958 = vmul.f32 %v934, %v943
  %v959 = vmul.f32 %v938, %v943
  %v960 = vadd.f32 %v860, %v944
  %v961 = vadd.f32 %v861, %v945
  %v962 = vadd.f32 %v862, %v946
  %v963 = vadd.f32 %v863, %v947
  %v964 = vadd.f32 %v864, %v948
  %v965 = vadd.f32 %v865, %v949
  %v966 = vadd.f32 %v866, %v950
  %v967 = vadd.f32 %v867, %v951
  %v968 = vadd.f32 %v868, %v952
  %v969 = vadd.f32 %v869, %v953
  %v970 = vadd.f32 %v870, %v954
  %v971 = vadd.f32 %v871, %v955
  %v972 = vadd.f32 %v872, %v956
  %v973 = vadd.f32 %v873, %v957
  %v974 = vadd.f32 %v874, %v958
  %v975 = vadd.f32 %v875, %v959
  %976 = vset.pattern.permute.xlu0 5
  %977 = vperm.xlu0 %976, %v459
  %v978 = vpop.permute.xlu0 %977
  %980 = vset.pattern.permute.xlu0 5
  %981 = vperm.xlu0 %980, %v460
  %v982 = vpop.permute.xlu0 %981
  %984 = vset.pattern.permute.xlu0 5
  %985 = vperm.xlu0 %984, %v461
  %v986 = vpop.permute.xlu0 %985
  %988 = vset.pattern.permute.xlu0 5
  %989 = vperm.xlu0 %988, %v462
  %v990 = vpop.permute.xlu0 %989
  %992 = vset.pattern.permute.xlu0 5
  %993 = vperm.xlu0 %992, %v463
  %v994 = vpop.permute.xlu0 %993
  %996 = vset.pattern.permute.xlu0 5
  %997 = vperm.xlu0 %996, %v464
  %v998 = vpop.permute.xlu0 %997
  %1000 = vset.pattern.permute.xlu0 5
  %1001 = vperm.xlu0 %1000, %v465
  %v1002 = vpop.permute.xlu0 %1001
  %1004 = vset.pattern.permute.xlu0 5
  %1005 = vperm.xlu0 %1004, %v466
  %v1006 = vpop.permute.xlu0 %1005
  %1008 = vset.pattern.permute.xlu0 5
  %1009 = vperm.xlu0 %1008, %v467
  %v1010 = vpop.permute.xlu0 %1009
  %1012 = vset.pattern.permute.xlu0 5
  %1013 = vperm.xlu0 %1012, %v468
  %v1014 = vpop.permute.xlu0 %1013
  %1016 = vset.pattern.permute.xlu0 5
  %1017 = vperm.xlu0 %1016, %v469
  %v1018 = vpop.permute.xlu0 %1017
  %1020 = vset.pattern.permute.xlu0 5
  %1021 = vperm.xlu0 %1020, %v470
  %v1022 = vpop.permute.xlu0 %1021
  %1024 = vset.pattern.permute.xlu0 5
  %1025 = vperm.xlu0 %1024, %v471
  %v1026 = vpop.permute.xlu0 %1025
  %1028 = vset.pattern.permute.xlu0 5
  %1029 = vperm.xlu0 %1028, %v472
  %v1030 = vpop.permute.xlu0 %1029
  %1032 = vset.pattern.permute.xlu0 5
  %1033 = vperm.xlu0 %1032, %v473
  %v1034 = vpop.permute.xlu0 %1033
  %1036 = vset.pattern.permute.xlu0 5
  %1037 = vperm.xlu0 %1036, %v474
  %v1038 = vpop.permute.xlu0 %1037
  %v1040 = vlaneseq
  %v1041 = vshrl.u32 %v1040, 7
  %v1042 = vsub.s32 5, %v1041
  %v1043 = vrot.slane %v475, %v1042
  %v1044 = vmul.f32 %v978, %v1043
  %v1045 = vmul.f32 %v982, %v1043
  %v1046 = vmul.f32 %v986, %v1043
  %v1047 = vmul.f32 %v990, %v1043
  %v1048 = vmul.f32 %v994, %v1043
  %v1049 = vmul.f32 %v998, %v1043
  %v1050 = vmul.f32 %v1002, %v1043
  %v1051 = vmul.f32 %v1006, %v1043
  %v1052 = vmul.f32 %v1010, %v1043
  %v1053 = vmul.f32 %v1014, %v1043
  %v1054 = vmul.f32 %v1018, %v1043
  %v1055 = vmul.f32 %v1022, %v1043
  %v1056 = vmul.f32 %v1026, %v1043
  %v1057 = vmul.f32 %v1030, %v1043
  %v1058 = vmul.f32 %v1034, %v1043
  %v1059 = vmul.f32 %v1038, %v1043
  %v1060 = vadd.f32 %v960, %v1044
  %v1061 = vadd.f32 %v961, %v1045
  %v1062 = vadd.f32 %v962, %v1046
  %v1063 = vadd.f32 %v963, %v1047
  %v1064 = vadd.f32 %v964, %v1048
  %v1065 = vadd.f32 %v965, %v1049
  %v1066 = vadd.f32 %v966, %v1050
  %v1067 = vadd.f32 %v967, %v1051
  %v1068 = vadd.f32 %v968, %v1052
  %v1069 = vadd.f32 %v969, %v1053
  %v1070 = vadd.f32 %v970, %v1054
  %v1071 = vadd.f32 %v971, %v1055
  %v1072 = vadd.f32 %v972, %v1056
  %v1073 = vadd.f32 %v973, %v1057
  %v1074 = vadd.f32 %v974, %v1058
  %v1075 = vadd.f32 %v975, %v1059
  %1076 = vset.pattern.permute.xlu0 6
  %1077 = vperm.xlu0 %1076, %v459
  %v1078 = vpop.permute.xlu0 %1077
  %1080 = vset.pattern.permute.xlu0 6
  %1081 = vperm.xlu0 %1080, %v460
  %v1082 = vpop.permute.xlu0 %1081
  %1084 = vset.pattern.permute.xlu0 6
  %1085 = vperm.xlu0 %1084, %v461
  %v1086 = vpop.permute.xlu0 %1085
  %1088 = vset.pattern.permute.xlu0 6
  %1089 = vperm.xlu0 %1088, %v462
  %v1090 = vpop.permute.xlu0 %1089
  %1092 = vset.pattern.permute.xlu0 6
  %1093 = vperm.xlu0 %1092, %v463
  %v1094 = vpop.permute.xlu0 %1093
  %1096 = vset.pattern.permute.xlu0 6
  %1097 = vperm.xlu0 %1096, %v464
  %v1098 = vpop.permute.xlu0 %1097
  %1100 = vset.pattern.permute.xlu0 6
  %1101 = vperm.xlu0 %1100, %v465
  %v1102 = vpop.permute.xlu0 %1101
  %1104 = vset.pattern.permute.xlu0 6
  %1105 = vperm.xlu0 %1104, %v466
  %v1106 = vpop.permute.xlu0 %1105
  %1108 = vset.pattern.permute.xlu0 6
  %1109 = vperm.xlu0 %1108, %v467
  %v1110 = vpop.permute.xlu0 %1109
  %1112 = vset.pattern.permute.xlu0 6
  %1113 = vperm.xlu0 %1112, %v468
  %v1114 = vpop.permute.xlu0 %1113
  %1116 = vset.pattern.permute.xlu0 6
  %1117 = vperm.xlu0 %1116, %v469
  %v1118 = vpop.permute.xlu0 %1117
  %1120 = vset.pattern.permute.xlu0 6
  %1121 = vperm.xlu0 %1120, %v470
  %v1122 = vpop.permute.xlu0 %1121
  %1124 = vset.pattern.permute.xlu0 6
  %1125 = vperm.xlu0 %1124, %v471
  %v1126 = vpop.permute.xlu0 %1125
  %1128 = vset.pattern.permute.xlu0 6
  %1129 = vperm.xlu0 %1128, %v472
  %v1130 = vpop.permute.xlu0 %1129
  %1132 = vset.pattern.permute.xlu0 6
  %1133 = vperm.xlu0 %1132, %v473
  %v1134 = vpop.permute.xlu0 %1133
  %1136 = vset.pattern.permute.xlu0 6
  %1137 = vperm.xlu0 %1136, %v474
  %v1138 = vpop.permute.xlu0 %1137
  %v1140 = vlaneseq
  %v1141 = vshrl.u32 %v1140, 7
  %v1142 = vsub.s32 6, %v1141
  %v1143 = vrot.slane %v475, %v1142
  %v1144 = vmul.f32 %v1078, %v1143
  %v1145 = vmul.f32 %v1082, %v1143
  %v1146 = vmul.f32 %v1086, %v1143
  %v1147 = vmul.f32 %v1090, %v1143
  %v1148 = vmul.f32 %v1094, %v1143
  %v1149 = vmul.f32 %v1098, %v1143
  %v1150 = vmul.f32 %v1102, %v1143
  %v1151 = vmul.f32 %v1106, %v1143
  %v1152 = vmul.f32 %v1110, %v1143
  %v1153 = vmul.f32 %v1114, %v1143
  %v1154 = vmul.f32 %v1118, %v1143
  %v1155 = vmul.f32 %v1122, %v1143
  %v1156 = vmul.f32 %v1126, %v1143
  %v1157 = vmul.f32 %v1130, %v1143
  %v1158 = vmul.f32 %v1134, %v1143
  %v1159 = vmul.f32 %v1138, %v1143
  %v1160 = vadd.f32 %v1060, %v1144
  %v1161 = vadd.f32 %v1061, %v1145
  %v1162 = vadd.f32 %v1062, %v1146
  %v1163 = vadd.f32 %v1063, %v1147
  %v1164 = vadd.f32 %v1064, %v1148
  %v1165 = vadd.f32 %v1065, %v1149
  %v1166 = vadd.f32 %v1066, %v1150
  %v1167 = vadd.f32 %v1067, %v1151
  %v1168 = vadd.f32 %v1068, %v1152
  %v1169 = vadd.f32 %v1069, %v1153
  %v1170 = vadd.f32 %v1070, %v1154
  %v1171 = vadd.f32 %v1071, %v1155
  %v1172 = vadd.f32 %v1072, %v1156
  %v1173 = vadd.f32 %v1073, %v1157
  %v1174 = vadd.f32 %v1074, %v1158
  %v1175 = vadd.f32 %v1075, %v1159
  %1176 = vset.pattern.permute.xlu0 7
  %1177 = vperm.xlu0 %1176, %v459
  %v1178 = vpop.permute.xlu0 %1177
  %1180 = vset.pattern.permute.xlu0 7
  %1181 = vperm.xlu0 %1180, %v460
  %v1182 = vpop.permute.xlu0 %1181
  %1184 = vset.pattern.permute.xlu0 7
  %1185 = vperm.xlu0 %1184, %v461
  %v1186 = vpop.permute.xlu0 %1185
  %1188 = vset.pattern.permute.xlu0 7
  %1189 = vperm.xlu0 %1188, %v462
  %v1190 = vpop.permute.xlu0 %1189
  %1192 = vset.pattern.permute.xlu0 7
  %1193 = vperm.xlu0 %1192, %v463
  %v1194 = vpop.permute.xlu0 %1193
  %1196 = vset.pattern.permute.xlu0 7
  %1197 = vperm.xlu0 %1196, %v464
  %v1198 = vpop.permute.xlu0 %1197
  %1200 = vset.pattern.permute.xlu0 7
  %1201 = vperm.xlu0 %1200, %v465
  %v1202 = vpop.permute.xlu0 %1201
  %1204 = vset.pattern.permute.xlu0 7
  %1205 = vperm.xlu0 %1204, %v466
  %v1206 = vpop.permute.xlu0 %1205
  %1208 = vset.pattern.permute.xlu0 7
  %1209 = vperm.xlu0 %1208, %v467
  %v1210 = vpop.permute.xlu0 %1209
  %1212 = vset.pattern.permute.xlu0 7
  %1213 = vperm.xlu0 %1212, %v468
  %v1214 = vpop.permute.xlu0 %1213
  %1216 = vset.pattern.permute.xlu0 7
  %1217 = vperm.xlu0 %1216, %v469
  %v1218 = vpop.permute.xlu0 %1217
  %1220 = vset.pattern.permute.xlu0 7
  %1221 = vperm.xlu0 %1220, %v470
  %v1222 = vpop.permute.xlu0 %1221
  %1224 = vset.pattern.permute.xlu0 7
  %1225 = vperm.xlu0 %1224, %v471
  %v1226 = vpop.permute.xlu0 %1225
  %1228 = vset.pattern.permute.xlu0 7
  %1229 = vperm.xlu0 %1228, %v472
  %v1230 = vpop.permute.xlu0 %1229
  %1232 = vset.pattern.permute.xlu0 7
  %1233 = vperm.xlu0 %1232, %v473
  %v1234 = vpop.permute.xlu0 %1233
  %1236 = vset.pattern.permute.xlu0 7
  %1237 = vperm.xlu0 %1236, %v474
  %v1238 = vpop.permute.xlu0 %1237
  %v1240 = vlaneseq
  %v1241 = vshrl.u32 %v1240, 7
  %v1242 = vsub.s32 7, %v1241
  %v1243 = vrot.slane %v475, %v1242
  %v1244 = vmul.f32 %v1178, %v1243
  %v1245 = vmul.f32 %v1182, %v1243
  %v1246 = vmul.f32 %v1186, %v1243
  %v1247 = vmul.f32 %v1190, %v1243
  %v1248 = vmul.f32 %v1194, %v1243
  %v1249 = vmul.f32 %v1198, %v1243
  %v1250 = vmul.f32 %v1202, %v1243
  %v1251 = vmul.f32 %v1206, %v1243
  %v1252 = vmul.f32 %v1210, %v1243
  %v1253 = vmul.f32 %v1214, %v1243
  %v1254 = vmul.f32 %v1218, %v1243
  %v1255 = vmul.f32 %v1222, %v1243
  %v1256 = vmul.f32 %v1226, %v1243
  %v1257 = vmul.f32 %v1230, %v1243
  %v1258 = vmul.f32 %v1234, %v1243
  %v1259 = vmul.f32 %v1238, %v1243
  %v1260 = vadd.f32 %v1160, %v1244
  %v1261 = vadd.f32 %v1161, %v1245
  %v1262 = vadd.f32 %v1162, %v1246
  %v1263 = vadd.f32 %v1163, %v1247
  %v1264 = vadd.f32 %v1164, %v1248
  %v1265 = vadd.f32 %v1165, %v1249
  %v1266 = vadd.f32 %v1166, %v1250
  %v1267 = vadd.f32 %v1167, %v1251
  %v1268 = vadd.f32 %v1168, %v1252
  %v1269 = vadd.f32 %v1169, %v1253
  %v1270 = vadd.f32 %v1170, %v1254
  %v1271 = vadd.f32 %v1171, %v1255
  %v1272 = vadd.f32 %v1172, %v1256
  %v1273 = vadd.f32 %v1173, %v1257
  %v1274 = vadd.f32 %v1174, %v1258
  %v1275 = vadd.f32 %v1175, %v1259
  %v1276 = vadd.f32 %v1260, 0.0
  %v1277 = vadd.f32 %v1261, 0.0
  %v1278 = vadd.f32 %v1262, 0.0
  %v1279 = vadd.f32 %v1263, 0.0
  %v1280 = vadd.f32 %v1264, 0.0
  %v1281 = vadd.f32 %v1265, 0.0
  %v1282 = vadd.f32 %v1266, 0.0
  %v1283 = vadd.f32 %v1267, 0.0
  %v1284 = vadd.f32 %v1268, 0.0
  %v1285 = vadd.f32 %v1269, 0.0
  %v1286 = vadd.f32 %v1270, 0.0
  %v1287 = vadd.f32 %v1271, 0.0
  %v1288 = vadd.f32 %v1272, 0.0
  %v1289 = vadd.f32 %v1273, 0.0
  %v1290 = vadd.f32 %v1274, 0.0
  %v1291 = vadd.f32 %v1275, 0.0
  %v1292 = vld [vmem:[%s0 + $0x1] sm:$0xff]
  %v1293 = vld [vmem:[%s0 + $0x9] sm:$0x3f]
  %v1294 = vld [vmem:[%s0 + $0x11] sm:$0xff]
  %v1295 = vld [vmem:[%s0 + $0x19] sm:$0x3f]
  %v1296 = vld [vmem:[%s0 + $0x21] sm:$0xff]
  %v1297 = vld [vmem:[%s0 + $0x29] sm:$0x3f]
  %v1298 = vld [vmem:[%s0 + $0x31] sm:$0xff]
  %v1299 = vld [vmem:[%s0 + $0x39] sm:$0x3f]
  %v1300 = vld [vmem:[%s0 + $0x41] sm:$0xff]
  %v1301 = vld [vmem:[%s0 + $0x49] sm:$0x3f]
  %v1302 = vld [vmem:[%s0 + $0x51] sm:$0xff]
  %v1303 = vld [vmem:[%s0 + $0x59] sm:$0x3f]
  %v1304 = vld [vmem:[%s0 + $0x61] sm:$0xff]
  %v1305 = vld [vmem:[%s0 + $0x69] sm:$0x3f]
  %v1306 = vld [vmem:[%s0 + $0x71] sm:$0xff]
  %v1307 = vld [vmem:[%s0 + $0x79] sm:$0x3f]
  %1309 = vset.pattern.permute.xlu0 0
  %1310 = vperm.xlu0 %1309, %v1292
  %v1311 = vpop.permute.xlu0 %1310
  %1314 = vset.pattern.permute.xlu0 0
  %1315 = vperm.xlu0 %1314, %v1293
  %v1316 = vpop.permute.xlu0 %1315
  %1319 = vset.pattern.permute.xlu0 0
  %1320 = vperm.xlu0 %1319, %v1294
  %v1321 = vpop.permute.xlu0 %1320
  %1324 = vset.pattern.permute.xlu0 0
  %1325 = vperm.xlu0 %1324, %v1295
  %v1326 = vpop.permute.xlu0 %1325
  %1329 = vset.pattern.permute.xlu0 0
  %1330 = vperm.xlu0 %1329, %v1296
  %v1331 = vpop.permute.xlu0 %1330
  %1334 = vset.pattern.permute.xlu0 0
  %1335 = vperm.xlu0 %1334, %v1297
  %v1336 = vpop.permute.xlu0 %1335
  %1339 = vset.pattern.permute.xlu0 0
  %1340 = vperm.xlu0 %1339, %v1298
  %v1341 = vpop.permute.xlu0 %1340
  %1344 = vset.pattern.permute.xlu0 0
  %1345 = vperm.xlu0 %1344, %v1299
  %v1346 = vpop.permute.xlu0 %1345
  %1349 = vset.pattern.permute.xlu0 0
  %1350 = vperm.xlu0 %1349, %v1300
  %v1351 = vpop.permute.xlu0 %1350
  %1354 = vset.pattern.permute.xlu0 0
  %1355 = vperm.xlu0 %1354, %v1301
  %v1356 = vpop.permute.xlu0 %1355
  %1359 = vset.pattern.permute.xlu0 0
  %1360 = vperm.xlu0 %1359, %v1302
  %v1361 = vpop.permute.xlu0 %1360
  %1364 = vset.pattern.permute.xlu0 0
  %1365 = vperm.xlu0 %1364, %v1303
  %v1366 = vpop.permute.xlu0 %1365
  %1369 = vset.pattern.permute.xlu0 0
  %1370 = vperm.xlu0 %1369, %v1304
  %v1371 = vpop.permute.xlu0 %1370
  %1374 = vset.pattern.permute.xlu0 0
  %1375 = vperm.xlu0 %1374, %v1305
  %v1376 = vpop.permute.xlu0 %1375
  %1379 = vset.pattern.permute.xlu0 0
  %1380 = vperm.xlu0 %1379, %v1306
  %v1381 = vpop.permute.xlu0 %1380
  %1384 = vset.pattern.permute.xlu0 0
  %1385 = vperm.xlu0 %1384, %v1307
  %v1386 = vpop.permute.xlu0 %1385
  %v1388 = vmul.f32 %v1311, %v136
  %v1389 = vmul.f32 %v1316, %v136
  %v1390 = vmul.f32 %v1321, %v136
  %v1391 = vmul.f32 %v1326, %v136
  %v1392 = vmul.f32 %v1331, %v136
  %v1393 = vmul.f32 %v1336, %v136
  %v1394 = vmul.f32 %v1341, %v136
  %v1395 = vmul.f32 %v1346, %v136
  %v1396 = vmul.f32 %v1351, %v136
  %v1397 = vmul.f32 %v1356, %v136
  %v1398 = vmul.f32 %v1361, %v136
  %v1399 = vmul.f32 %v1366, %v136
  %v1400 = vmul.f32 %v1371, %v136
  %v1401 = vmul.f32 %v1376, %v136
  %v1402 = vmul.f32 %v1381, %v136
  %v1403 = vmul.f32 %v1386, %v136
  %1404 = vset.pattern.permute.xlu0 1
  %1405 = vperm.xlu0 %1404, %v1292
  %v1406 = vpop.permute.xlu0 %1405
  %1408 = vset.pattern.permute.xlu0 1
  %1409 = vperm.xlu0 %1408, %v1293
  %v1410 = vpop.permute.xlu0 %1409
  %1412 = vset.pattern.permute.xlu0 1
  %1413 = vperm.xlu0 %1412, %v1294
  %v1414 = vpop.permute.xlu0 %1413
  %1416 = vset.pattern.permute.xlu0 1
  %1417 = vperm.xlu0 %1416, %v1295
  %v1418 = vpop.permute.xlu0 %1417
  %1420 = vset.pattern.permute.xlu0 1
  %1421 = vperm.xlu0 %1420, %v1296
  %v1422 = vpop.permute.xlu0 %1421
  %1424 = vset.pattern.permute.xlu0 1
  %1425 = vperm.xlu0 %1424, %v1297
  %v1426 = vpop.permute.xlu0 %1425
  %1428 = vset.pattern.permute.xlu0 1
  %1429 = vperm.xlu0 %1428, %v1298
  %v1430 = vpop.permute.xlu0 %1429
  %1432 = vset.pattern.permute.xlu0 1
  %1433 = vperm.xlu0 %1432, %v1299
  %v1434 = vpop.permute.xlu0 %1433
  %1436 = vset.pattern.permute.xlu0 1
  %1437 = vperm.xlu0 %1436, %v1300
  %v1438 = vpop.permute.xlu0 %1437
  %1440 = vset.pattern.permute.xlu0 1
  %1441 = vperm.xlu0 %1440, %v1301
  %v1442 = vpop.permute.xlu0 %1441
  %1444 = vset.pattern.permute.xlu0 1
  %1445 = vperm.xlu0 %1444, %v1302
  %v1446 = vpop.permute.xlu0 %1445
  %1448 = vset.pattern.permute.xlu0 1
  %1449 = vperm.xlu0 %1448, %v1303
  %v1450 = vpop.permute.xlu0 %1449
  %1452 = vset.pattern.permute.xlu0 1
  %1453 = vperm.xlu0 %1452, %v1304
  %v1454 = vpop.permute.xlu0 %1453
  %1456 = vset.pattern.permute.xlu0 1
  %1457 = vperm.xlu0 %1456, %v1305
  %v1458 = vpop.permute.xlu0 %1457
  %1460 = vset.pattern.permute.xlu0 1
  %1461 = vperm.xlu0 %1460, %v1306
  %v1462 = vpop.permute.xlu0 %1461
  %1464 = vset.pattern.permute.xlu0 1
  %1465 = vperm.xlu0 %1464, %v1307
  %v1466 = vpop.permute.xlu0 %1465
  %v1468 = vmul.f32 %v1406, %v220
  %v1469 = vmul.f32 %v1410, %v220
  %v1470 = vmul.f32 %v1414, %v220
  %v1471 = vmul.f32 %v1418, %v220
  %v1472 = vmul.f32 %v1422, %v220
  %v1473 = vmul.f32 %v1426, %v220
  %v1474 = vmul.f32 %v1430, %v220
  %v1475 = vmul.f32 %v1434, %v220
  %v1476 = vmul.f32 %v1438, %v220
  %v1477 = vmul.f32 %v1442, %v220
  %v1478 = vmul.f32 %v1446, %v220
  %v1479 = vmul.f32 %v1450, %v220
  %v1480 = vmul.f32 %v1454, %v220
  %v1481 = vmul.f32 %v1458, %v220
  %v1482 = vmul.f32 %v1462, %v220
  %v1483 = vmul.f32 %v1466, %v220
  %v1484 = vadd.f32 %v1388, %v1468
  %v1485 = vadd.f32 %v1389, %v1469
  %v1486 = vadd.f32 %v1390, %v1470
  %v1487 = vadd.f32 %v1391, %v1471
  %v1488 = vadd.f32 %v1392, %v1472
  %v1489 = vadd.f32 %v1393, %v1473
  %v1490 = vadd.f32 %v1394, %v1474
  %v1491 = vadd.f32 %v1395, %v1475
  %v1492 = vadd.f32 %v1396, %v1476
  %v1493 = vadd.f32 %v1397, %v1477
  %v1494 = vadd.f32 %v1398, %v1478
  %v1495 = vadd.f32 %v1399, %v1479
  %v1496 = vadd.f32 %v1400, %v1480
  %v1497 = vadd.f32 %v1401, %v1481
  %v1498 = vadd.f32 %v1402, %v1482
  %v1499 = vadd.f32 %v1403, %v1483
  %1500 = vset.pattern.permute.xlu0 2
  %1501 = vperm.xlu0 %1500, %v1292
  %v1502 = vpop.permute.xlu0 %1501
  %1504 = vset.pattern.permute.xlu0 2
  %1505 = vperm.xlu0 %1504, %v1293
  %v1506 = vpop.permute.xlu0 %1505
  %1508 = vset.pattern.permute.xlu0 2
  %1509 = vperm.xlu0 %1508, %v1294
  %v1510 = vpop.permute.xlu0 %1509
  %1512 = vset.pattern.permute.xlu0 2
  %1513 = vperm.xlu0 %1512, %v1295
  %v1514 = vpop.permute.xlu0 %1513
  %1516 = vset.pattern.permute.xlu0 2
  %1517 = vperm.xlu0 %1516, %v1296
  %v1518 = vpop.permute.xlu0 %1517
  %1520 = vset.pattern.permute.xlu0 2
  %1521 = vperm.xlu0 %1520, %v1297
  %v1522 = vpop.permute.xlu0 %1521
  %1524 = vset.pattern.permute.xlu0 2
  %1525 = vperm.xlu0 %1524, %v1298
  %v1526 = vpop.permute.xlu0 %1525
  %1528 = vset.pattern.permute.xlu0 2
  %1529 = vperm.xlu0 %1528, %v1299
  %v1530 = vpop.permute.xlu0 %1529
  %1532 = vset.pattern.permute.xlu0 2
  %1533 = vperm.xlu0 %1532, %v1300
  %v1534 = vpop.permute.xlu0 %1533
  %1536 = vset.pattern.permute.xlu0 2
  %1537 = vperm.xlu0 %1536, %v1301
  %v1538 = vpop.permute.xlu0 %1537
  %1540 = vset.pattern.permute.xlu0 2
  %1541 = vperm.xlu0 %1540, %v1302
  %v1542 = vpop.permute.xlu0 %1541
  %1544 = vset.pattern.permute.xlu0 2
  %1545 = vperm.xlu0 %1544, %v1303
  %v1546 = vpop.permute.xlu0 %1545
  %1548 = vset.pattern.permute.xlu0 2
  %1549 = vperm.xlu0 %1548, %v1304
  %v1550 = vpop.permute.xlu0 %1549
  %1552 = vset.pattern.permute.xlu0 2
  %1553 = vperm.xlu0 %1552, %v1305
  %v1554 = vpop.permute.xlu0 %1553
  %1556 = vset.pattern.permute.xlu0 2
  %1557 = vperm.xlu0 %1556, %v1306
  %v1558 = vpop.permute.xlu0 %1557
  %1560 = vset.pattern.permute.xlu0 2
  %1561 = vperm.xlu0 %1560, %v1307
  %v1562 = vpop.permute.xlu0 %1561
  %v1564 = vmul.f32 %v1502, %v320
  %v1565 = vmul.f32 %v1506, %v320
  %v1566 = vmul.f32 %v1510, %v320
  %v1567 = vmul.f32 %v1514, %v320
  %v1568 = vmul.f32 %v1518, %v320
  %v1569 = vmul.f32 %v1522, %v320
  %v1570 = vmul.f32 %v1526, %v320
  %v1571 = vmul.f32 %v1530, %v320
  %v1572 = vmul.f32 %v1534, %v320
  %v1573 = vmul.f32 %v1538, %v320
  %v1574 = vmul.f32 %v1542, %v320
  %v1575 = vmul.f32 %v1546, %v320
  %v1576 = vmul.f32 %v1550, %v320
  %v1577 = vmul.f32 %v1554, %v320
  %v1578 = vmul.f32 %v1558, %v320
  %v1579 = vmul.f32 %v1562, %v320
  %v1580 = vadd.f32 %v1484, %v1564
  %v1581 = vadd.f32 %v1485, %v1565
  %v1582 = vadd.f32 %v1486, %v1566
  %v1583 = vadd.f32 %v1487, %v1567
  %v1584 = vadd.f32 %v1488, %v1568
  %v1585 = vadd.f32 %v1489, %v1569
  %v1586 = vadd.f32 %v1490, %v1570
  %v1587 = vadd.f32 %v1491, %v1571
  %v1588 = vadd.f32 %v1492, %v1572
  %v1589 = vadd.f32 %v1493, %v1573
  %v1590 = vadd.f32 %v1494, %v1574
  %v1591 = vadd.f32 %v1495, %v1575
  %v1592 = vadd.f32 %v1496, %v1576
  %v1593 = vadd.f32 %v1497, %v1577
  %v1594 = vadd.f32 %v1498, %v1578
  %v1595 = vadd.f32 %v1499, %v1579
  %1596 = vset.pattern.permute.xlu0 3
  %1597 = vperm.xlu0 %1596, %v1292
  %v1598 = vpop.permute.xlu0 %1597
  %1600 = vset.pattern.permute.xlu0 3
  %1601 = vperm.xlu0 %1600, %v1293
  %v1602 = vpop.permute.xlu0 %1601
  %1604 = vset.pattern.permute.xlu0 3
  %1605 = vperm.xlu0 %1604, %v1294
  %v1606 = vpop.permute.xlu0 %1605
  %1608 = vset.pattern.permute.xlu0 3
  %1609 = vperm.xlu0 %1608, %v1295
  %v1610 = vpop.permute.xlu0 %1609
  %1612 = vset.pattern.permute.xlu0 3
  %1613 = vperm.xlu0 %1612, %v1296
  %v1614 = vpop.permute.xlu0 %1613
  %1616 = vset.pattern.permute.xlu0 3
  %1617 = vperm.xlu0 %1616, %v1297
  %v1618 = vpop.permute.xlu0 %1617
  %1620 = vset.pattern.permute.xlu0 3
  %1621 = vperm.xlu0 %1620, %v1298
  %v1622 = vpop.permute.xlu0 %1621
  %1624 = vset.pattern.permute.xlu0 3
  %1625 = vperm.xlu0 %1624, %v1299
  %v1626 = vpop.permute.xlu0 %1625
  %1628 = vset.pattern.permute.xlu0 3
  %1629 = vperm.xlu0 %1628, %v1300
  %v1630 = vpop.permute.xlu0 %1629
  %1632 = vset.pattern.permute.xlu0 3
  %1633 = vperm.xlu0 %1632, %v1301
  %v1634 = vpop.permute.xlu0 %1633
  %1636 = vset.pattern.permute.xlu0 3
  %1637 = vperm.xlu0 %1636, %v1302
  %v1638 = vpop.permute.xlu0 %1637
  %1640 = vset.pattern.permute.xlu0 3
  %1641 = vperm.xlu0 %1640, %v1303
  %v1642 = vpop.permute.xlu0 %1641
  %1644 = vset.pattern.permute.xlu0 3
  %1645 = vperm.xlu0 %1644, %v1304
  %v1646 = vpop.permute.xlu0 %1645
  %1648 = vset.pattern.permute.xlu0 3
  %1649 = vperm.xlu0 %1648, %v1305
  %v1650 = vpop.permute.xlu0 %1649
  %1652 = vset.pattern.permute.xlu0 3
  %1653 = vperm.xlu0 %1652, %v1306
  %v1654 = vpop.permute.xlu0 %1653
  %1656 = vset.pattern.permute.xlu0 3
  %1657 = vperm.xlu0 %1656, %v1307
  %v1658 = vpop.permute.xlu0 %1657
  %v1660 = vmul.f32 %v1598, %v420
  %v1661 = vmul.f32 %v1602, %v420
  %v1662 = vmul.f32 %v1606, %v420
  %v1663 = vmul.f32 %v1610, %v420
  %v1664 = vmul.f32 %v1614, %v420
  %v1665 = vmul.f32 %v1618, %v420
  %v1666 = vmul.f32 %v1622, %v420
  %v1667 = vmul.f32 %v1626, %v420
  %v1668 = vmul.f32 %v1630, %v420
  %v1669 = vmul.f32 %v1634, %v420
  %v1670 = vmul.f32 %v1638, %v420
  %v1671 = vmul.f32 %v1642, %v420
  %v1672 = vmul.f32 %v1646, %v420
  %v1673 = vmul.f32 %v1650, %v420
  %v1674 = vmul.f32 %v1654, %v420
  %v1675 = vmul.f32 %v1658, %v420
  %v1676 = vadd.f32 %v1580, %v1660
  %v1677 = vadd.f32 %v1581, %v1661
  %v1678 = vadd.f32 %v1582, %v1662
  %v1679 = vadd.f32 %v1583, %v1663
  %v1680 = vadd.f32 %v1584, %v1664
  %v1681 = vadd.f32 %v1585, %v1665
  %v1682 = vadd.f32 %v1586, %v1666
  %v1683 = vadd.f32 %v1587, %v1667
  %v1684 = vadd.f32 %v1588, %v1668
  %v1685 = vadd.f32 %v1589, %v1669
  %v1686 = vadd.f32 %v1590, %v1670
  %v1687 = vadd.f32 %v1591, %v1671
  %v1688 = vadd.f32 %v1592, %v1672
  %v1689 = vadd.f32 %v1593, %v1673
  %v1690 = vadd.f32 %v1594, %v1674
  %v1691 = vadd.f32 %v1595, %v1675
  %v1692 = vadd.f32 %v1676, %v457
  %v1693 = vadd.f32 %v1677, %v457
  %v1694 = vadd.f32 %v1678, %v457
  %v1695 = vadd.f32 %v1679, %v457
  %v1696 = vadd.f32 %v1680, %v457
  %v1697 = vadd.f32 %v1681, %v457
  %v1698 = vadd.f32 %v1682, %v457
  %v1699 = vadd.f32 %v1683, %v457
  %v1700 = vadd.f32 %v1684, %v457
  %v1701 = vadd.f32 %v1685, %v457
  %v1702 = vadd.f32 %v1686, %v457
  %v1703 = vadd.f32 %v1687, %v457
  %v1704 = vadd.f32 %v1688, %v457
  %v1705 = vadd.f32 %v1689, %v457
  %v1706 = vadd.f32 %v1690, %v457
  %v1707 = vadd.f32 %v1691, %v457
  %s1708 = scalar_lea.vmem %s3, 8
  %v1709 = vld [vmem:[%s1708] sm:$0xff]
  %1711 = vset.pattern.permute.xlu0 0
  %1712 = vperm.xlu0 %1711, %v1692
  %v1713 = vpop.permute.xlu0 %1712
  %1716 = vset.pattern.permute.xlu0 0
  %1717 = vperm.xlu0 %1716, %v1693
  %v1718 = vpop.permute.xlu0 %1717
  %1721 = vset.pattern.permute.xlu0 0
  %1722 = vperm.xlu0 %1721, %v1694
  %v1723 = vpop.permute.xlu0 %1722
  %1726 = vset.pattern.permute.xlu0 0
  %1727 = vperm.xlu0 %1726, %v1695
  %v1728 = vpop.permute.xlu0 %1727
  %1731 = vset.pattern.permute.xlu0 0
  %1732 = vperm.xlu0 %1731, %v1696
  %v1733 = vpop.permute.xlu0 %1732
  %1736 = vset.pattern.permute.xlu0 0
  %1737 = vperm.xlu0 %1736, %v1697
  %v1738 = vpop.permute.xlu0 %1737
  %1741 = vset.pattern.permute.xlu0 0
  %1742 = vperm.xlu0 %1741, %v1698
  %v1743 = vpop.permute.xlu0 %1742
  %1746 = vset.pattern.permute.xlu0 0
  %1747 = vperm.xlu0 %1746, %v1699
  %v1748 = vpop.permute.xlu0 %1747
  %1751 = vset.pattern.permute.xlu0 0
  %1752 = vperm.xlu0 %1751, %v1700
  %v1753 = vpop.permute.xlu0 %1752
  %1756 = vset.pattern.permute.xlu0 0
  %1757 = vperm.xlu0 %1756, %v1701
  %v1758 = vpop.permute.xlu0 %1757
  %1761 = vset.pattern.permute.xlu0 0
  %1762 = vperm.xlu0 %1761, %v1702
  %v1763 = vpop.permute.xlu0 %1762
  %1766 = vset.pattern.permute.xlu0 0
  %1767 = vperm.xlu0 %1766, %v1703
  %v1768 = vpop.permute.xlu0 %1767
  %1771 = vset.pattern.permute.xlu0 0
  %1772 = vperm.xlu0 %1771, %v1704
  %v1773 = vpop.permute.xlu0 %1772
  %1776 = vset.pattern.permute.xlu0 0
  %1777 = vperm.xlu0 %1776, %v1705
  %v1778 = vpop.permute.xlu0 %1777
  %1781 = vset.pattern.permute.xlu0 0
  %1782 = vperm.xlu0 %1781, %v1706
  %v1783 = vpop.permute.xlu0 %1782
  %1786 = vset.pattern.permute.xlu0 0
  %1787 = vperm.xlu0 %1786, %v1707
  %v1788 = vpop.permute.xlu0 %1787
  %v1790 = vlaneseq
  %v1791 = vshrl.u32 %v1790, 7
  %v1792 = vsub.s32 0, %v1791
  %v1793 = vrot.slane %v1709, %v1792
  %v1794 = vmul.f32 %v1713, %v1793
  %v1795 = vmul.f32 %v1718, %v1793
  %v1796 = vmul.f32 %v1723, %v1793
  %v1797 = vmul.f32 %v1728, %v1793
  %v1798 = vmul.f32 %v1733, %v1793
  %v1799 = vmul.f32 %v1738, %v1793
  %v1800 = vmul.f32 %v1743, %v1793
  %v1801 = vmul.f32 %v1748, %v1793
  %v1802 = vmul.f32 %v1753, %v1793
  %v1803 = vmul.f32 %v1758, %v1793
  %v1804 = vmul.f32 %v1763, %v1793
  %v1805 = vmul.f32 %v1768, %v1793
  %v1806 = vmul.f32 %v1773, %v1793
  %v1807 = vmul.f32 %v1778, %v1793
  %v1808 = vmul.f32 %v1783, %v1793
  %v1809 = vmul.f32 %v1788, %v1793
  %1810 = vset.pattern.permute.xlu0 1
  %1811 = vperm.xlu0 %1810, %v1692
  %v1812 = vpop.permute.xlu0 %1811
  %1814 = vset.pattern.permute.xlu0 1
  %1815 = vperm.xlu0 %1814, %v1693
  %v1816 = vpop.permute.xlu0 %1815
  %1818 = vset.pattern.permute.xlu0 1
  %1819 = vperm.xlu0 %1818, %v1694
  %v1820 = vpop.permute.xlu0 %1819
  %1822 = vset.pattern.permute.xlu0 1
  %1823 = vperm.xlu0 %1822, %v1695
  %v1824 = vpop.permute.xlu0 %1823
  %1826 = vset.pattern.permute.xlu0 1
  %1827 = vperm.xlu0 %1826, %v1696
  %v1828 = vpop.permute.xlu0 %1827
  %1830 = vset.pattern.permute.xlu0 1
  %1831 = vperm.xlu0 %1830, %v1697
  %v1832 = vpop.permute.xlu0 %1831
  %1834 = vset.pattern.permute.xlu0 1
  %1835 = vperm.xlu0 %1834, %v1698
  %v1836 = vpop.permute.xlu0 %1835
  %1838 = vset.pattern.permute.xlu0 1
  %1839 = vperm.xlu0 %1838, %v1699
  %v1840 = vpop.permute.xlu0 %1839
  %1842 = vset.pattern.permute.xlu0 1
  %1843 = vperm.xlu0 %1842, %v1700
  %v1844 = vpop.permute.xlu0 %1843
  %1846 = vset.pattern.permute.xlu0 1
  %1847 = vperm.xlu0 %1846, %v1701
  %v1848 = vpop.permute.xlu0 %1847
  %1850 = vset.pattern.permute.xlu0 1
  %1851 = vperm.xlu0 %1850, %v1702
  %v1852 = vpop.permute.xlu0 %1851
  %1854 = vset.pattern.permute.xlu0 1
  %1855 = vperm.xlu0 %1854, %v1703
  %v1856 = vpop.permute.xlu0 %1855
  %1858 = vset.pattern.permute.xlu0 1
  %1859 = vperm.xlu0 %1858, %v1704
  %v1860 = vpop.permute.xlu0 %1859
  %1862 = vset.pattern.permute.xlu0 1
  %1863 = vperm.xlu0 %1862, %v1705
  %v1864 = vpop.permute.xlu0 %1863
  %1866 = vset.pattern.permute.xlu0 1
  %1867 = vperm.xlu0 %1866, %v1706
  %v1868 = vpop.permute.xlu0 %1867
  %1870 = vset.pattern.permute.xlu0 1
  %1871 = vperm.xlu0 %1870, %v1707
  %v1872 = vpop.permute.xlu0 %1871
  %v1874 = vlaneseq
  %v1875 = vshrl.u32 %v1874, 7
  %v1876 = vsub.s32 1, %v1875
  %v1877 = vrot.slane %v1709, %v1876
  %v1878 = vmul.f32 %v1812, %v1877
  %v1879 = vmul.f32 %v1816, %v1877
  %v1880 = vmul.f32 %v1820, %v1877
  %v1881 = vmul.f32 %v1824, %v1877
  %v1882 = vmul.f32 %v1828, %v1877
  %v1883 = vmul.f32 %v1832, %v1877
  %v1884 = vmul.f32 %v1836, %v1877
  %v1885 = vmul.f32 %v1840, %v1877
  %v1886 = vmul.f32 %v1844, %v1877
  %v1887 = vmul.f32 %v1848, %v1877
  %v1888 = vmul.f32 %v1852, %v1877
  %v1889 = vmul.f32 %v1856, %v1877
  %v1890 = vmul.f32 %v1860, %v1877
  %v1891 = vmul.f32 %v1864, %v1877
  %v1892 = vmul.f32 %v1868, %v1877
  %v1893 = vmul.f32 %v1872, %v1877
  %v1894 = vadd.f32 %v1794, %v1878
  %v1895 = vadd.f32 %v1795, %v1879
  %v1896 = vadd.f32 %v1796, %v1880
  %v1897 = vadd.f32 %v1797, %v1881
  %v1898 = vadd.f32 %v1798, %v1882
  %v1899 = vadd.f32 %v1799, %v1883
  %v1900 = vadd.f32 %v1800, %v1884
  %v1901 = vadd.f32 %v1801, %v1885
  %v1902 = vadd.f32 %v1802, %v1886
  %v1903 = vadd.f32 %v1803, %v1887
  %v1904 = vadd.f32 %v1804, %v1888
  %v1905 = vadd.f32 %v1805, %v1889
  %v1906 = vadd.f32 %v1806, %v1890
  %v1907 = vadd.f32 %v1807, %v1891
  %v1908 = vadd.f32 %v1808, %v1892
  %v1909 = vadd.f32 %v1809, %v1893
  %1910 = vset.pattern.permute.xlu0 2
  %1911 = vperm.xlu0 %1910, %v1692
  %v1912 = vpop.permute.xlu0 %1911
  %1914 = vset.pattern.permute.xlu0 2
  %1915 = vperm.xlu0 %1914, %v1693
  %v1916 = vpop.permute.xlu0 %1915
  %1918 = vset.pattern.permute.xlu0 2
  %1919 = vperm.xlu0 %1918, %v1694
  %v1920 = vpop.permute.xlu0 %1919
  %1922 = vset.pattern.permute.xlu0 2
  %1923 = vperm.xlu0 %1922, %v1695
  %v1924 = vpop.permute.xlu0 %1923
  %1926 = vset.pattern.permute.xlu0 2
  %1927 = vperm.xlu0 %1926, %v1696
  %v1928 = vpop.permute.xlu0 %1927
  %1930 = vset.pattern.permute.xlu0 2
  %1931 = vperm.xlu0 %1930, %v1697
  %v1932 = vpop.permute.xlu0 %1931
  %1934 = vset.pattern.permute.xlu0 2
  %1935 = vperm.xlu0 %1934, %v1698
  %v1936 = vpop.permute.xlu0 %1935
  %1938 = vset.pattern.permute.xlu0 2
  %1939 = vperm.xlu0 %1938, %v1699
  %v1940 = vpop.permute.xlu0 %1939
  %1942 = vset.pattern.permute.xlu0 2
  %1943 = vperm.xlu0 %1942, %v1700
  %v1944 = vpop.permute.xlu0 %1943
  %1946 = vset.pattern.permute.xlu0 2
  %1947 = vperm.xlu0 %1946, %v1701
  %v1948 = vpop.permute.xlu0 %1947
  %1950 = vset.pattern.permute.xlu0 2
  %1951 = vperm.xlu0 %1950, %v1702
  %v1952 = vpop.permute.xlu0 %1951
  %1954 = vset.pattern.permute.xlu0 2
  %1955 = vperm.xlu0 %1954, %v1703
  %v1956 = vpop.permute.xlu0 %1955
  %1958 = vset.pattern.permute.xlu0 2
  %1959 = vperm.xlu0 %1958, %v1704
  %v1960 = vpop.permute.xlu0 %1959
  %1962 = vset.pattern.permute.xlu0 2
  %1963 = vperm.xlu0 %1962, %v1705
  %v1964 = vpop.permute.xlu0 %1963
  %1966 = vset.pattern.permute.xlu0 2
  %1967 = vperm.xlu0 %1966, %v1706
  %v1968 = vpop.permute.xlu0 %1967
  %1970 = vset.pattern.permute.xlu0 2
  %1971 = vperm.xlu0 %1970, %v1707
  %v1972 = vpop.permute.xlu0 %1971
  %v1974 = vlaneseq
  %v1975 = vshrl.u32 %v1974, 7
  %v1976 = vsub.s32 2, %v1975
  %v1977 = vrot.slane %v1709, %v1976
  %v1978 = vmul.f32 %v1912, %v1977
  %v1979 = vmul.f32 %v1916, %v1977
  %v1980 = vmul.f32 %v1920, %v1977
  %v1981 = vmul.f32 %v1924, %v1977
  %v1982 = vmul.f32 %v1928, %v1977
  %v1983 = vmul.f32 %v1932, %v1977
  %v1984 = vmul.f32 %v1936, %v1977
  %v1985 = vmul.f32 %v1940, %v1977
  %v1986 = vmul.f32 %v1944, %v1977
  %v1987 = vmul.f32 %v1948, %v1977
  %v1988 = vmul.f32 %v1952, %v1977
  %v1989 = vmul.f32 %v1956, %v1977
  %v1990 = vmul.f32 %v1960, %v1977
  %v1991 = vmul.f32 %v1964, %v1977
  %v1992 = vmul.f32 %v1968, %v1977
  %v1993 = vmul.f32 %v1972, %v1977
  %v1994 = vadd.f32 %v1894, %v1978
  %v1995 = vadd.f32 %v1895, %v1979
  %v1996 = vadd.f32 %v1896, %v1980
  %v1997 = vadd.f32 %v1897, %v1981
  %v1998 = vadd.f32 %v1898, %v1982
  %v1999 = vadd.f32 %v1899, %v1983
  %v2000 = vadd.f32 %v1900, %v1984
  %v2001 = vadd.f32 %v1901, %v1985
  %v2002 = vadd.f32 %v1902, %v1986
  %v2003 = vadd.f32 %v1903, %v1987
  %v2004 = vadd.f32 %v1904, %v1988
  %v2005 = vadd.f32 %v1905, %v1989
  %v2006 = vadd.f32 %v1906, %v1990
  %v2007 = vadd.f32 %v1907, %v1991
  %v2008 = vadd.f32 %v1908, %v1992
  %v2009 = vadd.f32 %v1909, %v1993
  %2010 = vset.pattern.permute.xlu0 3
  %2011 = vperm.xlu0 %2010, %v1692
  %v2012 = vpop.permute.xlu0 %2011
  %2014 = vset.pattern.permute.xlu0 3
  %2015 = vperm.xlu0 %2014, %v1693
  %v2016 = vpop.permute.xlu0 %2015
  %2018 = vset.pattern.permute.xlu0 3
  %2019 = vperm.xlu0 %2018, %v1694
  %v2020 = vpop.permute.xlu0 %2019
  %2022 = vset.pattern.permute.xlu0 3
  %2023 = vperm.xlu0 %2022, %v1695
  %v2024 = vpop.permute.xlu0 %2023
  %2026 = vset.pattern.permute.xlu0 3
  %2027 = vperm.xlu0 %2026, %v1696
  %v2028 = vpop.permute.xlu0 %2027
  %2030 = vset.pattern.permute.xlu0 3
  %2031 = vperm.xlu0 %2030, %v1697
  %v2032 = vpop.permute.xlu0 %2031
  %2034 = vset.pattern.permute.xlu0 3
  %2035 = vperm.xlu0 %2034, %v1698
  %v2036 = vpop.permute.xlu0 %2035
  %2038 = vset.pattern.permute.xlu0 3
  %2039 = vperm.xlu0 %2038, %v1699
  %v2040 = vpop.permute.xlu0 %2039
  %2042 = vset.pattern.permute.xlu0 3
  %2043 = vperm.xlu0 %2042, %v1700
  %v2044 = vpop.permute.xlu0 %2043
  %2046 = vset.pattern.permute.xlu0 3
  %2047 = vperm.xlu0 %2046, %v1701
  %v2048 = vpop.permute.xlu0 %2047
  %2050 = vset.pattern.permute.xlu0 3
  %2051 = vperm.xlu0 %2050, %v1702
  %v2052 = vpop.permute.xlu0 %2051
  %2054 = vset.pattern.permute.xlu0 3
  %2055 = vperm.xlu0 %2054, %v1703
  %v2056 = vpop.permute.xlu0 %2055
  %2058 = vset.pattern.permute.xlu0 3
  %2059 = vperm.xlu0 %2058, %v1704
  %v2060 = vpop.permute.xlu0 %2059
  %2062 = vset.pattern.permute.xlu0 3
  %2063 = vperm.xlu0 %2062, %v1705
  %v2064 = vpop.permute.xlu0 %2063
  %2066 = vset.pattern.permute.xlu0 3
  %2067 = vperm.xlu0 %2066, %v1706
  %v2068 = vpop.permute.xlu0 %2067
  %2070 = vset.pattern.permute.xlu0 3
  %2071 = vperm.xlu0 %2070, %v1707
  %v2072 = vpop.permute.xlu0 %2071
  %v2074 = vlaneseq
  %v2075 = vshrl.u32 %v2074, 7
  %v2076 = vsub.s32 3, %v2075
  %v2077 = vrot.slane %v1709, %v2076
  %v2078 = vmul.f32 %v2012, %v2077
  %v2079 = vmul.f32 %v2016, %v2077
  %v2080 = vmul.f32 %v2020, %v2077
  %v2081 = vmul.f32 %v2024, %v2077
  %v2082 = vmul.f32 %v2028, %v2077
  %v2083 = vmul.f32 %v2032, %v2077
  %v2084 = vmul.f32 %v2036, %v2077
  %v2085 = vmul.f32 %v2040, %v2077
  %v2086 = vmul.f32 %v2044, %v2077
  %v2087 = vmul.f32 %v2048, %v2077
  %v2088 = vmul.f32 %v2052, %v2077
  %v2089 = vmul.f32 %v2056, %v2077
  %v2090 = vmul.f32 %v2060, %v2077
  %v2091 = vmul.f32 %v2064, %v2077
  %v2092 = vmul.f32 %v2068, %v2077
  %v2093 = vmul.f32 %v2072, %v2077
  %v2094 = vadd.f32 %v1994, %v2078
  %v2095 = vadd.f32 %v1995, %v2079
  %v2096 = vadd.f32 %v1996, %v2080
  %v2097 = vadd.f32 %v1997, %v2081
  %v2098 = vadd.f32 %v1998, %v2082
  %v2099 = vadd.f32 %v1999, %v2083
  %v2100 = vadd.f32 %v2000, %v2084
  %v2101 = vadd.f32 %v2001, %v2085
  %v2102 = vadd.f32 %v2002, %v2086
  %v2103 = vadd.f32 %v2003, %v2087
  %v2104 = vadd.f32 %v2004, %v2088
  %v2105 = vadd.f32 %v2005, %v2089
  %v2106 = vadd.f32 %v2006, %v2090
  %v2107 = vadd.f32 %v2007, %v2091
  %v2108 = vadd.f32 %v2008, %v2092
  %v2109 = vadd.f32 %v2009, %v2093
  %2110 = vset.pattern.permute.xlu0 4
  %2111 = vperm.xlu0 %2110, %v1692
  %v2112 = vpop.permute.xlu0 %2111
  %2114 = vset.pattern.permute.xlu0 4
  %2115 = vperm.xlu0 %2114, %v1693
  %v2116 = vpop.permute.xlu0 %2115
  %2118 = vset.pattern.permute.xlu0 4
  %2119 = vperm.xlu0 %2118, %v1694
  %v2120 = vpop.permute.xlu0 %2119
  %2122 = vset.pattern.permute.xlu0 4
  %2123 = vperm.xlu0 %2122, %v1695
  %v2124 = vpop.permute.xlu0 %2123
  %2126 = vset.pattern.permute.xlu0 4
  %2127 = vperm.xlu0 %2126, %v1696
  %v2128 = vpop.permute.xlu0 %2127
  %2130 = vset.pattern.permute.xlu0 4
  %2131 = vperm.xlu0 %2130, %v1697
  %v2132 = vpop.permute.xlu0 %2131
  %2134 = vset.pattern.permute.xlu0 4
  %2135 = vperm.xlu0 %2134, %v1698
  %v2136 = vpop.permute.xlu0 %2135
  %2138 = vset.pattern.permute.xlu0 4
  %2139 = vperm.xlu0 %2138, %v1699
  %v2140 = vpop.permute.xlu0 %2139
  %2142 = vset.pattern.permute.xlu0 4
  %2143 = vperm.xlu0 %2142, %v1700
  %v2144 = vpop.permute.xlu0 %2143
  %2146 = vset.pattern.permute.xlu0 4
  %2147 = vperm.xlu0 %2146, %v1701
  %v2148 = vpop.permute.xlu0 %2147
  %2150 = vset.pattern.permute.xlu0 4
  %2151 = vperm.xlu0 %2150, %v1702
  %v2152 = vpop.permute.xlu0 %2151
  %2154 = vset.pattern.permute.xlu0 4
  %2155 = vperm.xlu0 %2154, %v1703
  %v2156 = vpop.permute.xlu0 %2155
  %2158 = vset.pattern.permute.xlu0 4
  %2159 = vperm.xlu0 %2158, %v1704
  %v2160 = vpop.permute.xlu0 %2159
  %2162 = vset.pattern.permute.xlu0 4
  %2163 = vperm.xlu0 %2162, %v1705
  %v2164 = vpop.permute.xlu0 %2163
  %2166 = vset.pattern.permute.xlu0 4
  %2167 = vperm.xlu0 %2166, %v1706
  %v2168 = vpop.permute.xlu0 %2167
  %2170 = vset.pattern.permute.xlu0 4
  %2171 = vperm.xlu0 %2170, %v1707
  %v2172 = vpop.permute.xlu0 %2171
  %v2174 = vlaneseq
  %v2175 = vshrl.u32 %v2174, 7
  %v2176 = vsub.s32 4, %v2175
  %v2177 = vrot.slane %v1709, %v2176
  %v2178 = vmul.f32 %v2112, %v2177
  %v2179 = vmul.f32 %v2116, %v2177
  %v2180 = vmul.f32 %v2120, %v2177
  %v2181 = vmul.f32 %v2124, %v2177
  %v2182 = vmul.f32 %v2128, %v2177
  %v2183 = vmul.f32 %v2132, %v2177
  %v2184 = vmul.f32 %v2136, %v2177
  %v2185 = vmul.f32 %v2140, %v2177
  %v2186 = vmul.f32 %v2144, %v2177
  %v2187 = vmul.f32 %v2148, %v2177
  %v2188 = vmul.f32 %v2152, %v2177
  %v2189 = vmul.f32 %v2156, %v2177
  %v2190 = vmul.f32 %v2160, %v2177
  %v2191 = vmul.f32 %v2164, %v2177
  %v2192 = vmul.f32 %v2168, %v2177
  %v2193 = vmul.f32 %v2172, %v2177
  %v2194 = vadd.f32 %v2094, %v2178
  %v2195 = vadd.f32 %v2095, %v2179
  %v2196 = vadd.f32 %v2096, %v2180
  %v2197 = vadd.f32 %v2097, %v2181
  %v2198 = vadd.f32 %v2098, %v2182
  %v2199 = vadd.f32 %v2099, %v2183
  %v2200 = vadd.f32 %v2100, %v2184
  %v2201 = vadd.f32 %v2101, %v2185
  %v2202 = vadd.f32 %v2102, %v2186
  %v2203 = vadd.f32 %v2103, %v2187
  %v2204 = vadd.f32 %v2104, %v2188
  %v2205 = vadd.f32 %v2105, %v2189
  %v2206 = vadd.f32 %v2106, %v2190
  %v2207 = vadd.f32 %v2107, %v2191
  %v2208 = vadd.f32 %v2108, %v2192
  %v2209 = vadd.f32 %v2109, %v2193
  %2210 = vset.pattern.permute.xlu0 5
  %2211 = vperm.xlu0 %2210, %v1692
  %v2212 = vpop.permute.xlu0 %2211
  %2214 = vset.pattern.permute.xlu0 5
  %2215 = vperm.xlu0 %2214, %v1693
  %v2216 = vpop.permute.xlu0 %2215
  %2218 = vset.pattern.permute.xlu0 5
  %2219 = vperm.xlu0 %2218, %v1694
  %v2220 = vpop.permute.xlu0 %2219
  %2222 = vset.pattern.permute.xlu0 5
  %2223 = vperm.xlu0 %2222, %v1695
  %v2224 = vpop.permute.xlu0 %2223
  %2226 = vset.pattern.permute.xlu0 5
  %2227 = vperm.xlu0 %2226, %v1696
  %v2228 = vpop.permute.xlu0 %2227
  %2230 = vset.pattern.permute.xlu0 5
  %2231 = vperm.xlu0 %2230, %v1697
  %v2232 = vpop.permute.xlu0 %2231
  %2234 = vset.pattern.permute.xlu0 5
  %2235 = vperm.xlu0 %2234, %v1698
  %v2236 = vpop.permute.xlu0 %2235
  %2238 = vset.pattern.permute.xlu0 5
  %2239 = vperm.xlu0 %2238, %v1699
  %v2240 = vpop.permute.xlu0 %2239
  %2242 = vset.pattern.permute.xlu0 5
  %2243 = vperm.xlu0 %2242, %v1700
  %v2244 = vpop.permute.xlu0 %2243
  %2246 = vset.pattern.permute.xlu0 5
  %2247 = vperm.xlu0 %2246, %v1701
  %v2248 = vpop.permute.xlu0 %2247
  %2250 = vset.pattern.permute.xlu0 5
  %2251 = vperm.xlu0 %2250, %v1702
  %v2252 = vpop.permute.xlu0 %2251
  %2254 = vset.pattern.permute.xlu0 5
  %2255 = vperm.xlu0 %2254, %v1703
  %v2256 = vpop.permute.xlu0 %2255
  %2258 = vset.pattern.permute.xlu0 5
  %2259 = vperm.xlu0 %2258, %v1704
  %v2260 = vpop.permute.xlu0 %2259
  %2262 = vset.pattern.permute.xlu0 5
  %2263 = vperm.xlu0 %2262, %v1705
  %v2264 = vpop.permute.xlu0 %2263
  %2266 = vset.pattern.permute.xlu0 5
  %2267 = vperm.xlu0 %2266, %v1706
  %v2268 = vpop.permute.xlu0 %2267
  %2270 = vset.pattern.permute.xlu0 5
  %2271 = vperm.xlu0 %2270, %v1707
  %v2272 = vpop.permute.xlu0 %2271
  %v2274 = vlaneseq
  %v2275 = vshrl.u32 %v2274, 7
  %v2276 = vsub.s32 5, %v2275
  %v2277 = vrot.slane %v1709, %v2276
  %v2278 = vmul.f32 %v2212, %v2277
  %v2279 = vmul.f32 %v2216, %v2277
  %v2280 = vmul.f32 %v2220, %v2277
  %v2281 = vmul.f32 %v2224, %v2277
  %v2282 = vmul.f32 %v2228, %v2277
  %v2283 = vmul.f32 %v2232, %v2277
  %v2284 = vmul.f32 %v2236, %v2277
  %v2285 = vmul.f32 %v2240, %v2277
  %v2286 = vmul.f32 %v2244, %v2277
  %v2287 = vmul.f32 %v2248, %v2277
  %v2288 = vmul.f32 %v2252, %v2277
  %v2289 = vmul.f32 %v2256, %v2277
  %v2290 = vmul.f32 %v2260, %v2277
  %v2291 = vmul.f32 %v2264, %v2277
  %v2292 = vmul.f32 %v2268, %v2277
  %v2293 = vmul.f32 %v2272, %v2277
  %v2294 = vadd.f32 %v2194, %v2278
  %v2295 = vadd.f32 %v2195, %v2279
  %v2296 = vadd.f32 %v2196, %v2280
  %v2297 = vadd.f32 %v2197, %v2281
  %v2298 = vadd.f32 %v2198, %v2282
  %v2299 = vadd.f32 %v2199, %v2283
  %v2300 = vadd.f32 %v2200, %v2284
  %v2301 = vadd.f32 %v2201, %v2285
  %v2302 = vadd.f32 %v2202, %v2286
  %v2303 = vadd.f32 %v2203, %v2287
  %v2304 = vadd.f32 %v2204, %v2288
  %v2305 = vadd.f32 %v2205, %v2289
  %v2306 = vadd.f32 %v2206, %v2290
  %v2307 = vadd.f32 %v2207, %v2291
  %v2308 = vadd.f32 %v2208, %v2292
  %v2309 = vadd.f32 %v2209, %v2293
  %2310 = vset.pattern.permute.xlu0 6
  %2311 = vperm.xlu0 %2310, %v1692
  %v2312 = vpop.permute.xlu0 %2311
  %2314 = vset.pattern.permute.xlu0 6
  %2315 = vperm.xlu0 %2314, %v1693
  %v2316 = vpop.permute.xlu0 %2315
  %2318 = vset.pattern.permute.xlu0 6
  %2319 = vperm.xlu0 %2318, %v1694
  %v2320 = vpop.permute.xlu0 %2319
  %2322 = vset.pattern.permute.xlu0 6
  %2323 = vperm.xlu0 %2322, %v1695
  %v2324 = vpop.permute.xlu0 %2323
  %2326 = vset.pattern.permute.xlu0 6
  %2327 = vperm.xlu0 %2326, %v1696
  %v2328 = vpop.permute.xlu0 %2327
  %2330 = vset.pattern.permute.xlu0 6
  %2331 = vperm.xlu0 %2330, %v1697
  %v2332 = vpop.permute.xlu0 %2331
  %2334 = vset.pattern.permute.xlu0 6
  %2335 = vperm.xlu0 %2334, %v1698
  %v2336 = vpop.permute.xlu0 %2335
  %2338 = vset.pattern.permute.xlu0 6
  %2339 = vperm.xlu0 %2338, %v1699
  %v2340 = vpop.permute.xlu0 %2339
  %2342 = vset.pattern.permute.xlu0 6
  %2343 = vperm.xlu0 %2342, %v1700
  %v2344 = vpop.permute.xlu0 %2343
  %2346 = vset.pattern.permute.xlu0 6
  %2347 = vperm.xlu0 %2346, %v1701
  %v2348 = vpop.permute.xlu0 %2347
  %2350 = vset.pattern.permute.xlu0 6
  %2351 = vperm.xlu0 %2350, %v1702
  %v2352 = vpop.permute.xlu0 %2351
  %2354 = vset.pattern.permute.xlu0 6
  %2355 = vperm.xlu0 %2354, %v1703
  %v2356 = vpop.permute.xlu0 %2355
  %2358 = vset.pattern.permute.xlu0 6
  %2359 = vperm.xlu0 %2358, %v1704
  %v2360 = vpop.permute.xlu0 %2359
  %2362 = vset.pattern.permute.xlu0 6
  %2363 = vperm.xlu0 %2362, %v1705
  %v2364 = vpop.permute.xlu0 %2363
  %2366 = vset.pattern.permute.xlu0 6
  %2367 = vperm.xlu0 %2366, %v1706
  %v2368 = vpop.permute.xlu0 %2367
  %2370 = vset.pattern.permute.xlu0 6
  %2371 = vperm.xlu0 %2370, %v1707
  %v2372 = vpop.permute.xlu0 %2371
  %v2374 = vlaneseq
  %v2375 = vshrl.u32 %v2374, 7
  %v2376 = vsub.s32 6, %v2375
  %v2377 = vrot.slane %v1709, %v2376
  %v2378 = vmul.f32 %v2312, %v2377
  %v2379 = vmul.f32 %v2316, %v2377
  %v2380 = vmul.f32 %v2320, %v2377
  %v2381 = vmul.f32 %v2324, %v2377
  %v2382 = vmul.f32 %v2328, %v2377
  %v2383 = vmul.f32 %v2332, %v2377
  %v2384 = vmul.f32 %v2336, %v2377
  %v2385 = vmul.f32 %v2340, %v2377
  %v2386 = vmul.f32 %v2344, %v2377
  %v2387 = vmul.f32 %v2348, %v2377
  %v2388 = vmul.f32 %v2352, %v2377
  %v2389 = vmul.f32 %v2356, %v2377
  %v2390 = vmul.f32 %v2360, %v2377
  %v2391 = vmul.f32 %v2364, %v2377
  %v2392 = vmul.f32 %v2368, %v2377
  %v2393 = vmul.f32 %v2372, %v2377
  %v2394 = vadd.f32 %v2294, %v2378
  %v2395 = vadd.f32 %v2295, %v2379
  %v2396 = vadd.f32 %v2296, %v2380
  %v2397 = vadd.f32 %v2297, %v2381
  %v2398 = vadd.f32 %v2298, %v2382
  %v2399 = vadd.f32 %v2299, %v2383
  %v2400 = vadd.f32 %v2300, %v2384
  %v2401 = vadd.f32 %v2301, %v2385
  %v2402 = vadd.f32 %v2302, %v2386
  %v2403 = vadd.f32 %v2303, %v2387
  %v2404 = vadd.f32 %v2304, %v2388
  %v2405 = vadd.f32 %v2305, %v2389
  %v2406 = vadd.f32 %v2306, %v2390
  %v2407 = vadd.f32 %v2307, %v2391
  %v2408 = vadd.f32 %v2308, %v2392
  %v2409 = vadd.f32 %v2309, %v2393
  %2410 = vset.pattern.permute.xlu0 7
  %2411 = vperm.xlu0 %2410, %v1692
  %v2412 = vpop.permute.xlu0 %2411
  %2414 = vset.pattern.permute.xlu0 7
  %2415 = vperm.xlu0 %2414, %v1693
  %v2416 = vpop.permute.xlu0 %2415
  %2418 = vset.pattern.permute.xlu0 7
  %2419 = vperm.xlu0 %2418, %v1694
  %v2420 = vpop.permute.xlu0 %2419
  %2422 = vset.pattern.permute.xlu0 7
  %2423 = vperm.xlu0 %2422, %v1695
  %v2424 = vpop.permute.xlu0 %2423
  %2426 = vset.pattern.permute.xlu0 7
  %2427 = vperm.xlu0 %2426, %v1696
  %v2428 = vpop.permute.xlu0 %2427
  %2430 = vset.pattern.permute.xlu0 7
  %2431 = vperm.xlu0 %2430, %v1697
  %v2432 = vpop.permute.xlu0 %2431
  %2434 = vset.pattern.permute.xlu0 7
  %2435 = vperm.xlu0 %2434, %v1698
  %v2436 = vpop.permute.xlu0 %2435
  %2438 = vset.pattern.permute.xlu0 7
  %2439 = vperm.xlu0 %2438, %v1699
  %v2440 = vpop.permute.xlu0 %2439
  %2442 = vset.pattern.permute.xlu0 7
  %2443 = vperm.xlu0 %2442, %v1700
  %v2444 = vpop.permute.xlu0 %2443
  %2446 = vset.pattern.permute.xlu0 7
  %2447 = vperm.xlu0 %2446, %v1701
  %v2448 = vpop.permute.xlu0 %2447
  %2450 = vset.pattern.permute.xlu0 7
  %2451 = vperm.xlu0 %2450, %v1702
  %v2452 = vpop.permute.xlu0 %2451
  %2454 = vset.pattern.permute.xlu0 7
  %2455 = vperm.xlu0 %2454, %v1703
  %v2456 = vpop.permute.xlu0 %2455
  %2458 = vset.pattern.permute.xlu0 7
  %2459 = vperm.xlu0 %2458, %v1704
  %v2460 = vpop.permute.xlu0 %2459
  %2462 = vset.pattern.permute.xlu0 7
  %2463 = vperm.xlu0 %2462, %v1705
  %v2464 = vpop.permute.xlu0 %2463
  %2466 = vset.pattern.permute.xlu0 7
  %2467 = vperm.xlu0 %2466, %v1706
  %v2468 = vpop.permute.xlu0 %2467
  %2470 = vset.pattern.permute.xlu0 7
  %2471 = vperm.xlu0 %2470, %v1707
  %v2472 = vpop.permute.xlu0 %2471
  %v2474 = vlaneseq
  %v2475 = vshrl.u32 %v2474, 7
  %v2476 = vsub.s32 7, %v2475
  %v2477 = vrot.slane %v1709, %v2476
  %v2478 = vmul.f32 %v2412, %v2477
  %v2479 = vmul.f32 %v2416, %v2477
  %v2480 = vmul.f32 %v2420, %v2477
  %v2481 = vmul.f32 %v2424, %v2477
  %v2482 = vmul.f32 %v2428, %v2477
  %v2483 = vmul.f32 %v2432, %v2477
  %v2484 = vmul.f32 %v2436, %v2477
  %v2485 = vmul.f32 %v2440, %v2477
  %v2486 = vmul.f32 %v2444, %v2477
  %v2487 = vmul.f32 %v2448, %v2477
  %v2488 = vmul.f32 %v2452, %v2477
  %v2489 = vmul.f32 %v2456, %v2477
  %v2490 = vmul.f32 %v2460, %v2477
  %v2491 = vmul.f32 %v2464, %v2477
  %v2492 = vmul.f32 %v2468, %v2477
  %v2493 = vmul.f32 %v2472, %v2477
  %v2494 = vadd.f32 %v2394, %v2478
  %v2495 = vadd.f32 %v2395, %v2479
  %v2496 = vadd.f32 %v2396, %v2480
  %v2497 = vadd.f32 %v2397, %v2481
  %v2498 = vadd.f32 %v2398, %v2482
  %v2499 = vadd.f32 %v2399, %v2483
  %v2500 = vadd.f32 %v2400, %v2484
  %v2501 = vadd.f32 %v2401, %v2485
  %v2502 = vadd.f32 %v2402, %v2486
  %v2503 = vadd.f32 %v2403, %v2487
  %v2504 = vadd.f32 %v2404, %v2488
  %v2505 = vadd.f32 %v2405, %v2489
  %v2506 = vadd.f32 %v2406, %v2490
  %v2507 = vadd.f32 %v2407, %v2491
  %v2508 = vadd.f32 %v2408, %v2492
  %v2509 = vadd.f32 %v2409, %v2493
  %v2510 = vadd.f32 %v1276, %v2494
  %v2511 = vadd.f32 %v1277, %v2495
  %v2512 = vadd.f32 %v1278, %v2496
  %v2513 = vadd.f32 %v1279, %v2497
  %v2514 = vadd.f32 %v1280, %v2498
  %v2515 = vadd.f32 %v1281, %v2499
  %v2516 = vadd.f32 %v1282, %v2500
  %v2517 = vadd.f32 %v1283, %v2501
  %v2518 = vadd.f32 %v1284, %v2502
  %v2519 = vadd.f32 %v1285, %v2503
  %v2520 = vadd.f32 %v1286, %v2504
  %v2521 = vadd.f32 %v1287, %v2505
  %v2522 = vadd.f32 %v1288, %v2506
  %v2523 = vadd.f32 %v1289, %v2507
  %v2524 = vadd.f32 %v1290, %v2508
  %v2525 = vadd.f32 %v1291, %v2509
  %v2526 = vld [vmem:[%s0 + $0x2] sm:$0xff]
  %v2527 = vld [vmem:[%s0 + $0xa] sm:$0x3f]
  %v2528 = vld [vmem:[%s0 + $0x12] sm:$0xff]
  %v2529 = vld [vmem:[%s0 + $0x1a] sm:$0x3f]
  %v2530 = vld [vmem:[%s0 + $0x22] sm:$0xff]
  %v2531 = vld [vmem:[%s0 + $0x2a] sm:$0x3f]
  %v2532 = vld [vmem:[%s0 + $0x32] sm:$0xff]
  %v2533 = vld [vmem:[%s0 + $0x3a] sm:$0x3f]
  %v2534 = vld [vmem:[%s0 + $0x42] sm:$0xff]
  %v2535 = vld [vmem:[%s0 + $0x4a] sm:$0x3f]
  %v2536 = vld [vmem:[%s0 + $0x52] sm:$0xff]
  %v2537 = vld [vmem:[%s0 + $0x5a] sm:$0x3f]
  %v2538 = vld [vmem:[%s0 + $0x62] sm:$0xff]
  %v2539 = vld [vmem:[%s0 + $0x6a] sm:$0x3f]
  %v2540 = vld [vmem:[%s0 + $0x72] sm:$0xff]
  %v2541 = vld [vmem:[%s0 + $0x7a] sm:$0x3f]
  %2543 = vset.pattern.permute.xlu0 0
  %2544 = vperm.xlu0 %2543, %v2526
  %v2545 = vpop.permute.xlu0 %2544
  %2548 = vset.pattern.permute.xlu0 0
  %2549 = vperm.xlu0 %2548, %v2527
  %v2550 = vpop.permute.xlu0 %2549
  %2553 = vset.pattern.permute.xlu0 0
  %2554 = vperm.xlu0 %2553, %v2528
  %v2555 = vpop.permute.xlu0 %2554
  %2558 = vset.pattern.permute.xlu0 0
  %2559 = vperm.xlu0 %2558, %v2529
  %v2560 = vpop.permute.xlu0 %2559
  %2563 = vset.pattern.permute.xlu0 0
  %2564 = vperm.xlu0 %2563, %v2530
  %v2565 = vpop.permute.xlu0 %2564
  %2568 = vset.pattern.permute.xlu0 0
  %2569 = vperm.xlu0 %2568, %v2531
  %v2570 = vpop.permute.xlu0 %2569
  %2573 = vset.pattern.permute.xlu0 0
  %2574 = vperm.xlu0 %2573, %v2532
  %v2575 = vpop.permute.xlu0 %2574
  %2578 = vset.pattern.permute.xlu0 0
  %2579 = vperm.xlu0 %2578, %v2533
  %v2580 = vpop.permute.xlu0 %2579
  %2583 = vset.pattern.permute.xlu0 0
  %2584 = vperm.xlu0 %2583, %v2534
  %v2585 = vpop.permute.xlu0 %2584
  %2588 = vset.pattern.permute.xlu0 0
  %2589 = vperm.xlu0 %2588, %v2535
  %v2590 = vpop.permute.xlu0 %2589
  %2593 = vset.pattern.permute.xlu0 0
  %2594 = vperm.xlu0 %2593, %v2536
  %v2595 = vpop.permute.xlu0 %2594
  %2598 = vset.pattern.permute.xlu0 0
  %2599 = vperm.xlu0 %2598, %v2537
  %v2600 = vpop.permute.xlu0 %2599
  %2603 = vset.pattern.permute.xlu0 0
  %2604 = vperm.xlu0 %2603, %v2538
  %v2605 = vpop.permute.xlu0 %2604
  %2608 = vset.pattern.permute.xlu0 0
  %2609 = vperm.xlu0 %2608, %v2539
  %v2610 = vpop.permute.xlu0 %2609
  %2613 = vset.pattern.permute.xlu0 0
  %2614 = vperm.xlu0 %2613, %v2540
  %v2615 = vpop.permute.xlu0 %2614
  %2618 = vset.pattern.permute.xlu0 0
  %2619 = vperm.xlu0 %2618, %v2541
  %v2620 = vpop.permute.xlu0 %2619
  %v2622 = vmul.f32 %v2545, %v136
  %v2623 = vmul.f32 %v2550, %v136
  %v2624 = vmul.f32 %v2555, %v136
  %v2625 = vmul.f32 %v2560, %v136
  %v2626 = vmul.f32 %v2565, %v136
  %v2627 = vmul.f32 %v2570, %v136
  %v2628 = vmul.f32 %v2575, %v136
  %v2629 = vmul.f32 %v2580, %v136
  %v2630 = vmul.f32 %v2585, %v136
  %v2631 = vmul.f32 %v2590, %v136
  %v2632 = vmul.f32 %v2595, %v136
  %v2633 = vmul.f32 %v2600, %v136
  %v2634 = vmul.f32 %v2605, %v136
  %v2635 = vmul.f32 %v2610, %v136
  %v2636 = vmul.f32 %v2615, %v136
  %v2637 = vmul.f32 %v2620, %v136
  %2638 = vset.pattern.permute.xlu0 1
  %2639 = vperm.xlu0 %2638, %v2526
  %v2640 = vpop.permute.xlu0 %2639
  %2642 = vset.pattern.permute.xlu0 1
  %2643 = vperm.xlu0 %2642, %v2527
  %v2644 = vpop.permute.xlu0 %2643
  %2646 = vset.pattern.permute.xlu0 1
  %2647 = vperm.xlu0 %2646, %v2528
  %v2648 = vpop.permute.xlu0 %2647
  %2650 = vset.pattern.permute.xlu0 1
  %2651 = vperm.xlu0 %2650, %v2529
  %v2652 = vpop.permute.xlu0 %2651
  %2654 = vset.pattern.permute.xlu0 1
  %2655 = vperm.xlu0 %2654, %v2530
  %v2656 = vpop.permute.xlu0 %2655
  %2658 = vset.pattern.permute.xlu0 1
  %2659 = vperm.xlu0 %2658, %v2531
  %v2660 = vpop.permute.xlu0 %2659
  %2662 = vset.pattern.permute.xlu0 1
  %2663 = vperm.xlu0 %2662, %v2532
  %v2664 = vpop.permute.xlu0 %2663
  %2666 = vset.pattern.permute.xlu0 1
  %2667 = vperm.xlu0 %2666, %v2533
  %v2668 = vpop.permute.xlu0 %2667
  %2670 = vset.pattern.permute.xlu0 1
  %2671 = vperm.xlu0 %2670, %v2534
  %v2672 = vpop.permute.xlu0 %2671
  %2674 = vset.pattern.permute.xlu0 1
  %2675 = vperm.xlu0 %2674, %v2535
  %v2676 = vpop.permute.xlu0 %2675
  %2678 = vset.pattern.permute.xlu0 1
  %2679 = vperm.xlu0 %2678, %v2536
  %v2680 = vpop.permute.xlu0 %2679
  %2682 = vset.pattern.permute.xlu0 1
  %2683 = vperm.xlu0 %2682, %v2537
  %v2684 = vpop.permute.xlu0 %2683
  %2686 = vset.pattern.permute.xlu0 1
  %2687 = vperm.xlu0 %2686, %v2538
  %v2688 = vpop.permute.xlu0 %2687
  %2690 = vset.pattern.permute.xlu0 1
  %2691 = vperm.xlu0 %2690, %v2539
  %v2692 = vpop.permute.xlu0 %2691
  %2694 = vset.pattern.permute.xlu0 1
  %2695 = vperm.xlu0 %2694, %v2540
  %v2696 = vpop.permute.xlu0 %2695
  %2698 = vset.pattern.permute.xlu0 1
  %2699 = vperm.xlu0 %2698, %v2541
  %v2700 = vpop.permute.xlu0 %2699
  %v2702 = vmul.f32 %v2640, %v220
  %v2703 = vmul.f32 %v2644, %v220
  %v2704 = vmul.f32 %v2648, %v220
  %v2705 = vmul.f32 %v2652, %v220
  %v2706 = vmul.f32 %v2656, %v220
  %v2707 = vmul.f32 %v2660, %v220
  %v2708 = vmul.f32 %v2664, %v220
  %v2709 = vmul.f32 %v2668, %v220
  %v2710 = vmul.f32 %v2672, %v220
  %v2711 = vmul.f32 %v2676, %v220
  %v2712 = vmul.f32 %v2680, %v220
  %v2713 = vmul.f32 %v2684, %v220
  %v2714 = vmul.f32 %v2688, %v220
  %v2715 = vmul.f32 %v2692, %v220
  %v2716 = vmul.f32 %v2696, %v220
  %v2717 = vmul.f32 %v2700, %v220
  %v2718 = vadd.f32 %v2622, %v2702
  %v2719 = vadd.f32 %v2623, %v2703
  %v2720 = vadd.f32 %v2624, %v2704
  %v2721 = vadd.f32 %v2625, %v2705
  %v2722 = vadd.f32 %v2626, %v2706
  %v2723 = vadd.f32 %v2627, %v2707
  %v2724 = vadd.f32 %v2628, %v2708
  %v2725 = vadd.f32 %v2629, %v2709
  %v2726 = vadd.f32 %v2630, %v2710
  %v2727 = vadd.f32 %v2631, %v2711
  %v2728 = vadd.f32 %v2632, %v2712
  %v2729 = vadd.f32 %v2633, %v2713
  %v2730 = vadd.f32 %v2634, %v2714
  %v2731 = vadd.f32 %v2635, %v2715
  %v2732 = vadd.f32 %v2636, %v2716
  %v2733 = vadd.f32 %v2637, %v2717
  %2734 = vset.pattern.permute.xlu0 2
  %2735 = vperm.xlu0 %2734, %v2526
  %v2736 = vpop.permute.xlu0 %2735
  %2738 = vset.pattern.permute.xlu0 2
  %2739 = vperm.xlu0 %2738, %v2527
  %v2740 = vpop.permute.xlu0 %2739
  %2742 = vset.pattern.permute.xlu0 2
  %2743 = vperm.xlu0 %2742, %v2528
  %v2744 = vpop.permute.xlu0 %2743
  %2746 = vset.pattern.permute.xlu0 2
  %2747 = vperm.xlu0 %2746, %v2529
  %v2748 = vpop.permute.xlu0 %2747
  %2750 = vset.pattern.permute.xlu0 2
  %2751 = vperm.xlu0 %2750, %v2530
  %v2752 = vpop.permute.xlu0 %2751
  %2754 = vset.pattern.permute.xlu0 2
  %2755 = vperm.xlu0 %2754, %v2531
  %v2756 = vpop.permute.xlu0 %2755
  %2758 = vset.pattern.permute.xlu0 2
  %2759 = vperm.xlu0 %2758, %v2532
  %v2760 = vpop.permute.xlu0 %2759
  %2762 = vset.pattern.permute.xlu0 2
  %2763 = vperm.xlu0 %2762, %v2533
  %v2764 = vpop.permute.xlu0 %2763
  %2766 = vset.pattern.permute.xlu0 2
  %2767 = vperm.xlu0 %2766, %v2534
  %v2768 = vpop.permute.xlu0 %2767
  %2770 = vset.pattern.permute.xlu0 2
  %2771 = vperm.xlu0 %2770, %v2535
  %v2772 = vpop.permute.xlu0 %2771
  %2774 = vset.pattern.permute.xlu0 2
  %2775 = vperm.xlu0 %2774, %v2536
  %v2776 = vpop.permute.xlu0 %2775
  %2778 = vset.pattern.permute.xlu0 2
  %2779 = vperm.xlu0 %2778, %v2537
  %v2780 = vpop.permute.xlu0 %2779
  %2782 = vset.pattern.permute.xlu0 2
  %2783 = vperm.xlu0 %2782, %v2538
  %v2784 = vpop.permute.xlu0 %2783
  %2786 = vset.pattern.permute.xlu0 2
  %2787 = vperm.xlu0 %2786, %v2539
  %v2788 = vpop.permute.xlu0 %2787
  %2790 = vset.pattern.permute.xlu0 2
  %2791 = vperm.xlu0 %2790, %v2540
  %v2792 = vpop.permute.xlu0 %2791
  %2794 = vset.pattern.permute.xlu0 2
  %2795 = vperm.xlu0 %2794, %v2541
  %v2796 = vpop.permute.xlu0 %2795
  %v2798 = vmul.f32 %v2736, %v320
  %v2799 = vmul.f32 %v2740, %v320
  %v2800 = vmul.f32 %v2744, %v320
  %v2801 = vmul.f32 %v2748, %v320
  %v2802 = vmul.f32 %v2752, %v320
  %v2803 = vmul.f32 %v2756, %v320
  %v2804 = vmul.f32 %v2760, %v320
  %v2805 = vmul.f32 %v2764, %v320
  %v2806 = vmul.f32 %v2768, %v320
  %v2807 = vmul.f32 %v2772, %v320
  %v2808 = vmul.f32 %v2776, %v320
  %v2809 = vmul.f32 %v2780, %v320
  %v2810 = vmul.f32 %v2784, %v320
  %v2811 = vmul.f32 %v2788, %v320
  %v2812 = vmul.f32 %v2792, %v320
  %v2813 = vmul.f32 %v2796, %v320
  %v2814 = vadd.f32 %v2718, %v2798
  %v2815 = vadd.f32 %v2719, %v2799
  %v2816 = vadd.f32 %v2720, %v2800
  %v2817 = vadd.f32 %v2721, %v2801
  %v2818 = vadd.f32 %v2722, %v2802
  %v2819 = vadd.f32 %v2723, %v2803
  %v2820 = vadd.f32 %v2724, %v2804
  %v2821 = vadd.f32 %v2725, %v2805
  %v2822 = vadd.f32 %v2726, %v2806
  %v2823 = vadd.f32 %v2727, %v2807
  %v2824 = vadd.f32 %v2728, %v2808
  %v2825 = vadd.f32 %v2729, %v2809
  %v2826 = vadd.f32 %v2730, %v2810
  %v2827 = vadd.f32 %v2731, %v2811
  %v2828 = vadd.f32 %v2732, %v2812
  %v2829 = vadd.f32 %v2733, %v2813
  %2830 = vset.pattern.permute.xlu0 3
  %2831 = vperm.xlu0 %2830, %v2526
  %v2832 = vpop.permute.xlu0 %2831
  %2834 = vset.pattern.permute.xlu0 3
  %2835 = vperm.xlu0 %2834, %v2527
  %v2836 = vpop.permute.xlu0 %2835
  %2838 = vset.pattern.permute.xlu0 3
  %2839 = vperm.xlu0 %2838, %v2528
  %v2840 = vpop.permute.xlu0 %2839
  %2842 = vset.pattern.permute.xlu0 3
  %2843 = vperm.xlu0 %2842, %v2529
  %v2844 = vpop.permute.xlu0 %2843
  %2846 = vset.pattern.permute.xlu0 3
  %2847 = vperm.xlu0 %2846, %v2530
  %v2848 = vpop.permute.xlu0 %2847
  %2850 = vset.pattern.permute.xlu0 3
  %2851 = vperm.xlu0 %2850, %v2531
  %v2852 = vpop.permute.xlu0 %2851
  %2854 = vset.pattern.permute.xlu0 3
  %2855 = vperm.xlu0 %2854, %v2532
  %v2856 = vpop.permute.xlu0 %2855
  %2858 = vset.pattern.permute.xlu0 3
  %2859 = vperm.xlu0 %2858, %v2533
  %v2860 = vpop.permute.xlu0 %2859
  %2862 = vset.pattern.permute.xlu0 3
  %2863 = vperm.xlu0 %2862, %v2534
  %v2864 = vpop.permute.xlu0 %2863
  %2866 = vset.pattern.permute.xlu0 3
  %2867 = vperm.xlu0 %2866, %v2535
  %v2868 = vpop.permute.xlu0 %2867
  %2870 = vset.pattern.permute.xlu0 3
  %2871 = vperm.xlu0 %2870, %v2536
  %v2872 = vpop.permute.xlu0 %2871
  %2874 = vset.pattern.permute.xlu0 3
  %2875 = vperm.xlu0 %2874, %v2537
  %v2876 = vpop.permute.xlu0 %2875
  %2878 = vset.pattern.permute.xlu0 3
  %2879 = vperm.xlu0 %2878, %v2538
  %v2880 = vpop.permute.xlu0 %2879
  %2882 = vset.pattern.permute.xlu0 3
  %2883 = vperm.xlu0 %2882, %v2539
  %v2884 = vpop.permute.xlu0 %2883
  %2886 = vset.pattern.permute.xlu0 3
  %2887 = vperm.xlu0 %2886, %v2540
  %v2888 = vpop.permute.xlu0 %2887
  %2890 = vset.pattern.permute.xlu0 3
  %2891 = vperm.xlu0 %2890, %v2541
  %v2892 = vpop.permute.xlu0 %2891
  %v2894 = vmul.f32 %v2832, %v420
  %v2895 = vmul.f32 %v2836, %v420
  %v2896 = vmul.f32 %v2840, %v420
  %v2897 = vmul.f32 %v2844, %v420
  %v2898 = vmul.f32 %v2848, %v420
  %v2899 = vmul.f32 %v2852, %v420
  %v2900 = vmul.f32 %v2856, %v420
  %v2901 = vmul.f32 %v2860, %v420
  %v2902 = vmul.f32 %v2864, %v420
  %v2903 = vmul.f32 %v2868, %v420
  %v2904 = vmul.f32 %v2872, %v420
  %v2905 = vmul.f32 %v2876, %v420
  %v2906 = vmul.f32 %v2880, %v420
  %v2907 = vmul.f32 %v2884, %v420
  %v2908 = vmul.f32 %v2888, %v420
  %v2909 = vmul.f32 %v2892, %v420
  %v2910 = vadd.f32 %v2814, %v2894
  %v2911 = vadd.f32 %v2815, %v2895
  %v2912 = vadd.f32 %v2816, %v2896
  %v2913 = vadd.f32 %v2817, %v2897
  %v2914 = vadd.f32 %v2818, %v2898
  %v2915 = vadd.f32 %v2819, %v2899
  %v2916 = vadd.f32 %v2820, %v2900
  %v2917 = vadd.f32 %v2821, %v2901
  %v2918 = vadd.f32 %v2822, %v2902
  %v2919 = vadd.f32 %v2823, %v2903
  %v2920 = vadd.f32 %v2824, %v2904
  %v2921 = vadd.f32 %v2825, %v2905
  %v2922 = vadd.f32 %v2826, %v2906
  %v2923 = vadd.f32 %v2827, %v2907
  %v2924 = vadd.f32 %v2828, %v2908
  %v2925 = vadd.f32 %v2829, %v2909
  %v2926 = vadd.f32 %v2910, %v457
  %v2927 = vadd.f32 %v2911, %v457
  %v2928 = vadd.f32 %v2912, %v457
  %v2929 = vadd.f32 %v2913, %v457
  %v2930 = vadd.f32 %v2914, %v457
  %v2931 = vadd.f32 %v2915, %v457
  %v2932 = vadd.f32 %v2916, %v457
  %v2933 = vadd.f32 %v2917, %v457
  %v2934 = vadd.f32 %v2918, %v457
  %v2935 = vadd.f32 %v2919, %v457
  %v2936 = vadd.f32 %v2920, %v457
  %v2937 = vadd.f32 %v2921, %v457
  %v2938 = vadd.f32 %v2922, %v457
  %v2939 = vadd.f32 %v2923, %v457
  %v2940 = vadd.f32 %v2924, %v457
  %v2941 = vadd.f32 %v2925, %v457
  %s2942 = scalar_lea.vmem %s3, 16
  %v2943 = vld [vmem:[%s2942] sm:$0xff]
  %2945 = vset.pattern.permute.xlu0 0
  %2946 = vperm.xlu0 %2945, %v2926
  %v2947 = vpop.permute.xlu0 %2946
  %2950 = vset.pattern.permute.xlu0 0
  %2951 = vperm.xlu0 %2950, %v2927
  %v2952 = vpop.permute.xlu0 %2951
  %2955 = vset.pattern.permute.xlu0 0
  %2956 = vperm.xlu0 %2955, %v2928
  %v2957 = vpop.permute.xlu0 %2956
  %2960 = vset.pattern.permute.xlu0 0
  %2961 = vperm.xlu0 %2960, %v2929
  %v2962 = vpop.permute.xlu0 %2961
  %2965 = vset.pattern.permute.xlu0 0
  %2966 = vperm.xlu0 %2965, %v2930
  %v2967 = vpop.permute.xlu0 %2966
  %2970 = vset.pattern.permute.xlu0 0
  %2971 = vperm.xlu0 %2970, %v2931
  %v2972 = vpop.permute.xlu0 %2971
  %2975 = vset.pattern.permute.xlu0 0
  %2976 = vperm.xlu0 %2975, %v2932
  %v2977 = vpop.permute.xlu0 %2976
  %2980 = vset.pattern.permute.xlu0 0
  %2981 = vperm.xlu0 %2980, %v2933
  %v2982 = vpop.permute.xlu0 %2981
  %2985 = vset.pattern.permute.xlu0 0
  %2986 = vperm.xlu0 %2985, %v2934
  %v2987 = vpop.permute.xlu0 %2986
  %2990 = vset.pattern.permute.xlu0 0
  %2991 = vperm.xlu0 %2990, %v2935
  %v2992 = vpop.permute.xlu0 %2991
  %2995 = vset.pattern.permute.xlu0 0
  %2996 = vperm.xlu0 %2995, %v2936
  %v2997 = vpop.permute.xlu0 %2996
  %3000 = vset.pattern.permute.xlu0 0
  %3001 = vperm.xlu0 %3000, %v2937
  %v3002 = vpop.permute.xlu0 %3001
  %3005 = vset.pattern.permute.xlu0 0
  %3006 = vperm.xlu0 %3005, %v2938
  %v3007 = vpop.permute.xlu0 %3006
  %3010 = vset.pattern.permute.xlu0 0
  %3011 = vperm.xlu0 %3010, %v2939
  %v3012 = vpop.permute.xlu0 %3011
  %3015 = vset.pattern.permute.xlu0 0
  %3016 = vperm.xlu0 %3015, %v2940
  %v3017 = vpop.permute.xlu0 %3016
  %3020 = vset.pattern.permute.xlu0 0
  %3021 = vperm.xlu0 %3020, %v2941
  %v3022 = vpop.permute.xlu0 %3021
  %v3024 = vlaneseq
  %v3025 = vshrl.u32 %v3024, 7
  %v3026 = vsub.s32 0, %v3025
  %v3027 = vrot.slane %v2943, %v3026
  %v3028 = vmul.f32 %v2947, %v3027
  %v3029 = vmul.f32 %v2952, %v3027
  %v3030 = vmul.f32 %v2957, %v3027
  %v3031 = vmul.f32 %v2962, %v3027
  %v3032 = vmul.f32 %v2967, %v3027
  %v3033 = vmul.f32 %v2972, %v3027
  %v3034 = vmul.f32 %v2977, %v3027
  %v3035 = vmul.f32 %v2982, %v3027
  %v3036 = vmul.f32 %v2987, %v3027
  %v3037 = vmul.f32 %v2992, %v3027
  %v3038 = vmul.f32 %v2997, %v3027
  %v3039 = vmul.f32 %v3002, %v3027
  %v3040 = vmul.f32 %v3007, %v3027
  %v3041 = vmul.f32 %v3012, %v3027
  %v3042 = vmul.f32 %v3017, %v3027
  %v3043 = vmul.f32 %v3022, %v3027
  %3044 = vset.pattern.permute.xlu0 1
  %3045 = vperm.xlu0 %3044, %v2926
  %v3046 = vpop.permute.xlu0 %3045
  %3048 = vset.pattern.permute.xlu0 1
  %3049 = vperm.xlu0 %3048, %v2927
  %v3050 = vpop.permute.xlu0 %3049
  %3052 = vset.pattern.permute.xlu0 1
  %3053 = vperm.xlu0 %3052, %v2928
  %v3054 = vpop.permute.xlu0 %3053
  %3056 = vset.pattern.permute.xlu0 1
  %3057 = vperm.xlu0 %3056, %v2929
  %v3058 = vpop.permute.xlu0 %3057
  %3060 = vset.pattern.permute.xlu0 1
  %3061 = vperm.xlu0 %3060, %v2930
  %v3062 = vpop.permute.xlu0 %3061
  %3064 = vset.pattern.permute.xlu0 1
  %3065 = vperm.xlu0 %3064, %v2931
  %v3066 = vpop.permute.xlu0 %3065
  %3068 = vset.pattern.permute.xlu0 1
  %3069 = vperm.xlu0 %3068, %v2932
  %v3070 = vpop.permute.xlu0 %3069
  %3072 = vset.pattern.permute.xlu0 1
  %3073 = vperm.xlu0 %3072, %v2933
  %v3074 = vpop.permute.xlu0 %3073
  %3076 = vset.pattern.permute.xlu0 1
  %3077 = vperm.xlu0 %3076, %v2934
  %v3078 = vpop.permute.xlu0 %3077
  %3080 = vset.pattern.permute.xlu0 1
  %3081 = vperm.xlu0 %3080, %v2935
  %v3082 = vpop.permute.xlu0 %3081
  %3084 = vset.pattern.permute.xlu0 1
  %3085 = vperm.xlu0 %3084, %v2936
  %v3086 = vpop.permute.xlu0 %3085
  %3088 = vset.pattern.permute.xlu0 1
  %3089 = vperm.xlu0 %3088, %v2937
  %v3090 = vpop.permute.xlu0 %3089
  %3092 = vset.pattern.permute.xlu0 1
  %3093 = vperm.xlu0 %3092, %v2938
  %v3094 = vpop.permute.xlu0 %3093
  %3096 = vset.pattern.permute.xlu0 1
  %3097 = vperm.xlu0 %3096, %v2939
  %v3098 = vpop.permute.xlu0 %3097
  %3100 = vset.pattern.permute.xlu0 1
  %3101 = vperm.xlu0 %3100, %v2940
  %v3102 = vpop.permute.xlu0 %3101
  %3104 = vset.pattern.permute.xlu0 1
  %3105 = vperm.xlu0 %3104, %v2941
  %v3106 = vpop.permute.xlu0 %3105
  %v3108 = vlaneseq
  %v3109 = vshrl.u32 %v3108, 7
  %v3110 = vsub.s32 1, %v3109
  %v3111 = vrot.slane %v2943, %v3110
  %v3112 = vmul.f32 %v3046, %v3111
  %v3113 = vmul.f32 %v3050, %v3111
  %v3114 = vmul.f32 %v3054, %v3111
  %v3115 = vmul.f32 %v3058, %v3111
  %v3116 = vmul.f32 %v3062, %v3111
  %v3117 = vmul.f32 %v3066, %v3111
  %v3118 = vmul.f32 %v3070, %v3111
  %v3119 = vmul.f32 %v3074, %v3111
  %v3120 = vmul.f32 %v3078, %v3111
  %v3121 = vmul.f32 %v3082, %v3111
  %v3122 = vmul.f32 %v3086, %v3111
  %v3123 = vmul.f32 %v3090, %v3111
  %v3124 = vmul.f32 %v3094, %v3111
  %v3125 = vmul.f32 %v3098, %v3111
  %v3126 = vmul.f32 %v3102, %v3111
  %v3127 = vmul.f32 %v3106, %v3111
  %v3128 = vadd.f32 %v3028, %v3112
  %v3129 = vadd.f32 %v3029, %v3113
  %v3130 = vadd.f32 %v3030, %v3114
  %v3131 = vadd.f32 %v3031, %v3115
  %v3132 = vadd.f32 %v3032, %v3116
  %v3133 = vadd.f32 %v3033, %v3117
  %v3134 = vadd.f32 %v3034, %v3118
  %v3135 = vadd.f32 %v3035, %v3119
  %v3136 = vadd.f32 %v3036, %v3120
  %v3137 = vadd.f32 %v3037, %v3121
  %v3138 = vadd.f32 %v3038, %v3122
  %v3139 = vadd.f32 %v3039, %v3123
  %v3140 = vadd.f32 %v3040, %v3124
  %v3141 = vadd.f32 %v3041, %v3125
  %v3142 = vadd.f32 %v3042, %v3126
  %v3143 = vadd.f32 %v3043, %v3127
  %3144 = vset.pattern.permute.xlu0 2
  %3145 = vperm.xlu0 %3144, %v2926
  %v3146 = vpop.permute.xlu0 %3145
  %3148 = vset.pattern.permute.xlu0 2
  %3149 = vperm.xlu0 %3148, %v2927
  %v3150 = vpop.permute.xlu0 %3149
  %3152 = vset.pattern.permute.xlu0 2
  %3153 = vperm.xlu0 %3152, %v2928
  %v3154 = vpop.permute.xlu0 %3153
  %3156 = vset.pattern.permute.xlu0 2
  %3157 = vperm.xlu0 %3156, %v2929
  %v3158 = vpop.permute.xlu0 %3157
  %3160 = vset.pattern.permute.xlu0 2
  %3161 = vperm.xlu0 %3160, %v2930
  %v3162 = vpop.permute.xlu0 %3161
  %3164 = vset.pattern.permute.xlu0 2
  %3165 = vperm.xlu0 %3164, %v2931
  %v3166 = vpop.permute.xlu0 %3165
  %3168 = vset.pattern.permute.xlu0 2
  %3169 = vperm.xlu0 %3168, %v2932
  %v3170 = vpop.permute.xlu0 %3169
  %3172 = vset.pattern.permute.xlu0 2
  %3173 = vperm.xlu0 %3172, %v2933
  %v3174 = vpop.permute.xlu0 %3173
  %3176 = vset.pattern.permute.xlu0 2
  %3177 = vperm.xlu0 %3176, %v2934
  %v3178 = vpop.permute.xlu0 %3177
  %3180 = vset.pattern.permute.xlu0 2
  %3181 = vperm.xlu0 %3180, %v2935
  %v3182 = vpop.permute.xlu0 %3181
  %3184 = vset.pattern.permute.xlu0 2
  %3185 = vperm.xlu0 %3184, %v2936
  %v3186 = vpop.permute.xlu0 %3185
  %3188 = vset.pattern.permute.xlu0 2
  %3189 = vperm.xlu0 %3188, %v2937
  %v3190 = vpop.permute.xlu0 %3189
  %3192 = vset.pattern.permute.xlu0 2
  %3193 = vperm.xlu0 %3192, %v2938
  %v3194 = vpop.permute.xlu0 %3193
  %3196 = vset.pattern.permute.xlu0 2
  %3197 = vperm.xlu0 %3196, %v2939
  %v3198 = vpop.permute.xlu0 %3197
  %3200 = vset.pattern.permute.xlu0 2
  %3201 = vperm.xlu0 %3200, %v2940
  %v3202 = vpop.permute.xlu0 %3201
  %3204 = vset.pattern.permute.xlu0 2
  %3205 = vperm.xlu0 %3204, %v2941
  %v3206 = vpop.permute.xlu0 %3205
  %v3208 = vlaneseq
  %v3209 = vshrl.u32 %v3208, 7
  %v3210 = vsub.s32 2, %v3209
  %v3211 = vrot.slane %v2943, %v3210
  %v3212 = vmul.f32 %v3146, %v3211
  %v3213 = vmul.f32 %v3150, %v3211
  %v3214 = vmul.f32 %v3154, %v3211
  %v3215 = vmul.f32 %v3158, %v3211
  %v3216 = vmul.f32 %v3162, %v3211
  %v3217 = vmul.f32 %v3166, %v3211
  %v3218 = vmul.f32 %v3170, %v3211
  %v3219 = vmul.f32 %v3174, %v3211
  %v3220 = vmul.f32 %v3178, %v3211
  %v3221 = vmul.f32 %v3182, %v3211
  %v3222 = vmul.f32 %v3186, %v3211
  %v3223 = vmul.f32 %v3190, %v3211
  %v3224 = vmul.f32 %v3194, %v3211
  %v3225 = vmul.f32 %v3198, %v3211
  %v3226 = vmul.f32 %v3202, %v3211
  %v3227 = vmul.f32 %v3206, %v3211
  %v3228 = vadd.f32 %v3128, %v3212
  %v3229 = vadd.f32 %v3129, %v3213
  %v3230 = vadd.f32 %v3130, %v3214
  %v3231 = vadd.f32 %v3131, %v3215
  %v3232 = vadd.f32 %v3132, %v3216
  %v3233 = vadd.f32 %v3133, %v3217
  %v3234 = vadd.f32 %v3134, %v3218
  %v3235 = vadd.f32 %v3135, %v3219
  %v3236 = vadd.f32 %v3136, %v3220
  %v3237 = vadd.f32 %v3137, %v3221
  %v3238 = vadd.f32 %v3138, %v3222
  %v3239 = vadd.f32 %v3139, %v3223
  %v3240 = vadd.f32 %v3140, %v3224
  %v3241 = vadd.f32 %v3141, %v3225
  %v3242 = vadd.f32 %v3142, %v3226
  %v3243 = vadd.f32 %v3143, %v3227
  %3244 = vset.pattern.permute.xlu0 3
  %3245 = vperm.xlu0 %3244, %v2926
  %v3246 = vpop.permute.xlu0 %3245
  %3248 = vset.pattern.permute.xlu0 3
  %3249 = vperm.xlu0 %3248, %v2927
  %v3250 = vpop.permute.xlu0 %3249
  %3252 = vset.pattern.permute.xlu0 3
  %3253 = vperm.xlu0 %3252, %v2928
  %v3254 = vpop.permute.xlu0 %3253
  %3256 = vset.pattern.permute.xlu0 3
  %3257 = vperm.xlu0 %3256, %v2929
  %v3258 = vpop.permute.xlu0 %3257
  %3260 = vset.pattern.permute.xlu0 3
  %3261 = vperm.xlu0 %3260, %v2930
  %v3262 = vpop.permute.xlu0 %3261
  %3264 = vset.pattern.permute.xlu0 3
  %3265 = vperm.xlu0 %3264, %v2931
  %v3266 = vpop.permute.xlu0 %3265
  %3268 = vset.pattern.permute.xlu0 3
  %3269 = vperm.xlu0 %3268, %v2932
  %v3270 = vpop.permute.xlu0 %3269
  %3272 = vset.pattern.permute.xlu0 3
  %3273 = vperm.xlu0 %3272, %v2933
  %v3274 = vpop.permute.xlu0 %3273
  %3276 = vset.pattern.permute.xlu0 3
  %3277 = vperm.xlu0 %3276, %v2934
  %v3278 = vpop.permute.xlu0 %3277
  %3280 = vset.pattern.permute.xlu0 3
  %3281 = vperm.xlu0 %3280, %v2935
  %v3282 = vpop.permute.xlu0 %3281
  %3284 = vset.pattern.permute.xlu0 3
  %3285 = vperm.xlu0 %3284, %v2936
  %v3286 = vpop.permute.xlu0 %3285
  %3288 = vset.pattern.permute.xlu0 3
  %3289 = vperm.xlu0 %3288, %v2937
  %v3290 = vpop.permute.xlu0 %3289
  %3292 = vset.pattern.permute.xlu0 3
  %3293 = vperm.xlu0 %3292, %v2938
  %v3294 = vpop.permute.xlu0 %3293
  %3296 = vset.pattern.permute.xlu0 3
  %3297 = vperm.xlu0 %3296, %v2939
  %v3298 = vpop.permute.xlu0 %3297
  %3300 = vset.pattern.permute.xlu0 3
  %3301 = vperm.xlu0 %3300, %v2940
  %v3302 = vpop.permute.xlu0 %3301
  %3304 = vset.pattern.permute.xlu0 3
  %3305 = vperm.xlu0 %3304, %v2941
  %v3306 = vpop.permute.xlu0 %3305
  %v3308 = vlaneseq
  %v3309 = vshrl.u32 %v3308, 7
  %v3310 = vsub.s32 3, %v3309
  %v3311 = vrot.slane %v2943, %v3310
  %v3312 = vmul.f32 %v3246, %v3311
  %v3313 = vmul.f32 %v3250, %v3311
  %v3314 = vmul.f32 %v3254, %v3311
  %v3315 = vmul.f32 %v3258, %v3311
  %v3316 = vmul.f32 %v3262, %v3311
  %v3317 = vmul.f32 %v3266, %v3311
  %v3318 = vmul.f32 %v3270, %v3311
  %v3319 = vmul.f32 %v3274, %v3311
  %v3320 = vmul.f32 %v3278, %v3311
  %v3321 = vmul.f32 %v3282, %v3311
  %v3322 = vmul.f32 %v3286, %v3311
  %v3323 = vmul.f32 %v3290, %v3311
  %v3324 = vmul.f32 %v3294, %v3311
  %v3325 = vmul.f32 %v3298, %v3311
  %v3326 = vmul.f32 %v3302, %v3311
  %v3327 = vmul.f32 %v3306, %v3311
  %v3328 = vadd.f32 %v3228, %v3312
  %v3329 = vadd.f32 %v3229, %v3313
  %v3330 = vadd.f32 %v3230, %v3314
  %v3331 = vadd.f32 %v3231, %v3315
  %v3332 = vadd.f32 %v3232, %v3316
  %v3333 = vadd.f32 %v3233, %v3317
  %v3334 = vadd.f32 %v3234, %v3318
  %v3335 = vadd.f32 %v3235, %v3319
  %v3336 = vadd.f32 %v3236, %v3320
  %v3337 = vadd.f32 %v3237, %v3321
  %v3338 = vadd.f32 %v3238, %v3322
  %v3339 = vadd.f32 %v3239, %v3323
  %v3340 = vadd.f32 %v3240, %v3324
  %v3341 = vadd.f32 %v3241, %v3325
  %v3342 = vadd.f32 %v3242, %v3326
  %v3343 = vadd.f32 %v3243, %v3327
  %3344 = vset.pattern.permute.xlu0 4
  %3345 = vperm.xlu0 %3344, %v2926
  %v3346 = vpop.permute.xlu0 %3345
  %3348 = vset.pattern.permute.xlu0 4
  %3349 = vperm.xlu0 %3348, %v2927
  %v3350 = vpop.permute.xlu0 %3349
  %3352 = vset.pattern.permute.xlu0 4
  %3353 = vperm.xlu0 %3352, %v2928
  %v3354 = vpop.permute.xlu0 %3353
  %3356 = vset.pattern.permute.xlu0 4
  %3357 = vperm.xlu0 %3356, %v2929
  %v3358 = vpop.permute.xlu0 %3357
  %3360 = vset.pattern.permute.xlu0 4
  %3361 = vperm.xlu0 %3360, %v2930
  %v3362 = vpop.permute.xlu0 %3361
  %3364 = vset.pattern.permute.xlu0 4
  %3365 = vperm.xlu0 %3364, %v2931
  %v3366 = vpop.permute.xlu0 %3365
  %3368 = vset.pattern.permute.xlu0 4
  %3369 = vperm.xlu0 %3368, %v2932
  %v3370 = vpop.permute.xlu0 %3369
  %3372 = vset.pattern.permute.xlu0 4
  %3373 = vperm.xlu0 %3372, %v2933
  %v3374 = vpop.permute.xlu0 %3373
  %3376 = vset.pattern.permute.xlu0 4
  %3377 = vperm.xlu0 %3376, %v2934
  %v3378 = vpop.permute.xlu0 %3377
  %3380 = vset.pattern.permute.xlu0 4
  %3381 = vperm.xlu0 %3380, %v2935
  %v3382 = vpop.permute.xlu0 %3381
  %3384 = vset.pattern.permute.xlu0 4
  %3385 = vperm.xlu0 %3384, %v2936
  %v3386 = vpop.permute.xlu0 %3385
  %3388 = vset.pattern.permute.xlu0 4
  %3389 = vperm.xlu0 %3388, %v2937
  %v3390 = vpop.permute.xlu0 %3389
  %3392 = vset.pattern.permute.xlu0 4
  %3393 = vperm.xlu0 %3392, %v2938
  %v3394 = vpop.permute.xlu0 %3393
  %3396 = vset.pattern.permute.xlu0 4
  %3397 = vperm.xlu0 %3396, %v2939
  %v3398 = vpop.permute.xlu0 %3397
  %3400 = vset.pattern.permute.xlu0 4
  %3401 = vperm.xlu0 %3400, %v2940
  %v3402 = vpop.permute.xlu0 %3401
  %3404 = vset.pattern.permute.xlu0 4
  %3405 = vperm.xlu0 %3404, %v2941
  %v3406 = vpop.permute.xlu0 %3405
  %v3408 = vlaneseq
  %v3409 = vshrl.u32 %v3408, 7
  %v3410 = vsub.s32 4, %v3409
  %v3411 = vrot.slane %v2943, %v3410
  %v3412 = vmul.f32 %v3346, %v3411
  %v3413 = vmul.f32 %v3350, %v3411
  %v3414 = vmul.f32 %v3354, %v3411
  %v3415 = vmul.f32 %v3358, %v3411
  %v3416 = vmul.f32 %v3362, %v3411
  %v3417 = vmul.f32 %v3366, %v3411
  %v3418 = vmul.f32 %v3370, %v3411
  %v3419 = vmul.f32 %v3374, %v3411
  %v3420 = vmul.f32 %v3378, %v3411
  %v3421 = vmul.f32 %v3382, %v3411
  %v3422 = vmul.f32 %v3386, %v3411
  %v3423 = vmul.f32 %v3390, %v3411
  %v3424 = vmul.f32 %v3394, %v3411
  %v3425 = vmul.f32 %v3398, %v3411
  %v3426 = vmul.f32 %v3402, %v3411
  %v3427 = vmul.f32 %v3406, %v3411
  %v3428 = vadd.f32 %v3328, %v3412
  %v3429 = vadd.f32 %v3329, %v3413
  %v3430 = vadd.f32 %v3330, %v3414
  %v3431 = vadd.f32 %v3331, %v3415
  %v3432 = vadd.f32 %v3332, %v3416
  %v3433 = vadd.f32 %v3333, %v3417
  %v3434 = vadd.f32 %v3334, %v3418
  %v3435 = vadd.f32 %v3335, %v3419
  %v3436 = vadd.f32 %v3336, %v3420
  %v3437 = vadd.f32 %v3337, %v3421
  %v3438 = vadd.f32 %v3338, %v3422
  %v3439 = vadd.f32 %v3339, %v3423
  %v3440 = vadd.f32 %v3340, %v3424
  %v3441 = vadd.f32 %v3341, %v3425
  %v3442 = vadd.f32 %v3342, %v3426
  %v3443 = vadd.f32 %v3343, %v3427
  %3444 = vset.pattern.permute.xlu0 5
  %3445 = vperm.xlu0 %3444, %v2926
  %v3446 = vpop.permute.xlu0 %3445
  %3448 = vset.pattern.permute.xlu0 5
  %3449 = vperm.xlu0 %3448, %v2927
  %v3450 = vpop.permute.xlu0 %3449
  %3452 = vset.pattern.permute.xlu0 5
  %3453 = vperm.xlu0 %3452, %v2928
  %v3454 = vpop.permute.xlu0 %3453
  %3456 = vset.pattern.permute.xlu0 5
  %3457 = vperm.xlu0 %3456, %v2929
  %v3458 = vpop.permute.xlu0 %3457
  %3460 = vset.pattern.permute.xlu0 5
  %3461 = vperm.xlu0 %3460, %v2930
  %v3462 = vpop.permute.xlu0 %3461
  %3464 = vset.pattern.permute.xlu0 5
  %3465 = vperm.xlu0 %3464, %v2931
  %v3466 = vpop.permute.xlu0 %3465
  %3468 = vset.pattern.permute.xlu0 5
  %3469 = vperm.xlu0 %3468, %v2932
  %v3470 = vpop.permute.xlu0 %3469
  %3472 = vset.pattern.permute.xlu0 5
  %3473 = vperm.xlu0 %3472, %v2933
  %v3474 = vpop.permute.xlu0 %3473
  %3476 = vset.pattern.permute.xlu0 5
  %3477 = vperm.xlu0 %3476, %v2934
  %v3478 = vpop.permute.xlu0 %3477
  %3480 = vset.pattern.permute.xlu0 5
  %3481 = vperm.xlu0 %3480, %v2935
  %v3482 = vpop.permute.xlu0 %3481
  %3484 = vset.pattern.permute.xlu0 5
  %3485 = vperm.xlu0 %3484, %v2936
  %v3486 = vpop.permute.xlu0 %3485
  %3488 = vset.pattern.permute.xlu0 5
  %3489 = vperm.xlu0 %3488, %v2937
  %v3490 = vpop.permute.xlu0 %3489
  %3492 = vset.pattern.permute.xlu0 5
  %3493 = vperm.xlu0 %3492, %v2938
  %v3494 = vpop.permute.xlu0 %3493
  %3496 = vset.pattern.permute.xlu0 5
  %3497 = vperm.xlu0 %3496, %v2939
  %v3498 = vpop.permute.xlu0 %3497
  %3500 = vset.pattern.permute.xlu0 5
  %3501 = vperm.xlu0 %3500, %v2940
  %v3502 = vpop.permute.xlu0 %3501
  %3504 = vset.pattern.permute.xlu0 5
  %3505 = vperm.xlu0 %3504, %v2941
  %v3506 = vpop.permute.xlu0 %3505
  %v3508 = vlaneseq
  %v3509 = vshrl.u32 %v3508, 7
  %v3510 = vsub.s32 5, %v3509
  %v3511 = vrot.slane %v2943, %v3510
  %v3512 = vmul.f32 %v3446, %v3511
  %v3513 = vmul.f32 %v3450, %v3511
  %v3514 = vmul.f32 %v3454, %v3511
  %v3515 = vmul.f32 %v3458, %v3511
  %v3516 = vmul.f32 %v3462, %v3511
  %v3517 = vmul.f32 %v3466, %v3511
  %v3518 = vmul.f32 %v3470, %v3511
  %v3519 = vmul.f32 %v3474, %v3511
  %v3520 = vmul.f32 %v3478, %v3511
  %v3521 = vmul.f32 %v3482, %v3511
  %v3522 = vmul.f32 %v3486, %v3511
  %v3523 = vmul.f32 %v3490, %v3511
  %v3524 = vmul.f32 %v3494, %v3511
  %v3525 = vmul.f32 %v3498, %v3511
  %v3526 = vmul.f32 %v3502, %v3511
  %v3527 = vmul.f32 %v3506, %v3511
  %v3528 = vadd.f32 %v3428, %v3512
  %v3529 = vadd.f32 %v3429, %v3513
  %v3530 = vadd.f32 %v3430, %v3514
  %v3531 = vadd.f32 %v3431, %v3515
  %v3532 = vadd.f32 %v3432, %v3516
  %v3533 = vadd.f32 %v3433, %v3517
  %v3534 = vadd.f32 %v3434, %v3518
  %v3535 = vadd.f32 %v3435, %v3519
  %v3536 = vadd.f32 %v3436, %v3520
  %v3537 = vadd.f32 %v3437, %v3521
  %v3538 = vadd.f32 %v3438, %v3522
  %v3539 = vadd.f32 %v3439, %v3523
  %v3540 = vadd.f32 %v3440, %v3524
  %v3541 = vadd.f32 %v3441, %v3525
  %v3542 = vadd.f32 %v3442, %v3526
  %v3543 = vadd.f32 %v3443, %v3527
  %3544 = vset.pattern.permute.xlu0 6
  %3545 = vperm.xlu0 %3544, %v2926
  %v3546 = vpop.permute.xlu0 %3545
  %3548 = vset.pattern.permute.xlu0 6
  %3549 = vperm.xlu0 %3548, %v2927
  %v3550 = vpop.permute.xlu0 %3549
  %3552 = vset.pattern.permute.xlu0 6
  %3553 = vperm.xlu0 %3552, %v2928
  %v3554 = vpop.permute.xlu0 %3553
  %3556 = vset.pattern.permute.xlu0 6
  %3557 = vperm.xlu0 %3556, %v2929
  %v3558 = vpop.permute.xlu0 %3557
  %3560 = vset.pattern.permute.xlu0 6
  %3561 = vperm.xlu0 %3560, %v2930
  %v3562 = vpop.permute.xlu0 %3561
  %3564 = vset.pattern.permute.xlu0 6
  %3565 = vperm.xlu0 %3564, %v2931
  %v3566 = vpop.permute.xlu0 %3565
  %3568 = vset.pattern.permute.xlu0 6
  %3569 = vperm.xlu0 %3568, %v2932
  %v3570 = vpop.permute.xlu0 %3569
  %3572 = vset.pattern.permute.xlu0 6
  %3573 = vperm.xlu0 %3572, %v2933
  %v3574 = vpop.permute.xlu0 %3573
  %3576 = vset.pattern.permute.xlu0 6
  %3577 = vperm.xlu0 %3576, %v2934
  %v3578 = vpop.permute.xlu0 %3577
  %3580 = vset.pattern.permute.xlu0 6
  %3581 = vperm.xlu0 %3580, %v2935
  %v3582 = vpop.permute.xlu0 %3581
  %3584 = vset.pattern.permute.xlu0 6
  %3585 = vperm.xlu0 %3584, %v2936
  %v3586 = vpop.permute.xlu0 %3585
  %3588 = vset.pattern.permute.xlu0 6
  %3589 = vperm.xlu0 %3588, %v2937
  %v3590 = vpop.permute.xlu0 %3589
  %3592 = vset.pattern.permute.xlu0 6
  %3593 = vperm.xlu0 %3592, %v2938
  %v3594 = vpop.permute.xlu0 %3593
  %3596 = vset.pattern.permute.xlu0 6
  %3597 = vperm.xlu0 %3596, %v2939
  %v3598 = vpop.permute.xlu0 %3597
  %3600 = vset.pattern.permute.xlu0 6
  %3601 = vperm.xlu0 %3600, %v2940
  %v3602 = vpop.permute.xlu0 %3601
  %3604 = vset.pattern.permute.xlu0 6
  %3605 = vperm.xlu0 %3604, %v2941
  %v3606 = vpop.permute.xlu0 %3605
  %v3608 = vlaneseq
  %v3609 = vshrl.u32 %v3608, 7
  %v3610 = vsub.s32 6, %v3609
  %v3611 = vrot.slane %v2943, %v3610
  %v3612 = vmul.f32 %v3546, %v3611
  %v3613 = vmul.f32 %v3550, %v3611
  %v3614 = vmul.f32 %v3554, %v3611
  %v3615 = vmul.f32 %v3558, %v3611
  %v3616 = vmul.f32 %v3562, %v3611
  %v3617 = vmul.f32 %v3566, %v3611
  %v3618 = vmul.f32 %v3570, %v3611
  %v3619 = vmul.f32 %v3574, %v3611
  %v3620 = vmul.f32 %v3578, %v3611
  %v3621 = vmul.f32 %v3582, %v3611
  %v3622 = vmul.f32 %v3586, %v3611
  %v3623 = vmul.f32 %v3590, %v3611
  %v3624 = vmul.f32 %v3594, %v3611
  %v3625 = vmul.f32 %v3598, %v3611
  %v3626 = vmul.f32 %v3602, %v3611
  %v3627 = vmul.f32 %v3606, %v3611
  %v3628 = vadd.f32 %v3528, %v3612
  %v3629 = vadd.f32 %v3529, %v3613
  %v3630 = vadd.f32 %v3530, %v3614
  %v3631 = vadd.f32 %v3531, %v3615
  %v3632 = vadd.f32 %v3532, %v3616
  %v3633 = vadd.f32 %v3533, %v3617
  %v3634 = vadd.f32 %v3534, %v3618
  %v3635 = vadd.f32 %v3535, %v3619
  %v3636 = vadd.f32 %v3536, %v3620
  %v3637 = vadd.f32 %v3537, %v3621
  %v3638 = vadd.f32 %v3538, %v3622
  %v3639 = vadd.f32 %v3539, %v3623
  %v3640 = vadd.f32 %v3540, %v3624
  %v3641 = vadd.f32 %v3541, %v3625
  %v3642 = vadd.f32 %v3542, %v3626
  %v3643 = vadd.f32 %v3543, %v3627
  %3644 = vset.pattern.permute.xlu0 7
  %3645 = vperm.xlu0 %3644, %v2926
  %v3646 = vpop.permute.xlu0 %3645
  %3648 = vset.pattern.permute.xlu0 7
  %3649 = vperm.xlu0 %3648, %v2927
  %v3650 = vpop.permute.xlu0 %3649
  %3652 = vset.pattern.permute.xlu0 7
  %3653 = vperm.xlu0 %3652, %v2928
  %v3654 = vpop.permute.xlu0 %3653
  %3656 = vset.pattern.permute.xlu0 7
  %3657 = vperm.xlu0 %3656, %v2929
  %v3658 = vpop.permute.xlu0 %3657
  %3660 = vset.pattern.permute.xlu0 7
  %3661 = vperm.xlu0 %3660, %v2930
  %v3662 = vpop.permute.xlu0 %3661
  %3664 = vset.pattern.permute.xlu0 7
  %3665 = vperm.xlu0 %3664, %v2931
  %v3666 = vpop.permute.xlu0 %3665
  %3668 = vset.pattern.permute.xlu0 7
  %3669 = vperm.xlu0 %3668, %v2932
  %v3670 = vpop.permute.xlu0 %3669
  %3672 = vset.pattern.permute.xlu0 7
  %3673 = vperm.xlu0 %3672, %v2933
  %v3674 = vpop.permute.xlu0 %3673
  %3676 = vset.pattern.permute.xlu0 7
  %3677 = vperm.xlu0 %3676, %v2934
  %v3678 = vpop.permute.xlu0 %3677
  %3680 = vset.pattern.permute.xlu0 7
  %3681 = vperm.xlu0 %3680, %v2935
  %v3682 = vpop.permute.xlu0 %3681
  %3684 = vset.pattern.permute.xlu0 7
  %3685 = vperm.xlu0 %3684, %v2936
  %v3686 = vpop.permute.xlu0 %3685
  %3688 = vset.pattern.permute.xlu0 7
  %3689 = vperm.xlu0 %3688, %v2937
  %v3690 = vpop.permute.xlu0 %3689
  %3692 = vset.pattern.permute.xlu0 7
  %3693 = vperm.xlu0 %3692, %v2938
  %v3694 = vpop.permute.xlu0 %3693
  %3696 = vset.pattern.permute.xlu0 7
  %3697 = vperm.xlu0 %3696, %v2939
  %v3698 = vpop.permute.xlu0 %3697
  %3700 = vset.pattern.permute.xlu0 7
  %3701 = vperm.xlu0 %3700, %v2940
  %v3702 = vpop.permute.xlu0 %3701
  %3704 = vset.pattern.permute.xlu0 7
  %3705 = vperm.xlu0 %3704, %v2941
  %v3706 = vpop.permute.xlu0 %3705
  %v3708 = vlaneseq
  %v3709 = vshrl.u32 %v3708, 7
  %v3710 = vsub.s32 7, %v3709
  %v3711 = vrot.slane %v2943, %v3710
  %v3712 = vmul.f32 %v3646, %v3711
  %v3713 = vmul.f32 %v3650, %v3711
  %v3714 = vmul.f32 %v3654, %v3711
  %v3715 = vmul.f32 %v3658, %v3711
  %v3716 = vmul.f32 %v3662, %v3711
  %v3717 = vmul.f32 %v3666, %v3711
  %v3718 = vmul.f32 %v3670, %v3711
  %v3719 = vmul.f32 %v3674, %v3711
  %v3720 = vmul.f32 %v3678, %v3711
  %v3721 = vmul.f32 %v3682, %v3711
  %v3722 = vmul.f32 %v3686, %v3711
  %v3723 = vmul.f32 %v3690, %v3711
  %v3724 = vmul.f32 %v3694, %v3711
  %v3725 = vmul.f32 %v3698, %v3711
  %v3726 = vmul.f32 %v3702, %v3711
  %v3727 = vmul.f32 %v3706, %v3711
  %v3728 = vadd.f32 %v3628, %v3712
  %v3729 = vadd.f32 %v3629, %v3713
  %v3730 = vadd.f32 %v3630, %v3714
  %v3731 = vadd.f32 %v3631, %v3715
  %v3732 = vadd.f32 %v3632, %v3716
  %v3733 = vadd.f32 %v3633, %v3717
  %v3734 = vadd.f32 %v3634, %v3718
  %v3735 = vadd.f32 %v3635, %v3719
  %v3736 = vadd.f32 %v3636, %v3720
  %v3737 = vadd.f32 %v3637, %v3721
  %v3738 = vadd.f32 %v3638, %v3722
  %v3739 = vadd.f32 %v3639, %v3723
  %v3740 = vadd.f32 %v3640, %v3724
  %v3741 = vadd.f32 %v3641, %v3725
  %v3742 = vadd.f32 %v3642, %v3726
  %v3743 = vadd.f32 %v3643, %v3727
  %v3744 = vadd.f32 %v2510, %v3728
  %v3745 = vadd.f32 %v2511, %v3729
  %v3746 = vadd.f32 %v2512, %v3730
  %v3747 = vadd.f32 %v2513, %v3731
  %v3748 = vadd.f32 %v2514, %v3732
  %v3749 = vadd.f32 %v2515, %v3733
  %v3750 = vadd.f32 %v2516, %v3734
  %v3751 = vadd.f32 %v2517, %v3735
  %v3752 = vadd.f32 %v2518, %v3736
  %v3753 = vadd.f32 %v2519, %v3737
  %v3754 = vadd.f32 %v2520, %v3738
  %v3755 = vadd.f32 %v2521, %v3739
  %v3756 = vadd.f32 %v2522, %v3740
  %v3757 = vadd.f32 %v2523, %v3741
  %v3758 = vadd.f32 %v2524, %v3742
  %v3759 = vadd.f32 %v2525, %v3743
  %v3761 = vlaneseq
  %v3762 = vshrl.u32 %v3761, 7
  %v3763 = vsub.s32 0, %v3762
  %v3764 = vrot.slane %v36, %v3763
  %v3766 = vadd.f32 %v3744, %v3764
  %v3767 = vadd.f32 %v3745, %v3764
  %v3768 = vadd.f32 %v3746, %v3764
  %v3769 = vadd.f32 %v3747, %v3764
  %v3770 = vadd.f32 %v3748, %v3764
  %v3771 = vadd.f32 %v3749, %v3764
  %v3772 = vadd.f32 %v3750, %v3764
  %v3773 = vadd.f32 %v3751, %v3764
  %v3774 = vadd.f32 %v3752, %v3764
  %v3775 = vadd.f32 %v3753, %v3764
  %v3776 = vadd.f32 %v3754, %v3764
  %v3777 = vadd.f32 %v3755, %v3764
  %v3778 = vadd.f32 %v3756, %v3764
  %v3779 = vadd.f32 %v3757, %v3764
  %v3780 = vadd.f32 %v3758, %v3764
  %v3781 = vadd.f32 %v3759, %v3764
  %vm3782 = vcmask 64512
  %3783 = vst.msk [vmem:[%s9] sm:$0xff] %vm3782, %v3766
  %vm3784 = vcmask 62464
  %3785 = vst.msk [vmem:[%s9 + $0x8] sm:$0x3f] %vm3784, %v3767
  %3786 = vst.msk [vmem:[%s9 + $0x10] sm:$0xff] %vm3782, %v3768
  %3787 = vst.msk [vmem:[%s9 + $0x18] sm:$0x3f] %vm3784, %v3769
  %3788 = vst.msk [vmem:[%s9 + $0x20] sm:$0xff] %vm3782, %v3770
  %3789 = vst.msk [vmem:[%s9 + $0x28] sm:$0x3f] %vm3784, %v3771
  %3790 = vst.msk [vmem:[%s9 + $0x30] sm:$0xff] %vm3782, %v3772
  %3791 = vst.msk [vmem:[%s9 + $0x38] sm:$0x3f] %vm3784, %v3773
  %3792 = vst.msk [vmem:[%s9 + $0x40] sm:$0xff] %vm3782, %v3774
  %3793 = vst.msk [vmem:[%s9 + $0x48] sm:$0x3f] %vm3784, %v3775
  %3794 = vst.msk [vmem:[%s9 + $0x50] sm:$0xff] %vm3782, %v3776
  %3795 = vst.msk [vmem:[%s9 + $0x58] sm:$0x3f] %vm3784, %v3777
  %3796 = vst.msk [vmem:[%s9 + $0x60] sm:$0xff] %vm3782, %v3778
  %3797 = vst.msk [vmem:[%s9 + $0x68] sm:$0x3f] %vm3784, %v3779
  %3798 = vst.msk [vmem:[%s9 + $0x70] sm:$0xff] %vm3782, %v3780
  %3799 = vst.msk [vmem:[%s9 + $0x78] sm:$0x3f] %vm3784, %v3781
  %v3800 = vld [vmem:[%s5] sm:$0xff]
  %v3801 = vld [vmem:[%s6] sm:$0x1]
  %v3802 = vld [vmem:[%s8] sm:$0x1]
  %v3803 = vld [vmem:[%s9] ss:$2 sm:$0x1f]
  %s3804 = scalar_lea.vmem %s9, 16
  %v3805 = vld [vmem:[%s3804] ss:$2 sm:$0x1f]
  %s3806 = scalar_lea.vmem %s9, 32
  %v3807 = vld [vmem:[%s3806] ss:$2 sm:$0x1f]
  %s3808 = scalar_lea.vmem %s9, 48
  %v3809 = vld [vmem:[%s3808] ss:$2 sm:$0x1f]
  %s3810 = scalar_lea.vmem %s9, 64
  %v3811 = vld [vmem:[%s3810] ss:$2 sm:$0x1f]
  %s3812 = scalar_lea.vmem %s9, 80
  %v3813 = vld [vmem:[%s3812] ss:$2 sm:$0x1f]
  %s3814 = scalar_lea.vmem %s9, 96
  %v3815 = vld [vmem:[%s3814] ss:$2 sm:$0x1f]
  %s3816 = scalar_lea.vmem %s9, 112
  %v3817 = vld [vmem:[%s3816] ss:$2 sm:$0x1f]
  %v3818 = vld [vmem:[%s7] sm:$0xff]
  %3820 = vset.pattern.permute.xlu0 0
  %3821 = vperm.xlu0 %3820, %v3803
  %v3822 = vpop.permute.xlu0 %3821
  %3825 = vset.pattern.permute.xlu0 0
  %3826 = vperm.xlu0 %3825, %v3805
  %v3827 = vpop.permute.xlu0 %3826
  %3830 = vset.pattern.permute.xlu0 0
  %3831 = vperm.xlu0 %3830, %v3807
  %v3832 = vpop.permute.xlu0 %3831
  %3835 = vset.pattern.permute.xlu0 0
  %3836 = vperm.xlu0 %3835, %v3809
  %v3837 = vpop.permute.xlu0 %3836
  %3840 = vset.pattern.permute.xlu0 0
  %3841 = vperm.xlu0 %3840, %v3811
  %v3842 = vpop.permute.xlu0 %3841
  %3845 = vset.pattern.permute.xlu0 0
  %3846 = vperm.xlu0 %3845, %v3813
  %v3847 = vpop.permute.xlu0 %3846
  %3850 = vset.pattern.permute.xlu0 0
  %3851 = vperm.xlu0 %3850, %v3815
  %v3852 = vpop.permute.xlu0 %3851
  %3855 = vset.pattern.permute.xlu0 0
  %3856 = vperm.xlu0 %3855, %v3817
  %v3857 = vpop.permute.xlu0 %3856
  %v3859 = vlaneseq
  %v3860 = vshrl.u32 %v3859, 7
  %v3861 = vsub.s32 0, %v3860
  %v3862 = vrot.slane %v3818, %v3861
  %v3863 = vmul.f32 %v3822, %v3862
  %v3864 = vmul.f32 %v3827, %v3862
  %v3865 = vmul.f32 %v3832, %v3862
  %v3866 = vmul.f32 %v3837, %v3862
  %v3867 = vmul.f32 %v3842, %v3862
  %v3868 = vmul.f32 %v3847, %v3862
  %v3869 = vmul.f32 %v3852, %v3862
  %v3870 = vmul.f32 %v3857, %v3862
  %3871 = vset.pattern.permute.xlu0 1
  %3872 = vperm.xlu0 %3871, %v3803
  %v3873 = vpop.permute.xlu0 %3872
  %3875 = vset.pattern.permute.xlu0 1
  %3876 = vperm.xlu0 %3875, %v3805
  %v3877 = vpop.permute.xlu0 %3876
  %3879 = vset.pattern.permute.xlu0 1
  %3880 = vperm.xlu0 %3879, %v3807
  %v3881 = vpop.permute.xlu0 %3880
  %3883 = vset.pattern.permute.xlu0 1
  %3884 = vperm.xlu0 %3883, %v3809
  %v3885 = vpop.permute.xlu0 %3884
  %3887 = vset.pattern.permute.xlu0 1
  %3888 = vperm.xlu0 %3887, %v3811
  %v3889 = vpop.permute.xlu0 %3888
  %3891 = vset.pattern.permute.xlu0 1
  %3892 = vperm.xlu0 %3891, %v3813
  %v3893 = vpop.permute.xlu0 %3892
  %3895 = vset.pattern.permute.xlu0 1
  %3896 = vperm.xlu0 %3895, %v3815
  %v3897 = vpop.permute.xlu0 %3896
  %3899 = vset.pattern.permute.xlu0 1
  %3900 = vperm.xlu0 %3899, %v3817
  %v3901 = vpop.permute.xlu0 %3900
  %v3903 = vlaneseq
  %v3904 = vshrl.u32 %v3903, 7
  %v3905 = vsub.s32 1, %v3904
  %v3906 = vrot.slane %v3818, %v3905
  %v3907 = vmul.f32 %v3873, %v3906
  %v3908 = vmul.f32 %v3877, %v3906
  %v3909 = vmul.f32 %v3881, %v3906
  %v3910 = vmul.f32 %v3885, %v3906
  %v3911 = vmul.f32 %v3889, %v3906
  %v3912 = vmul.f32 %v3893, %v3906
  %v3913 = vmul.f32 %v3897, %v3906
  %v3914 = vmul.f32 %v3901, %v3906
  %v3915 = vadd.f32 %v3863, %v3907
  %v3916 = vadd.f32 %v3864, %v3908
  %v3917 = vadd.f32 %v3865, %v3909
  %v3918 = vadd.f32 %v3866, %v3910
  %v3919 = vadd.f32 %v3867, %v3911
  %v3920 = vadd.f32 %v3868, %v3912
  %v3921 = vadd.f32 %v3869, %v3913
  %v3922 = vadd.f32 %v3870, %v3914
  %3923 = vset.pattern.permute.xlu0 2
  %3924 = vperm.xlu0 %3923, %v3803
  %v3925 = vpop.permute.xlu0 %3924
  %3927 = vset.pattern.permute.xlu0 2
  %3928 = vperm.xlu0 %3927, %v3805
  %v3929 = vpop.permute.xlu0 %3928
  %3931 = vset.pattern.permute.xlu0 2
  %3932 = vperm.xlu0 %3931, %v3807
  %v3933 = vpop.permute.xlu0 %3932
  %3935 = vset.pattern.permute.xlu0 2
  %3936 = vperm.xlu0 %3935, %v3809
  %v3937 = vpop.permute.xlu0 %3936
  %3939 = vset.pattern.permute.xlu0 2
  %3940 = vperm.xlu0 %3939, %v3811
  %v3941 = vpop.permute.xlu0 %3940
  %3943 = vset.pattern.permute.xlu0 2
  %3944 = vperm.xlu0 %3943, %v3813
  %v3945 = vpop.permute.xlu0 %3944
  %3947 = vset.pattern.permute.xlu0 2
  %3948 = vperm.xlu0 %3947, %v3815
  %v3949 = vpop.permute.xlu0 %3948
  %3951 = vset.pattern.permute.xlu0 2
  %3952 = vperm.xlu0 %3951, %v3817
  %v3953 = vpop.permute.xlu0 %3952
  %v3955 = vlaneseq
  %v3956 = vshrl.u32 %v3955, 7
  %v3957 = vsub.s32 2, %v3956
  %v3958 = vrot.slane %v3818, %v3957
  %v3959 = vmul.f32 %v3925, %v3958
  %v3960 = vmul.f32 %v3929, %v3958
  %v3961 = vmul.f32 %v3933, %v3958
  %v3962 = vmul.f32 %v3937, %v3958
  %v3963 = vmul.f32 %v3941, %v3958
  %v3964 = vmul.f32 %v3945, %v3958
  %v3965 = vmul.f32 %v3949, %v3958
  %v3966 = vmul.f32 %v3953, %v3958
  %v3967 = vadd.f32 %v3915, %v3959
  %v3968 = vadd.f32 %v3916, %v3960
  %v3969 = vadd.f32 %v3917, %v3961
  %v3970 = vadd.f32 %v3918, %v3962
  %v3971 = vadd.f32 %v3919, %v3963
  %v3972 = vadd.f32 %v3920, %v3964
  %v3973 = vadd.f32 %v3921, %v3965
  %v3974 = vadd.f32 %v3922, %v3966
  %3975 = vset.pattern.permute.xlu0 3
  %3976 = vperm.xlu0 %3975, %v3803
  %v3977 = vpop.permute.xlu0 %3976
  %3979 = vset.pattern.permute.xlu0 3
  %3980 = vperm.xlu0 %3979, %v3805
  %v3981 = vpop.permute.xlu0 %3980
  %3983 = vset.pattern.permute.xlu0 3
  %3984 = vperm.xlu0 %3983, %v3807
  %v3985 = vpop.permute.xlu0 %3984
  %3987 = vset.pattern.permute.xlu0 3
  %3988 = vperm.xlu0 %3987, %v3809
  %v3989 = vpop.permute.xlu0 %3988
  %3991 = vset.pattern.permute.xlu0 3
  %3992 = vperm.xlu0 %3991, %v3811
  %v3993 = vpop.permute.xlu0 %3992
  %3995 = vset.pattern.permute.xlu0 3
  %3996 = vperm.xlu0 %3995, %v3813
  %v3997 = vpop.permute.xlu0 %3996
  %3999 = vset.pattern.permute.xlu0 3
  %4000 = vperm.xlu0 %3999, %v3815
  %v4001 = vpop.permute.xlu0 %4000
  %4003 = vset.pattern.permute.xlu0 3
  %4004 = vperm.xlu0 %4003, %v3817
  %v4005 = vpop.permute.xlu0 %4004
  %v4007 = vlaneseq
  %v4008 = vshrl.u32 %v4007, 7
  %v4009 = vsub.s32 3, %v4008
  %v4010 = vrot.slane %v3818, %v4009
  %v4011 = vmul.f32 %v3977, %v4010
  %v4012 = vmul.f32 %v3981, %v4010
  %v4013 = vmul.f32 %v3985, %v4010
  %v4014 = vmul.f32 %v3989, %v4010
  %v4015 = vmul.f32 %v3993, %v4010
  %v4016 = vmul.f32 %v3997, %v4010
  %v4017 = vmul.f32 %v4001, %v4010
  %v4018 = vmul.f32 %v4005, %v4010
  %v4019 = vadd.f32 %v3967, %v4011
  %v4020 = vadd.f32 %v3968, %v4012
  %v4021 = vadd.f32 %v3969, %v4013
  %v4022 = vadd.f32 %v3970, %v4014
  %v4023 = vadd.f32 %v3971, %v4015
  %v4024 = vadd.f32 %v3972, %v4016
  %v4025 = vadd.f32 %v3973, %v4017
  %v4026 = vadd.f32 %v3974, %v4018
  %4027 = vset.pattern.permute.xlu0 4
  %4028 = vperm.xlu0 %4027, %v3803
  %v4029 = vpop.permute.xlu0 %4028
  %4031 = vset.pattern.permute.xlu0 4
  %4032 = vperm.xlu0 %4031, %v3805
  %v4033 = vpop.permute.xlu0 %4032
  %4035 = vset.pattern.permute.xlu0 4
  %4036 = vperm.xlu0 %4035, %v3807
  %v4037 = vpop.permute.xlu0 %4036
  %4039 = vset.pattern.permute.xlu0 4
  %4040 = vperm.xlu0 %4039, %v3809
  %v4041 = vpop.permute.xlu0 %4040
  %4043 = vset.pattern.permute.xlu0 4
  %4044 = vperm.xlu0 %4043, %v3811
  %v4045 = vpop.permute.xlu0 %4044
  %4047 = vset.pattern.permute.xlu0 4
  %4048 = vperm.xlu0 %4047, %v3813
  %v4049 = vpop.permute.xlu0 %4048
  %4051 = vset.pattern.permute.xlu0 4
  %4052 = vperm.xlu0 %4051, %v3815
  %v4053 = vpop.permute.xlu0 %4052
  %4055 = vset.pattern.permute.xlu0 4
  %4056 = vperm.xlu0 %4055, %v3817
  %v4057 = vpop.permute.xlu0 %4056
  %v4059 = vlaneseq
  %v4060 = vshrl.u32 %v4059, 7
  %v4061 = vsub.s32 4, %v4060
  %v4062 = vrot.slane %v3818, %v4061
  %v4063 = vmul.f32 %v4029, %v4062
  %v4064 = vmul.f32 %v4033, %v4062
  %v4065 = vmul.f32 %v4037, %v4062
  %v4066 = vmul.f32 %v4041, %v4062
  %v4067 = vmul.f32 %v4045, %v4062
  %v4068 = vmul.f32 %v4049, %v4062
  %v4069 = vmul.f32 %v4053, %v4062
  %v4070 = vmul.f32 %v4057, %v4062
  %v4071 = vadd.f32 %v4019, %v4063
  %v4072 = vadd.f32 %v4020, %v4064
  %v4073 = vadd.f32 %v4021, %v4065
  %v4074 = vadd.f32 %v4022, %v4066
  %v4075 = vadd.f32 %v4023, %v4067
  %v4076 = vadd.f32 %v4024, %v4068
  %v4077 = vadd.f32 %v4025, %v4069
  %v4078 = vadd.f32 %v4026, %v4070
  %4079 = vset.pattern.permute.xlu0 5
  %4080 = vperm.xlu0 %4079, %v3803
  %v4081 = vpop.permute.xlu0 %4080
  %4083 = vset.pattern.permute.xlu0 5
  %4084 = vperm.xlu0 %4083, %v3805
  %v4085 = vpop.permute.xlu0 %4084
  %4087 = vset.pattern.permute.xlu0 5
  %4088 = vperm.xlu0 %4087, %v3807
  %v4089 = vpop.permute.xlu0 %4088
  %4091 = vset.pattern.permute.xlu0 5
  %4092 = vperm.xlu0 %4091, %v3809
  %v4093 = vpop.permute.xlu0 %4092
  %4095 = vset.pattern.permute.xlu0 5
  %4096 = vperm.xlu0 %4095, %v3811
  %v4097 = vpop.permute.xlu0 %4096
  %4099 = vset.pattern.permute.xlu0 5
  %4100 = vperm.xlu0 %4099, %v3813
  %v4101 = vpop.permute.xlu0 %4100
  %4103 = vset.pattern.permute.xlu0 5
  %4104 = vperm.xlu0 %4103, %v3815
  %v4105 = vpop.permute.xlu0 %4104
  %4107 = vset.pattern.permute.xlu0 5
  %4108 = vperm.xlu0 %4107, %v3817
  %v4109 = vpop.permute.xlu0 %4108
  %v4111 = vlaneseq
  %v4112 = vshrl.u32 %v4111, 7
  %v4113 = vsub.s32 5, %v4112
  %v4114 = vrot.slane %v3818, %v4113
  %v4115 = vmul.f32 %v4081, %v4114
  %v4116 = vmul.f32 %v4085, %v4114
  %v4117 = vmul.f32 %v4089, %v4114
  %v4118 = vmul.f32 %v4093, %v4114
  %v4119 = vmul.f32 %v4097, %v4114
  %v4120 = vmul.f32 %v4101, %v4114
  %v4121 = vmul.f32 %v4105, %v4114
  %v4122 = vmul.f32 %v4109, %v4114
  %v4123 = vadd.f32 %v4071, %v4115
  %v4124 = vadd.f32 %v4072, %v4116
  %v4125 = vadd.f32 %v4073, %v4117
  %v4126 = vadd.f32 %v4074, %v4118
  %v4127 = vadd.f32 %v4075, %v4119
  %v4128 = vadd.f32 %v4076, %v4120
  %v4129 = vadd.f32 %v4077, %v4121
  %v4130 = vadd.f32 %v4078, %v4122
  %4131 = vset.pattern.permute.xlu0 6
  %4132 = vperm.xlu0 %4131, %v3803
  %v4133 = vpop.permute.xlu0 %4132
  %4135 = vset.pattern.permute.xlu0 6
  %4136 = vperm.xlu0 %4135, %v3805
  %v4137 = vpop.permute.xlu0 %4136
  %4139 = vset.pattern.permute.xlu0 6
  %4140 = vperm.xlu0 %4139, %v3807
  %v4141 = vpop.permute.xlu0 %4140
  %4143 = vset.pattern.permute.xlu0 6
  %4144 = vperm.xlu0 %4143, %v3809
  %v4145 = vpop.permute.xlu0 %4144
  %4147 = vset.pattern.permute.xlu0 6
  %4148 = vperm.xlu0 %4147, %v3811
  %v4149 = vpop.permute.xlu0 %4148
  %4151 = vset.pattern.permute.xlu0 6
  %4152 = vperm.xlu0 %4151, %v3813
  %v4153 = vpop.permute.xlu0 %4152
  %4155 = vset.pattern.permute.xlu0 6
  %4156 = vperm.xlu0 %4155, %v3815
  %v4157 = vpop.permute.xlu0 %4156
  %4159 = vset.pattern.permute.xlu0 6
  %4160 = vperm.xlu0 %4159, %v3817
  %v4161 = vpop.permute.xlu0 %4160
  %v4163 = vlaneseq
  %v4164 = vshrl.u32 %v4163, 7
  %v4165 = vsub.s32 6, %v4164
  %v4166 = vrot.slane %v3818, %v4165
  %v4167 = vmul.f32 %v4133, %v4166
  %v4168 = vmul.f32 %v4137, %v4166
  %v4169 = vmul.f32 %v4141, %v4166
  %v4170 = vmul.f32 %v4145, %v4166
  %v4171 = vmul.f32 %v4149, %v4166
  %v4172 = vmul.f32 %v4153, %v4166
  %v4173 = vmul.f32 %v4157, %v4166
  %v4174 = vmul.f32 %v4161, %v4166
  %v4175 = vadd.f32 %v4123, %v4167
  %v4176 = vadd.f32 %v4124, %v4168
  %v4177 = vadd.f32 %v4125, %v4169
  %v4178 = vadd.f32 %v4126, %v4170
  %v4179 = vadd.f32 %v4127, %v4171
  %v4180 = vadd.f32 %v4128, %v4172
  %v4181 = vadd.f32 %v4129, %v4173
  %v4182 = vadd.f32 %v4130, %v4174
  %4183 = vset.pattern.permute.xlu0 7
  %4184 = vperm.xlu0 %4183, %v3803
  %v4185 = vpop.permute.xlu0 %4184
  %4187 = vset.pattern.permute.xlu0 7
  %4188 = vperm.xlu0 %4187, %v3805
  %v4189 = vpop.permute.xlu0 %4188
  %4191 = vset.pattern.permute.xlu0 7
  %4192 = vperm.xlu0 %4191, %v3807
  %v4193 = vpop.permute.xlu0 %4192
  %4195 = vset.pattern.permute.xlu0 7
  %4196 = vperm.xlu0 %4195, %v3809
  %v4197 = vpop.permute.xlu0 %4196
  %4199 = vset.pattern.permute.xlu0 7
  %4200 = vperm.xlu0 %4199, %v3811
  %v4201 = vpop.permute.xlu0 %4200
  %4203 = vset.pattern.permute.xlu0 7
  %4204 = vperm.xlu0 %4203, %v3813
  %v4205 = vpop.permute.xlu0 %4204
  %4207 = vset.pattern.permute.xlu0 7
  %4208 = vperm.xlu0 %4207, %v3815
  %v4209 = vpop.permute.xlu0 %4208
  %4211 = vset.pattern.permute.xlu0 7
  %4212 = vperm.xlu0 %4211, %v3817
  %v4213 = vpop.permute.xlu0 %4212
  %v4215 = vlaneseq
  %v4216 = vshrl.u32 %v4215, 7
  %v4217 = vsub.s32 7, %v4216
  %v4218 = vrot.slane %v3818, %v4217
  %v4219 = vmul.f32 %v4185, %v4218
  %v4220 = vmul.f32 %v4189, %v4218
  %v4221 = vmul.f32 %v4193, %v4218
  %v4222 = vmul.f32 %v4197, %v4218
  %v4223 = vmul.f32 %v4201, %v4218
  %v4224 = vmul.f32 %v4205, %v4218
  %v4225 = vmul.f32 %v4209, %v4218
  %v4226 = vmul.f32 %v4213, %v4218
  %v4227 = vadd.f32 %v4175, %v4219
  %v4228 = vadd.f32 %v4176, %v4220
  %v4229 = vadd.f32 %v4177, %v4221
  %v4230 = vadd.f32 %v4178, %v4222
  %v4231 = vadd.f32 %v4179, %v4223
  %v4232 = vadd.f32 %v4180, %v4224
  %v4233 = vadd.f32 %v4181, %v4225
  %v4234 = vadd.f32 %v4182, %v4226
  %v4235 = vadd.f32 %v4227, 0.0
  %v4236 = vadd.f32 %v4228, 0.0
  %v4237 = vadd.f32 %v4229, 0.0
  %v4238 = vadd.f32 %v4230, 0.0
  %v4239 = vadd.f32 %v4231, 0.0
  %v4240 = vadd.f32 %v4232, 0.0
  %v4241 = vadd.f32 %v4233, 0.0
  %v4242 = vadd.f32 %v4234, 0.0
  %s4243 = scalar_lea.vmem %s9, 1
  %v4244 = vld [vmem:[%s4243] ss:$2 sm:$0x1f]
  %s4245 = scalar_lea.vmem %s9, 17
  %v4246 = vld [vmem:[%s4245] ss:$2 sm:$0x1f]
  %s4247 = scalar_lea.vmem %s9, 33
  %v4248 = vld [vmem:[%s4247] ss:$2 sm:$0x1f]
  %s4249 = scalar_lea.vmem %s9, 49
  %v4250 = vld [vmem:[%s4249] ss:$2 sm:$0x1f]
  %s4251 = scalar_lea.vmem %s9, 65
  %v4252 = vld [vmem:[%s4251] ss:$2 sm:$0x1f]
  %s4253 = scalar_lea.vmem %s9, 81
  %v4254 = vld [vmem:[%s4253] ss:$2 sm:$0x1f]
  %s4255 = scalar_lea.vmem %s9, 97
  %v4256 = vld [vmem:[%s4255] ss:$2 sm:$0x1f]
  %s4257 = scalar_lea.vmem %s9, 113
  %v4258 = vld [vmem:[%s4257] ss:$2 sm:$0x1f]
  %s4259 = scalar_lea.vmem %s7, 8
  %v4260 = vld [vmem:[%s4259] sm:$0xff]
  %4262 = vset.pattern.permute.xlu0 0
  %4263 = vperm.xlu0 %4262, %v4244
  %v4264 = vpop.permute.xlu0 %4263
  %4267 = vset.pattern.permute.xlu0 0
  %4268 = vperm.xlu0 %4267, %v4246
  %v4269 = vpop.permute.xlu0 %4268
  %4272 = vset.pattern.permute.xlu0 0
  %4273 = vperm.xlu0 %4272, %v4248
  %v4274 = vpop.permute.xlu0 %4273
  %4277 = vset.pattern.permute.xlu0 0
  %4278 = vperm.xlu0 %4277, %v4250
  %v4279 = vpop.permute.xlu0 %4278
  %4282 = vset.pattern.permute.xlu0 0
  %4283 = vperm.xlu0 %4282, %v4252
  %v4284 = vpop.permute.xlu0 %4283
  %4287 = vset.pattern.permute.xlu0 0
  %4288 = vperm.xlu0 %4287, %v4254
  %v4289 = vpop.permute.xlu0 %4288
  %4292 = vset.pattern.permute.xlu0 0
  %4293 = vperm.xlu0 %4292, %v4256
  %v4294 = vpop.permute.xlu0 %4293
  %4297 = vset.pattern.permute.xlu0 0
  %4298 = vperm.xlu0 %4297, %v4258
  %v4299 = vpop.permute.xlu0 %4298
  %v4301 = vlaneseq
  %v4302 = vshrl.u32 %v4301, 7
  %v4303 = vsub.s32 0, %v4302
  %v4304 = vrot.slane %v4260, %v4303
  %v4305 = vmul.f32 %v4264, %v4304
  %v4306 = vmul.f32 %v4269, %v4304
  %v4307 = vmul.f32 %v4274, %v4304
  %v4308 = vmul.f32 %v4279, %v4304
  %v4309 = vmul.f32 %v4284, %v4304
  %v4310 = vmul.f32 %v4289, %v4304
  %v4311 = vmul.f32 %v4294, %v4304
  %v4312 = vmul.f32 %v4299, %v4304
  %4313 = vset.pattern.permute.xlu0 1
  %4314 = vperm.xlu0 %4313, %v4244
  %v4315 = vpop.permute.xlu0 %4314
  %4317 = vset.pattern.permute.xlu0 1
  %4318 = vperm.xlu0 %4317, %v4246
  %v4319 = vpop.permute.xlu0 %4318
  %4321 = vset.pattern.permute.xlu0 1
  %4322 = vperm.xlu0 %4321, %v4248
  %v4323 = vpop.permute.xlu0 %4322
  %4325 = vset.pattern.permute.xlu0 1
  %4326 = vperm.xlu0 %4325, %v4250
  %v4327 = vpop.permute.xlu0 %4326
  %4329 = vset.pattern.permute.xlu0 1
  %4330 = vperm.xlu0 %4329, %v4252
  %v4331 = vpop.permute.xlu0 %4330
  %4333 = vset.pattern.permute.xlu0 1
  %4334 = vperm.xlu0 %4333, %v4254
  %v4335 = vpop.permute.xlu0 %4334
  %4337 = vset.pattern.permute.xlu0 1
  %4338 = vperm.xlu0 %4337, %v4256
  %v4339 = vpop.permute.xlu0 %4338
  %4341 = vset.pattern.permute.xlu0 1
  %4342 = vperm.xlu0 %4341, %v4258
  %v4343 = vpop.permute.xlu0 %4342
  %v4345 = vlaneseq
  %v4346 = vshrl.u32 %v4345, 7
  %v4347 = vsub.s32 1, %v4346
  %v4348 = vrot.slane %v4260, %v4347
  %v4349 = vmul.f32 %v4315, %v4348
  %v4350 = vmul.f32 %v4319, %v4348
  %v4351 = vmul.f32 %v4323, %v4348
  %v4352 = vmul.f32 %v4327, %v4348
  %v4353 = vmul.f32 %v4331, %v4348
  %v4354 = vmul.f32 %v4335, %v4348
  %v4355 = vmul.f32 %v4339, %v4348
  %v4356 = vmul.f32 %v4343, %v4348
  %v4357 = vadd.f32 %v4305, %v4349
  %v4358 = vadd.f32 %v4306, %v4350
  %v4359 = vadd.f32 %v4307, %v4351
  %v4360 = vadd.f32 %v4308, %v4352
  %v4361 = vadd.f32 %v4309, %v4353
  %v4362 = vadd.f32 %v4310, %v4354
  %v4363 = vadd.f32 %v4311, %v4355
  %v4364 = vadd.f32 %v4312, %v4356
  %4365 = vset.pattern.permute.xlu0 2
  %4366 = vperm.xlu0 %4365, %v4244
  %v4367 = vpop.permute.xlu0 %4366
  %4369 = vset.pattern.permute.xlu0 2
  %4370 = vperm.xlu0 %4369, %v4246
  %v4371 = vpop.permute.xlu0 %4370
  %4373 = vset.pattern.permute.xlu0 2
  %4374 = vperm.xlu0 %4373, %v4248
  %v4375 = vpop.permute.xlu0 %4374
  %4377 = vset.pattern.permute.xlu0 2
  %4378 = vperm.xlu0 %4377, %v4250
  %v4379 = vpop.permute.xlu0 %4378
  %4381 = vset.pattern.permute.xlu0 2
  %4382 = vperm.xlu0 %4381, %v4252
  %v4383 = vpop.permute.xlu0 %4382
  %4385 = vset.pattern.permute.xlu0 2
  %4386 = vperm.xlu0 %4385, %v4254
  %v4387 = vpop.permute.xlu0 %4386
  %4389 = vset.pattern.permute.xlu0 2
  %4390 = vperm.xlu0 %4389, %v4256
  %v4391 = vpop.permute.xlu0 %4390
  %4393 = vset.pattern.permute.xlu0 2
  %4394 = vperm.xlu0 %4393, %v4258
  %v4395 = vpop.permute.xlu0 %4394
  %v4397 = vlaneseq
  %v4398 = vshrl.u32 %v4397, 7
  %v4399 = vsub.s32 2, %v4398
  %v4400 = vrot.slane %v4260, %v4399
  %v4401 = vmul.f32 %v4367, %v4400
  %v4402 = vmul.f32 %v4371, %v4400
  %v4403 = vmul.f32 %v4375, %v4400
  %v4404 = vmul.f32 %v4379, %v4400
  %v4405 = vmul.f32 %v4383, %v4400
  %v4406 = vmul.f32 %v4387, %v4400
  %v4407 = vmul.f32 %v4391, %v4400
  %v4408 = vmul.f32 %v4395, %v4400
  %v4409 = vadd.f32 %v4357, %v4401
  %v4410 = vadd.f32 %v4358, %v4402
  %v4411 = vadd.f32 %v4359, %v4403
  %v4412 = vadd.f32 %v4360, %v4404
  %v4413 = vadd.f32 %v4361, %v4405
  %v4414 = vadd.f32 %v4362, %v4406
  %v4415 = vadd.f32 %v4363, %v4407
  %v4416 = vadd.f32 %v4364, %v4408
  %4417 = vset.pattern.permute.xlu0 3
  %4418 = vperm.xlu0 %4417, %v4244
  %v4419 = vpop.permute.xlu0 %4418
  %4421 = vset.pattern.permute.xlu0 3
  %4422 = vperm.xlu0 %4421, %v4246
  %v4423 = vpop.permute.xlu0 %4422
  %4425 = vset.pattern.permute.xlu0 3
  %4426 = vperm.xlu0 %4425, %v4248
  %v4427 = vpop.permute.xlu0 %4426
  %4429 = vset.pattern.permute.xlu0 3
  %4430 = vperm.xlu0 %4429, %v4250
  %v4431 = vpop.permute.xlu0 %4430
  %4433 = vset.pattern.permute.xlu0 3
  %4434 = vperm.xlu0 %4433, %v4252
  %v4435 = vpop.permute.xlu0 %4434
  %4437 = vset.pattern.permute.xlu0 3
  %4438 = vperm.xlu0 %4437, %v4254
  %v4439 = vpop.permute.xlu0 %4438
  %4441 = vset.pattern.permute.xlu0 3
  %4442 = vperm.xlu0 %4441, %v4256
  %v4443 = vpop.permute.xlu0 %4442
  %4445 = vset.pattern.permute.xlu0 3
  %4446 = vperm.xlu0 %4445, %v4258
  %v4447 = vpop.permute.xlu0 %4446
  %v4449 = vlaneseq
  %v4450 = vshrl.u32 %v4449, 7
  %v4451 = vsub.s32 3, %v4450
  %v4452 = vrot.slane %v4260, %v4451
  %v4453 = vmul.f32 %v4419, %v4452
  %v4454 = vmul.f32 %v4423, %v4452
  %v4455 = vmul.f32 %v4427, %v4452
  %v4456 = vmul.f32 %v4431, %v4452
  %v4457 = vmul.f32 %v4435, %v4452
  %v4458 = vmul.f32 %v4439, %v4452
  %v4459 = vmul.f32 %v4443, %v4452
  %v4460 = vmul.f32 %v4447, %v4452
  %v4461 = vadd.f32 %v4409, %v4453
  %v4462 = vadd.f32 %v4410, %v4454
  %v4463 = vadd.f32 %v4411, %v4455
  %v4464 = vadd.f32 %v4412, %v4456
  %v4465 = vadd.f32 %v4413, %v4457
  %v4466 = vadd.f32 %v4414, %v4458
  %v4467 = vadd.f32 %v4415, %v4459
  %v4468 = vadd.f32 %v4416, %v4460
  %4469 = vset.pattern.permute.xlu0 4
  %4470 = vperm.xlu0 %4469, %v4244
  %v4471 = vpop.permute.xlu0 %4470
  %4473 = vset.pattern.permute.xlu0 4
  %4474 = vperm.xlu0 %4473, %v4246
  %v4475 = vpop.permute.xlu0 %4474
  %4477 = vset.pattern.permute.xlu0 4
  %4478 = vperm.xlu0 %4477, %v4248
  %v4479 = vpop.permute.xlu0 %4478
  %4481 = vset.pattern.permute.xlu0 4
  %4482 = vperm.xlu0 %4481, %v4250
  %v4483 = vpop.permute.xlu0 %4482
  %4485 = vset.pattern.permute.xlu0 4
  %4486 = vperm.xlu0 %4485, %v4252
  %v4487 = vpop.permute.xlu0 %4486
  %4489 = vset.pattern.permute.xlu0 4
  %4490 = vperm.xlu0 %4489, %v4254
  %v4491 = vpop.permute.xlu0 %4490
  %4493 = vset.pattern.permute.xlu0 4
  %4494 = vperm.xlu0 %4493, %v4256
  %v4495 = vpop.permute.xlu0 %4494
  %4497 = vset.pattern.permute.xlu0 4
  %4498 = vperm.xlu0 %4497, %v4258
  %v4499 = vpop.permute.xlu0 %4498
  %v4501 = vlaneseq
  %v4502 = vshrl.u32 %v4501, 7
  %v4503 = vsub.s32 4, %v4502
  %v4504 = vrot.slane %v4260, %v4503
  %v4505 = vmul.f32 %v4471, %v4504
  %v4506 = vmul.f32 %v4475, %v4504
  %v4507 = vmul.f32 %v4479, %v4504
  %v4508 = vmul.f32 %v4483, %v4504
  %v4509 = vmul.f32 %v4487, %v4504
  %v4510 = vmul.f32 %v4491, %v4504
  %v4511 = vmul.f32 %v4495, %v4504
  %v4512 = vmul.f32 %v4499, %v4504
  %v4513 = vadd.f32 %v4461, %v4505
  %v4514 = vadd.f32 %v4462, %v4506
  %v4515 = vadd.f32 %v4463, %v4507
  %v4516 = vadd.f32 %v4464, %v4508
  %v4517 = vadd.f32 %v4465, %v4509
  %v4518 = vadd.f32 %v4466, %v4510
  %v4519 = vadd.f32 %v4467, %v4511
  %v4520 = vadd.f32 %v4468, %v4512
  %4521 = vset.pattern.permute.xlu0 5
  %4522 = vperm.xlu0 %4521, %v4244
  %v4523 = vpop.permute.xlu0 %4522
  %4525 = vset.pattern.permute.xlu0 5
  %4526 = vperm.xlu0 %4525, %v4246
  %v4527 = vpop.permute.xlu0 %4526
  %4529 = vset.pattern.permute.xlu0 5
  %4530 = vperm.xlu0 %4529, %v4248
  %v4531 = vpop.permute.xlu0 %4530
  %4533 = vset.pattern.permute.xlu0 5
  %4534 = vperm.xlu0 %4533, %v4250
  %v4535 = vpop.permute.xlu0 %4534
  %4537 = vset.pattern.permute.xlu0 5
  %4538 = vperm.xlu0 %4537, %v4252
  %v4539 = vpop.permute.xlu0 %4538
  %4541 = vset.pattern.permute.xlu0 5
  %4542 = vperm.xlu0 %4541, %v4254
  %v4543 = vpop.permute.xlu0 %4542
  %4545 = vset.pattern.permute.xlu0 5
  %4546 = vperm.xlu0 %4545, %v4256
  %v4547 = vpop.permute.xlu0 %4546
  %4549 = vset.pattern.permute.xlu0 5
  %4550 = vperm.xlu0 %4549, %v4258
  %v4551 = vpop.permute.xlu0 %4550
  %v4553 = vlaneseq
  %v4554 = vshrl.u32 %v4553, 7
  %v4555 = vsub.s32 5, %v4554
  %v4556 = vrot.slane %v4260, %v4555
  %v4557 = vmul.f32 %v4523, %v4556
  %v4558 = vmul.f32 %v4527, %v4556
  %v4559 = vmul.f32 %v4531, %v4556
  %v4560 = vmul.f32 %v4535, %v4556
  %v4561 = vmul.f32 %v4539, %v4556
  %v4562 = vmul.f32 %v4543, %v4556
  %v4563 = vmul.f32 %v4547, %v4556
  %v4564 = vmul.f32 %v4551, %v4556
  %v4565 = vadd.f32 %v4513, %v4557
  %v4566 = vadd.f32 %v4514, %v4558
  %v4567 = vadd.f32 %v4515, %v4559
  %v4568 = vadd.f32 %v4516, %v4560
  %v4569 = vadd.f32 %v4517, %v4561
  %v4570 = vadd.f32 %v4518, %v4562
  %v4571 = vadd.f32 %v4519, %v4563
  %v4572 = vadd.f32 %v4520, %v4564
  %4573 = vset.pattern.permute.xlu0 6
  %4574 = vperm.xlu0 %4573, %v4244
  %v4575 = vpop.permute.xlu0 %4574
  %4577 = vset.pattern.permute.xlu0 6
  %4578 = vperm.xlu0 %4577, %v4246
  %v4579 = vpop.permute.xlu0 %4578
  %4581 = vset.pattern.permute.xlu0 6
  %4582 = vperm.xlu0 %4581, %v4248
  %v4583 = vpop.permute.xlu0 %4582
  %4585 = vset.pattern.permute.xlu0 6
  %4586 = vperm.xlu0 %4585, %v4250
  %v4587 = vpop.permute.xlu0 %4586
  %4589 = vset.pattern.permute.xlu0 6
  %4590 = vperm.xlu0 %4589, %v4252
  %v4591 = vpop.permute.xlu0 %4590
  %4593 = vset.pattern.permute.xlu0 6
  %4594 = vperm.xlu0 %4593, %v4254
  %v4595 = vpop.permute.xlu0 %4594
  %4597 = vset.pattern.permute.xlu0 6
  %4598 = vperm.xlu0 %4597, %v4256
  %v4599 = vpop.permute.xlu0 %4598
  %4601 = vset.pattern.permute.xlu0 6
  %4602 = vperm.xlu0 %4601, %v4258
  %v4603 = vpop.permute.xlu0 %4602
  %v4605 = vlaneseq
  %v4606 = vshrl.u32 %v4605, 7
  %v4607 = vsub.s32 6, %v4606
  %v4608 = vrot.slane %v4260, %v4607
  %v4609 = vmul.f32 %v4575, %v4608
  %v4610 = vmul.f32 %v4579, %v4608
  %v4611 = vmul.f32 %v4583, %v4608
  %v4612 = vmul.f32 %v4587, %v4608
  %v4613 = vmul.f32 %v4591, %v4608
  %v4614 = vmul.f32 %v4595, %v4608
  %v4615 = vmul.f32 %v4599, %v4608
  %v4616 = vmul.f32 %v4603, %v4608
  %v4617 = vadd.f32 %v4565, %v4609
  %v4618 = vadd.f32 %v4566, %v4610
  %v4619 = vadd.f32 %v4567, %v4611
  %v4620 = vadd.f32 %v4568, %v4612
  %v4621 = vadd.f32 %v4569, %v4613
  %v4622 = vadd.f32 %v4570, %v4614
  %v4623 = vadd.f32 %v4571, %v4615
  %v4624 = vadd.f32 %v4572, %v4616
  %4625 = vset.pattern.permute.xlu0 7
  %4626 = vperm.xlu0 %4625, %v4244
  %v4627 = vpop.permute.xlu0 %4626
  %4629 = vset.pattern.permute.xlu0 7
  %4630 = vperm.xlu0 %4629, %v4246
  %v4631 = vpop.permute.xlu0 %4630
  %4633 = vset.pattern.permute.xlu0 7
  %4634 = vperm.xlu0 %4633, %v4248
  %v4635 = vpop.permute.xlu0 %4634
  %4637 = vset.pattern.permute.xlu0 7
  %4638 = vperm.xlu0 %4637, %v4250
  %v4639 = vpop.permute.xlu0 %4638
  %4641 = vset.pattern.permute.xlu0 7
  %4642 = vperm.xlu0 %4641, %v4252
  %v4643 = vpop.permute.xlu0 %4642
  %4645 = vset.pattern.permute.xlu0 7
  %4646 = vperm.xlu0 %4645, %v4254
  %v4647 = vpop.permute.xlu0 %4646
  %4649 = vset.pattern.permute.xlu0 7
  %4650 = vperm.xlu0 %4649, %v4256
  %v4651 = vpop.permute.xlu0 %4650
  %4653 = vset.pattern.permute.xlu0 7
  %4654 = vperm.xlu0 %4653, %v4258
  %v4655 = vpop.permute.xlu0 %4654
  %v4657 = vlaneseq
  %v4658 = vshrl.u32 %v4657, 7
  %v4659 = vsub.s32 7, %v4658
  %v4660 = vrot.slane %v4260, %v4659
  %v4661 = vmul.f32 %v4627, %v4660
  %v4662 = vmul.f32 %v4631, %v4660
  %v4663 = vmul.f32 %v4635, %v4660
  %v4664 = vmul.f32 %v4639, %v4660
  %v4665 = vmul.f32 %v4643, %v4660
  %v4666 = vmul.f32 %v4647, %v4660
  %v4667 = vmul.f32 %v4651, %v4660
  %v4668 = vmul.f32 %v4655, %v4660
  %v4669 = vadd.f32 %v4617, %v4661
  %v4670 = vadd.f32 %v4618, %v4662
  %v4671 = vadd.f32 %v4619, %v4663
  %v4672 = vadd.f32 %v4620, %v4664
  %v4673 = vadd.f32 %v4621, %v4665
  %v4674 = vadd.f32 %v4622, %v4666
  %v4675 = vadd.f32 %v4623, %v4667
  %v4676 = vadd.f32 %v4624, %v4668
  %v4677 = vadd.f32 %v4235, %v4669
  %v4678 = vadd.f32 %v4236, %v4670
  %v4679 = vadd.f32 %v4237, %v4671
  %v4680 = vadd.f32 %v4238, %v4672
  %v4681 = vadd.f32 %v4239, %v4673
  %v4682 = vadd.f32 %v4240, %v4674
  %v4683 = vadd.f32 %v4241, %v4675
  %v4684 = vadd.f32 %v4242, %v4676
  %s4685 = scalar_lea.vmem %s9, 2
  %v4686 = vld [vmem:[%s4685] ss:$2 sm:$0x1f]
  %s4687 = scalar_lea.vmem %s9, 18
  %v4688 = vld [vmem:[%s4687] ss:$2 sm:$0x1f]
  %s4689 = scalar_lea.vmem %s9, 34
  %v4690 = vld [vmem:[%s4689] ss:$2 sm:$0x1f]
  %s4691 = scalar_lea.vmem %s9, 50
  %v4692 = vld [vmem:[%s4691] ss:$2 sm:$0x1f]
  %s4693 = scalar_lea.vmem %s9, 66
  %v4694 = vld [vmem:[%s4693] ss:$2 sm:$0x1f]
  %s4695 = scalar_lea.vmem %s9, 82
  %v4696 = vld [vmem:[%s4695] ss:$2 sm:$0x1f]
  %s4697 = scalar_lea.vmem %s9, 98
  %v4698 = vld [vmem:[%s4697] ss:$2 sm:$0x1f]
  %s4699 = scalar_lea.vmem %s9, 114
  %v4700 = vld [vmem:[%s4699] ss:$2 sm:$0x1f]
  %s4701 = scalar_lea.vmem %s7, 16
  %v4702 = vld [vmem:[%s4701] sm:$0xff]
  %4704 = vset.pattern.permute.xlu0 0
  %4705 = vperm.xlu0 %4704, %v4686
  %v4706 = vpop.permute.xlu0 %4705
  %4709 = vset.pattern.permute.xlu0 0
  %4710 = vperm.xlu0 %4709, %v4688
  %v4711 = vpop.permute.xlu0 %4710
  %4714 = vset.pattern.permute.xlu0 0
  %4715 = vperm.xlu0 %4714, %v4690
  %v4716 = vpop.permute.xlu0 %4715
  %4719 = vset.pattern.permute.xlu0 0
  %4720 = vperm.xlu0 %4719, %v4692
  %v4721 = vpop.permute.xlu0 %4720
  %4724 = vset.pattern.permute.xlu0 0
  %4725 = vperm.xlu0 %4724, %v4694
  %v4726 = vpop.permute.xlu0 %4725
  %4729 = vset.pattern.permute.xlu0 0
  %4730 = vperm.xlu0 %4729, %v4696
  %v4731 = vpop.permute.xlu0 %4730
  %4734 = vset.pattern.permute.xlu0 0
  %4735 = vperm.xlu0 %4734, %v4698
  %v4736 = vpop.permute.xlu0 %4735
  %4739 = vset.pattern.permute.xlu0 0
  %4740 = vperm.xlu0 %4739, %v4700
  %v4741 = vpop.permute.xlu0 %4740
  %v4743 = vlaneseq
  %v4744 = vshrl.u32 %v4743, 7
  %v4745 = vsub.s32 0, %v4744
  %v4746 = vrot.slane %v4702, %v4745
  %v4747 = vmul.f32 %v4706, %v4746
  %v4748 = vmul.f32 %v4711, %v4746
  %v4749 = vmul.f32 %v4716, %v4746
  %v4750 = vmul.f32 %v4721, %v4746
  %v4751 = vmul.f32 %v4726, %v4746
  %v4752 = vmul.f32 %v4731, %v4746
  %v4753 = vmul.f32 %v4736, %v4746
  %v4754 = vmul.f32 %v4741, %v4746
  %4755 = vset.pattern.permute.xlu0 1
  %4756 = vperm.xlu0 %4755, %v4686
  %v4757 = vpop.permute.xlu0 %4756
  %4759 = vset.pattern.permute.xlu0 1
  %4760 = vperm.xlu0 %4759, %v4688
  %v4761 = vpop.permute.xlu0 %4760
  %4763 = vset.pattern.permute.xlu0 1
  %4764 = vperm.xlu0 %4763, %v4690
  %v4765 = vpop.permute.xlu0 %4764
  %4767 = vset.pattern.permute.xlu0 1
  %4768 = vperm.xlu0 %4767, %v4692
  %v4769 = vpop.permute.xlu0 %4768
  %4771 = vset.pattern.permute.xlu0 1
  %4772 = vperm.xlu0 %4771, %v4694
  %v4773 = vpop.permute.xlu0 %4772
  %4775 = vset.pattern.permute.xlu0 1
  %4776 = vperm.xlu0 %4775, %v4696
  %v4777 = vpop.permute.xlu0 %4776
  %4779 = vset.pattern.permute.xlu0 1
  %4780 = vperm.xlu0 %4779, %v4698
  %v4781 = vpop.permute.xlu0 %4780
  %4783 = vset.pattern.permute.xlu0 1
  %4784 = vperm.xlu0 %4783, %v4700
  %v4785 = vpop.permute.xlu0 %4784
  %v4787 = vlaneseq
  %v4788 = vshrl.u32 %v4787, 7
  %v4789 = vsub.s32 1, %v4788
  %v4790 = vrot.slane %v4702, %v4789
  %v4791 = vmul.f32 %v4757, %v4790
  %v4792 = vmul.f32 %v4761, %v4790
  %v4793 = vmul.f32 %v4765, %v4790
  %v4794 = vmul.f32 %v4769, %v4790
  %v4795 = vmul.f32 %v4773, %v4790
  %v4796 = vmul.f32 %v4777, %v4790
  %v4797 = vmul.f32 %v4781, %v4790
  %v4798 = vmul.f32 %v4785, %v4790
  %v4799 = vadd.f32 %v4747, %v4791
  %v4800 = vadd.f32 %v4748, %v4792
  %v4801 = vadd.f32 %v4749, %v4793
  %v4802 = vadd.f32 %v4750, %v4794
  %v4803 = vadd.f32 %v4751, %v4795
  %v4804 = vadd.f32 %v4752, %v4796
  %v4805 = vadd.f32 %v4753, %v4797
  %v4806 = vadd.f32 %v4754, %v4798
  %4807 = vset.pattern.permute.xlu0 2
  %4808 = vperm.xlu0 %4807, %v4686
  %v4809 = vpop.permute.xlu0 %4808
  %4811 = vset.pattern.permute.xlu0 2
  %4812 = vperm.xlu0 %4811, %v4688
  %v4813 = vpop.permute.xlu0 %4812
  %4815 = vset.pattern.permute.xlu0 2
  %4816 = vperm.xlu0 %4815, %v4690
  %v4817 = vpop.permute.xlu0 %4816
  %4819 = vset.pattern.permute.xlu0 2
  %4820 = vperm.xlu0 %4819, %v4692
  %v4821 = vpop.permute.xlu0 %4820
  %4823 = vset.pattern.permute.xlu0 2
  %4824 = vperm.xlu0 %4823, %v4694
  %v4825 = vpop.permute.xlu0 %4824
  %4827 = vset.pattern.permute.xlu0 2
  %4828 = vperm.xlu0 %4827, %v4696
  %v4829 = vpop.permute.xlu0 %4828
  %4831 = vset.pattern.permute.xlu0 2
  %4832 = vperm.xlu0 %4831, %v4698
  %v4833 = vpop.permute.xlu0 %4832
  %4835 = vset.pattern.permute.xlu0 2
  %4836 = vperm.xlu0 %4835, %v4700
  %v4837 = vpop.permute.xlu0 %4836
  %v4839 = vlaneseq
  %v4840 = vshrl.u32 %v4839, 7
  %v4841 = vsub.s32 2, %v4840
  %v4842 = vrot.slane %v4702, %v4841
  %v4843 = vmul.f32 %v4809, %v4842
  %v4844 = vmul.f32 %v4813, %v4842
  %v4845 = vmul.f32 %v4817, %v4842
  %v4846 = vmul.f32 %v4821, %v4842
  %v4847 = vmul.f32 %v4825, %v4842
  %v4848 = vmul.f32 %v4829, %v4842
  %v4849 = vmul.f32 %v4833, %v4842
  %v4850 = vmul.f32 %v4837, %v4842
  %v4851 = vadd.f32 %v4799, %v4843
  %v4852 = vadd.f32 %v4800, %v4844
  %v4853 = vadd.f32 %v4801, %v4845
  %v4854 = vadd.f32 %v4802, %v4846
  %v4855 = vadd.f32 %v4803, %v4847
  %v4856 = vadd.f32 %v4804, %v4848
  %v4857 = vadd.f32 %v4805, %v4849
  %v4858 = vadd.f32 %v4806, %v4850
  %4859 = vset.pattern.permute.xlu0 3
  %4860 = vperm.xlu0 %4859, %v4686
  %v4861 = vpop.permute.xlu0 %4860
  %4863 = vset.pattern.permute.xlu0 3
  %4864 = vperm.xlu0 %4863, %v4688
  %v4865 = vpop.permute.xlu0 %4864
  %4867 = vset.pattern.permute.xlu0 3
  %4868 = vperm.xlu0 %4867, %v4690
  %v4869 = vpop.permute.xlu0 %4868
  %4871 = vset.pattern.permute.xlu0 3
  %4872 = vperm.xlu0 %4871, %v4692
  %v4873 = vpop.permute.xlu0 %4872
  %4875 = vset.pattern.permute.xlu0 3
  %4876 = vperm.xlu0 %4875, %v4694
  %v4877 = vpop.permute.xlu0 %4876
  %4879 = vset.pattern.permute.xlu0 3
  %4880 = vperm.xlu0 %4879, %v4696
  %v4881 = vpop.permute.xlu0 %4880
  %4883 = vset.pattern.permute.xlu0 3
  %4884 = vperm.xlu0 %4883, %v4698
  %v4885 = vpop.permute.xlu0 %4884
  %4887 = vset.pattern.permute.xlu0 3
  %4888 = vperm.xlu0 %4887, %v4700
  %v4889 = vpop.permute.xlu0 %4888
  %v4891 = vlaneseq
  %v4892 = vshrl.u32 %v4891, 7
  %v4893 = vsub.s32 3, %v4892
  %v4894 = vrot.slane %v4702, %v4893
  %v4895 = vmul.f32 %v4861, %v4894
  %v4896 = vmul.f32 %v4865, %v4894
  %v4897 = vmul.f32 %v4869, %v4894
  %v4898 = vmul.f32 %v4873, %v4894
  %v4899 = vmul.f32 %v4877, %v4894
  %v4900 = vmul.f32 %v4881, %v4894
  %v4901 = vmul.f32 %v4885, %v4894
  %v4902 = vmul.f32 %v4889, %v4894
  %v4903 = vadd.f32 %v4851, %v4895
  %v4904 = vadd.f32 %v4852, %v4896
  %v4905 = vadd.f32 %v4853, %v4897
  %v4906 = vadd.f32 %v4854, %v4898
  %v4907 = vadd.f32 %v4855, %v4899
  %v4908 = vadd.f32 %v4856, %v4900
  %v4909 = vadd.f32 %v4857, %v4901
  %v4910 = vadd.f32 %v4858, %v4902
  %4911 = vset.pattern.permute.xlu0 4
  %4912 = vperm.xlu0 %4911, %v4686
  %v4913 = vpop.permute.xlu0 %4912
  %4915 = vset.pattern.permute.xlu0 4
  %4916 = vperm.xlu0 %4915, %v4688
  %v4917 = vpop.permute.xlu0 %4916
  %4919 = vset.pattern.permute.xlu0 4
  %4920 = vperm.xlu0 %4919, %v4690
  %v4921 = vpop.permute.xlu0 %4920
  %4923 = vset.pattern.permute.xlu0 4
  %4924 = vperm.xlu0 %4923, %v4692
  %v4925 = vpop.permute.xlu0 %4924
  %4927 = vset.pattern.permute.xlu0 4
  %4928 = vperm.xlu0 %4927, %v4694
  %v4929 = vpop.permute.xlu0 %4928
  %4931 = vset.pattern.permute.xlu0 4
  %4932 = vperm.xlu0 %4931, %v4696
  %v4933 = vpop.permute.xlu0 %4932
  %4935 = vset.pattern.permute.xlu0 4
  %4936 = vperm.xlu0 %4935, %v4698
  %v4937 = vpop.permute.xlu0 %4936
  %4939 = vset.pattern.permute.xlu0 4
  %4940 = vperm.xlu0 %4939, %v4700
  %v4941 = vpop.permute.xlu0 %4940
  %v4943 = vlaneseq
  %v4944 = vshrl.u32 %v4943, 7
  %v4945 = vsub.s32 4, %v4944
  %v4946 = vrot.slane %v4702, %v4945
  %v4947 = vmul.f32 %v4913, %v4946
  %v4948 = vmul.f32 %v4917, %v4946
  %v4949 = vmul.f32 %v4921, %v4946
  %v4950 = vmul.f32 %v4925, %v4946
  %v4951 = vmul.f32 %v4929, %v4946
  %v4952 = vmul.f32 %v4933, %v4946
  %v4953 = vmul.f32 %v4937, %v4946
  %v4954 = vmul.f32 %v4941, %v4946
  %v4955 = vadd.f32 %v4903, %v4947
  %v4956 = vadd.f32 %v4904, %v4948
  %v4957 = vadd.f32 %v4905, %v4949
  %v4958 = vadd.f32 %v4906, %v4950
  %v4959 = vadd.f32 %v4907, %v4951
  %v4960 = vadd.f32 %v4908, %v4952
  %v4961 = vadd.f32 %v4909, %v4953
  %v4962 = vadd.f32 %v4910, %v4954
  %4963 = vset.pattern.permute.xlu0 5
  %4964 = vperm.xlu0 %4963, %v4686
  %v4965 = vpop.permute.xlu0 %4964
  %4967 = vset.pattern.permute.xlu0 5
  %4968 = vperm.xlu0 %4967, %v4688
  %v4969 = vpop.permute.xlu0 %4968
  %4971 = vset.pattern.permute.xlu0 5
  %4972 = vperm.xlu0 %4971, %v4690
  %v4973 = vpop.permute.xlu0 %4972
  %4975 = vset.pattern.permute.xlu0 5
  %4976 = vperm.xlu0 %4975, %v4692
  %v4977 = vpop.permute.xlu0 %4976
  %4979 = vset.pattern.permute.xlu0 5
  %4980 = vperm.xlu0 %4979, %v4694
  %v4981 = vpop.permute.xlu0 %4980
  %4983 = vset.pattern.permute.xlu0 5
  %4984 = vperm.xlu0 %4983, %v4696
  %v4985 = vpop.permute.xlu0 %4984
  %4987 = vset.pattern.permute.xlu0 5
  %4988 = vperm.xlu0 %4987, %v4698
  %v4989 = vpop.permute.xlu0 %4988
  %4991 = vset.pattern.permute.xlu0 5
  %4992 = vperm.xlu0 %4991, %v4700
  %v4993 = vpop.permute.xlu0 %4992
  %v4995 = vlaneseq
  %v4996 = vshrl.u32 %v4995, 7
  %v4997 = vsub.s32 5, %v4996
  %v4998 = vrot.slane %v4702, %v4997
  %v4999 = vmul.f32 %v4965, %v4998
  %v5000 = vmul.f32 %v4969, %v4998
  %v5001 = vmul.f32 %v4973, %v4998
  %v5002 = vmul.f32 %v4977, %v4998
  %v5003 = vmul.f32 %v4981, %v4998
  %v5004 = vmul.f32 %v4985, %v4998
  %v5005 = vmul.f32 %v4989, %v4998
  %v5006 = vmul.f32 %v4993, %v4998
  %v5007 = vadd.f32 %v4955, %v4999
  %v5008 = vadd.f32 %v4956, %v5000
  %v5009 = vadd.f32 %v4957, %v5001
  %v5010 = vadd.f32 %v4958, %v5002
  %v5011 = vadd.f32 %v4959, %v5003
  %v5012 = vadd.f32 %v4960, %v5004
  %v5013 = vadd.f32 %v4961, %v5005
  %v5014 = vadd.f32 %v4962, %v5006
  %5015 = vset.pattern.permute.xlu0 6
  %5016 = vperm.xlu0 %5015, %v4686
  %v5017 = vpop.permute.xlu0 %5016
  %5019 = vset.pattern.permute.xlu0 6
  %5020 = vperm.xlu0 %5019, %v4688
  %v5021 = vpop.permute.xlu0 %5020
  %5023 = vset.pattern.permute.xlu0 6
  %5024 = vperm.xlu0 %5023, %v4690
  %v5025 = vpop.permute.xlu0 %5024
  %5027 = vset.pattern.permute.xlu0 6
  %5028 = vperm.xlu0 %5027, %v4692
  %v5029 = vpop.permute.xlu0 %5028
  %5031 = vset.pattern.permute.xlu0 6
  %5032 = vperm.xlu0 %5031, %v4694
  %v5033 = vpop.permute.xlu0 %5032
  %5035 = vset.pattern.permute.xlu0 6
  %5036 = vperm.xlu0 %5035, %v4696
  %v5037 = vpop.permute.xlu0 %5036
  %5039 = vset.pattern.permute.xlu0 6
  %5040 = vperm.xlu0 %5039, %v4698
  %v5041 = vpop.permute.xlu0 %5040
  %5043 = vset.pattern.permute.xlu0 6
  %5044 = vperm.xlu0 %5043, %v4700
  %v5045 = vpop.permute.xlu0 %5044
  %v5047 = vlaneseq
  %v5048 = vshrl.u32 %v5047, 7
  %v5049 = vsub.s32 6, %v5048
  %v5050 = vrot.slane %v4702, %v5049
  %v5051 = vmul.f32 %v5017, %v5050
  %v5052 = vmul.f32 %v5021, %v5050
  %v5053 = vmul.f32 %v5025, %v5050
  %v5054 = vmul.f32 %v5029, %v5050
  %v5055 = vmul.f32 %v5033, %v5050
  %v5056 = vmul.f32 %v5037, %v5050
  %v5057 = vmul.f32 %v5041, %v5050
  %v5058 = vmul.f32 %v5045, %v5050
  %v5059 = vadd.f32 %v5007, %v5051
  %v5060 = vadd.f32 %v5008, %v5052
  %v5061 = vadd.f32 %v5009, %v5053
  %v5062 = vadd.f32 %v5010, %v5054
  %v5063 = vadd.f32 %v5011, %v5055
  %v5064 = vadd.f32 %v5012, %v5056
  %v5065 = vadd.f32 %v5013, %v5057
  %v5066 = vadd.f32 %v5014, %v5058
  %5067 = vset.pattern.permute.xlu0 7
  %5068 = vperm.xlu0 %5067, %v4686
  %v5069 = vpop.permute.xlu0 %5068
  %5071 = vset.pattern.permute.xlu0 7
  %5072 = vperm.xlu0 %5071, %v4688
  %v5073 = vpop.permute.xlu0 %5072
  %5075 = vset.pattern.permute.xlu0 7
  %5076 = vperm.xlu0 %5075, %v4690
  %v5077 = vpop.permute.xlu0 %5076
  %5079 = vset.pattern.permute.xlu0 7
  %5080 = vperm.xlu0 %5079, %v4692
  %v5081 = vpop.permute.xlu0 %5080
  %5083 = vset.pattern.permute.xlu0 7
  %5084 = vperm.xlu0 %5083, %v4694
  %v5085 = vpop.permute.xlu0 %5084
  %5087 = vset.pattern.permute.xlu0 7
  %5088 = vperm.xlu0 %5087, %v4696
  %v5089 = vpop.permute.xlu0 %5088
  %5091 = vset.pattern.permute.xlu0 7
  %5092 = vperm.xlu0 %5091, %v4698
  %v5093 = vpop.permute.xlu0 %5092
  %5095 = vset.pattern.permute.xlu0 7
  %5096 = vperm.xlu0 %5095, %v4700
  %v5097 = vpop.permute.xlu0 %5096
  %v5099 = vlaneseq
  %v5100 = vshrl.u32 %v5099, 7
  %v5101 = vsub.s32 7, %v5100
  %v5102 = vrot.slane %v4702, %v5101
  %v5103 = vmul.f32 %v5069, %v5102
  %v5104 = vmul.f32 %v5073, %v5102
  %v5105 = vmul.f32 %v5077, %v5102
  %v5106 = vmul.f32 %v5081, %v5102
  %v5107 = vmul.f32 %v5085, %v5102
  %v5108 = vmul.f32 %v5089, %v5102
  %v5109 = vmul.f32 %v5093, %v5102
  %v5110 = vmul.f32 %v5097, %v5102
  %v5111 = vadd.f32 %v5059, %v5103
  %v5112 = vadd.f32 %v5060, %v5104
  %v5113 = vadd.f32 %v5061, %v5105
  %v5114 = vadd.f32 %v5062, %v5106
  %v5115 = vadd.f32 %v5063, %v5107
  %v5116 = vadd.f32 %v5064, %v5108
  %v5117 = vadd.f32 %v5065, %v5109
  %v5118 = vadd.f32 %v5066, %v5110
  %v5119 = vadd.f32 %v4677, %v5111
  %v5120 = vadd.f32 %v4678, %v5112
  %v5121 = vadd.f32 %v4679, %v5113
  %v5122 = vadd.f32 %v4680, %v5114
  %v5123 = vadd.f32 %v4681, %v5115
  %v5124 = vadd.f32 %v4682, %v5116
  %v5125 = vadd.f32 %v4683, %v5117
  %v5126 = vadd.f32 %v4684, %v5118
  %v5127 = vmul.f32 %v4264, %v3862
  %v5128 = vmul.f32 %v4269, %v3862
  %v5129 = vmul.f32 %v4274, %v3862
  %v5130 = vmul.f32 %v4279, %v3862
  %v5131 = vmul.f32 %v4284, %v3862
  %v5132 = vmul.f32 %v4289, %v3862
  %v5133 = vmul.f32 %v4294, %v3862
  %v5134 = vmul.f32 %v4299, %v3862
  %v5135 = vmul.f32 %v4315, %v3906
  %v5136 = vmul.f32 %v4319, %v3906
  %v5137 = vmul.f32 %v4323, %v3906
  %v5138 = vmul.f32 %v4327, %v3906
  %v5139 = vmul.f32 %v4331, %v3906
  %v5140 = vmul.f32 %v4335, %v3906
  %v5141 = vmul.f32 %v4339, %v3906
  %v5142 = vmul.f32 %v4343, %v3906
  %v5143 = vadd.f32 %v5127, %v5135
  %v5144 = vadd.f32 %v5128, %v5136
  %v5145 = vadd.f32 %v5129, %v5137
  %v5146 = vadd.f32 %v5130, %v5138
  %v5147 = vadd.f32 %v5131, %v5139
  %v5148 = vadd.f32 %v5132, %v5140
  %v5149 = vadd.f32 %v5133, %v5141
  %v5150 = vadd.f32 %v5134, %v5142
  %v5151 = vmul.f32 %v4367, %v3958
  %v5152 = vmul.f32 %v4371, %v3958
  %v5153 = vmul.f32 %v4375, %v3958
  %v5154 = vmul.f32 %v4379, %v3958
  %v5155 = vmul.f32 %v4383, %v3958
  %v5156 = vmul.f32 %v4387, %v3958
  %v5157 = vmul.f32 %v4391, %v3958
  %v5158 = vmul.f32 %v4395, %v3958
  %v5159 = vadd.f32 %v5143, %v5151
  %v5160 = vadd.f32 %v5144, %v5152
  %v5161 = vadd.f32 %v5145, %v5153
  %v5162 = vadd.f32 %v5146, %v5154
  %v5163 = vadd.f32 %v5147, %v5155
  %v5164 = vadd.f32 %v5148, %v5156
  %v5165 = vadd.f32 %v5149, %v5157
  %v5166 = vadd.f32 %v5150, %v5158
  %v5167 = vmul.f32 %v4419, %v4010
  %v5168 = vmul.f32 %v4423, %v4010
  %v5169 = vmul.f32 %v4427, %v4010
  %v5170 = vmul.f32 %v4431, %v4010
  %v5171 = vmul.f32 %v4435, %v4010
  %v5172 = vmul.f32 %v4439, %v4010
  %v5173 = vmul.f32 %v4443, %v4010
  %v5174 = vmul.f32 %v4447, %v4010
  %v5175 = vadd.f32 %v5159, %v5167
  %v5176 = vadd.f32 %v5160, %v5168
  %v5177 = vadd.f32 %v5161, %v5169
  %v5178 = vadd.f32 %v5162, %v5170
  %v5179 = vadd.f32 %v5163, %v5171
  %v5180 = vadd.f32 %v5164, %v5172
  %v5181 = vadd.f32 %v5165, %v5173
  %v5182 = vadd.f32 %v5166, %v5174
  %v5183 = vmul.f32 %v4471, %v4062
  %v5184 = vmul.f32 %v4475, %v4062
  %v5185 = vmul.f32 %v4479, %v4062
  %v5186 = vmul.f32 %v4483, %v4062
  %v5187 = vmul.f32 %v4487, %v4062
  %v5188 = vmul.f32 %v4491, %v4062
  %v5189 = vmul.f32 %v4495, %v4062
  %v5190 = vmul.f32 %v4499, %v4062
  %v5191 = vadd.f32 %v5175, %v5183
  %v5192 = vadd.f32 %v5176, %v5184
  %v5193 = vadd.f32 %v5177, %v5185
  %v5194 = vadd.f32 %v5178, %v5186
  %v5195 = vadd.f32 %v5179, %v5187
  %v5196 = vadd.f32 %v5180, %v5188
  %v5197 = vadd.f32 %v5181, %v5189
  %v5198 = vadd.f32 %v5182, %v5190
  %v5199 = vmul.f32 %v4523, %v4114
  %v5200 = vmul.f32 %v4527, %v4114
  %v5201 = vmul.f32 %v4531, %v4114
  %v5202 = vmul.f32 %v4535, %v4114
  %v5203 = vmul.f32 %v4539, %v4114
  %v5204 = vmul.f32 %v4543, %v4114
  %v5205 = vmul.f32 %v4547, %v4114
  %v5206 = vmul.f32 %v4551, %v4114
  %v5207 = vadd.f32 %v5191, %v5199
  %v5208 = vadd.f32 %v5192, %v5200
  %v5209 = vadd.f32 %v5193, %v5201
  %v5210 = vadd.f32 %v5194, %v5202
  %v5211 = vadd.f32 %v5195, %v5203
  %v5212 = vadd.f32 %v5196, %v5204
  %v5213 = vadd.f32 %v5197, %v5205
  %v5214 = vadd.f32 %v5198, %v5206
  %v5215 = vmul.f32 %v4575, %v4166
  %v5216 = vmul.f32 %v4579, %v4166
  %v5217 = vmul.f32 %v4583, %v4166
  %v5218 = vmul.f32 %v4587, %v4166
  %v5219 = vmul.f32 %v4591, %v4166
  %v5220 = vmul.f32 %v4595, %v4166
  %v5221 = vmul.f32 %v4599, %v4166
  %v5222 = vmul.f32 %v4603, %v4166
  %v5223 = vadd.f32 %v5207, %v5215
  %v5224 = vadd.f32 %v5208, %v5216
  %v5225 = vadd.f32 %v5209, %v5217
  %v5226 = vadd.f32 %v5210, %v5218
  %v5227 = vadd.f32 %v5211, %v5219
  %v5228 = vadd.f32 %v5212, %v5220
  %v5229 = vadd.f32 %v5213, %v5221
  %v5230 = vadd.f32 %v5214, %v5222
  %v5231 = vmul.f32 %v4627, %v4218
  %v5232 = vmul.f32 %v4631, %v4218
  %v5233 = vmul.f32 %v4635, %v4218
  %v5234 = vmul.f32 %v4639, %v4218
  %v5235 = vmul.f32 %v4643, %v4218
  %v5236 = vmul.f32 %v4647, %v4218
  %v5237 = vmul.f32 %v4651, %v4218
  %v5238 = vmul.f32 %v4655, %v4218
  %v5239 = vadd.f32 %v5223, %v5231
  %v5240 = vadd.f32 %v5224, %v5232
  %v5241 = vadd.f32 %v5225, %v5233
  %v5242 = vadd.f32 %v5226, %v5234
  %v5243 = vadd.f32 %v5227, %v5235
  %v5244 = vadd.f32 %v5228, %v5236
  %v5245 = vadd.f32 %v5229, %v5237
  %v5246 = vadd.f32 %v5230, %v5238
  %v5247 = vadd.f32 %v5239, 0.0
  %v5248 = vadd.f32 %v5240, 0.0
  %v5249 = vadd.f32 %v5241, 0.0
  %v5250 = vadd.f32 %v5242, 0.0
  %v5251 = vadd.f32 %v5243, 0.0
  %v5252 = vadd.f32 %v5244, 0.0
  %v5253 = vadd.f32 %v5245, 0.0
  %v5254 = vadd.f32 %v5246, 0.0
  %v5255 = vmul.f32 %v4706, %v4304
  %v5256 = vmul.f32 %v4711, %v4304
  %v5257 = vmul.f32 %v4716, %v4304
  %v5258 = vmul.f32 %v4721, %v4304
  %v5259 = vmul.f32 %v4726, %v4304
  %v5260 = vmul.f32 %v4731, %v4304
  %v5261 = vmul.f32 %v4736, %v4304
  %v5262 = vmul.f32 %v4741, %v4304
  %v5263 = vmul.f32 %v4757, %v4348
  %v5264 = vmul.f32 %v4761, %v4348
  %v5265 = vmul.f32 %v4765, %v4348
  %v5266 = vmul.f32 %v4769, %v4348
  %v5267 = vmul.f32 %v4773, %v4348
  %v5268 = vmul.f32 %v4777, %v4348
  %v5269 = vmul.f32 %v4781, %v4348
  %v5270 = vmul.f32 %v4785, %v4348
  %v5271 = vadd.f32 %v5255, %v5263
  %v5272 = vadd.f32 %v5256, %v5264
  %v5273 = vadd.f32 %v5257, %v5265
  %v5274 = vadd.f32 %v5258, %v5266
  %v5275 = vadd.f32 %v5259, %v5267
  %v5276 = vadd.f32 %v5260, %v5268
  %v5277 = vadd.f32 %v5261, %v5269
  %v5278 = vadd.f32 %v5262, %v5270
  %v5279 = vmul.f32 %v4809, %v4400
  %v5280 = vmul.f32 %v4813, %v4400
  %v5281 = vmul.f32 %v4817, %v4400
  %v5282 = vmul.f32 %v4821, %v4400
  %v5283 = vmul.f32 %v4825, %v4400
  %v5284 = vmul.f32 %v4829, %v4400
  %v5285 = vmul.f32 %v4833, %v4400
  %v5286 = vmul.f32 %v4837, %v4400
  %v5287 = vadd.f32 %v5271, %v5279
  %v5288 = vadd.f32 %v5272, %v5280
  %v5289 = vadd.f32 %v5273, %v5281
  %v5290 = vadd.f32 %v5274, %v5282
  %v5291 = vadd.f32 %v5275, %v5283
  %v5292 = vadd.f32 %v5276, %v5284
  %v5293 = vadd.f32 %v5277, %v5285
  %v5294 = vadd.f32 %v5278, %v5286
  %v5295 = vmul.f32 %v4861, %v4452
  %v5296 = vmul.f32 %v4865, %v4452
  %v5297 = vmul.f32 %v4869, %v4452
  %v5298 = vmul.f32 %v4873, %v4452
  %v5299 = vmul.f32 %v4877, %v4452
  %v5300 = vmul.f32 %v4881, %v4452
  %v5301 = vmul.f32 %v4885, %v4452
  %v5302 = vmul.f32 %v4889, %v4452
  %v5303 = vadd.f32 %v5287, %v5295
  %v5304 = vadd.f32 %v5288, %v5296
  %v5305 = vadd.f32 %v5289, %v5297
  %v5306 = vadd.f32 %v5290, %v5298
  %v5307 = vadd.f32 %v5291, %v5299
  %v5308 = vadd.f32 %v5292, %v5300
  %v5309 = vadd.f32 %v5293, %v5301
  %v5310 = vadd.f32 %v5294, %v5302
  %v5311 = vmul.f32 %v4913, %v4504
  %v5312 = vmul.f32 %v4917, %v4504
  %v5313 = vmul.f32 %v4921, %v4504
  %v5314 = vmul.f32 %v4925, %v4504
  %v5315 = vmul.f32 %v4929, %v4504
  %v5316 = vmul.f32 %v4933, %v4504
  %v5317 = vmul.f32 %v4937, %v4504
  %v5318 = vmul.f32 %v4941, %v4504
  %v5319 = vadd.f32 %v5303, %v5311
  %v5320 = vadd.f32 %v5304, %v5312
  %v5321 = vadd.f32 %v5305, %v5313
  %v5322 = vadd.f32 %v5306, %v5314
  %v5323 = vadd.f32 %v5307, %v5315
  %v5324 = vadd.f32 %v5308, %v5316
  %v5325 = vadd.f32 %v5309, %v5317
  %v5326 = vadd.f32 %v5310, %v5318
  %v5327 = vmul.f32 %v4965, %v4556
  %v5328 = vmul.f32 %v4969, %v4556
  %v5329 = vmul.f32 %v4973, %v4556
  %v5330 = vmul.f32 %v4977, %v4556
  %v5331 = vmul.f32 %v4981, %v4556
  %v5332 = vmul.f32 %v4985, %v4556
  %v5333 = vmul.f32 %v4989, %v4556
  %v5334 = vmul.f32 %v4993, %v4556
  %v5335 = vadd.f32 %v5319, %v5327
  %v5336 = vadd.f32 %v5320, %v5328
  %v5337 = vadd.f32 %v5321, %v5329
  %v5338 = vadd.f32 %v5322, %v5330
  %v5339 = vadd.f32 %v5323, %v5331
  %v5340 = vadd.f32 %v5324, %v5332
  %v5341 = vadd.f32 %v5325, %v5333
  %v5342 = vadd.f32 %v5326, %v5334
  %v5343 = vmul.f32 %v5017, %v4608
  %v5344 = vmul.f32 %v5021, %v4608
  %v5345 = vmul.f32 %v5025, %v4608
  %v5346 = vmul.f32 %v5029, %v4608
  %v5347 = vmul.f32 %v5033, %v4608
  %v5348 = vmul.f32 %v5037, %v4608
  %v5349 = vmul.f32 %v5041, %v4608
  %v5350 = vmul.f32 %v5045, %v4608
  %v5351 = vadd.f32 %v5335, %v5343
  %v5352 = vadd.f32 %v5336, %v5344
  %v5353 = vadd.f32 %v5337, %v5345
  %v5354 = vadd.f32 %v5338, %v5346
  %v5355 = vadd.f32 %v5339, %v5347
  %v5356 = vadd.f32 %v5340, %v5348
  %v5357 = vadd.f32 %v5341, %v5349
  %v5358 = vadd.f32 %v5342, %v5350
  %v5359 = vmul.f32 %v5069, %v4660
  %v5360 = vmul.f32 %v5073, %v4660
  %v5361 = vmul.f32 %v5077, %v4660
  %v5362 = vmul.f32 %v5081, %v4660
  %v5363 = vmul.f32 %v5085, %v4660
  %v5364 = vmul.f32 %v5089, %v4660
  %v5365 = vmul.f32 %v5093, %v4660
  %v5366 = vmul.f32 %v5097, %v4660
  %v5367 = vadd.f32 %v5351, %v5359
  %v5368 = vadd.f32 %v5352, %v5360
  %v5369 = vadd.f32 %v5353, %v5361
  %v5370 = vadd.f32 %v5354, %v5362
  %v5371 = vadd.f32 %v5355, %v5363
  %v5372 = vadd.f32 %v5356, %v5364
  %v5373 = vadd.f32 %v5357, %v5365
  %v5374 = vadd.f32 %v5358, %v5366
  %v5375 = vadd.f32 %v5247, %v5367
  %v5376 = vadd.f32 %v5248, %v5368
  %v5377 = vadd.f32 %v5249, %v5369
  %v5378 = vadd.f32 %v5250, %v5370
  %v5379 = vadd.f32 %v5251, %v5371
  %v5380 = vadd.f32 %v5252, %v5372
  %v5381 = vadd.f32 %v5253, %v5373
  %v5382 = vadd.f32 %v5254, %v5374
  %s5383 = scalar_lea.vmem %s9, 3
  %v5384 = vld [vmem:[%s5383] ss:$2 sm:$0x1f]
  %s5385 = scalar_lea.vmem %s9, 19
  %v5386 = vld [vmem:[%s5385] ss:$2 sm:$0x1f]
  %s5387 = scalar_lea.vmem %s9, 35
  %v5388 = vld [vmem:[%s5387] ss:$2 sm:$0x1f]
  %s5389 = scalar_lea.vmem %s9, 51
  %v5390 = vld [vmem:[%s5389] ss:$2 sm:$0x1f]
  %s5391 = scalar_lea.vmem %s9, 67
  %v5392 = vld [vmem:[%s5391] ss:$2 sm:$0x1f]
  %s5393 = scalar_lea.vmem %s9, 83
  %v5394 = vld [vmem:[%s5393] ss:$2 sm:$0x1f]
  %s5395 = scalar_lea.vmem %s9, 99
  %v5396 = vld [vmem:[%s5395] ss:$2 sm:$0x1f]
  %s5397 = scalar_lea.vmem %s9, 115
  %v5398 = vld [vmem:[%s5397] ss:$2 sm:$0x1f]
  %5400 = vset.pattern.permute.xlu0 0
  %5401 = vperm.xlu0 %5400, %v5384
  %v5402 = vpop.permute.xlu0 %5401
  %5405 = vset.pattern.permute.xlu0 0
  %5406 = vperm.xlu0 %5405, %v5386
  %v5407 = vpop.permute.xlu0 %5406
  %5410 = vset.pattern.permute.xlu0 0
  %5411 = vperm.xlu0 %5410, %v5388
  %v5412 = vpop.permute.xlu0 %5411
  %5415 = vset.pattern.permute.xlu0 0
  %5416 = vperm.xlu0 %5415, %v5390
  %v5417 = vpop.permute.xlu0 %5416
  %5420 = vset.pattern.permute.xlu0 0
  %5421 = vperm.xlu0 %5420, %v5392
  %v5422 = vpop.permute.xlu0 %5421
  %5425 = vset.pattern.permute.xlu0 0
  %5426 = vperm.xlu0 %5425, %v5394
  %v5427 = vpop.permute.xlu0 %5426
  %5430 = vset.pattern.permute.xlu0 0
  %5431 = vperm.xlu0 %5430, %v5396
  %v5432 = vpop.permute.xlu0 %5431
  %5435 = vset.pattern.permute.xlu0 0
  %5436 = vperm.xlu0 %5435, %v5398
  %v5437 = vpop.permute.xlu0 %5436
  %v5439 = vmul.f32 %v5402, %v4746
  %v5440 = vmul.f32 %v5407, %v4746
  %v5441 = vmul.f32 %v5412, %v4746
  %v5442 = vmul.f32 %v5417, %v4746
  %v5443 = vmul.f32 %v5422, %v4746
  %v5444 = vmul.f32 %v5427, %v4746
  %v5445 = vmul.f32 %v5432, %v4746
  %v5446 = vmul.f32 %v5437, %v4746
  %5447 = vset.pattern.permute.xlu0 1
  %5448 = vperm.xlu0 %5447, %v5384
  %v5449 = vpop.permute.xlu0 %5448
  %5451 = vset.pattern.permute.xlu0 1
  %5452 = vperm.xlu0 %5451, %v5386
  %v5453 = vpop.permute.xlu0 %5452
  %5455 = vset.pattern.permute.xlu0 1
  %5456 = vperm.xlu0 %5455, %v5388
  %v5457 = vpop.permute.xlu0 %5456
  %5459 = vset.pattern.permute.xlu0 1
  %5460 = vperm.xlu0 %5459, %v5390
  %v5461 = vpop.permute.xlu0 %5460
  %5463 = vset.pattern.permute.xlu0 1
  %5464 = vperm.xlu0 %5463, %v5392
  %v5465 = vpop.permute.xlu0 %5464
  %5467 = vset.pattern.permute.xlu0 1
  %5468 = vperm.xlu0 %5467, %v5394
  %v5469 = vpop.permute.xlu0 %5468
  %5471 = vset.pattern.permute.xlu0 1
  %5472 = vperm.xlu0 %5471, %v5396
  %v5473 = vpop.permute.xlu0 %5472
  %5475 = vset.pattern.permute.xlu0 1
  %5476 = vperm.xlu0 %5475, %v5398
  %v5477 = vpop.permute.xlu0 %5476
  %v5479 = vmul.f32 %v5449, %v4790
  %v5480 = vmul.f32 %v5453, %v4790
  %v5481 = vmul.f32 %v5457, %v4790
  %v5482 = vmul.f32 %v5461, %v4790
  %v5483 = vmul.f32 %v5465, %v4790
  %v5484 = vmul.f32 %v5469, %v4790
  %v5485 = vmul.f32 %v5473, %v4790
  %v5486 = vmul.f32 %v5477, %v4790
  %v5487 = vadd.f32 %v5439, %v5479
  %v5488 = vadd.f32 %v5440, %v5480
  %v5489 = vadd.f32 %v5441, %v5481
  %v5490 = vadd.f32 %v5442, %v5482
  %v5491 = vadd.f32 %v5443, %v5483
  %v5492 = vadd.f32 %v5444, %v5484
  %v5493 = vadd.f32 %v5445, %v5485
  %v5494 = vadd.f32 %v5446, %v5486
  %5495 = vset.pattern.permute.xlu0 2
  %5496 = vperm.xlu0 %5495, %v5384
  %v5497 = vpop.permute.xlu0 %5496
  %5499 = vset.pattern.permute.xlu0 2
  %5500 = vperm.xlu0 %5499, %v5386
  %v5501 = vpop.permute.xlu0 %5500
  %5503 = vset.pattern.permute.xlu0 2
  %5504 = vperm.xlu0 %5503, %v5388
  %v5505 = vpop.permute.xlu0 %5504
  %5507 = vset.pattern.permute.xlu0 2
  %5508 = vperm.xlu0 %5507, %v5390
  %v5509 = vpop.permute.xlu0 %5508
  %5511 = vset.pattern.permute.xlu0 2
  %5512 = vperm.xlu0 %5511, %v5392
  %v5513 = vpop.permute.xlu0 %5512
  %5515 = vset.pattern.permute.xlu0 2
  %5516 = vperm.xlu0 %5515, %v5394
  %v5517 = vpop.permute.xlu0 %5516
  %5519 = vset.pattern.permute.xlu0 2
  %5520 = vperm.xlu0 %5519, %v5396
  %v5521 = vpop.permute.xlu0 %5520
  %5523 = vset.pattern.permute.xlu0 2
  %5524 = vperm.xlu0 %5523, %v5398
  %v5525 = vpop.permute.xlu0 %5524
  %v5527 = vmul.f32 %v5497, %v4842
  %v5528 = vmul.f32 %v5501, %v4842
  %v5529 = vmul.f32 %v5505, %v4842
  %v5530 = vmul.f32 %v5509, %v4842
  %v5531 = vmul.f32 %v5513, %v4842
  %v5532 = vmul.f32 %v5517, %v4842
  %v5533 = vmul.f32 %v5521, %v4842
  %v5534 = vmul.f32 %v5525, %v4842
  %v5535 = vadd.f32 %v5487, %v5527
  %v5536 = vadd.f32 %v5488, %v5528
  %v5537 = vadd.f32 %v5489, %v5529
  %v5538 = vadd.f32 %v5490, %v5530
  %v5539 = vadd.f32 %v5491, %v5531
  %v5540 = vadd.f32 %v5492, %v5532
  %v5541 = vadd.f32 %v5493, %v5533
  %v5542 = vadd.f32 %v5494, %v5534
  %5543 = vset.pattern.permute.xlu0 3
  %5544 = vperm.xlu0 %5543, %v5384
  %v5545 = vpop.permute.xlu0 %5544
  %5547 = vset.pattern.permute.xlu0 3
  %5548 = vperm.xlu0 %5547, %v5386
  %v5549 = vpop.permute.xlu0 %5548
  %5551 = vset.pattern.permute.xlu0 3
  %5552 = vperm.xlu0 %5551, %v5388
  %v5553 = vpop.permute.xlu0 %5552
  %5555 = vset.pattern.permute.xlu0 3
  %5556 = vperm.xlu0 %5555, %v5390
  %v5557 = vpop.permute.xlu0 %5556
  %5559 = vset.pattern.permute.xlu0 3
  %5560 = vperm.xlu0 %5559, %v5392
  %v5561 = vpop.permute.xlu0 %5560
  %5563 = vset.pattern.permute.xlu0 3
  %5564 = vperm.xlu0 %5563, %v5394
  %v5565 = vpop.permute.xlu0 %5564
  %5567 = vset.pattern.permute.xlu0 3
  %5568 = vperm.xlu0 %5567, %v5396
  %v5569 = vpop.permute.xlu0 %5568
  %5571 = vset.pattern.permute.xlu0 3
  %5572 = vperm.xlu0 %5571, %v5398
  %v5573 = vpop.permute.xlu0 %5572
  %v5575 = vmul.f32 %v5545, %v4894
  %v5576 = vmul.f32 %v5549, %v4894
  %v5577 = vmul.f32 %v5553, %v4894
  %v5578 = vmul.f32 %v5557, %v4894
  %v5579 = vmul.f32 %v5561, %v4894
  %v5580 = vmul.f32 %v5565, %v4894
  %v5581 = vmul.f32 %v5569, %v4894
  %v5582 = vmul.f32 %v5573, %v4894
  %v5583 = vadd.f32 %v5535, %v5575
  %v5584 = vadd.f32 %v5536, %v5576
  %v5585 = vadd.f32 %v5537, %v5577
  %v5586 = vadd.f32 %v5538, %v5578
  %v5587 = vadd.f32 %v5539, %v5579
  %v5588 = vadd.f32 %v5540, %v5580
  %v5589 = vadd.f32 %v5541, %v5581
  %v5590 = vadd.f32 %v5542, %v5582
  %5591 = vset.pattern.permute.xlu0 4
  %5592 = vperm.xlu0 %5591, %v5384
  %v5593 = vpop.permute.xlu0 %5592
  %5595 = vset.pattern.permute.xlu0 4
  %5596 = vperm.xlu0 %5595, %v5386
  %v5597 = vpop.permute.xlu0 %5596
  %5599 = vset.pattern.permute.xlu0 4
  %5600 = vperm.xlu0 %5599, %v5388
  %v5601 = vpop.permute.xlu0 %5600
  %5603 = vset.pattern.permute.xlu0 4
  %5604 = vperm.xlu0 %5603, %v5390
  %v5605 = vpop.permute.xlu0 %5604
  %5607 = vset.pattern.permute.xlu0 4
  %5608 = vperm.xlu0 %5607, %v5392
  %v5609 = vpop.permute.xlu0 %5608
  %5611 = vset.pattern.permute.xlu0 4
  %5612 = vperm.xlu0 %5611, %v5394
  %v5613 = vpop.permute.xlu0 %5612
  %5615 = vset.pattern.permute.xlu0 4
  %5616 = vperm.xlu0 %5615, %v5396
  %v5617 = vpop.permute.xlu0 %5616
  %5619 = vset.pattern.permute.xlu0 4
  %5620 = vperm.xlu0 %5619, %v5398
  %v5621 = vpop.permute.xlu0 %5620
  %v5623 = vmul.f32 %v5593, %v4946
  %v5624 = vmul.f32 %v5597, %v4946
  %v5625 = vmul.f32 %v5601, %v4946
  %v5626 = vmul.f32 %v5605, %v4946
  %v5627 = vmul.f32 %v5609, %v4946
  %v5628 = vmul.f32 %v5613, %v4946
  %v5629 = vmul.f32 %v5617, %v4946
  %v5630 = vmul.f32 %v5621, %v4946
  %v5631 = vadd.f32 %v5583, %v5623
  %v5632 = vadd.f32 %v5584, %v5624
  %v5633 = vadd.f32 %v5585, %v5625
  %v5634 = vadd.f32 %v5586, %v5626
  %v5635 = vadd.f32 %v5587, %v5627
  %v5636 = vadd.f32 %v5588, %v5628
  %v5637 = vadd.f32 %v5589, %v5629
  %v5638 = vadd.f32 %v5590, %v5630
  %5639 = vset.pattern.permute.xlu0 5
  %5640 = vperm.xlu0 %5639, %v5384
  %v5641 = vpop.permute.xlu0 %5640
  %5643 = vset.pattern.permute.xlu0 5
  %5644 = vperm.xlu0 %5643, %v5386
  %v5645 = vpop.permute.xlu0 %5644
  %5647 = vset.pattern.permute.xlu0 5
  %5648 = vperm.xlu0 %5647, %v5388
  %v5649 = vpop.permute.xlu0 %5648
  %5651 = vset.pattern.permute.xlu0 5
  %5652 = vperm.xlu0 %5651, %v5390
  %v5653 = vpop.permute.xlu0 %5652
  %5655 = vset.pattern.permute.xlu0 5
  %5656 = vperm.xlu0 %5655, %v5392
  %v5657 = vpop.permute.xlu0 %5656
  %5659 = vset.pattern.permute.xlu0 5
  %5660 = vperm.xlu0 %5659, %v5394
  %v5661 = vpop.permute.xlu0 %5660
  %5663 = vset.pattern.permute.xlu0 5
  %5664 = vperm.xlu0 %5663, %v5396
  %v5665 = vpop.permute.xlu0 %5664
  %5667 = vset.pattern.permute.xlu0 5
  %5668 = vperm.xlu0 %5667, %v5398
  %v5669 = vpop.permute.xlu0 %5668
  %v5671 = vmul.f32 %v5641, %v4998
  %v5672 = vmul.f32 %v5645, %v4998
  %v5673 = vmul.f32 %v5649, %v4998
  %v5674 = vmul.f32 %v5653, %v4998
  %v5675 = vmul.f32 %v5657, %v4998
  %v5676 = vmul.f32 %v5661, %v4998
  %v5677 = vmul.f32 %v5665, %v4998
  %v5678 = vmul.f32 %v5669, %v4998
  %v5679 = vadd.f32 %v5631, %v5671
  %v5680 = vadd.f32 %v5632, %v5672
  %v5681 = vadd.f32 %v5633, %v5673
  %v5682 = vadd.f32 %v5634, %v5674
  %v5683 = vadd.f32 %v5635, %v5675
  %v5684 = vadd.f32 %v5636, %v5676
  %v5685 = vadd.f32 %v5637, %v5677
  %v5686 = vadd.f32 %v5638, %v5678
  %5687 = vset.pattern.permute.xlu0 6
  %5688 = vperm.xlu0 %5687, %v5384
  %v5689 = vpop.permute.xlu0 %5688
  %5691 = vset.pattern.permute.xlu0 6
  %5692 = vperm.xlu0 %5691, %v5386
  %v5693 = vpop.permute.xlu0 %5692
  %5695 = vset.pattern.permute.xlu0 6
  %5696 = vperm.xlu0 %5695, %v5388
  %v5697 = vpop.permute.xlu0 %5696
  %5699 = vset.pattern.permute.xlu0 6
  %5700 = vperm.xlu0 %5699, %v5390
  %v5701 = vpop.permute.xlu0 %5700
  %5703 = vset.pattern.permute.xlu0 6
  %5704 = vperm.xlu0 %5703, %v5392
  %v5705 = vpop.permute.xlu0 %5704
  %5707 = vset.pattern.permute.xlu0 6
  %5708 = vperm.xlu0 %5707, %v5394
  %v5709 = vpop.permute.xlu0 %5708
  %5711 = vset.pattern.permute.xlu0 6
  %5712 = vperm.xlu0 %5711, %v5396
  %v5713 = vpop.permute.xlu0 %5712
  %5715 = vset.pattern.permute.xlu0 6
  %5716 = vperm.xlu0 %5715, %v5398
  %v5717 = vpop.permute.xlu0 %5716
  %v5719 = vmul.f32 %v5689, %v5050
  %v5720 = vmul.f32 %v5693, %v5050
  %v5721 = vmul.f32 %v5697, %v5050
  %v5722 = vmul.f32 %v5701, %v5050
  %v5723 = vmul.f32 %v5705, %v5050
  %v5724 = vmul.f32 %v5709, %v5050
  %v5725 = vmul.f32 %v5713, %v5050
  %v5726 = vmul.f32 %v5717, %v5050
  %v5727 = vadd.f32 %v5679, %v5719
  %v5728 = vadd.f32 %v5680, %v5720
  %v5729 = vadd.f32 %v5681, %v5721
  %v5730 = vadd.f32 %v5682, %v5722
  %v5731 = vadd.f32 %v5683, %v5723
  %v5732 = vadd.f32 %v5684, %v5724
  %v5733 = vadd.f32 %v5685, %v5725
  %v5734 = vadd.f32 %v5686, %v5726
  %5735 = vset.pattern.permute.xlu0 7
  %5736 = vperm.xlu0 %5735, %v5384
  %v5737 = vpop.permute.xlu0 %5736
  %5739 = vset.pattern.permute.xlu0 7
  %5740 = vperm.xlu0 %5739, %v5386
  %v5741 = vpop.permute.xlu0 %5740
  %5743 = vset.pattern.permute.xlu0 7
  %5744 = vperm.xlu0 %5743, %v5388
  %v5745 = vpop.permute.xlu0 %5744
  %5747 = vset.pattern.permute.xlu0 7
  %5748 = vperm.xlu0 %5747, %v5390
  %v5749 = vpop.permute.xlu0 %5748
  %5751 = vset.pattern.permute.xlu0 7
  %5752 = vperm.xlu0 %5751, %v5392
  %v5753 = vpop.permute.xlu0 %5752
  %5755 = vset.pattern.permute.xlu0 7
  %5756 = vperm.xlu0 %5755, %v5394
  %v5757 = vpop.permute.xlu0 %5756
  %5759 = vset.pattern.permute.xlu0 7
  %5760 = vperm.xlu0 %5759, %v5396
  %v5761 = vpop.permute.xlu0 %5760
  %5763 = vset.pattern.permute.xlu0 7
  %5764 = vperm.xlu0 %5763, %v5398
  %v5765 = vpop.permute.xlu0 %5764
  %v5767 = vmul.f32 %v5737, %v5102
  %v5768 = vmul.f32 %v5741, %v5102
  %v5769 = vmul.f32 %v5745, %v5102
  %v5770 = vmul.f32 %v5749, %v5102
  %v5771 = vmul.f32 %v5753, %v5102
  %v5772 = vmul.f32 %v5757, %v5102
  %v5773 = vmul.f32 %v5761, %v5102
  %v5774 = vmul.f32 %v5765, %v5102
  %v5775 = vadd.f32 %v5727, %v5767
  %v5776 = vadd.f32 %v5728, %v5768
  %v5777 = vadd.f32 %v5729, %v5769
  %v5778 = vadd.f32 %v5730, %v5770
  %v5779 = vadd.f32 %v5731, %v5771
  %v5780 = vadd.f32 %v5732, %v5772
  %v5781 = vadd.f32 %v5733, %v5773
  %v5782 = vadd.f32 %v5734, %v5774
  %v5783 = vadd.f32 %v5375, %v5775
  %v5784 = vadd.f32 %v5376, %v5776
  %v5785 = vadd.f32 %v5377, %v5777
  %v5786 = vadd.f32 %v5378, %v5778
  %v5787 = vadd.f32 %v5379, %v5779
  %v5788 = vadd.f32 %v5380, %v5780
  %v5789 = vadd.f32 %v5381, %v5781
  %v5790 = vadd.f32 %v5382, %v5782
  %v5791 = vmax.f32 %v5119, %v5783
  %v5792 = vmax.f32 %v5120, %v5784
  %v5793 = vmax.f32 %v5121, %v5785
  %v5794 = vmax.f32 %v5122, %v5786
  %v5795 = vmax.f32 %v5123, %v5787
  %v5796 = vmax.f32 %v5124, %v5788
  %v5797 = vmax.f32 %v5125, %v5789
  %v5798 = vmax.f32 %v5126, %v5790
  %v5799 = vmul.f32 %v4706, %v3862
  %v5800 = vmul.f32 %v4711, %v3862
  %v5801 = vmul.f32 %v4716, %v3862
  %v5802 = vmul.f32 %v4721, %v3862
  %v5803 = vmul.f32 %v4726, %v3862
  %v5804 = vmul.f32 %v4731, %v3862
  %v5805 = vmul.f32 %v4736, %v3862
  %v5806 = vmul.f32 %v4741, %v3862
  %v5807 = vmul.f32 %v4757, %v3906
  %v5808 = vmul.f32 %v4761, %v3906
  %v5809 = vmul.f32 %v4765, %v3906
  %v5810 = vmul.f32 %v4769, %v3906
  %v5811 = vmul.f32 %v4773, %v3906
  %v5812 = vmul.f32 %v4777, %v3906
  %v5813 = vmul.f32 %v4781, %v3906
  %v5814 = vmul.f32 %v4785, %v3906
  %v5815 = vadd.f32 %v5799, %v5807
  %v5816 = vadd.f32 %v5800, %v5808
  %v5817 = vadd.f32 %v5801, %v5809
  %v5818 = vadd.f32 %v5802, %v5810
  %v5819 = vadd.f32 %v5803, %v5811
  %v5820 = vadd.f32 %v5804, %v5812
  %v5821 = vadd.f32 %v5805, %v5813
  %v5822 = vadd.f32 %v5806, %v5814
  %v5823 = vmul.f32 %v4809, %v3958
  %v5824 = vmul.f32 %v4813, %v3958
  %v5825 = vmul.f32 %v4817, %v3958
  %v5826 = vmul.f32 %v4821, %v3958
  %v5827 = vmul.f32 %v4825, %v3958
  %v5828 = vmul.f32 %v4829, %v3958
  %v5829 = vmul.f32 %v4833, %v3958
  %v5830 = vmul.f32 %v4837, %v3958
  %v5831 = vadd.f32 %v5815, %v5823
  %v5832 = vadd.f32 %v5816, %v5824
  %v5833 = vadd.f32 %v5817, %v5825
  %v5834 = vadd.f32 %v5818, %v5826
  %v5835 = vadd.f32 %v5819, %v5827
  %v5836 = vadd.f32 %v5820, %v5828
  %v5837 = vadd.f32 %v5821, %v5829
  %v5838 = vadd.f32 %v5822, %v5830
  %v5839 = vmul.f32 %v4861, %v4010
  %v5840 = vmul.f32 %v4865, %v4010
  %v5841 = vmul.f32 %v4869, %v4010
  %v5842 = vmul.f32 %v4873, %v4010
  %v5843 = vmul.f32 %v4877, %v4010
  %v5844 = vmul.f32 %v4881, %v4010
  %v5845 = vmul.f32 %v4885, %v4010
  %v5846 = vmul.f32 %v4889, %v4010
  %v5847 = vadd.f32 %v5831, %v5839
  %v5848 = vadd.f32 %v5832, %v5840
  %v5849 = vadd.f32 %v5833, %v5841
  %v5850 = vadd.f32 %v5834, %v5842
  %v5851 = vadd.f32 %v5835, %v5843
  %v5852 = vadd.f32 %v5836, %v5844
  %v5853 = vadd.f32 %v5837, %v5845
  %v5854 = vadd.f32 %v5838, %v5846
  %v5855 = vmul.f32 %v4913, %v4062
  %v5856 = vmul.f32 %v4917, %v4062
  %v5857 = vmul.f32 %v4921, %v4062
  %v5858 = vmul.f32 %v4925, %v4062
  %v5859 = vmul.f32 %v4929, %v4062
  %v5860 = vmul.f32 %v4933, %v4062
  %v5861 = vmul.f32 %v4937, %v4062
  %v5862 = vmul.f32 %v4941, %v4062
  %v5863 = vadd.f32 %v5847, %v5855
  %v5864 = vadd.f32 %v5848, %v5856
  %v5865 = vadd.f32 %v5849, %v5857
  %v5866 = vadd.f32 %v5850, %v5858
  %v5867 = vadd.f32 %v5851, %v5859
  %v5868 = vadd.f32 %v5852, %v5860
  %v5869 = vadd.f32 %v5853, %v5861
  %v5870 = vadd.f32 %v5854, %v5862
  %v5871 = vmul.f32 %v4965, %v4114
  %v5872 = vmul.f32 %v4969, %v4114
  %v5873 = vmul.f32 %v4973, %v4114
  %v5874 = vmul.f32 %v4977, %v4114
  %v5875 = vmul.f32 %v4981, %v4114
  %v5876 = vmul.f32 %v4985, %v4114
  %v5877 = vmul.f32 %v4989, %v4114
  %v5878 = vmul.f32 %v4993, %v4114
  %v5879 = vadd.f32 %v5863, %v5871
  %v5880 = vadd.f32 %v5864, %v5872
  %v5881 = vadd.f32 %v5865, %v5873
  %v5882 = vadd.f32 %v5866, %v5874
  %v5883 = vadd.f32 %v5867, %v5875
  %v5884 = vadd.f32 %v5868, %v5876
  %v5885 = vadd.f32 %v5869, %v5877
  %v5886 = vadd.f32 %v5870, %v5878
  %v5887 = vmul.f32 %v5017, %v4166
  %v5888 = vmul.f32 %v5021, %v4166
  %v5889 = vmul.f32 %v5025, %v4166
  %v5890 = vmul.f32 %v5029, %v4166
  %v5891 = vmul.f32 %v5033, %v4166
  %v5892 = vmul.f32 %v5037, %v4166
  %v5893 = vmul.f32 %v5041, %v4166
  %v5894 = vmul.f32 %v5045, %v4166
  %v5895 = vadd.f32 %v5879, %v5887
  %v5896 = vadd.f32 %v5880, %v5888
  %v5897 = vadd.f32 %v5881, %v5889
  %v5898 = vadd.f32 %v5882, %v5890
  %v5899 = vadd.f32 %v5883, %v5891
  %v5900 = vadd.f32 %v5884, %v5892
  %v5901 = vadd.f32 %v5885, %v5893
  %v5902 = vadd.f32 %v5886, %v5894
  %v5903 = vmul.f32 %v5069, %v4218
  %v5904 = vmul.f32 %v5073, %v4218
  %v5905 = vmul.f32 %v5077, %v4218
  %v5906 = vmul.f32 %v5081, %v4218
  %v5907 = vmul.f32 %v5085, %v4218
  %v5908 = vmul.f32 %v5089, %v4218
  %v5909 = vmul.f32 %v5093, %v4218
  %v5910 = vmul.f32 %v5097, %v4218
  %v5911 = vadd.f32 %v5895, %v5903
  %v5912 = vadd.f32 %v5896, %v5904
  %v5913 = vadd.f32 %v5897, %v5905
  %v5914 = vadd.f32 %v5898, %v5906
  %v5915 = vadd.f32 %v5899, %v5907
  %v5916 = vadd.f32 %v5900, %v5908
  %v5917 = vadd.f32 %v5901, %v5909
  %v5918 = vadd.f32 %v5902, %v5910
  %v5919 = vadd.f32 %v5911, 0.0
  %v5920 = vadd.f32 %v5912, 0.0
  %v5921 = vadd.f32 %v5913, 0.0
  %v5922 = vadd.f32 %v5914, 0.0
  %v5923 = vadd.f32 %v5915, 0.0
  %v5924 = vadd.f32 %v5916, 0.0
  %v5925 = vadd.f32 %v5917, 0.0
  %v5926 = vadd.f32 %v5918, 0.0
  %v5927 = vmul.f32 %v5402, %v4304
  %v5928 = vmul.f32 %v5407, %v4304
  %v5929 = vmul.f32 %v5412, %v4304
  %v5930 = vmul.f32 %v5417, %v4304
  %v5931 = vmul.f32 %v5422, %v4304
  %v5932 = vmul.f32 %v5427, %v4304
  %v5933 = vmul.f32 %v5432, %v4304
  %v5934 = vmul.f32 %v5437, %v4304
  %v5935 = vmul.f32 %v5449, %v4348
  %v5936 = vmul.f32 %v5453, %v4348
  %v5937 = vmul.f32 %v5457, %v4348
  %v5938 = vmul.f32 %v5461, %v4348
  %v5939 = vmul.f32 %v5465, %v4348
  %v5940 = vmul.f32 %v5469, %v4348
  %v5941 = vmul.f32 %v5473, %v4348
  %v5942 = vmul.f32 %v5477, %v4348
  %v5943 = vadd.f32 %v5927, %v5935
  %v5944 = vadd.f32 %v5928, %v5936
  %v5945 = vadd.f32 %v5929, %v5937
  %v5946 = vadd.f32 %v5930, %v5938
  %v5947 = vadd.f32 %v5931, %v5939
  %v5948 = vadd.f32 %v5932, %v5940
  %v5949 = vadd.f32 %v5933, %v5941
  %v5950 = vadd.f32 %v5934, %v5942
  %v5951 = vmul.f32 %v5497, %v4400
  %v5952 = vmul.f32 %v5501, %v4400
  %v5953 = vmul.f32 %v5505, %v4400
  %v5954 = vmul.f32 %v5509, %v4400
  %v5955 = vmul.f32 %v5513, %v4400
  %v5956 = vmul.f32 %v5517, %v4400
  %v5957 = vmul.f32 %v5521, %v4400
  %v5958 = vmul.f32 %v5525, %v4400
  %v5959 = vadd.f32 %v5943, %v5951
  %v5960 = vadd.f32 %v5944, %v5952
  %v5961 = vadd.f32 %v5945, %v5953
  %v5962 = vadd.f32 %v5946, %v5954
  %v5963 = vadd.f32 %v5947, %v5955
  %v5964 = vadd.f32 %v5948, %v5956
  %v5965 = vadd.f32 %v5949, %v5957
  %v5966 = vadd.f32 %v5950, %v5958
  %v5967 = vmul.f32 %v5545, %v4452
  %v5968 = vmul.f32 %v5549, %v4452
  %v5969 = vmul.f32 %v5553, %v4452
  %v5970 = vmul.f32 %v5557, %v4452
  %v5971 = vmul.f32 %v5561, %v4452
  %v5972 = vmul.f32 %v5565, %v4452
  %v5973 = vmul.f32 %v5569, %v4452
  %v5974 = vmul.f32 %v5573, %v4452
  %v5975 = vadd.f32 %v5959, %v5967
  %v5976 = vadd.f32 %v5960, %v5968
  %v5977 = vadd.f32 %v5961, %v5969
  %v5978 = vadd.f32 %v5962, %v5970
  %v5979 = vadd.f32 %v5963, %v5971
  %v5980 = vadd.f32 %v5964, %v5972
  %v5981 = vadd.f32 %v5965, %v5973
  %v5982 = vadd.f32 %v5966, %v5974
  %v5983 = vmul.f32 %v5593, %v4504
  %v5984 = vmul.f32 %v5597, %v4504
  %v5985 = vmul.f32 %v5601, %v4504
  %v5986 = vmul.f32 %v5605, %v4504
  %v5987 = vmul.f32 %v5609, %v4504
  %v5988 = vmul.f32 %v5613, %v4504
  %v5989 = vmul.f32 %v5617, %v4504
  %v5990 = vmul.f32 %v5621, %v4504
  %v5991 = vadd.f32 %v5975, %v5983
  %v5992 = vadd.f32 %v5976, %v5984
  %v5993 = vadd.f32 %v5977, %v5985
  %v5994 = vadd.f32 %v5978, %v5986
  %v5995 = vadd.f32 %v5979, %v5987
  %v5996 = vadd.f32 %v5980, %v5988
  %v5997 = vadd.f32 %v5981, %v5989
  %v5998 = vadd.f32 %v5982, %v5990
  %v5999 = vmul.f32 %v5641, %v4556
  %v6000 = vmul.f32 %v5645, %v4556
  %v6001 = vmul.f32 %v5649, %v4556
  %v6002 = vmul.f32 %v5653, %v4556
  %v6003 = vmul.f32 %v5657, %v4556
  %v6004 = vmul.f32 %v5661, %v4556
  %v6005 = vmul.f32 %v5665, %v4556
  %v6006 = vmul.f32 %v5669, %v4556
  %v6007 = vadd.f32 %v5991, %v5999
  %v6008 = vadd.f32 %v5992, %v6000
  %v6009 = vadd.f32 %v5993, %v6001
  %v6010 = vadd.f32 %v5994, %v6002
  %v6011 = vadd.f32 %v5995, %v6003
  %v6012 = vadd.f32 %v5996, %v6004
  %v6013 = vadd.f32 %v5997, %v6005
  %v6014 = vadd.f32 %v5998, %v6006
  %v6015 = vmul.f32 %v5689, %v4608
  %v6016 = vmul.f32 %v5693, %v4608
  %v6017 = vmul.f32 %v5697, %v4608
  %v6018 = vmul.f32 %v5701, %v4608
  %v6019 = vmul.f32 %v5705, %v4608
  %v6020 = vmul.f32 %v5709, %v4608
  %v6021 = vmul.f32 %v5713, %v4608
  %v6022 = vmul.f32 %v5717, %v4608
  %v6023 = vadd.f32 %v6007, %v6015
  %v6024 = vadd.f32 %v6008, %v6016
  %v6025 = vadd.f32 %v6009, %v6017
  %v6026 = vadd.f32 %v6010, %v6018
  %v6027 = vadd.f32 %v6011, %v6019
  %v6028 = vadd.f32 %v6012, %v6020
  %v6029 = vadd.f32 %v6013, %v6021
  %v6030 = vadd.f32 %v6014, %v6022
  %v6031 = vmul.f32 %v5737, %v4660
  %v6032 = vmul.f32 %v5741, %v4660
  %v6033 = vmul.f32 %v5745, %v4660
  %v6034 = vmul.f32 %v5749, %v4660
  %v6035 = vmul.f32 %v5753, %v4660
  %v6036 = vmul.f32 %v5757, %v4660
  %v6037 = vmul.f32 %v5761, %v4660
  %v6038 = vmul.f32 %v5765, %v4660
  %v6039 = vadd.f32 %v6023, %v6031
  %v6040 = vadd.f32 %v6024, %v6032
  %v6041 = vadd.f32 %v6025, %v6033
  %v6042 = vadd.f32 %v6026, %v6034
  %v6043 = vadd.f32 %v6027, %v6035
  %v6044 = vadd.f32 %v6028, %v6036
  %v6045 = vadd.f32 %v6029, %v6037
  %v6046 = vadd.f32 %v6030, %v6038
  %v6047 = vadd.f32 %v5919, %v6039
  %v6048 = vadd.f32 %v5920, %v6040
  %v6049 = vadd.f32 %v5921, %v6041
  %v6050 = vadd.f32 %v5922, %v6042
  %v6051 = vadd.f32 %v5923, %v6043
  %v6052 = vadd.f32 %v5924, %v6044
  %v6053 = vadd.f32 %v5925, %v6045
  %v6054 = vadd.f32 %v5926, %v6046
  %s6055 = scalar_lea.vmem %s9, 4
  %v6056 = vld [vmem:[%s6055] ss:$2 sm:$0x1f]
  %s6057 = scalar_lea.vmem %s9, 20
  %v6058 = vld [vmem:[%s6057] ss:$2 sm:$0x1f]
  %s6059 = scalar_lea.vmem %s9, 36
  %v6060 = vld [vmem:[%s6059] ss:$2 sm:$0x1f]
  %s6061 = scalar_lea.vmem %s9, 52
  %v6062 = vld [vmem:[%s6061] ss:$2 sm:$0x1f]
  %s6063 = scalar_lea.vmem %s9, 68
  %v6064 = vld [vmem:[%s6063] ss:$2 sm:$0x1f]
  %s6065 = scalar_lea.vmem %s9, 84
  %v6066 = vld [vmem:[%s6065] ss:$2 sm:$0x1f]
  %s6067 = scalar_lea.vmem %s9, 100
  %v6068 = vld [vmem:[%s6067] ss:$2 sm:$0x1f]
  %s6069 = scalar_lea.vmem %s9, 116
  %v6070 = vld [vmem:[%s6069] ss:$2 sm:$0x1f]
  %6072 = vset.pattern.permute.xlu0 0
  %6073 = vperm.xlu0 %6072, %v6056
  %v6074 = vpop.permute.xlu0 %6073
  %6077 = vset.pattern.permute.xlu0 0
  %6078 = vperm.xlu0 %6077, %v6058
  %v6079 = vpop.permute.xlu0 %6078
  %6082 = vset.pattern.permute.xlu0 0
  %6083 = vperm.xlu0 %6082, %v6060
  %v6084 = vpop.permute.xlu0 %6083
  %6087 = vset.pattern.permute.xlu0 0
  %6088 = vperm.xlu0 %6087, %v6062
  %v6089 = vpop.permute.xlu0 %6088
  %6092 = vset.pattern.permute.xlu0 0
  %6093 = vperm.xlu0 %6092, %v6064
  %v6094 = vpop.permute.xlu0 %6093
  %6097 = vset.pattern.permute.xlu0 0
  %6098 = vperm.xlu0 %6097, %v6066
  %v6099 = vpop.permute.xlu0 %6098
  %6102 = vset.pattern.permute.xlu0 0
  %6103 = vperm.xlu0 %6102, %v6068
  %v6104 = vpop.permute.xlu0 %6103
  %6107 = vset.pattern.permute.xlu0 0
  %6108 = vperm.xlu0 %6107, %v6070
  %v6109 = vpop.permute.xlu0 %6108
  %v6111 = vmul.f32 %v6074, %v4746
  %v6112 = vmul.f32 %v6079, %v4746
  %v6113 = vmul.f32 %v6084, %v4746
  %v6114 = vmul.f32 %v6089, %v4746
  %v6115 = vmul.f32 %v6094, %v4746
  %v6116 = vmul.f32 %v6099, %v4746
  %v6117 = vmul.f32 %v6104, %v4746
  %v6118 = vmul.f32 %v6109, %v4746
  %6119 = vset.pattern.permute.xlu0 1
  %6120 = vperm.xlu0 %6119, %v6056
  %v6121 = vpop.permute.xlu0 %6120
  %6123 = vset.pattern.permute.xlu0 1
  %6124 = vperm.xlu0 %6123, %v6058
  %v6125 = vpop.permute.xlu0 %6124
  %6127 = vset.pattern.permute.xlu0 1
  %6128 = vperm.xlu0 %6127, %v6060
  %v6129 = vpop.permute.xlu0 %6128
  %6131 = vset.pattern.permute.xlu0 1
  %6132 = vperm.xlu0 %6131, %v6062
  %v6133 = vpop.permute.xlu0 %6132
  %6135 = vset.pattern.permute.xlu0 1
  %6136 = vperm.xlu0 %6135, %v6064
  %v6137 = vpop.permute.xlu0 %6136
  %6139 = vset.pattern.permute.xlu0 1
  %6140 = vperm.xlu0 %6139, %v6066
  %v6141 = vpop.permute.xlu0 %6140
  %6143 = vset.pattern.permute.xlu0 1
  %6144 = vperm.xlu0 %6143, %v6068
  %v6145 = vpop.permute.xlu0 %6144
  %6147 = vset.pattern.permute.xlu0 1
  %6148 = vperm.xlu0 %6147, %v6070
  %v6149 = vpop.permute.xlu0 %6148
  %v6151 = vmul.f32 %v6121, %v4790
  %v6152 = vmul.f32 %v6125, %v4790
  %v6153 = vmul.f32 %v6129, %v4790
  %v6154 = vmul.f32 %v6133, %v4790
  %v6155 = vmul.f32 %v6137, %v4790
  %v6156 = vmul.f32 %v6141, %v4790
  %v6157 = vmul.f32 %v6145, %v4790
  %v6158 = vmul.f32 %v6149, %v4790
  %v6159 = vadd.f32 %v6111, %v6151
  %v6160 = vadd.f32 %v6112, %v6152
  %v6161 = vadd.f32 %v6113, %v6153
  %v6162 = vadd.f32 %v6114, %v6154
  %v6163 = vadd.f32 %v6115, %v6155
  %v6164 = vadd.f32 %v6116, %v6156
  %v6165 = vadd.f32 %v6117, %v6157
  %v6166 = vadd.f32 %v6118, %v6158
  %6167 = vset.pattern.permute.xlu0 2
  %6168 = vperm.xlu0 %6167, %v6056
  %v6169 = vpop.permute.xlu0 %6168
  %6171 = vset.pattern.permute.xlu0 2
  %6172 = vperm.xlu0 %6171, %v6058
  %v6173 = vpop.permute.xlu0 %6172
  %6175 = vset.pattern.permute.xlu0 2
  %6176 = vperm.xlu0 %6175, %v6060
  %v6177 = vpop.permute.xlu0 %6176
  %6179 = vset.pattern.permute.xlu0 2
  %6180 = vperm.xlu0 %6179, %v6062
  %v6181 = vpop.permute.xlu0 %6180
  %6183 = vset.pattern.permute.xlu0 2
  %6184 = vperm.xlu0 %6183, %v6064
  %v6185 = vpop.permute.xlu0 %6184
  %6187 = vset.pattern.permute.xlu0 2
  %6188 = vperm.xlu0 %6187, %v6066
  %v6189 = vpop.permute.xlu0 %6188
  %6191 = vset.pattern.permute.xlu0 2
  %6192 = vperm.xlu0 %6191, %v6068
  %v6193 = vpop.permute.xlu0 %6192
  %6195 = vset.pattern.permute.xlu0 2
  %6196 = vperm.xlu0 %6195, %v6070
  %v6197 = vpop.permute.xlu0 %6196
  %v6199 = vmul.f32 %v6169, %v4842
  %v6200 = vmul.f32 %v6173, %v4842
  %v6201 = vmul.f32 %v6177, %v4842
  %v6202 = vmul.f32 %v6181, %v4842
  %v6203 = vmul.f32 %v6185, %v4842
  %v6204 = vmul.f32 %v6189, %v4842
  %v6205 = vmul.f32 %v6193, %v4842
  %v6206 = vmul.f32 %v6197, %v4842
  %v6207 = vadd.f32 %v6159, %v6199
  %v6208 = vadd.f32 %v6160, %v6200
  %v6209 = vadd.f32 %v6161, %v6201
  %v6210 = vadd.f32 %v6162, %v6202
  %v6211 = vadd.f32 %v6163, %v6203
  %v6212 = vadd.f32 %v6164, %v6204
  %v6213 = vadd.f32 %v6165, %v6205
  %v6214 = vadd.f32 %v6166, %v6206
  %6215 = vset.pattern.permute.xlu0 3
  %6216 = vperm.xlu0 %6215, %v6056
  %v6217 = vpop.permute.xlu0 %6216
  %6219 = vset.pattern.permute.xlu0 3
  %6220 = vperm.xlu0 %6219, %v6058
  %v6221 = vpop.permute.xlu0 %6220
  %6223 = vset.pattern.permute.xlu0 3
  %6224 = vperm.xlu0 %6223, %v6060
  %v6225 = vpop.permute.xlu0 %6224
  %6227 = vset.pattern.permute.xlu0 3
  %6228 = vperm.xlu0 %6227, %v6062
  %v6229 = vpop.permute.xlu0 %6228
  %6231 = vset.pattern.permute.xlu0 3
  %6232 = vperm.xlu0 %6231, %v6064
  %v6233 = vpop.permute.xlu0 %6232
  %6235 = vset.pattern.permute.xlu0 3
  %6236 = vperm.xlu0 %6235, %v6066
  %v6237 = vpop.permute.xlu0 %6236
  %6239 = vset.pattern.permute.xlu0 3
  %6240 = vperm.xlu0 %6239, %v6068
  %v6241 = vpop.permute.xlu0 %6240
  %6243 = vset.pattern.permute.xlu0 3
  %6244 = vperm.xlu0 %6243, %v6070
  %v6245 = vpop.permute.xlu0 %6244
  %v6247 = vmul.f32 %v6217, %v4894
  %v6248 = vmul.f32 %v6221, %v4894
  %v6249 = vmul.f32 %v6225, %v4894
  %v6250 = vmul.f32 %v6229, %v4894
  %v6251 = vmul.f32 %v6233, %v4894
  %v6252 = vmul.f32 %v6237, %v4894
  %v6253 = vmul.f32 %v6241, %v4894
  %v6254 = vmul.f32 %v6245, %v4894
  %v6255 = vadd.f32 %v6207, %v6247
  %v6256 = vadd.f32 %v6208, %v6248
  %v6257 = vadd.f32 %v6209, %v6249
  %v6258 = vadd.f32 %v6210, %v6250
  %v6259 = vadd.f32 %v6211, %v6251
  %v6260 = vadd.f32 %v6212, %v6252
  %v6261 = vadd.f32 %v6213, %v6253
  %v6262 = vadd.f32 %v6214, %v6254
  %6263 = vset.pattern.permute.xlu0 4
  %6264 = vperm.xlu0 %6263, %v6056
  %v6265 = vpop.permute.xlu0 %6264
  %6267 = vset.pattern.permute.xlu0 4
  %6268 = vperm.xlu0 %6267, %v6058
  %v6269 = vpop.permute.xlu0 %6268
  %6271 = vset.pattern.permute.xlu0 4
  %6272 = vperm.xlu0 %6271, %v6060
  %v6273 = vpop.permute.xlu0 %6272
  %6275 = vset.pattern.permute.xlu0 4
  %6276 = vperm.xlu0 %6275, %v6062
  %v6277 = vpop.permute.xlu0 %6276
  %6279 = vset.pattern.permute.xlu0 4
  %6280 = vperm.xlu0 %6279, %v6064
  %v6281 = vpop.permute.xlu0 %6280
  %6283 = vset.pattern.permute.xlu0 4
  %6284 = vperm.xlu0 %6283, %v6066
  %v6285 = vpop.permute.xlu0 %6284
  %6287 = vset.pattern.permute.xlu0 4
  %6288 = vperm.xlu0 %6287, %v6068
  %v6289 = vpop.permute.xlu0 %6288
  %6291 = vset.pattern.permute.xlu0 4
  %6292 = vperm.xlu0 %6291, %v6070
  %v6293 = vpop.permute.xlu0 %6292
  %v6295 = vmul.f32 %v6265, %v4946
  %v6296 = vmul.f32 %v6269, %v4946
  %v6297 = vmul.f32 %v6273, %v4946
  %v6298 = vmul.f32 %v6277, %v4946
  %v6299 = vmul.f32 %v6281, %v4946
  %v6300 = vmul.f32 %v6285, %v4946
  %v6301 = vmul.f32 %v6289, %v4946
  %v6302 = vmul.f32 %v6293, %v4946
  %v6303 = vadd.f32 %v6255, %v6295
  %v6304 = vadd.f32 %v6256, %v6296
  %v6305 = vadd.f32 %v6257, %v6297
  %v6306 = vadd.f32 %v6258, %v6298
  %v6307 = vadd.f32 %v6259, %v6299
  %v6308 = vadd.f32 %v6260, %v6300
  %v6309 = vadd.f32 %v6261, %v6301
  %v6310 = vadd.f32 %v6262, %v6302
  %6311 = vset.pattern.permute.xlu0 5
  %6312 = vperm.xlu0 %6311, %v6056
  %v6313 = vpop.permute.xlu0 %6312
  %6315 = vset.pattern.permute.xlu0 5
  %6316 = vperm.xlu0 %6315, %v6058
  %v6317 = vpop.permute.xlu0 %6316
  %6319 = vset.pattern.permute.xlu0 5
  %6320 = vperm.xlu0 %6319, %v6060
  %v6321 = vpop.permute.xlu0 %6320
  %6323 = vset.pattern.permute.xlu0 5
  %6324 = vperm.xlu0 %6323, %v6062
  %v6325 = vpop.permute.xlu0 %6324
  %6327 = vset.pattern.permute.xlu0 5
  %6328 = vperm.xlu0 %6327, %v6064
  %v6329 = vpop.permute.xlu0 %6328
  %6331 = vset.pattern.permute.xlu0 5
  %6332 = vperm.xlu0 %6331, %v6066
  %v6333 = vpop.permute.xlu0 %6332
  %6335 = vset.pattern.permute.xlu0 5
  %6336 = vperm.xlu0 %6335, %v6068
  %v6337 = vpop.permute.xlu0 %6336
  %6339 = vset.pattern.permute.xlu0 5
  %6340 = vperm.xlu0 %6339, %v6070
  %v6341 = vpop.permute.xlu0 %6340
  %v6343 = vmul.f32 %v6313, %v4998
  %v6344 = vmul.f32 %v6317, %v4998
  %v6345 = vmul.f32 %v6321, %v4998
  %v6346 = vmul.f32 %v6325, %v4998
  %v6347 = vmul.f32 %v6329, %v4998
  %v6348 = vmul.f32 %v6333, %v4998
  %v6349 = vmul.f32 %v6337, %v4998
  %v6350 = vmul.f32 %v6341, %v4998
  %v6351 = vadd.f32 %v6303, %v6343
  %v6352 = vadd.f32 %v6304, %v6344
  %v6353 = vadd.f32 %v6305, %v6345
  %v6354 = vadd.f32 %v6306, %v6346
  %v6355 = vadd.f32 %v6307, %v6347
  %v6356 = vadd.f32 %v6308, %v6348
  %v6357 = vadd.f32 %v6309, %v6349
  %v6358 = vadd.f32 %v6310, %v6350
  %6359 = vset.pattern.permute.xlu0 6
  %6360 = vperm.xlu0 %6359, %v6056
  %v6361 = vpop.permute.xlu0 %6360
  %6363 = vset.pattern.permute.xlu0 6
  %6364 = vperm.xlu0 %6363, %v6058
  %v6365 = vpop.permute.xlu0 %6364
  %6367 = vset.pattern.permute.xlu0 6
  %6368 = vperm.xlu0 %6367, %v6060
  %v6369 = vpop.permute.xlu0 %6368
  %6371 = vset.pattern.permute.xlu0 6
  %6372 = vperm.xlu0 %6371, %v6062
  %v6373 = vpop.permute.xlu0 %6372
  %6375 = vset.pattern.permute.xlu0 6
  %6376 = vperm.xlu0 %6375, %v6064
  %v6377 = vpop.permute.xlu0 %6376
  %6379 = vset.pattern.permute.xlu0 6
  %6380 = vperm.xlu0 %6379, %v6066
  %v6381 = vpop.permute.xlu0 %6380
  %6383 = vset.pattern.permute.xlu0 6
  %6384 = vperm.xlu0 %6383, %v6068
  %v6385 = vpop.permute.xlu0 %6384
  %6387 = vset.pattern.permute.xlu0 6
  %6388 = vperm.xlu0 %6387, %v6070
  %v6389 = vpop.permute.xlu0 %6388
  %v6391 = vmul.f32 %v6361, %v5050
  %v6392 = vmul.f32 %v6365, %v5050
  %v6393 = vmul.f32 %v6369, %v5050
  %v6394 = vmul.f32 %v6373, %v5050
  %v6395 = vmul.f32 %v6377, %v5050
  %v6396 = vmul.f32 %v6381, %v5050
  %v6397 = vmul.f32 %v6385, %v5050
  %v6398 = vmul.f32 %v6389, %v5050
  %v6399 = vadd.f32 %v6351, %v6391
  %v6400 = vadd.f32 %v6352, %v6392
  %v6401 = vadd.f32 %v6353, %v6393
  %v6402 = vadd.f32 %v6354, %v6394
  %v6403 = vadd.f32 %v6355, %v6395
  %v6404 = vadd.f32 %v6356, %v6396
  %v6405 = vadd.f32 %v6357, %v6397
  %v6406 = vadd.f32 %v6358, %v6398
  %6407 = vset.pattern.permute.xlu0 7
  %6408 = vperm.xlu0 %6407, %v6056
  %v6409 = vpop.permute.xlu0 %6408
  %6411 = vset.pattern.permute.xlu0 7
  %6412 = vperm.xlu0 %6411, %v6058
  %v6413 = vpop.permute.xlu0 %6412
  %6415 = vset.pattern.permute.xlu0 7
  %6416 = vperm.xlu0 %6415, %v6060
  %v6417 = vpop.permute.xlu0 %6416
  %6419 = vset.pattern.permute.xlu0 7
  %6420 = vperm.xlu0 %6419, %v6062
  %v6421 = vpop.permute.xlu0 %6420
  %6423 = vset.pattern.permute.xlu0 7
  %6424 = vperm.xlu0 %6423, %v6064
  %v6425 = vpop.permute.xlu0 %6424
  %6427 = vset.pattern.permute.xlu0 7
  %6428 = vperm.xlu0 %6427, %v6066
  %v6429 = vpop.permute.xlu0 %6428
  %6431 = vset.pattern.permute.xlu0 7
  %6432 = vperm.xlu0 %6431, %v6068
  %v6433 = vpop.permute.xlu0 %6432
  %6435 = vset.pattern.permute.xlu0 7
  %6436 = vperm.xlu0 %6435, %v6070
  %v6437 = vpop.permute.xlu0 %6436
  %v6439 = vmul.f32 %v6409, %v5102
  %v6440 = vmul.f32 %v6413, %v5102
  %v6441 = vmul.f32 %v6417, %v5102
  %v6442 = vmul.f32 %v6421, %v5102
  %v6443 = vmul.f32 %v6425, %v5102
  %v6444 = vmul.f32 %v6429, %v5102
  %v6445 = vmul.f32 %v6433, %v5102
  %v6446 = vmul.f32 %v6437, %v5102
  %v6447 = vadd.f32 %v6399, %v6439
  %v6448 = vadd.f32 %v6400, %v6440
  %v6449 = vadd.f32 %v6401, %v6441
  %v6450 = vadd.f32 %v6402, %v6442
  %v6451 = vadd.f32 %v6403, %v6443
  %v6452 = vadd.f32 %v6404, %v6444
  %v6453 = vadd.f32 %v6405, %v6445
  %v6454 = vadd.f32 %v6406, %v6446
  %v6455 = vadd.f32 %v6047, %v6447
  %v6456 = vadd.f32 %v6048, %v6448
  %v6457 = vadd.f32 %v6049, %v6449
  %v6458 = vadd.f32 %v6050, %v6450
  %v6459 = vadd.f32 %v6051, %v6451
  %v6460 = vadd.f32 %v6052, %v6452
  %v6461 = vadd.f32 %v6053, %v6453
  %v6462 = vadd.f32 %v6054, %v6454
  %v6463 = vmax.f32 %v5791, %v6455
  %v6464 = vmax.f32 %v5792, %v6456
  %v6465 = vmax.f32 %v5793, %v6457
  %v6466 = vmax.f32 %v5794, %v6458
  %v6467 = vmax.f32 %v5795, %v6459
  %v6468 = vmax.f32 %v5796, %v6460
  %v6469 = vmax.f32 %v5797, %v6461
  %v6470 = vmax.f32 %v5798, %v6462
  %v6472 = vlaneseq
  %v6473 = vshrl.u32 %v6472, 7
  %v6474 = vsub.s32 0, %v6473
  %v6475 = vrot.slane %v3802, %v6474
  %v6477 = vadd.f32 %v6463, %v6475
  %v6478 = vadd.f32 %v6464, %v6475
  %v6479 = vadd.f32 %v6465, %v6475
  %v6480 = vadd.f32 %v6466, %v6475
  %v6481 = vadd.f32 %v6467, %v6475
  %v6482 = vadd.f32 %v6468, %v6475
  %v6483 = vadd.f32 %v6469, %v6475
  %v6484 = vadd.f32 %v6470, %v6475
  %v6485 = vlaneseq
  %v6486 = vshrl.u32 %v6485, 7
  %v6487 = vsub.s32 0, %v6486
  %v6488 = vrot.slane %v3800, %v6487
  %v6489 = vmul.f32 %v6074, %v6488
  %v6490 = vmul.f32 %v6079, %v6488
  %v6491 = vmul.f32 %v6084, %v6488
  %v6492 = vmul.f32 %v6089, %v6488
  %v6493 = vmul.f32 %v6094, %v6488
  %v6494 = vmul.f32 %v6099, %v6488
  %v6495 = vmul.f32 %v6104, %v6488
  %v6496 = vmul.f32 %v6109, %v6488
  %v6497 = vlaneseq
  %v6498 = vshrl.u32 %v6497, 7
  %v6499 = vsub.s32 1, %v6498
  %v6500 = vrot.slane %v3800, %v6499
  %v6501 = vmul.f32 %v6121, %v6500
  %v6502 = vmul.f32 %v6125, %v6500
  %v6503 = vmul.f32 %v6129, %v6500
  %v6504 = vmul.f32 %v6133, %v6500
  %v6505 = vmul.f32 %v6137, %v6500
  %v6506 = vmul.f32 %v6141, %v6500
  %v6507 = vmul.f32 %v6145, %v6500
  %v6508 = vmul.f32 %v6149, %v6500
  %v6509 = vadd.f32 %v6489, %v6501
  %v6510 = vadd.f32 %v6490, %v6502
  %v6511 = vadd.f32 %v6491, %v6503
  %v6512 = vadd.f32 %v6492, %v6504
  %v6513 = vadd.f32 %v6493, %v6505
  %v6514 = vadd.f32 %v6494, %v6506
  %v6515 = vadd.f32 %v6495, %v6507
  %v6516 = vadd.f32 %v6496, %v6508
  %v6517 = vlaneseq
  %v6518 = vshrl.u32 %v6517, 7
  %v6519 = vsub.s32 2, %v6518
  %v6520 = vrot.slane %v3800, %v6519
  %v6521 = vmul.f32 %v6169, %v6520
  %v6522 = vmul.f32 %v6173, %v6520
  %v6523 = vmul.f32 %v6177, %v6520
  %v6524 = vmul.f32 %v6181, %v6520
  %v6525 = vmul.f32 %v6185, %v6520
  %v6526 = vmul.f32 %v6189, %v6520
  %v6527 = vmul.f32 %v6193, %v6520
  %v6528 = vmul.f32 %v6197, %v6520
  %v6529 = vadd.f32 %v6509, %v6521
  %v6530 = vadd.f32 %v6510, %v6522
  %v6531 = vadd.f32 %v6511, %v6523
  %v6532 = vadd.f32 %v6512, %v6524
  %v6533 = vadd.f32 %v6513, %v6525
  %v6534 = vadd.f32 %v6514, %v6526
  %v6535 = vadd.f32 %v6515, %v6527
  %v6536 = vadd.f32 %v6516, %v6528
  %v6537 = vlaneseq
  %v6538 = vshrl.u32 %v6537, 7
  %v6539 = vsub.s32 3, %v6538
  %v6540 = vrot.slane %v3800, %v6539
  %v6541 = vmul.f32 %v6217, %v6540
  %v6542 = vmul.f32 %v6221, %v6540
  %v6543 = vmul.f32 %v6225, %v6540
  %v6544 = vmul.f32 %v6229, %v6540
  %v6545 = vmul.f32 %v6233, %v6540
  %v6546 = vmul.f32 %v6237, %v6540
  %v6547 = vmul.f32 %v6241, %v6540
  %v6548 = vmul.f32 %v6245, %v6540
  %v6549 = vadd.f32 %v6529, %v6541
  %v6550 = vadd.f32 %v6530, %v6542
  %v6551 = vadd.f32 %v6531, %v6543
  %v6552 = vadd.f32 %v6532, %v6544
  %v6553 = vadd.f32 %v6533, %v6545
  %v6554 = vadd.f32 %v6534, %v6546
  %v6555 = vadd.f32 %v6535, %v6547
  %v6556 = vadd.f32 %v6536, %v6548
  %v6557 = vlaneseq
  %v6558 = vshrl.u32 %v6557, 7
  %v6559 = vsub.s32 4, %v6558
  %v6560 = vrot.slane %v3800, %v6559
  %v6561 = vmul.f32 %v6265, %v6560
  %v6562 = vmul.f32 %v6269, %v6560
  %v6563 = vmul.f32 %v6273, %v6560
  %v6564 = vmul.f32 %v6277, %v6560
  %v6565 = vmul.f32 %v6281, %v6560
  %v6566 = vmul.f32 %v6285, %v6560
  %v6567 = vmul.f32 %v6289, %v6560
  %v6568 = vmul.f32 %v6293, %v6560
  %v6569 = vadd.f32 %v6549, %v6561
  %v6570 = vadd.f32 %v6550, %v6562
  %v6571 = vadd.f32 %v6551, %v6563
  %v6572 = vadd.f32 %v6552, %v6564
  %v6573 = vadd.f32 %v6553, %v6565
  %v6574 = vadd.f32 %v6554, %v6566
  %v6575 = vadd.f32 %v6555, %v6567
  %v6576 = vadd.f32 %v6556, %v6568
  %v6577 = vlaneseq
  %v6578 = vshrl.u32 %v6577, 7
  %v6579 = vsub.s32 5, %v6578
  %v6580 = vrot.slane %v3800, %v6579
  %v6581 = vmul.f32 %v6313, %v6580
  %v6582 = vmul.f32 %v6317, %v6580
  %v6583 = vmul.f32 %v6321, %v6580
  %v6584 = vmul.f32 %v6325, %v6580
  %v6585 = vmul.f32 %v6329, %v6580
  %v6586 = vmul.f32 %v6333, %v6580
  %v6587 = vmul.f32 %v6337, %v6580
  %v6588 = vmul.f32 %v6341, %v6580
  %v6589 = vadd.f32 %v6569, %v6581
  %v6590 = vadd.f32 %v6570, %v6582
  %v6591 = vadd.f32 %v6571, %v6583
  %v6592 = vadd.f32 %v6572, %v6584
  %v6593 = vadd.f32 %v6573, %v6585
  %v6594 = vadd.f32 %v6574, %v6586
  %v6595 = vadd.f32 %v6575, %v6587
  %v6596 = vadd.f32 %v6576, %v6588
  %v6597 = vlaneseq
  %v6598 = vshrl.u32 %v6597, 7
  %v6599 = vsub.s32 6, %v6598
  %v6600 = vrot.slane %v3800, %v6599
  %v6601 = vmul.f32 %v6361, %v6600
  %v6602 = vmul.f32 %v6365, %v6600
  %v6603 = vmul.f32 %v6369, %v6600
  %v6604 = vmul.f32 %v6373, %v6600
  %v6605 = vmul.f32 %v6377, %v6600
  %v6606 = vmul.f32 %v6381, %v6600
  %v6607 = vmul.f32 %v6385, %v6600
  %v6608 = vmul.f32 %v6389, %v6600
  %v6609 = vadd.f32 %v6589, %v6601
  %v6610 = vadd.f32 %v6590, %v6602
  %v6611 = vadd.f32 %v6591, %v6603
  %v6612 = vadd.f32 %v6592, %v6604
  %v6613 = vadd.f32 %v6593, %v6605
  %v6614 = vadd.f32 %v6594, %v6606
  %v6615 = vadd.f32 %v6595, %v6607
  %v6616 = vadd.f32 %v6596, %v6608
  %v6617 = vlaneseq
  %v6618 = vshrl.u32 %v6617, 7
  %v6619 = vsub.s32 7, %v6618
  %v6620 = vrot.slane %v3800, %v6619
  %v6621 = vmul.f32 %v6409, %v6620
  %v6622 = vmul.f32 %v6413, %v6620
  %v6623 = vmul.f32 %v6417, %v6620
  %v6624 = vmul.f32 %v6421, %v6620
  %v6625 = vmul.f32 %v6425, %v6620
  %v6626 = vmul.f32 %v6429, %v6620
  %v6627 = vmul.f32 %v6433, %v6620
  %v6628 = vmul.f32 %v6437, %v6620
  %v6629 = vadd.f32 %v6609, %v6621
  %v6630 = vadd.f32 %v6610, %v6622
  %v6631 = vadd.f32 %v6611, %v6623
  %v6632 = vadd.f32 %v6612, %v6624
  %v6633 = vadd.f32 %v6613, %v6625
  %v6634 = vadd.f32 %v6614, %v6626
  %v6635 = vadd.f32 %v6615, %v6627
  %v6636 = vadd.f32 %v6616, %v6628
  %v6638 = vlaneseq
  %v6639 = vshrl.u32 %v6638, 7
  %v6640 = vsub.s32 0, %v6639
  %v6641 = vrot.slane %v3801, %v6640
  %v6643 = vadd.f32 %v6629, %v6641
  %v6644 = vadd.f32 %v6630, %v6641
  %v6645 = vadd.f32 %v6631, %v6641
  %v6646 = vadd.f32 %v6632, %v6641
  %v6647 = vadd.f32 %v6633, %v6641
  %v6648 = vadd.f32 %v6634, %v6641
  %v6649 = vadd.f32 %v6635, %v6641
  %v6650 = vadd.f32 %v6636, %v6641
  %v6651 = vadd.f32 %v6477, %v6643
  %v6652 = vadd.f32 %v6478, %v6644
  %v6653 = vadd.f32 %v6479, %v6645
  %v6654 = vadd.f32 %v6480, %v6646
  %v6655 = vadd.f32 %v6481, %v6647
  %v6656 = vadd.f32 %v6482, %v6648
  %v6657 = vadd.f32 %v6483, %v6649
  %v6658 = vadd.f32 %v6484, %v6650
  %v6659 = vmax.f32 %v6651, 0.0
  %v6660 = vmax.f32 %v6652, 0.0
  %v6661 = vmax.f32 %v6653, 0.0
  %v6662 = vmax.f32 %v6654, 0.0
  %v6663 = vmax.f32 %v6655, 0.0
  %v6664 = vmax.f32 %v6656, 0.0
  %v6665 = vmax.f32 %v6657, 0.0
  %v6666 = vmax.f32 %v6658, 0.0
  %vm6667 = vcmask 61440
  %6668 = vst.msk [vmem:[%s10] sm:$0x1f] %vm6667, %v6659
  %6669 = vst.msk [vmem:[%s10 + $0x8] sm:$0x1f] %vm6667, %v6660
  %6670 = vst.msk [vmem:[%s10 + $0x10] sm:$0x1f] %vm6667, %v6661
  %6671 = vst.msk [vmem:[%s10 + $0x18] sm:$0x1f] %vm6667, %v6662
  %6672 = vst.msk [vmem:[%s10 + $0x20] sm:$0x1f] %vm6667, %v6663
  %6673 = vst.msk [vmem:[%s10 + $0x28] sm:$0x1f] %vm6667, %v6664
  %6674 = vst.msk [vmem:[%s10 + $0x30] sm:$0x1f] %vm6667, %v6665
  %6675 = vst.msk [vmem:[%s10 + $0x38] sm:$0x1f] %vm6667, %v6666
  // Predicated region
  $region38: #{tpu_custom_call.1} parent=0 // pred_check
    _
  $region39: #{tpu_custom_call.1} parent=0 // pred_check_branch
    %6677 = sbr.rel (0) target = $region41
  $region40: #{tpu_custom_call.1} parent=0 // pred_region
    _
  $region41: #{tpu_custom_call.1} parent=0 // pred_fallthru
    _
  // Predicated region
  $region42: #{tpu_custom_call.1} parent=0 // pred_check
    _
  $region43: #{tpu_custom_call.1} parent=0 // pred_check_branch
    %6679 = sbr.rel (0) target = $region45
  $region44: #{tpu_custom_call.1} parent=0 // pred_region
    _
  $region45: #{tpu_custom_call.1} parent=0 // pred_fallthru
    _
  // Predicated region
  $region46: #{tpu_custom_call.1} parent=0 // pred_check
    _
  $region47: #{tpu_custom_call.1} parent=0 // pred_check_branch
    %6681 = sbr.rel (0) target = $region49
  $region48: #{tpu_custom_call.1} parent=0 // pred_region
    _
  $region49: #{tpu_custom_call.1} parent=0 // pred_fallthru
    _
  // Predicated region
  $region50: #{tpu_custom_call.1} parent=0 // pred_check
    _
  $region51: #{tpu_custom_call.1} parent=0 // pred_check_branch
    %6683 = sbr.rel (0) target = $region53
  $region52: #{tpu_custom_call.1} parent=0 // pred_region
    _
  $region53: #{tpu_custom_call.1} parent=0 // pred_fallthru
    _

</llo_original>
